<compile_context>
chip_gen: v6e
topology: v6e:2x2x1
jax: 0.10.0
libtpu: 0.0.40
codegen_flags: <defaults>
</compile_context>

<pallas_src>
import jax
import jax.numpy as jnp
from jax.experimental import pallas as pl
from jax.experimental.pallas import tpu as pltpu

# ----------------------------- model config ---------------------------------
IN_CHANNELS = 1
LATENT_DIM = 16
NUM_CLASSES = 10
HIDDEN_DIMS = [8, 16, 32, 32]          # small variant of the default [32,64,128,256]
IMG = 64                               # the module hard-codes a 64x64 probe input
N_DOWN = len(HIDDEN_DIMS)
LAST_HW = IMG // (2 ** N_DOWN)         # 4
LAST_C = HIDDEN_DIMS[-1]               # 32
FLAT_DIM = LAST_C * LAST_HW * LAST_HW  # 512
COND_FEAT = 128
COMBINED_DIM = FLAT_DIM + COND_FEAT    # 640
BN_EPS = 1e-5
LRELU_SLOPE = 0.01
TM_MAX = 1024                          # row tile for the conv/deconv GEMM grids
TN_FINAL = 1024                        # lane tile for the final transposed conv GEMM


def _row_tile(m):
    if m >= TM_MAX:
        return TM_MAX
    return max(16, ((m + 15) // 16) * 16)   # bf16 sublane-pack granularity


# ----------------------------- Pallas kernels --------------------------------
def _gemm_stats_kernel(a_ref, b_ref, bias_ref, o_ref, st_ref):
    """Patch GEMM + bias.  Raw (pre-BN) output stored bf16; per-column sum and
    sum-of-squares of THIS row tile are written to rows 0/1 of the stats block,
    so the row grid has no carried accumulator and stays fully "parallel"
    (megacore-splittable on v7x)."""
    acc = jnp.dot(a_ref[...], b_ref[...], preferred_element_type=jnp.float32)
    acc = acc + bias_ref[...]
    o_ref[...] = acc.astype(o_ref.dtype)
    s = jnp.sum(acc, axis=0, keepdims=True)            # (1, N)
    q = jnp.sum(acc * acc, axis=0, keepdims=True)      # (1, N)
    ridx = jax.lax.broadcasted_iota(jnp.int32, st_ref.shape, 0)
    st_ref[...] = jnp.where(ridx == 0, s, 0.0) + jnp.where(ridx == 1, q, 0.0)


def _rowvec_sigmoid_kernel(w_ref, a_ref, bias_ref, o_ref):
    """Final 1-output-channel conv + sigmoid as a transposed GEMM: (8,K)@(K,tn)
    so output pixels sit on the 128-lane axis -> lane-dense stores.  The 8 LHS
    rows are replicas of the same weight row (row 0 of the output is used).
    Sigmoid denominator reciprocal goes to the EUP (approx=True)."""
    acc = jnp.dot(w_ref[...], a_ref[...], preferred_element_type=jnp.float32)
    acc = acc + bias_ref[...]
    acc = jnp.clip(acc, -30.0, 30.0)                    # avoid inf in exp
    o_ref[...] = pl.reciprocal(1.0 + jnp.exp(-acc), approx=True)


def _head_kernel(flat_ref, cond_ref, eps_ref,
                 w1_ref, b1_ref, w2_ref, b2_ref,
                 wmu_f_ref, wmu_c_ref, bmu_ref,
                 wv_f_ref, wv_c_ref, bv_ref,
                 wdz_ref, wdc_ref, bd_ref,
                 mu_ref, lv_ref, d_ref):
    """Fused latent head: condition-encoder MLP, fc_mu, fc_var,
    reparameterization and decoder_input in one kernel (f32 math)."""
    f32 = jnp.float32
    cond = cond_ref[...]
    flat = flat_ref[...]
    c1 = jnp.maximum(jnp.dot(cond, w1_ref[...], preferred_element_type=f32)
                     + b1_ref[...], 0.0)
    c2 = jnp.maximum(jnp.dot(c1, w2_ref[...], preferred_element_type=f32)
                     + b2_ref[...], 0.0)
    mu = (jnp.dot(flat, wmu_f_ref[...], preferred_element_type=f32)
          + jnp.dot(c2, wmu_c_ref[...], preferred_element_type=f32) + bmu_ref[...])
    lv = (jnp.dot(flat, wv_f_ref[...], preferred_element_type=f32)
          + jnp.dot(c2, wv_c_ref[...], preferred_element_type=f32) + bv_ref[...])
    z = eps_ref[...] * jnp.exp(0.5 * lv) + mu
    d = (jnp.dot(z, wdz_ref[...], preferred_element_type=f32)
         + jnp.dot(cond, wdc_ref[...], preferred_element_type=f32) + bd_ref[...])
    mu_ref[...] = mu
    lv_ref[...] = lv
    d_ref[...] = d


# ----------------------------- Pallas wrappers --------------------------------
def conv_gemm_stats(a_bf16, w_bf16, bias):
    """(M,K)bf16 @ (K,N)bf16 + bias -> raw output (M,N) bf16, plus exact
    per-column sum / sum-of-squares (f32) over the M valid rows (zero-padded
    rows contribute exactly `bias` per column and are corrected analytically)."""
    M, K = a_bf16.shape
    N = w_bf16.shape[1]
    tm = _row_tile(M)
    Mp = ((M + tm - 1) // tm) * tm
    grid_m = Mp // tm
    a_p = a_bf16 if Mp == M else jnp.pad(a_bf16, ((0, Mp - M), (0, 0)))
    bias2 = bias.reshape(1, N).astype(jnp.float32)
    y, st = pl.pallas_call(
        _gemm_stats_kernel,
        out_shape=(jax.ShapeDtypeStruct((Mp, N), jnp.bfloat16),
                   jax.ShapeDtypeStruct((grid_m * 8, N), jnp.float32)),
        grid=(grid_m,),
        in_specs=[
            pl.BlockSpec((tm, K), lambda i: (i, 0)),
            pl.BlockSpec((K, N), lambda i: (0, 0)),
            pl.BlockSpec((1, N), lambda i: (0, 0)),
        ],
        out_specs=(pl.BlockSpec((tm, N), lambda i: (i, 0)),
                   pl.BlockSpec((8, N), lambda i: (i, 0))),
        compiler_params=pltpu.CompilerParams(dimension_semantics=("parallel",)),
    )(a_p, w_bf16, bias2)
    st = st.reshape(grid_m, 8, N)
    s = jnp.sum(st[:, 0, :], axis=0)
    q = jnp.sum(st[:, 1, :], axis=0)
    npad = Mp - M
    if npad:
        b32 = bias.astype(jnp.float32)
        s = s - npad * b32
        q = q - npad * b32 * b32
    return y[:M], s, q


def final_conv_sigmoid(a_t_bf16, w_rep_bf16, bias_11):
    """Final conv (cout=1) + sigmoid via transposed GEMM over (K, M) patches."""
    K, M = a_t_bf16.shape
    tn = TN_FINAL
    Mp = ((M + tn - 1) // tn) * tn
    a_p = a_t_bf16 if Mp == M else jnp.pad(a_t_bf16, ((0, 0), (0, Mp - M)))
    out = pl.pallas_call(
        _rowvec_sigmoid_kernel,
        out_shape=jax.ShapeDtypeStruct((8, Mp), jnp.float32),
        grid=(Mp // tn,),
        in_specs=[
            pl.BlockSpec((8, K), lambda j: (0, 0)),
            pl.BlockSpec((K, tn), lambda j: (0, j)),
            pl.BlockSpec((1, 1), lambda j: (0, 0)),
        ],
        out_specs=pl.BlockSpec((8, tn), lambda j: (0, j)),
        compiler_params=pltpu.CompilerParams(dimension_semantics=("parallel",)),
    )(w_rep_bf16, a_p, bias_11)
    return out[0, :M]


def latent_head(flat, cond, eps, hp):
    """Single Pallas kernel for cond-MLP + fc_mu + fc_var + reparam + dec_in."""
    B = flat.shape[0]
    Bp = max(8, ((B + 7) // 8) * 8)
    padr = lambda a: jnp.pad(a.astype(jnp.float32), ((0, Bp - B), (0, 0)))
    inputs = [padr(flat), padr(cond), padr(eps),
              hp["w1"], hp["b1"], hp["w2"], hp["b2"],
              hp["wmu_f"], hp["wmu_c"], hp["bmu"],
              hp["wv_f"], hp["wv_c"], hp["bv"],
              hp["wdz"], hp["wdc"], hp["bd"]]
    spec = lambda a: pl.BlockSpec(a.shape, lambda i: (0, 0))
    mu, lv, d = pl.pallas_call(
        _head_kernel,
        out_shape=(jax.ShapeDtypeStruct((Bp, LATENT_DIM), jnp.float32),
                   jax.ShapeDtypeStruct((Bp, LATENT_DIM), jnp.float32),
                   jax.ShapeDtypeStruct((Bp, FLAT_DIM), jnp.float32)),
        grid=(1,),
        in_specs=[spec(a) for a in inputs],
        out_specs=(pl.BlockSpec((Bp, LATENT_DIM), lambda i: (0, 0)),
                   pl.BlockSpec((Bp, LATENT_DIM), lambda i: (0, 0)),
                   pl.BlockSpec((Bp, FLAT_DIM), lambda i: (0, 0))),
    )(*inputs)
    return mu[:B], lv[:B], d[:B]


# ----------------------------- XLA glue (layout + folded BN affine) -----------
def bn_scale_shift(s, q, count, gamma, beta, phases=1):
    """Training-mode BatchNorm scale/shift from per-column sum / sumsq."""
    if phases > 1:
        s = s.reshape(phases, -1).sum(axis=0)
        q = q.reshape(phases, -1).sum(axis=0)
    mean = s / count
    var = jnp.maximum(q / count - mean * mean, 0.0)   # biased variance (training BN)
    scale = gamma / jnp.sqrt(var + BN_EPS)
    shift = beta - mean * scale
    return scale, shift


def _act_affine(x_bf16, scale, shift):
    """Previous layer's BN affine + LeakyReLU, folded into the consumer's patch
    build (f32 math per v5e guidance, bf16 storage).  Applied BEFORE the
    consumer's zero padding, so conv padding semantics stay exact."""
    y = x_bf16.astype(jnp.float32) * scale + shift
    y = jnp.where(y >= 0, y, LRELU_SLOPE * y)
    return y.astype(jnp.bfloat16)


def _im2col_s2(x_p, Ho, Wo):
    """x_p: spatially padded NHWC (pad=1, bf16).  Returns (N*Ho*Wo, 9*C) patches
    for a k=3 stride=2 conv; column order (ky, kx, c)."""
    N = x_p.shape[0]
    C = x_p.shape[-1]
    cols = [x_p[:, di:di + 2 * Ho - 1:2, dj:dj + 2 * Wo - 1:2, :]
            for di in range(3) for dj in range(3)]
    return jnp.concatenate(cols, axis=-1).reshape(N * Ho * Wo, 9 * C)


# ----------------------------- parameters ------------------------------------
def init_params(key):
    keys = iter(jax.random.split(key, 128))

    def nrm(shape, scale=0.1):
        return (scale * jax.random.normal(next(keys), shape)).astype(jnp.float32)

    params = {}
    enc = []
    cin = IN_CHANNELS
    for h in HIDDEN_DIMS:
        enc.append(dict(w=nrm((h, cin, 3, 3)), b=nrm((h,)),
                        gamma=jnp.ones((h,), jnp.float32),
                        beta=jnp.zeros((h,), jnp.float32)))
        cin = h
    params["encoder"] = enc

    params["ce_w1"] = nrm((NUM_CLASSES, 64));  params["ce_b1"] = nrm((64,))
    params["ce_w2"] = nrm((64, COND_FEAT));    params["ce_b2"] = nrm((COND_FEAT,))

    params["mu_w"] = nrm((COMBINED_DIM, LATENT_DIM));  params["mu_b"] = nrm((LATENT_DIM,))
    params["var_w"] = nrm((COMBINED_DIM, LATENT_DIM)); params["var_b"] = nrm((LATENT_DIM,))

    params["dec_in_w"] = nrm((LATENT_DIM + NUM_CLASSES, FLAT_DIM))
    params["dec_in_b"] = nrm((FLAT_DIM,))

    rev = list(reversed(HIDDEN_DIMS))  # [32, 32, 16, 8]
    dec = []
    for i in range(len(rev) - 1):
        dec.append(dict(w=nrm((rev[i], rev[i + 1], 3, 3)), b=nrm((rev[i + 1],)),
                        gamma=jnp.ones((rev[i + 1],), jnp.float32),
                        beta=jnp.zeros((rev[i + 1],), jnp.float32)))
    params["decoder"] = dec

    last = rev[-1]
    params["final"] = dict(ct_w=nrm((last, last, 3, 3)), ct_b=nrm((last,)),
                           gamma=jnp.ones((last,), jnp.float32),
                           beta=jnp.zeros((last,), jnp.float32),
                           conv_w=nrm((1, last, 3, 3)), conv_b=nrm((1,)))
    return params


def _tap_index(parity, d):
    # Which 3x3 kernel tap feeds input offset d (0/1) for output parity (even/odd).
    if parity == 0:
        return 1 if d == 0 else None
    return 0 if d == 0 else 2


def _make_deconv_mats(w_iohw, bias):
    """Build the (4*Cin, 4*Cout) sub-pixel GEMM weight for a stride-2 k=3
    ConvTranspose2d with pad=1, output_padding=1 (PyTorch semantics)."""
    cin, cout = int(w_iohw.shape[0]), int(w_iohw.shape[1])
    # equivalent forward-conv weight: w_eq[o, c, ty, tx] = w_iohw[c, o, 2-ty, 2-tx]
    w_eq = jnp.transpose(w_iohw[:, :, ::-1, ::-1], (1, 0, 2, 3))
    phase_cols = []
    for py in (0, 1):
        for px in (0, 1):
            rows = []
            for dy in (0, 1):
                for dx in (0, 1):
                    ty = _tap_index(py, dy)
                    tx = _tap_index(px, dx)
                    if ty is None or tx is None:
                        rows.append(jnp.zeros((cin, cout), jnp.float32))
                    else:
                        rows.append(jnp.transpose(w_eq[:, :, ty, tx]))  # [c, o]
            phase_cols.append(jnp.concatenate(rows, axis=0))            # (4*cin, cout)
    w_big = jnp.concatenate(phase_cols, axis=1).astype(jnp.bfloat16)    # (4*cin, 4*cout)
    bias_big = jnp.tile(bias.astype(jnp.float32), 4)
    return w_big, bias_big


def prepare_params(raw):
    """One-time conversion of raw (PyTorch-layout) params to GEMM-ready layouts
    (hoisted out of the jitted forward path), with bf16 weight casts."""
    prep = {"encoder": [], "decoder": []}
    cin = IN_CHANNELS
    for blk in raw["encoder"]:
        cout = int(blk["w"].shape[0])
        w_mat = jnp.transpose(blk["w"], (2, 3, 1, 0)).reshape(9 * cin, cout)
        prep["encoder"].append(dict(w_mat=w_mat.astype(jnp.bfloat16),
                                    b=blk["b"].astype(jnp.float32),
                                    gamma=blk["gamma"], beta=blk["beta"]))
        cin = cout

    prep["head"] = dict(
        w1=raw["ce_w1"], b1=raw["ce_b1"].reshape(1, -1),
        w2=raw["ce_w2"], b2=raw["ce_b2"].reshape(1, -1),
        wmu_f=raw["mu_w"][:FLAT_DIM], wmu_c=raw["mu_w"][FLAT_DIM:],
        bmu=raw["mu_b"].reshape(1, -1),
        wv_f=raw["var_w"][:FLAT_DIM], wv_c=raw["var_w"][FLAT_DIM:],
        bv=raw["var_b"].reshape(1, -1),
        wdz=raw["dec_in_w"][:LATENT_DIM], wdc=raw["dec_in_w"][LATENT_DIM:],
        bd=raw["dec_in_b"].reshape(1, -1))

    for blk in raw["decoder"]:
        w_big, bias_big = _make_deconv_mats(blk["w"], blk["b"])
        prep["decoder"].append(dict(w_big=w_big, bias_big=bias_big,
                                    gamma=blk["gamma"], beta=blk["beta"]))

    fl = raw["final"]
    w_big, bias_big = _make_deconv_mats(fl["ct_w"], fl["ct_b"])
    prep["final_deconv"] = dict(w_big=w_big, bias_big=bias_big,
                                gamma=fl["gamma"], beta=fl["beta"])
    last = HIDDEN_DIMS[0]
    conv_w_mat = jnp.transpose(fl["conv_w"], (2, 3, 1, 0)).reshape(9 * last, 1)
    w_rep = jnp.tile(conv_w_mat.T, (8, 1)).astype(jnp.bfloat16)         # (8, 9*last)
    prep["final_conv"] = dict(w_rep=w_rep,
                              b=fl["conv_b"].reshape(1, 1).astype(jnp.float32))
    return prep


# ----------------------------- forward ----------------------------------------
@jax.jit
def cvae_forward(params, x_nchw, cond, eps):
    N = x_nchw.shape[0]
    x_act = jnp.transpose(x_nchw, (0, 2, 3, 1)).astype(jnp.bfloat16)   # NHWC bf16

    # --- encoder: Conv(s2) -> BN(batch stats) -> LeakyReLU, 4 layers ---
    H = W = IMG
    for blk in params["encoder"]:
        cout = blk["w_mat"].shape[1]
        Ho, Wo = H // 2, W // 2
        x_p = jnp.pad(x_act, ((0, 0), (1, 1), (1, 1), (0, 0)))
        patches = _im2col_s2(x_p, Ho, Wo)
        y, s, q = conv_gemm_stats(patches, blk["w_mat"], blk["b"])
        scale, shift = bn_scale_shift(s, q, N * Ho * Wo, blk["gamma"], blk["beta"])
        x_act = _act_affine(y.reshape(N, Ho, Wo, cout), scale, shift)
        H, W = Ho, Wo

    # flatten in NCHW order to match torch semantics
    flat = jnp.transpose(x_act, (0, 3, 1, 2)).reshape(N, FLAT_DIM).astype(jnp.float32)

    # --- latent head (cond-MLP, mu, log_var, reparam, decoder_input) ---
    mu, log_var, d = latent_head(flat, cond.astype(jnp.float32),
                                 eps.astype(jnp.float32), params["head"])

    # --- decoder: 4-phase sub-pixel ConvTranspose GEMMs -> BN -> LeakyReLU ---
    x_act = jnp.transpose(d.reshape(N, LAST_C, LAST_HW, LAST_HW),
                          (0, 2, 3, 1)).astype(jnp.bfloat16)            # .view + NHWC
    H = W = LAST_HW
    for blk in params["decoder"] + [params["final_deconv"]]:
        cin = x_act.shape[-1]
        cout = blk["w_big"].shape[1] // 4
        x_p = jnp.pad(x_act, ((0, 0), (0, 1), (0, 1), (0, 0)))
        taps = [x_p[:, dy:dy + H, dx:dx + W, :] for dy in (0, 1) for dx in (0, 1)]
        patches = jnp.concatenate(taps, axis=-1).reshape(N * H * W, 4 * cin)
        y, s, q = conv_gemm_stats(patches, blk["w_big"], blk["bias_big"])
        scale, shift = bn_scale_shift(s, q, 4 * N * H * W,
                                      blk["gamma"], blk["beta"], phases=4)
        y_act = _act_affine(y, jnp.tile(scale, 4), jnp.tile(shift, 4))
        # TODO(synk): fold this 4-phase interleave into the kernel's out index_map
        # (or keep activations phase-major) to remove one XLA relayout per layer.
        x_act = y_act.reshape(N, H, W, 2, 2, cout).transpose(0, 1, 3, 2, 4, 5)
        x_act = x_act.reshape(N, 2 * H, 2 * W, cout)
        H, W = 2 * H, 2 * W

    # --- final 3x3 conv (cout=1) + sigmoid: transposed, lane-dense GEMM ---
    cin = x_act.shape[-1]
    x_p = jnp.pad(x_act, ((0, 0), (1, 1), (1, 1), (0, 0)))
    xc = jnp.transpose(x_p, (3, 0, 1, 2))                               # (C, N, H+2, W+2)
    rows = [xc[:, :, dy:dy + H, dx:dx + W].reshape(cin, N * H * W)
            for dy in range(3) for dx in range(3)]
    a_t = jnp.concatenate(rows, axis=0)                                 # (9C, N*H*W) bf16
    rec = final_conv_sigmoid(a_t, params["final_conv"]["w_rep"],
                             params["final_conv"]["b"])
    recon = rec.reshape(N, 1, H, W)                                     # NCHW
    return recon, x_nchw, mu, log_var


# ----------------------------- main -------------------------------------------
if __name__ == "__main__":
    key = jax.random.PRNGKey(0)
    k_param, k_x, k_eps = jax.random.split(key, 3)

    raw_params = init_params(k_param)
    params = prepare_params(raw_params)

    batch = 2
    x = jax.random.normal(k_x, (batch, IN_CHANNELS, IMG, IMG), dtype=jnp.float32)
    labels = jnp.array([3, 7], dtype=jnp.int32)
    cond = jax.nn.one_hot(labels, NUM_CLASSES, dtype=jnp.float32)
    eps = jax.random.normal(k_eps, (batch, LATENT_DIM), dtype=jnp.float32)

    recon, inp, mu, log_var = cvae_forward(params, x, cond, eps)
    jax.block_until_ready((recon, mu, log_var))

    assert recon.shape == (batch, 1, IMG, IMG)
    assert mu.shape == (batch, LATENT_DIM) and log_var.shape == (batch, LATENT_DIM)
    assert bool(jnp.all(jnp.isfinite(recon)))
    print("KERNEL_OK")
</pallas_src>

<mosaic_0001>
module attributes {stable_mosaic.version = 11 : i64} {
  func.func @_gemm_stats_kernel(%arg0: i32, %arg1: memref<1024x9xbf16, #tpu.memory_space<vmem>>, %arg2: memref<9x8xbf16, #tpu.memory_space<vmem>>, %arg3: memref<1x8xf32, #tpu.memory_space<vmem>>, %arg4: memref<1024x8xbf16, #tpu.memory_space<vmem>>, %arg5: memref<8x8xf32, #tpu.memory_space<vmem>>) attributes {dimension_semantics = [#tpu.dimension_semantics<parallel>], iteration_bounds = array<i64: 2>, scalar_prefetch = 0 : i64, scratch_operands = 0 : i64, tpu.core_type = #tpu.core_type<tc>, window_params = [{transform_indices = @transform_0, window_bounds = array<i64: 1024, 9>}, {pipeline_mode = #tpu.pipeline_mode<synchronous>, transform_indices = @transform_1, window_bounds = array<i64: 9, 8>}, {pipeline_mode = #tpu.pipeline_mode<synchronous>, transform_indices = @transform_2, window_bounds = array<i64: 1, 8>}, {transform_indices = @transform_3, window_bounds = array<i64: 1024, 8>}, {transform_indices = @transform_4, window_bounds = array<i64: 8, 8>}]} {
    %c0 = arith.constant 0 : index
    %c0_0 = arith.constant 0 : index
    %0 = vector.load %arg1[%c0, %c0_0] : memref<1024x9xbf16, #tpu.memory_space<vmem>>, vector<1024x9xbf16>
    %c0_1 = arith.constant 0 : index
    %c0_2 = arith.constant 0 : index
    %1 = vector.load %arg2[%c0_1, %c0_2] : memref<9x8xbf16, #tpu.memory_space<vmem>>, vector<9x8xbf16>
    %cst = arith.constant dense<0.000000e+00> : vector<1024x8xf32>
    %2 = tpu.matmul %0, %1, %cst {dimension_numbers = #tpu.dot_dimension_numbers<[1], [0], [0], [1], [0, 0, 1, 1], [], []>} : vector<1024x9xbf16>, vector<9x8xbf16>, vector<1024x8xf32> -> vector<1024x8xf32>
    %c0_3 = arith.constant 0 : index
    %c0_4 = arith.constant 0 : index
    %3 = vector.load %arg3[%c0_3, %c0_4] : memref<1x8xf32, #tpu.memory_space<vmem>>, vector<1x8xf32>
    %4 = vector.broadcast %3 : vector<1x8xf32> to vector<1024x8xf32>
    %5 = arith.addf %2, %4 : vector<1024x8xf32>
    %6 = arith.truncf %5 : vector<1024x8xf32> to vector<1024x8xbf16>
    %c0_5 = arith.constant 0 : index
    %c0_6 = arith.constant 0 : index
    %7 = vector.load %arg4[%c0_5, %c0_6] : memref<1024x8xbf16, #tpu.memory_space<vmem>>, vector<1024x8xbf16>
    tpu.vector_store %arg4[%c0_5, %c0_6], %6 {strides = array<i32>} : memref<1024x8xbf16, #tpu.memory_space<vmem>>, vector<1024x8xbf16>,
    %cst_7 = arith.constant dense<0.000000e+00> : vector<8xf32>
    %8 = vector.multi_reduction <add>, %5, %cst_7 [0] : vector<1024x8xf32> to vector<8xf32>
    %9 = vector.shape_cast %8 : vector<8xf32> to vector<1x8xf32>
    %10 = arith.mulf %5, %5 : vector<1024x8xf32>
    %cst_8 = arith.constant dense<0.000000e+00> : vector<8xf32>
    %11 = vector.multi_reduction <add>, %10, %cst_8 [0] : vector<1024x8xf32> to vector<8xf32>
    %12 = vector.shape_cast %11 : vector<8xf32> to vector<1x8xf32>
    %13 = tpu.iota {dimensions = array<i32: 0>} : vector<8x8xi32>
    %c0_i32 = arith.constant 0 : i32
    %14 = vector.broadcast %c0_i32 : i32 to vector<8x8xi32>
    %15 = arith.cmpi eq, %13, %14 : vector<8x8xi32>
    %cst_9 = arith.constant 0.000000e+00 : f32
    %16 = vector.shape_cast %9 : vector<1x8xf32> to vector<1x8xf32>
    %17 = vector.broadcast %16 : vector<1x8xf32> to vector<8x8xf32>
    %18 = vector.broadcast %cst_9 : f32 to vector<8x8xf32>
    %19 = arith.select %15, %17, %18 : vector<8x8xi1>, vector<8x8xf32>
    %c1_i32 = arith.constant 1 : i32
    %20 = vector.broadcast %c1_i32 : i32 to vector<8x8xi32>
    %21 = arith.cmpi eq, %13, %20 : vector<8x8xi32>
    %cst_10 = arith.constant 0.000000e+00 : f32
    %22 = vector.shape_cast %12 : vector<1x8xf32> to vector<1x8xf32>
    %23 = vector.broadcast %22 : vector<1x8xf32> to vector<8x8xf32>
    %24 = vector.broadcast %cst_10 : f32 to vector<8x8xf32>
    %25 = arith.select %21, %23, %24 : vector<8x8xi1>, vector<8x8xf32>
    %26 = arith.addf %19, %25 : vector<8x8xf32>
    %c0_11 = arith.constant 0 : index
    %c0_12 = arith.constant 0 : index
    %27 = vector.load %arg5[%c0_11, %c0_12] : memref<8x8xf32, #tpu.memory_space<vmem>>, vector<8x8xf32>
    tpu.vector_store %arg5[%c0_11, %c0_12], %26 {strides = array<i32>} : memref<8x8xf32, #tpu.memory_space<vmem>>, vector<8x8xf32>,
    return
  }
  func.func @transform_0(%arg0: i32) -> (i32, i32) {
    %c0_i32 = arith.constant 0 : i32
    %c0_i32_0 = arith.constant 0 : i32
    return %arg0, %c0_i32 : i32, i32
  }
  func.func @transform_1(%arg0: i32) -> (i32, i32) {
    %c0_i32 = arith.constant 0 : i32
    %c0_i32_0 = arith.constant 0 : i32
    %c0_i32_1 = arith.constant 0 : i32
    return %c0_i32, %c0_i32_0 : i32, i32
  }
  func.func @transform_2(%arg0: i32) -> (i32, i32) {
    %c0_i32 = arith.constant 0 : i32
    %c0_i32_0 = arith.constant 0 : i32
    %c0_i32_1 = arith.constant 0 : i32
    return %c0_i32, %c0_i32_0 : i32, i32
  }
  func.func @transform_3(%arg0: i32) -> (i32, i32) {
    %c0_i32 = arith.constant 0 : i32
    %c0_i32_0 = arith.constant 0 : i32
    return %arg0, %c0_i32 : i32, i32
  }
  func.func @transform_4(%arg0: i32) -> (i32, i32) {
    %c0_i32 = arith.constant 0 : i32
    %c0_i32_0 = arith.constant 0 : i32
    return %arg0, %c0_i32 : i32, i32
  }
}

module attributes {stable_mosaic.version = 11 : i64} {
  func.func @_gemm_stats_kernel(%arg0: i32, %arg1: memref<512x72xbf16, #tpu.memory_space<vmem>>, %arg2: memref<72x16xbf16, #tpu.memory_space<vmem>>, %arg3: memref<1x16xf32, #tpu.memory_space<vmem>>, %arg4: memref<512x16xbf16, #tpu.memory_space<vmem>>, %arg5: memref<8x16xf32, #tpu.memory_space<vmem>>) attributes {dimension_semantics = [#tpu.dimension_semantics<parallel>], iteration_bounds = array<i64: 1>, scalar_prefetch = 0 : i64, scratch_operands = 0 : i64, tpu.core_type = #tpu.core_type<tc>, window_params = [{transform_indices = @transform_0, window_bounds = array<i64: 512, 72>}, {pipeline_mode = #tpu.pipeline_mode<synchronous>, transform_indices = @transform_1, window_bounds = array<i64: 72, 16>}, {pipeline_mode = #tpu.pipeline_mode<synchronous>, transform_indices = @transform_2, window_bounds = array<i64: 1, 16>}, {transform_indices = @transform_3, window_bounds = array<i64: 512, 16>}, {transform_indices = @transform_4, window_bounds = array<i64: 8, 16>}]} {
    %c0 = arith.constant 0 : index
    %c0_0 = arith.constant 0 : index
    %0 = vector.load %arg1[%c0, %c0_0] : memref<512x72xbf16, #tpu.memory_space<vmem>>, vector<512x72xbf16>
    %c0_1 = arith.constant 0 : index
    %c0_2 = arith.constant 0 : index
    %1 = vector.load %arg2[%c0_1, %c0_2] : memref<72x16xbf16, #tpu.memory_space<vmem>>, vector<72x16xbf16>
    %cst = arith.constant dense<0.000000e+00> : vector<512x16xf32>
    %2 = tpu.matmul %0, %1, %cst {dimension_numbers = #tpu.dot_dimension_numbers<[1], [0], [0], [1], [0, 0, 1, 1], [], []>} : vector<512x72xbf16>, vector<72x16xbf16>, vector<512x16xf32> -> vector<512x16xf32>
    %c0_3 = arith.constant 0 : index
    %c0_4 = arith.constant 0 : index
    %3 = vector.load %arg3[%c0_3, %c0_4] : memref<1x16xf32, #tpu.memory_space<vmem>>, vector<1x16xf32>
    %4 = vector.broadcast %3 : vector<1x16xf32> to vector<512x16xf32>
    %5 = arith.addf %2, %4 : vector<512x16xf32>
    %6 = arith.truncf %5 : vector<512x16xf32> to vector<512x16xbf16>
    %c0_5 = arith.constant 0 : index
    %c0_6 = arith.constant 0 : index
    %7 = vector.load %arg4[%c0_5, %c0_6] : memref<512x16xbf16, #tpu.memory_space<vmem>>, vector<512x16xbf16>
    tpu.vector_store %arg4[%c0_5, %c0_6], %6 {strides = array<i32>} : memref<512x16xbf16, #tpu.memory_space<vmem>>, vector<512x16xbf16>,
    %cst_7 = arith.constant dense<0.000000e+00> : vector<16xf32>
    %8 = vector.multi_reduction <add>, %5, %cst_7 [0] : vector<512x16xf32> to vector<16xf32>
    %9 = vector.shape_cast %8 : vector<16xf32> to vector<1x16xf32>
    %10 = arith.mulf %5, %5 : vector<512x16xf32>
    %cst_8 = arith.constant dense<0.000000e+00> : vector<16xf32>
    %11 = vector.multi_reduction <add>, %10, %cst_8 [0] : vector<512x16xf32> to vector<16xf32>
    %12 = vector.shape_cast %11 : vector<16xf32> to vector<1x16xf32>
    %13 = tpu.iota {dimensions = array<i32: 0>} : vector<8x16xi32>
    %c0_i32 = arith.constant 0 : i32
    %14 = vector.broadcast %c0_i32 : i32 to vector<8x16xi32>
    %15 = arith.cmpi eq, %13, %14 : vector<8x16xi32>
    %cst_9 = arith.constant 0.000000e+00 : f32
    %16 = vector.shape_cast %9 : vector<1x16xf32> to vector<1x16xf32>
    %17 = vector.broadcast %16 : vector<1x16xf32> to vector<8x16xf32>
    %18 = vector.broadcast %cst_9 : f32 to vector<8x16xf32>
    %19 = arith.select %15, %17, %18 : vector<8x16xi1>, vector<8x16xf32>
    %c1_i32 = arith.constant 1 : i32
    %20 = vector.broadcast %c1_i32 : i32 to vector<8x16xi32>
    %21 = arith.cmpi eq, %13, %20 : vector<8x16xi32>
    %cst_10 = arith.constant 0.000000e+00 : f32
    %22 = vector.shape_cast %12 : vector<1x16xf32> to vector<1x16xf32>
    %23 = vector.broadcast %22 : vector<1x16xf32> to vector<8x16xf32>
    %24 = vector.broadcast %cst_10 : f32 to vector<8x16xf32>
    %25 = arith.select %21, %23, %24 : vector<8x16xi1>, vector<8x16xf32>
    %26 = arith.addf %19, %25 : vector<8x16xf32>
    %c0_11 = arith.constant 0 : index
    %c0_12 = arith.constant 0 : index
    %27 = vector.load %arg5[%c0_11, %c0_12] : memref<8x16xf32, #tpu.memory_space<vmem>>, vector<8x16xf32>
    tpu.vector_store %arg5[%c0_11, %c0_12], %26 {strides = array<i32>} : memref<8x16xf32, #tpu.memory_space<vmem>>, vector<8x16xf32>,
    return
  }
  func.func @transform_0(%arg0: i32) -> (i32, i32) {
    %c0_i32 = arith.constant 0 : i32
    %c0_i32_0 = arith.constant 0 : i32
    return %arg0, %c0_i32 : i32, i32
  }
  func.func @transform_1(%arg0: i32) -> (i32, i32) {
    %c0_i32 = arith.constant 0 : i32
    %c0_i32_0 = arith.constant 0 : i32
    %c0_i32_1 = arith.constant 0 : i32
    return %c0_i32, %c0_i32_0 : i32, i32
  }
  func.func @transform_2(%arg0: i32) -> (i32, i32) {
    %c0_i32 = arith.constant 0 : i32
    %c0_i32_0 = arith.constant 0 : i32
    %c0_i32_1 = arith.constant 0 : i32
    return %c0_i32, %c0_i32_0 : i32, i32
  }
  func.func @transform_3(%arg0: i32) -> (i32, i32) {
    %c0_i32 = arith.constant 0 : i32
    %c0_i32_0 = arith.constant 0 : i32
    return %arg0, %c0_i32 : i32, i32
  }
  func.func @transform_4(%arg0: i32) -> (i32, i32) {
    %c0_i32 = arith.constant 0 : i32
    %c0_i32_0 = arith.constant 0 : i32
    return %arg0, %c0_i32 : i32, i32
  }
}

module attributes {stable_mosaic.version = 11 : i64} {
  func.func @_gemm_stats_kernel(%arg0: i32, %arg1: memref<128x144xbf16, #tpu.memory_space<vmem>>, %arg2: memref<144x32xbf16, #tpu.memory_space<vmem>>, %arg3: memref<1x32xf32, #tpu.memory_space<vmem>>, %arg4: memref<128x32xbf16, #tpu.memory_space<vmem>>, %arg5: memref<8x32xf32, #tpu.memory_space<vmem>>) attributes {dimension_semantics = [#tpu.dimension_semantics<parallel>], iteration_bounds = array<i64: 1>, scalar_prefetch = 0 : i64, scratch_operands = 0 : i64, tpu.core_type = #tpu.core_type<tc>, window_params = [{transform_indices = @transform_0, window_bounds = array<i64: 128, 144>}, {pipeline_mode = #tpu.pipeline_mode<synchronous>, transform_indices = @transform_1, window_bounds = array<i64: 144, 32>}, {pipeline_mode = #tpu.pipeline_mode<synchronous>, transform_indices = @transform_2, window_bounds = array<i64: 1, 32>}, {transform_indices = @transform_3, window_bounds = array<i64: 128, 32>}, {transform_indices = @transform_4, window_bounds = array<i64: 8, 32>}]} {
    %c0 = arith.constant 0 : index
    %c0_0 = arith.constant 0 : index
    %0 = vector.load %arg1[%c0, %c0_0] : memref<128x144xbf16, #tpu.memory_space<vmem>>, vector<128x144xbf16>
    %c0_1 = arith.constant 0 : index
    %c0_2 = arith.constant 0 : index
    %1 = vector.load %arg2[%c0_1, %c0_2] : memref<144x32xbf16, #tpu.memory_space<vmem>>, vector<144x32xbf16>
    %cst = arith.constant dense<0.000000e+00> : vector<128x32xf32>
    %2 = tpu.matmul %0, %1, %cst {dimension_numbers = #tpu.dot_dimension_numbers<[1], [0], [0], [1], [0, 0, 1, 1], [], []>} : vector<128x144xbf16>, vector<144x32xbf16>, vector<128x32xf32> -> vector<128x32xf32>
    %c0_3 = arith.constant 0 : index
    %c0_4 = arith.constant 0 : index
    %3 = vector.load %arg3[%c0_3, %c0_4] : memref<1x32xf32, #tpu.memory_space<vmem>>, vector<1x32xf32>
    %4 = vector.broadcast %3 : vector<1x32xf32> to vector<128x32xf32>
    %5 = arith.addf %2, %4 : vector<128x32xf32>
    %6 = arith.truncf %5 : vector<128x32xf32> to vector<128x32xbf16>
    %c0_5 = arith.constant 0 : index
    %c0_6 = arith.constant 0 : index
    %7 = vector.load %arg4[%c0_5, %c0_6] : memref<128x32xbf16, #tpu.memory_space<vmem>>, vector<128x32xbf16>
    tpu.vector_store %arg4[%c0_5, %c0_6], %6 {strides = array<i32>} : memref<128x32xbf16, #tpu.memory_space<vmem>>, vector<128x32xbf16>,
    %cst_7 = arith.constant dense<0.000000e+00> : vector<32xf32>
    %8 = vector.multi_reduction <add>, %5, %cst_7 [0] : vector<128x32xf32> to vector<32xf32>
    %9 = vector.shape_cast %8 : vector<32xf32> to vector<1x32xf32>
    %10 = arith.mulf %5, %5 : vector<128x32xf32>
    %cst_8 = arith.constant dense<0.000000e+00> : vector<32xf32>
    %11 = vector.multi_reduction <add>, %10, %cst_8 [0] : vector<128x32xf32> to vector<32xf32>
    %12 = vector.shape_cast %11 : vector<32xf32> to vector<1x32xf32>
    %13 = tpu.iota {dimensions = array<i32: 0>} : vector<8x32xi32>
    %c0_i32 = arith.constant 0 : i32
    %14 = vector.broadcast %c0_i32 : i32 to vector<8x32xi32>
    %15 = arith.cmpi eq, %13, %14 : vector<8x32xi32>
    %cst_9 = arith.constant 0.000000e+00 : f32
    %16 = vector.shape_cast %9 : vector<1x32xf32> to vector<1x32xf32>
    %17 = vector.broadcast %16 : vector<1x32xf32> to vector<8x32xf32>
    %18 = vector.broadcast %cst_9 : f32 to vector<8x32xf32>
    %19 = arith.select %15, %17, %18 : vector<8x32xi1>, vector<8x32xf32>
    %c1_i32 = arith.constant 1 : i32
    %20 = vector.broadcast %c1_i32 : i32 to vector<8x32xi32>
    %21 = arith.cmpi eq, %13, %20 : vector<8x32xi32>
    %cst_10 = arith.constant 0.000000e+00 : f32
    %22 = vector.shape_cast %12 : vector<1x32xf32> to vector<1x32xf32>
    %23 = vector.broadcast %22 : vector<1x32xf32> to vector<8x32xf32>
    %24 = vector.broadcast %cst_10 : f32 to vector<8x32xf32>
    %25 = arith.select %21, %23, %24 : vector<8x32xi1>, vector<8x32xf32>
    %26 = arith.addf %19, %25 : vector<8x32xf32>
    %c0_11 = arith.constant 0 : index
    %c0_12 = arith.constant 0 : index
    %27 = vector.load %arg5[%c0_11, %c0_12] : memref<8x32xf32, #tpu.memory_space<vmem>>, vector<8x32xf32>
    tpu.vector_store %arg5[%c0_11, %c0_12], %26 {strides = array<i32>} : memref<8x32xf32, #tpu.memory_space<vmem>>, vector<8x32xf32>,
    return
  }
  func.func @transform_0(%arg0: i32) -> (i32, i32) {
    %c0_i32 = arith.constant 0 : i32
    %c0_i32_0 = arith.constant 0 : i32
    return %arg0, %c0_i32 : i32, i32
  }
  func.func @transform_1(%arg0: i32) -> (i32, i32) {
    %c0_i32 = arith.constant 0 : i32
    %c0_i32_0 = arith.constant 0 : i32
    %c0_i32_1 = arith.constant 0 : i32
    return %c0_i32, %c0_i32_0 : i32, i32
  }
  func.func @transform_2(%arg0: i32) -> (i32, i32) {
    %c0_i32 = arith.constant 0 : i32
    %c0_i32_0 = arith.constant 0 : i32
    %c0_i32_1 = arith.constant 0 : i32
    return %c0_i32, %c0_i32_0 : i32, i32
  }
  func.func @transform_3(%arg0: i32) -> (i32, i32) {
    %c0_i32 = arith.constant 0 : i32
    %c0_i32_0 = arith.constant 0 : i32
    return %arg0, %c0_i32 : i32, i32
  }
  func.func @transform_4(%arg0: i32) -> (i32, i32) {
    %c0_i32 = arith.constant 0 : i32
    %c0_i32_0 = arith.constant 0 : i32
    return %arg0, %c0_i32 : i32, i32
  }
}

module attributes {stable_mosaic.version = 11 : i64} {
  func.func @_gemm_stats_kernel(%arg0: i32, %arg1: memref<32x288xbf16, #tpu.memory_space<vmem>>, %arg2: memref<288x32xbf16, #tpu.memory_space<vmem>>, %arg3: memref<1x32xf32, #tpu.memory_space<vmem>>, %arg4: memref<32x32xbf16, #tpu.memory_space<vmem>>, %arg5: memref<8x32xf32, #tpu.memory_space<vmem>>) attributes {dimension_semantics = [#tpu.dimension_semantics<parallel>], iteration_bounds = array<i64: 1>, scalar_prefetch = 0 : i64, scratch_operands = 0 : i64, tpu.core_type = #tpu.core_type<tc>, window_params = [{transform_indices = @transform_0, window_bounds = array<i64: 32, 288>}, {pipeline_mode = #tpu.pipeline_mode<synchronous>, transform_indices = @transform_1, window_bounds = array<i64: 288, 32>}, {pipeline_mode = #tpu.pipeline_mode<synchronous>, transform_indices = @transform_2, window_bounds = array<i64: 1, 32>}, {transform_indices = @transform_3, window_bounds = array<i64: 32, 32>}, {transform_indices = @transform_4, window_bounds = array<i64: 8, 32>}]} {
    %c0 = arith.constant 0 : index
    %c0_0 = arith.constant 0 : index
    %0 = vector.load %arg1[%c0, %c0_0] : memref<32x288xbf16, #tpu.memory_space<vmem>>, vector<32x288xbf16>
    %c0_1 = arith.constant 0 : index
    %c0_2 = arith.constant 0 : index
    %1 = vector.load %arg2[%c0_1, %c0_2] : memref<288x32xbf16, #tpu.memory_space<vmem>>, vector<288x32xbf16>
    %cst = arith.constant dense<0.000000e+00> : vector<32x32xf32>
    %2 = tpu.matmul %0, %1, %cst {dimension_numbers = #tpu.dot_dimension_numbers<[1], [0], [0], [1], [0, 0, 1, 1], [], []>} : vector<32x288xbf16>, vector<288x32xbf16>, vector<32x32xf32> -> vector<32x32xf32>
    %c0_3 = arith.constant 0 : index
    %c0_4 = arith.constant 0 : index
    %3 = vector.load %arg3[%c0_3, %c0_4] : memref<1x32xf32, #tpu.memory_space<vmem>>, vector<1x32xf32>
    %4 = vector.broadcast %3 : vector<1x32xf32> to vector<32x32xf32>
    %5 = arith.addf %2, %4 : vector<32x32xf32>
    %6 = arith.truncf %5 : vector<32x32xf32> to vector<32x32xbf16>
    %c0_5 = arith.constant 0 : index
    %c0_6 = arith.constant 0 : index
    %7 = vector.load %arg4[%c0_5, %c0_6] : memref<32x32xbf16, #tpu.memory_space<vmem>>, vector<32x32xbf16>
    tpu.vector_store %arg4[%c0_5, %c0_6], %6 {strides = array<i32>} : memref<32x32xbf16, #tpu.memory_space<vmem>>, vector<32x32xbf16>,
    %cst_7 = arith.constant dense<0.000000e+00> : vector<32xf32>
    %8 = vector.multi_reduction <add>, %5, %cst_7 [0] : vector<32x32xf32> to vector<32xf32>
    %9 = vector.shape_cast %8 : vector<32xf32> to vector<1x32xf32>
    %10 = arith.mulf %5, %5 : vector<32x32xf32>
    %cst_8 = arith.constant dense<0.000000e+00> : vector<32xf32>
    %11 = vector.multi_reduction <add>, %10, %cst_8 [0] : vector<32x32xf32> to vector<32xf32>
    %12 = vector.shape_cast %11 : vector<32xf32> to vector<1x32xf32>
    %13 = tpu.iota {dimensions = array<i32: 0>} : vector<8x32xi32>
    %c0_i32 = arith.constant 0 : i32
    %14 = vector.broadcast %c0_i32 : i32 to vector<8x32xi32>
    %15 = arith.cmpi eq, %13, %14 : vector<8x32xi32>
    %cst_9 = arith.constant 0.000000e+00 : f32
    %16 = vector.shape_cast %9 : vector<1x32xf32> to vector<1x32xf32>
    %17 = vector.broadcast %16 : vector<1x32xf32> to vector<8x32xf32>
    %18 = vector.broadcast %cst_9 : f32 to vector<8x32xf32>
    %19 = arith.select %15, %17, %18 : vector<8x32xi1>, vector<8x32xf32>
    %c1_i32 = arith.constant 1 : i32
    %20 = vector.broadcast %c1_i32 : i32 to vector<8x32xi32>
    %21 = arith.cmpi eq, %13, %20 : vector<8x32xi32>
    %cst_10 = arith.constant 0.000000e+00 : f32
    %22 = vector.shape_cast %12 : vector<1x32xf32> to vector<1x32xf32>
    %23 = vector.broadcast %22 : vector<1x32xf32> to vector<8x32xf32>
    %24 = vector.broadcast %cst_10 : f32 to vector<8x32xf32>
    %25 = arith.select %21, %23, %24 : vector<8x32xi1>, vector<8x32xf32>
    %26 = arith.addf %19, %25 : vector<8x32xf32>
    %c0_11 = arith.constant 0 : index
    %c0_12 = arith.constant 0 : index
    %27 = vector.load %arg5[%c0_11, %c0_12] : memref<8x32xf32, #tpu.memory_space<vmem>>, vector<8x32xf32>
    tpu.vector_store %arg5[%c0_11, %c0_12], %26 {strides = array<i32>} : memref<8x32xf32, #tpu.memory_space<vmem>>, vector<8x32xf32>,
    return
  }
  func.func @transform_0(%arg0: i32) -> (i32, i32) {
    %c0_i32 = arith.constant 0 : i32
    %c0_i32_0 = arith.constant 0 : i32
    return %arg0, %c0_i32 : i32, i32
  }
  func.func @transform_1(%arg0: i32) -> (i32, i32) {
    %c0_i32 = arith.constant 0 : i32
    %c0_i32_0 = arith.constant 0 : i32
    %c0_i32_1 = arith.constant 0 : i32
    return %c0_i32, %c0_i32_0 : i32, i32
  }
  func.func @transform_2(%arg0: i32) -> (i32, i32) {
    %c0_i32 = arith.constant 0 : i32
    %c0_i32_0 = arith.constant 0 : i32
    %c0_i32_1 = arith.constant 0 : i32
    return %c0_i32, %c0_i32_0 : i32, i32
  }
  func.func @transform_3(%arg0: i32) -> (i32, i32) {
    %c0_i32 = arith.constant 0 : i32
    %c0_i32_0 = arith.constant 0 : i32
    return %arg0, %c0_i32 : i32, i32
  }
  func.func @transform_4(%arg0: i32) -> (i32, i32) {
    %c0_i32 = arith.constant 0 : i32
    %c0_i32_0 = arith.constant 0 : i32
    return %arg0, %c0_i32 : i32, i32
  }
}

module attributes {stable_mosaic.version = 11 : i64} {
  func.func @_head_kernel(%arg0: i32, %arg1: memref<8x512xf32, #tpu.memory_space<vmem>>, %arg2: memref<8x10xf32, #tpu.memory_space<vmem>>, %arg3: memref<8x16xf32, #tpu.memory_space<vmem>>, %arg4: memref<10x64xf32, #tpu.memory_space<vmem>>, %arg5: memref<1x64xf32, #tpu.memory_space<vmem>>, %arg6: memref<64x128xf32, #tpu.memory_space<vmem>>, %arg7: memref<1x128xf32, #tpu.memory_space<vmem>>, %arg8: memref<512x16xf32, #tpu.memory_space<vmem>>, %arg9: memref<128x16xf32, #tpu.memory_space<vmem>>, %arg10: memref<1x16xf32, #tpu.memory_space<vmem>>, %arg11: memref<512x16xf32, #tpu.memory_space<vmem>>, %arg12: memref<128x16xf32, #tpu.memory_space<vmem>>, %arg13: memref<1x16xf32, #tpu.memory_space<vmem>>, %arg14: memref<16x512xf32, #tpu.memory_space<vmem>>, %arg15: memref<10x512xf32, #tpu.memory_space<vmem>>, %arg16: memref<1x512xf32, #tpu.memory_space<vmem>>, %arg17: memref<8x16xf32, #tpu.memory_space<vmem>>, %arg18: memref<8x16xf32, #tpu.memory_space<vmem>>, %arg19: memref<8x512xf32, #tpu.memory_space<vmem>>) attributes {dimension_semantics = [#tpu.dimension_semantics<arbitrary>], iteration_bounds = array<i64: 1>, scalar_prefetch = 0 : i64, scratch_operands = 0 : i64, tpu.core_type = #tpu.core_type<tc>, window_params = [{pipeline_mode = #tpu.pipeline_mode<synchronous>, transform_indices = @transform_0, window_bounds = array<i64: 8, 512>}, {pipeline_mode = #tpu.pipeline_mode<synchronous>, transform_indices = @transform_1, window_bounds = array<i64: 8, 10>}, {pipeline_mode = #tpu.pipeline_mode<synchronous>, transform_indices = @transform_2, window_bounds = array<i64: 8, 16>}, {pipeline_mode = #tpu.pipeline_mode<synchronous>, transform_indices = @transform_3, window_bounds = array<i64: 10, 64>}, {pipeline_mode = #tpu.pipeline_mode<synchronous>, transform_indices = @transform_4, window_bounds = array<i64: 1, 64>}, {pipeline_mode = #tpu.pipeline_mode<synchronous>, transform_indices = @transform_5, window_bounds = array<i64: 64, 128>}, {pipeline_mode = #tpu.pipeline_mode<synchronous>, transform_indices = @transform_6, window_bounds = array<i64: 1, 128>}, {pipeline_mode = #tpu.pipeline_mode<synchronous>, transform_indices = @transform_7, window_bounds = array<i64: 512, 16>}, {pipeline_mode = #tpu.pipeline_mode<synchronous>, transform_indices = @transform_8, window_bounds = array<i64: 128, 16>}, {pipeline_mode = #tpu.pipeline_mode<synchronous>, transform_indices = @transform_9, window_bounds = array<i64: 1, 16>}, {pipeline_mode = #tpu.pipeline_mode<synchronous>, transform_indices = @transform_10, window_bounds = array<i64: 512, 16>}, {pipeline_mode = #tpu.pipeline_mode<synchronous>, transform_indices = @transform_11, window_bounds = array<i64: 128, 16>}, {pipeline_mode = #tpu.pipeline_mode<synchronous>, transform_indices = @transform_12, window_bounds = array<i64: 1, 16>}, {pipeline_mode = #tpu.pipeline_mode<synchronous>, transform_indices = @transform_13, window_bounds = array<i64: 16, 512>}, {pipeline_mode = #tpu.pipeline_mode<synchronous>, transform_indices = @transform_14, window_bounds = array<i64: 10, 512>}, {pipeline_mode = #tpu.pipeline_mode<synchronous>, transform_indices = @transform_15, window_bounds = array<i64: 1, 512>}, {pipeline_mode = #tpu.pipeline_mode<synchronous>, transform_indices = @transform_16, window_bounds = array<i64: 8, 16>}, {pipeline_mode = #tpu.pipeline_mode<synchronous>, transform_indices = @transform_17, window_bounds = array<i64: 8, 16>}, {pipeline_mode = #tpu.pipeline_mode<synchronous>, transform_indices = @transform_18, window_bounds = array<i64: 8, 512>}]} {
    %c0 = arith.constant 0 : index
    %c0_0 = arith.constant 0 : index
    %0 = vector.load %arg2[%c0, %c0_0] : memref<8x10xf32, #tpu.memory_space<vmem>>, vector<8x10xf32>
    %c0_1 = arith.constant 0 : index
    %c0_2 = arith.constant 0 : index
    %1 = vector.load %arg1[%c0_1, %c0_2] : memref<8x512xf32, #tpu.memory_space<vmem>>, vector<8x512xf32>
    %c0_3 = arith.constant 0 : index
    %c0_4 = arith.constant 0 : index
    %2 = vector.load %arg4[%c0_3, %c0_4] : memref<10x64xf32, #tpu.memory_space<vmem>>, vector<10x64xf32>
    %cst = arith.constant dense<0.000000e+00> : vector<8x64xf32>
    %3 = tpu.matmul %0, %2, %cst {dimension_numbers = #tpu.dot_dimension_numbers<[1], [0], [0], [1], [0, 0, 1, 1], [], []>} : vector<8x10xf32>, vector<10x64xf32>, vector<8x64xf32> -> vector<8x64xf32>
    %c0_5 = arith.constant 0 : index
    %c0_6 = arith.constant 0 : index
    %4 = vector.load %arg5[%c0_5, %c0_6] : memref<1x64xf32, #tpu.memory_space<vmem>>, vector<1x64xf32>
    %5 = vector.broadcast %4 : vector<1x64xf32> to vector<8x64xf32>
    %6 = arith.addf %3, %5 : vector<8x64xf32>
    %cst_7 = arith.constant 0.000000e+00 : f32
    %7 = vector.broadcast %cst_7 : f32 to vector<8x64xf32>
    %8 = arith.maximumf %6, %7 : vector<8x64xf32>
    %c0_8 = arith.constant 0 : index
    %c0_9 = arith.constant 0 : index
    %9 = vector.load %arg6[%c0_8, %c0_9] : memref<64x128xf32, #tpu.memory_space<vmem>>, vector<64x128xf32>
    %cst_10 = arith.constant dense<0.000000e+00> : vector<8x128xf32>
    %10 = tpu.matmul %8, %9, %cst_10 {dimension_numbers = #tpu.dot_dimension_numbers<[1], [0], [0], [1], [0, 0, 1, 1], [], []>} : vector<8x64xf32>, vector<64x128xf32>, vector<8x128xf32> -> vector<8x128xf32>
    %c0_11 = arith.constant 0 : index
    %c0_12 = arith.constant 0 : index
    %11 = vector.load %arg7[%c0_11, %c0_12] : memref<1x128xf32, #tpu.memory_space<vmem>>, vector<1x128xf32>
    %12 = vector.broadcast %11 : vector<1x128xf32> to vector<8x128xf32>
    %13 = arith.addf %10, %12 : vector<8x128xf32>
    %cst_13 = arith.constant 0.000000e+00 : f32
    %14 = vector.broadcast %cst_13 : f32 to vector<8x128xf32>
    %15 = arith.maximumf %13, %14 : vector<8x128xf32>
    %c0_14 = arith.constant 0 : index
    %c0_15 = arith.constant 0 : index
    %16 = vector.load %arg8[%c0_14, %c0_15] : memref<512x16xf32, #tpu.memory_space<vmem>>, vector<512x16xf32>
    %cst_16 = arith.constant dense<0.000000e+00> : vector<8x16xf32>
    %17 = tpu.matmul %1, %16, %cst_16 {dimension_numbers = #tpu.dot_dimension_numbers<[1], [0], [0], [1], [0, 0, 1, 1], [], []>} : vector<8x512xf32>, vector<512x16xf32>, vector<8x16xf32> -> vector<8x16xf32>
    %c0_17 = arith.constant 0 : index
    %c0_18 = arith.constant 0 : index
    %18 = vector.load %arg9[%c0_17, %c0_18] : memref<128x16xf32, #tpu.memory_space<vmem>>, vector<128x16xf32>
    %cst_19 = arith.constant dense<0.000000e+00> : vector<8x16xf32>
    %19 = tpu.matmul %15, %18, %cst_19 {dimension_numbers = #tpu.dot_dimension_numbers<[1], [0], [0], [1], [0, 0, 1, 1], [], []>} : vector<8x128xf32>, vector<128x16xf32>, vector<8x16xf32> -> vector<8x16xf32>
    %20 = arith.addf %17, %19 : vector<8x16xf32>
    %c0_20 = arith.constant 0 : index
    %c0_21 = arith.constant 0 : index
    %21 = vector.load %arg10[%c0_20, %c0_21] : memref<1x16xf32, #tpu.memory_space<vmem>>, vector<1x16xf32>
    %22 = vector.broadcast %21 : vector<1x16xf32> to vector<8x16xf32>
    %23 = arith.addf %20, %22 : vector<8x16xf32>
    %c0_22 = arith.constant 0 : index
    %c0_23 = arith.constant 0 : index
    %24 = vector.load %arg11[%c0_22, %c0_23] : memref<512x16xf32, #tpu.memory_space<vmem>>, vector<512x16xf32>
    %cst_24 = arith.constant dense<0.000000e+00> : vector<8x16xf32>
    %25 = tpu.matmul %1, %24, %cst_24 {dimension_numbers = #tpu.dot_dimension_numbers<[1], [0], [0], [1], [0, 0, 1, 1], [], []>} : vector<8x512xf32>, vector<512x16xf32>, vector<8x16xf32> -> vector<8x16xf32>
    %c0_25 = arith.constant 0 : index
    %c0_26 = arith.constant 0 : index
    %26 = vector.load %arg12[%c0_25, %c0_26] : memref<128x16xf32, #tpu.memory_space<vmem>>, vector<128x16xf32>
    %cst_27 = arith.constant dense<0.000000e+00> : vector<8x16xf32>
    %27 = tpu.matmul %15, %26, %cst_27 {dimension_numbers = #tpu.dot_dimension_numbers<[1], [0], [0], [1], [0, 0, 1, 1], [], []>} : vector<8x128xf32>, vector<128x16xf32>, vector<8x16xf32> -> vector<8x16xf32>
    %28 = arith.addf %25, %27 : vector<8x16xf32>
    %c0_28 = arith.constant 0 : index
    %c0_29 = arith.constant 0 : index
    %29 = vector.load %arg13[%c0_28, %c0_29] : memref<1x16xf32, #tpu.memory_space<vmem>>, vector<1x16xf32>
    %30 = vector.broadcast %29 : vector<1x16xf32> to vector<8x16xf32>
    %31 = arith.addf %28, %30 : vector<8x16xf32>
    %c0_30 = arith.constant 0 : index
    %c0_31 = arith.constant 0 : index
    %32 = vector.load %arg3[%c0_30, %c0_31] : memref<8x16xf32, #tpu.memory_space<vmem>>, vector<8x16xf32>
    %cst_32 = arith.constant 5.000000e-01 : f32
    %33 = vector.broadcast %cst_32 : f32 to vector<8x16xf32>
    %34 = arith.mulf %33, %31 : vector<8x16xf32>
    %35 = math.exp %34 : vector<8x16xf32>
    %36 = arith.mulf %32, %35 : vector<8x16xf32>
    %37 = arith.addf %36, %23 : vector<8x16xf32>
    %c0_33 = arith.constant 0 : index
    %c0_34 = arith.constant 0 : index
    %38 = vector.load %arg14[%c0_33, %c0_34] : memref<16x512xf32, #tpu.memory_space<vmem>>, vector<16x512xf32>
    %cst_35 = arith.constant dense<0.000000e+00> : vector<8x512xf32>
    %39 = tpu.matmul %37, %38, %cst_35 {dimension_numbers = #tpu.dot_dimension_numbers<[1], [0], [0], [1], [0, 0, 1, 1], [], []>} : vector<8x16xf32>, vector<16x512xf32>, vector<8x512xf32> -> vector<8x512xf32>
    %c0_36 = arith.constant 0 : index
    %c0_37 = arith.constant 0 : index
    %40 = vector.load %arg15[%c0_36, %c0_37] : memref<10x512xf32, #tpu.memory_space<vmem>>, vector<10x512xf32>
    %cst_38 = arith.constant dense<0.000000e+00> : vector<8x512xf32>
    %41 = tpu.matmul %0, %40, %cst_38 {dimension_numbers = #tpu.dot_dimension_numbers<[1], [0], [0], [1], [0, 0, 1, 1], [], []>} : vector<8x10xf32>, vector<10x512xf32>, vector<8x512xf32> -> vector<8x512xf32>
    %42 = arith.addf %39, %41 : vector<8x512xf32>
    %c0_39 = arith.constant 0 : index
    %c0_40 = arith.constant 0 : index
    %43 = vector.load %arg16[%c0_39, %c0_40] : memref<1x512xf32, #tpu.memory_space<vmem>>, vector<1x512xf32>
    %44 = vector.broadcast %43 : vector<1x512xf32> to vector<8x512xf32>
    %45 = arith.addf %42, %44 : vector<8x512xf32>
    %c0_41 = arith.constant 0 : index
    %c0_42 = arith.constant 0 : index
    %46 = vector.load %arg17[%c0_41, %c0_42] : memref<8x16xf32, #tpu.memory_space<vmem>>, vector<8x16xf32>
    tpu.vector_store %arg17[%c0_41, %c0_42], %23 {strides = array<i32>} : memref<8x16xf32, #tpu.memory_space<vmem>>, vector<8x16xf32>,
    %c0_43 = arith.constant 0 : index
    %c0_44 = arith.constant 0 : index
    %47 = vector.load %arg18[%c0_43, %c0_44] : memref<8x16xf32, #tpu.memory_space<vmem>>, vector<8x16xf32>
    tpu.vector_store %arg18[%c0_43, %c0_44], %31 {strides = array<i32>} : memref<8x16xf32, #tpu.memory_space<vmem>>, vector<8x16xf32>,
    %c0_45 = arith.constant 0 : index
    %c0_46 = arith.constant 0 : index
    %48 = vector.load %arg19[%c0_45, %c0_46] : memref<8x512xf32, #tpu.memory_space<vmem>>, vector<8x512xf32>
    tpu.vector_store %arg19[%c0_45, %c0_46], %45 {strides = array<i32>} : memref<8x512xf32, #tpu.memory_space<vmem>>, vector<8x512xf32>,
    return
  }
  func.func @transform_0(%arg0: i32) -> (i32, i32) {
    %c0_i32 = arith.constant 0 : i32
    %c0_i32_0 = arith.constant 0 : i32
    %c0_i32_1 = arith.constant 0 : i32
    return %c0_i32, %c0_i32_0 : i32, i32
  }
  func.func @transform_1(%arg0: i32) -> (i32, i32) {
    %c0_i32 = arith.constant 0 : i32
    %c0_i32_0 = arith.constant 0 : i32
    %c0_i32_1 = arith.constant 0 : i32
    return %c0_i32, %c0_i32_0 : i32, i32
  }
  func.func @transform_2(%arg0: i32) -> (i32, i32) {
    %c0_i32 = arith.constant 0 : i32
    %c0_i32_0 = arith.constant 0 : i32
    %c0_i32_1 = arith.constant 0 : i32
    return %c0_i32, %c0_i32_0 : i32, i32
  }
  func.func @transform_3(%arg0: i32) -> (i32, i32) {
    %c0_i32 = arith.constant 0 : i32
    %c0_i32_0 = arith.constant 0 : i32
    %c0_i32_1 = arith.constant 0 : i32
    return %c0_i32, %c0_i32_0 : i32, i32
  }
  func.func @transform_4(%arg0: i32) -> (i32, i32) {
    %c0_i32 = arith.constant 0 : i32
    %c0_i32_0 = arith.constant 0 : i32
    %c0_i32_1 = arith.constant 0 : i32
    return %c0_i32, %c0_i32_0 : i32, i32
  }
  func.func @transform_5(%arg0: i32) -> (i32, i32) {
    %c0_i32 = arith.constant 0 : i32
    %c0_i32_0 = arith.constant 0 : i32
    %c0_i32_1 = arith.constant 0 : i32
    return %c0_i32, %c0_i32_0 : i32, i32
  }
  func.func @transform_6(%arg0: i32) -> (i32, i32) {
    %c0_i32 = arith.constant 0 : i32
    %c0_i32_0 = arith.constant 0 : i32
    %c0_i32_1 = arith.constant 0 : i32
    return %c0_i32, %c0_i32_0 : i32, i32
  }
  func.func @transform_7(%arg0: i32) -> (i32, i32) {
    %c0_i32 = arith.constant 0 : i32
    %c0_i32_0 = arith.constant 0 : i32
    %c0_i32_1 = arith.constant 0 : i32
    return %c0_i32, %c0_i32_0 : i32, i32
  }
  func.func @transform_8(%arg0: i32) -> (i32, i32) {
    %c0_i32 = arith.constant 0 : i32
    %c0_i32_0 = arith.constant 0 : i32
    %c0_i32_1 = arith.constant 0 : i32
    return %c0_i32, %c0_i32_0 : i32, i32
  }
  func.func @transform_9(%arg0: i32) -> (i32, i32) {
    %c0_i32 = arith.constant 0 : i32
    %c0_i32_0 = arith.constant 0 : i32
    %c0_i32_1 = arith.constant 0 : i32
    return %c0_i32, %c0_i32_0 : i32, i32
  }
  func.func @transform_10(%arg0: i32) -> (i32, i32) {
    %c0_i32 = arith.constant 0 : i32
    %c0_i32_0 = arith.constant 0 : i32
    %c0_i32_1 = arith.constant 0 : i32
    return %c0_i32, %c0_i32_0 : i32, i32
  }
  func.func @transform_11(%arg0: i32) -> (i32, i32) {
    %c0_i32 = arith.constant 0 : i32
    %c0_i32_0 = arith.constant 0 : i32
    %c0_i32_1 = arith.constant 0 : i32
    return %c0_i32, %c0_i32_0 : i32, i32
  }
  func.func @transform_12(%arg0: i32) -> (i32, i32) {
    %c0_i32 = arith.constant 0 : i32
    %c0_i32_0 = arith.constant 0 : i32
    %c0_i32_1 = arith.constant 0 : i32
    return %c0_i32, %c0_i32_0 : i32, i32
  }
  func.func @transform_13(%arg0: i32) -> (i32, i32) {
    %c0_i32 = arith.constant 0 : i32
    %c0_i32_0 = arith.constant 0 : i32
    %c0_i32_1 = arith.constant 0 : i32
    return %c0_i32, %c0_i32_0 : i32, i32
  }
  func.func @transform_14(%arg0: i32) -> (i32, i32) {
    %c0_i32 = arith.constant 0 : i32
    %c0_i32_0 = arith.constant 0 : i32
    %c0_i32_1 = arith.constant 0 : i32
    return %c0_i32, %c0_i32_0 : i32, i32
  }
  func.func @transform_15(%arg0: i32) -> (i32, i32) {
    %c0_i32 = arith.constant 0 : i32
    %c0_i32_0 = arith.constant 0 : i32
    %c0_i32_1 = arith.constant 0 : i32
    return %c0_i32, %c0_i32_0 : i32, i32
  }
  func.func @transform_16(%arg0: i32) -> (i32, i32) {
    %c0_i32 = arith.constant 0 : i32
    %c0_i32_0 = arith.constant 0 : i32
    %c0_i32_1 = arith.constant 0 : i32
    return %c0_i32, %c0_i32_0 : i32, i32
  }
  func.func @transform_17(%arg0: i32) -> (i32, i32) {
    %c0_i32 = arith.constant 0 : i32
    %c0_i32_0 = arith.constant 0 : i32
    %c0_i32_1 = arith.constant 0 : i32
    return %c0_i32, %c0_i32_0 : i32, i32
  }
  func.func @transform_18(%arg0: i32) -> (i32, i32) {
    %c0_i32 = arith.constant 0 : i32
    %c0_i32_0 = arith.constant 0 : i32
    %c0_i32_1 = arith.constant 0 : i32
    return %c0_i32, %c0_i32_0 : i32, i32
  }
}

module attributes {stable_mosaic.version = 11 : i64} {
  func.func @_gemm_stats_kernel(%arg0: i32, %arg1: memref<32x128xbf16, #tpu.memory_space<vmem>>, %arg2: memref<128x128xbf16, #tpu.memory_space<vmem>>, %arg3: memref<1x128xf32, #tpu.memory_space<vmem>>, %arg4: memref<32x128xbf16, #tpu.memory_space<vmem>>, %arg5: memref<8x128xf32, #tpu.memory_space<vmem>>) attributes {dimension_semantics = [#tpu.dimension_semantics<parallel>], iteration_bounds = array<i64: 1>, scalar_prefetch = 0 : i64, scratch_operands = 0 : i64, tpu.core_type = #tpu.core_type<tc>, window_params = [{transform_indices = @transform_0, window_bounds = array<i64: 32, 128>}, {pipeline_mode = #tpu.pipeline_mode<synchronous>, transform_indices = @transform_1, window_bounds = array<i64: 128, 128>}, {pipeline_mode = #tpu.pipeline_mode<synchronous>, transform_indices = @transform_2, window_bounds = array<i64: 1, 128>}, {transform_indices = @transform_3, window_bounds = array<i64: 32, 128>}, {transform_indices = @transform_4, window_bounds = array<i64: 8, 128>}]} {
    %c0 = arith.constant 0 : index
    %c0_0 = arith.constant 0 : index
    %0 = vector.load %arg1[%c0, %c0_0] : memref<32x128xbf16, #tpu.memory_space<vmem>>, vector<32x128xbf16>
    %c0_1 = arith.constant 0 : index
    %c0_2 = arith.constant 0 : index
    %1 = vector.load %arg2[%c0_1, %c0_2] : memref<128x128xbf16, #tpu.memory_space<vmem>>, vector<128x128xbf16>
    %cst = arith.constant dense<0.000000e+00> : vector<32x128xf32>
    %2 = tpu.matmul %0, %1, %cst {dimension_numbers = #tpu.dot_dimension_numbers<[1], [0], [0], [1], [0, 0, 1, 1], [], []>} : vector<32x128xbf16>, vector<128x128xbf16>, vector<32x128xf32> -> vector<32x128xf32>
    %c0_3 = arith.constant 0 : index
    %c0_4 = arith.constant 0 : index
    %3 = vector.load %arg3[%c0_3, %c0_4] : memref<1x128xf32, #tpu.memory_space<vmem>>, vector<1x128xf32>
    %4 = vector.broadcast %3 : vector<1x128xf32> to vector<32x128xf32>
    %5 = arith.addf %2, %4 : vector<32x128xf32>
    %6 = arith.truncf %5 : vector<32x128xf32> to vector<32x128xbf16>
    %c0_5 = arith.constant 0 : index
    %c0_6 = arith.constant 0 : index
    %7 = vector.load %arg4[%c0_5, %c0_6] : memref<32x128xbf16, #tpu.memory_space<vmem>>, vector<32x128xbf16>
    tpu.vector_store %arg4[%c0_5, %c0_6], %6 {strides = array<i32>} : memref<32x128xbf16, #tpu.memory_space<vmem>>, vector<32x128xbf16>,
    %cst_7 = arith.constant dense<0.000000e+00> : vector<128xf32>
    %8 = vector.multi_reduction <add>, %5, %cst_7 [0] : vector<32x128xf32> to vector<128xf32>
    %9 = vector.shape_cast %8 : vector<128xf32> to vector<1x128xf32>
    %10 = arith.mulf %5, %5 : vector<32x128xf32>
    %cst_8 = arith.constant dense<0.000000e+00> : vector<128xf32>
    %11 = vector.multi_reduction <add>, %10, %cst_8 [0] : vector<32x128xf32> to vector<128xf32>
    %12 = vector.shape_cast %11 : vector<128xf32> to vector<1x128xf32>
    %13 = tpu.iota {dimensions = array<i32: 0>} : vector<8x128xi32>
    %c0_i32 = arith.constant 0 : i32
    %14 = vector.broadcast %c0_i32 : i32 to vector<8x128xi32>
    %15 = arith.cmpi eq, %13, %14 : vector<8x128xi32>
    %cst_9 = arith.constant 0.000000e+00 : f32
    %16 = vector.shape_cast %9 : vector<1x128xf32> to vector<1x128xf32>
    %17 = vector.broadcast %16 : vector<1x128xf32> to vector<8x128xf32>
    %18 = vector.broadcast %cst_9 : f32 to vector<8x128xf32>
    %19 = arith.select %15, %17, %18 : vector<8x128xi1>, vector<8x128xf32>
    %c1_i32 = arith.constant 1 : i32
    %20 = vector.broadcast %c1_i32 : i32 to vector<8x128xi32>
    %21 = arith.cmpi eq, %13, %20 : vector<8x128xi32>
    %cst_10 = arith.constant 0.000000e+00 : f32
    %22 = vector.shape_cast %12 : vector<1x128xf32> to vector<1x128xf32>
    %23 = vector.broadcast %22 : vector<1x128xf32> to vector<8x128xf32>
    %24 = vector.broadcast %cst_10 : f32 to vector<8x128xf32>
    %25 = arith.select %21, %23, %24 : vector<8x128xi1>, vector<8x128xf32>
    %26 = arith.addf %19, %25 : vector<8x128xf32>
    %c0_11 = arith.constant 0 : index
    %c0_12 = arith.constant 0 : index
    %27 = vector.load %arg5[%c0_11, %c0_12] : memref<8x128xf32, #tpu.memory_space<vmem>>, vector<8x128xf32>
    tpu.vector_store %arg5[%c0_11, %c0_12], %26 {strides = array<i32>} : memref<8x128xf32, #tpu.memory_space<vmem>>, vector<8x128xf32>,
    return
  }
  func.func @transform_0(%arg0: i32) -> (i32, i32) {
    %c0_i32 = arith.constant 0 : i32
    %c0_i32_0 = arith.constant 0 : i32
    return %arg0, %c0_i32 : i32, i32
  }
  func.func @transform_1(%arg0: i32) -> (i32, i32) {
    %c0_i32 = arith.constant 0 : i32
    %c0_i32_0 = arith.constant 0 : i32
    %c0_i32_1 = arith.constant 0 : i32
    return %c0_i32, %c0_i32_0 : i32, i32
  }
  func.func @transform_2(%arg0: i32) -> (i32, i32) {
    %c0_i32 = arith.constant 0 : i32
    %c0_i32_0 = arith.constant 0 : i32
    %c0_i32_1 = arith.constant 0 : i32
    return %c0_i32, %c0_i32_0 : i32, i32
  }
  func.func @transform_3(%arg0: i32) -> (i32, i32) {
    %c0_i32 = arith.constant 0 : i32
    %c0_i32_0 = arith.constant 0 : i32
    return %arg0, %c0_i32 : i32, i32
  }
  func.func @transform_4(%arg0: i32) -> (i32, i32) {
    %c0_i32 = arith.constant 0 : i32
    %c0_i32_0 = arith.constant 0 : i32
    return %arg0, %c0_i32 : i32, i32
  }
}

module attributes {stable_mosaic.version = 11 : i64} {
  func.func @_gemm_stats_kernel(%arg0: i32, %arg1: memref<128x128xbf16, #tpu.memory_space<vmem>>, %arg2: memref<128x64xbf16, #tpu.memory_space<vmem>>, %arg3: memref<1x64xf32, #tpu.memory_space<vmem>>, %arg4: memref<128x64xbf16, #tpu.memory_space<vmem>>, %arg5: memref<8x64xf32, #tpu.memory_space<vmem>>) attributes {dimension_semantics = [#tpu.dimension_semantics<parallel>], iteration_bounds = array<i64: 1>, scalar_prefetch = 0 : i64, scratch_operands = 0 : i64, tpu.core_type = #tpu.core_type<tc>, window_params = [{transform_indices = @transform_0, window_bounds = array<i64: 128, 128>}, {pipeline_mode = #tpu.pipeline_mode<synchronous>, transform_indices = @transform_1, window_bounds = array<i64: 128, 64>}, {pipeline_mode = #tpu.pipeline_mode<synchronous>, transform_indices = @transform_2, window_bounds = array<i64: 1, 64>}, {transform_indices = @transform_3, window_bounds = array<i64: 128, 64>}, {transform_indices = @transform_4, window_bounds = array<i64: 8, 64>}]} {
    %c0 = arith.constant 0 : index
    %c0_0 = arith.constant 0 : index
    %0 = vector.load %arg1[%c0, %c0_0] : memref<128x128xbf16, #tpu.memory_space<vmem>>, vector<128x128xbf16>
    %c0_1 = arith.constant 0 : index
    %c0_2 = arith.constant 0 : index
    %1 = vector.load %arg2[%c0_1, %c0_2] : memref<128x64xbf16, #tpu.memory_space<vmem>>, vector<128x64xbf16>
    %cst = arith.constant dense<0.000000e+00> : vector<128x64xf32>
    %2 = tpu.matmul %0, %1, %cst {dimension_numbers = #tpu.dot_dimension_numbers<[1], [0], [0], [1], [0, 0, 1, 1], [], []>} : vector<128x128xbf16>, vector<128x64xbf16>, vector<128x64xf32> -> vector<128x64xf32>
    %c0_3 = arith.constant 0 : index
    %c0_4 = arith.constant 0 : index
    %3 = vector.load %arg3[%c0_3, %c0_4] : memref<1x64xf32, #tpu.memory_space<vmem>>, vector<1x64xf32>
    %4 = vector.broadcast %3 : vector<1x64xf32> to vector<128x64xf32>
    %5 = arith.addf %2, %4 : vector<128x64xf32>
    %6 = arith.truncf %5 : vector<128x64xf32> to vector<128x64xbf16>
    %c0_5 = arith.constant 0 : index
    %c0_6 = arith.constant 0 : index
    %7 = vector.load %arg4[%c0_5, %c0_6] : memref<128x64xbf16, #tpu.memory_space<vmem>>, vector<128x64xbf16>
    tpu.vector_store %arg4[%c0_5, %c0_6], %6 {strides = array<i32>} : memref<128x64xbf16, #tpu.memory_space<vmem>>, vector<128x64xbf16>,
    %cst_7 = arith.constant dense<0.000000e+00> : vector<64xf32>
    %8 = vector.multi_reduction <add>, %5, %cst_7 [0] : vector<128x64xf32> to vector<64xf32>
    %9 = vector.shape_cast %8 : vector<64xf32> to vector<1x64xf32>
    %10 = arith.mulf %5, %5 : vector<128x64xf32>
    %cst_8 = arith.constant dense<0.000000e+00> : vector<64xf32>
    %11 = vector.multi_reduction <add>, %10, %cst_8 [0] : vector<128x64xf32> to vector<64xf32>
    %12 = vector.shape_cast %11 : vector<64xf32> to vector<1x64xf32>
    %13 = tpu.iota {dimensions = array<i32: 0>} : vector<8x64xi32>
    %c0_i32 = arith.constant 0 : i32
    %14 = vector.broadcast %c0_i32 : i32 to vector<8x64xi32>
    %15 = arith.cmpi eq, %13, %14 : vector<8x64xi32>
    %cst_9 = arith.constant 0.000000e+00 : f32
    %16 = vector.shape_cast %9 : vector<1x64xf32> to vector<1x64xf32>
    %17 = vector.broadcast %16 : vector<1x64xf32> to vector<8x64xf32>
    %18 = vector.broadcast %cst_9 : f32 to vector<8x64xf32>
    %19 = arith.select %15, %17, %18 : vector<8x64xi1>, vector<8x64xf32>
    %c1_i32 = arith.constant 1 : i32
    %20 = vector.broadcast %c1_i32 : i32 to vector<8x64xi32>
    %21 = arith.cmpi eq, %13, %20 : vector<8x64xi32>
    %cst_10 = arith.constant 0.000000e+00 : f32
    %22 = vector.shape_cast %12 : vector<1x64xf32> to vector<1x64xf32>
    %23 = vector.broadcast %22 : vector<1x64xf32> to vector<8x64xf32>
    %24 = vector.broadcast %cst_10 : f32 to vector<8x64xf32>
    %25 = arith.select %21, %23, %24 : vector<8x64xi1>, vector<8x64xf32>
    %26 = arith.addf %19, %25 : vector<8x64xf32>
    %c0_11 = arith.constant 0 : index
    %c0_12 = arith.constant 0 : index
    %27 = vector.load %arg5[%c0_11, %c0_12] : memref<8x64xf32, #tpu.memory_space<vmem>>, vector<8x64xf32>
    tpu.vector_store %arg5[%c0_11, %c0_12], %26 {strides = array<i32>} : memref<8x64xf32, #tpu.memory_space<vmem>>, vector<8x64xf32>,
    return
  }
  func.func @transform_0(%arg0: i32) -> (i32, i32) {
    %c0_i32 = arith.constant 0 : i32
    %c0_i32_0 = arith.constant 0 : i32
    return %arg0, %c0_i32 : i32, i32
  }
  func.func @transform_1(%arg0: i32) -> (i32, i32) {
    %c0_i32 = arith.constant 0 : i32
    %c0_i32_0 = arith.constant 0 : i32
    %c0_i32_1 = arith.constant 0 : i32
    return %c0_i32, %c0_i32_0 : i32, i32
  }
  func.func @transform_2(%arg0: i32) -> (i32, i32) {
    %c0_i32 = arith.constant 0 : i32
    %c0_i32_0 = arith.constant 0 : i32
    %c0_i32_1 = arith.constant 0 : i32
    return %c0_i32, %c0_i32_0 : i32, i32
  }
  func.func @transform_3(%arg0: i32) -> (i32, i32) {
    %c0_i32 = arith.constant 0 : i32
    %c0_i32_0 = arith.constant 0 : i32
    return %arg0, %c0_i32 : i32, i32
  }
  func.func @transform_4(%arg0: i32) -> (i32, i32) {
    %c0_i32 = arith.constant 0 : i32
    %c0_i32_0 = arith.constant 0 : i32
    return %arg0, %c0_i32 : i32, i32
  }
}

module attributes {stable_mosaic.version = 11 : i64} {
  func.func @_gemm_stats_kernel(%arg0: i32, %arg1: memref<512x64xbf16, #tpu.memory_space<vmem>>, %arg2: memref<64x32xbf16, #tpu.memory_space<vmem>>, %arg3: memref<1x32xf32, #tpu.memory_space<vmem>>, %arg4: memref<512x32xbf16, #tpu.memory_space<vmem>>, %arg5: memref<8x32xf32, #tpu.memory_space<vmem>>) attributes {dimension_semantics = [#tpu.dimension_semantics<parallel>], iteration_bounds = array<i64: 1>, scalar_prefetch = 0 : i64, scratch_operands = 0 : i64, tpu.core_type = #tpu.core_type<tc>, window_params = [{transform_indices = @transform_0, window_bounds = array<i64: 512, 64>}, {pipeline_mode = #tpu.pipeline_mode<synchronous>, transform_indices = @transform_1, window_bounds = array<i64: 64, 32>}, {pipeline_mode = #tpu.pipeline_mode<synchronous>, transform_indices = @transform_2, window_bounds = array<i64: 1, 32>}, {transform_indices = @transform_3, window_bounds = array<i64: 512, 32>}, {transform_indices = @transform_4, window_bounds = array<i64: 8, 32>}]} {
    %c0 = arith.constant 0 : index
    %c0_0 = arith.constant 0 : index
    %0 = vector.load %arg1[%c0, %c0_0] : memref<512x64xbf16, #tpu.memory_space<vmem>>, vector<512x64xbf16>
    %c0_1 = arith.constant 0 : index
    %c0_2 = arith.constant 0 : index
    %1 = vector.load %arg2[%c0_1, %c0_2] : memref<64x32xbf16, #tpu.memory_space<vmem>>, vector<64x32xbf16>
    %cst = arith.constant dense<0.000000e+00> : vector<512x32xf32>
    %2 = tpu.matmul %0, %1, %cst {dimension_numbers = #tpu.dot_dimension_numbers<[1], [0], [0], [1], [0, 0, 1, 1], [], []>} : vector<512x64xbf16>, vector<64x32xbf16>, vector<512x32xf32> -> vector<512x32xf32>
    %c0_3 = arith.constant 0 : index
    %c0_4 = arith.constant 0 : index
    %3 = vector.load %arg3[%c0_3, %c0_4] : memref<1x32xf32, #tpu.memory_space<vmem>>, vector<1x32xf32>
    %4 = vector.broadcast %3 : vector<1x32xf32> to vector<512x32xf32>
    %5 = arith.addf %2, %4 : vector<512x32xf32>
    %6 = arith.truncf %5 : vector<512x32xf32> to vector<512x32xbf16>
    %c0_5 = arith.constant 0 : index
    %c0_6 = arith.constant 0 : index
    %7 = vector.load %arg4[%c0_5, %c0_6] : memref<512x32xbf16, #tpu.memory_space<vmem>>, vector<512x32xbf16>
    tpu.vector_store %arg4[%c0_5, %c0_6], %6 {strides = array<i32>} : memref<512x32xbf16, #tpu.memory_space<vmem>>, vector<512x32xbf16>,
    %cst_7 = arith.constant dense<0.000000e+00> : vector<32xf32>
    %8 = vector.multi_reduction <add>, %5, %cst_7 [0] : vector<512x32xf32> to vector<32xf32>
    %9 = vector.shape_cast %8 : vector<32xf32> to vector<1x32xf32>
    %10 = arith.mulf %5, %5 : vector<512x32xf32>
    %cst_8 = arith.constant dense<0.000000e+00> : vector<32xf32>
    %11 = vector.multi_reduction <add>, %10, %cst_8 [0] : vector<512x32xf32> to vector<32xf32>
    %12 = vector.shape_cast %11 : vector<32xf32> to vector<1x32xf32>
    %13 = tpu.iota {dimensions = array<i32: 0>} : vector<8x32xi32>
    %c0_i32 = arith.constant 0 : i32
    %14 = vector.broadcast %c0_i32 : i32 to vector<8x32xi32>
    %15 = arith.cmpi eq, %13, %14 : vector<8x32xi32>
    %cst_9 = arith.constant 0.000000e+00 : f32
    %16 = vector.shape_cast %9 : vector<1x32xf32> to vector<1x32xf32>
    %17 = vector.broadcast %16 : vector<1x32xf32> to vector<8x32xf32>
    %18 = vector.broadcast %cst_9 : f32 to vector<8x32xf32>
    %19 = arith.select %15, %17, %18 : vector<8x32xi1>, vector<8x32xf32>
    %c1_i32 = arith.constant 1 : i32
    %20 = vector.broadcast %c1_i32 : i32 to vector<8x32xi32>
    %21 = arith.cmpi eq, %13, %20 : vector<8x32xi32>
    %cst_10 = arith.constant 0.000000e+00 : f32
    %22 = vector.shape_cast %12 : vector<1x32xf32> to vector<1x32xf32>
    %23 = vector.broadcast %22 : vector<1x32xf32> to vector<8x32xf32>
    %24 = vector.broadcast %cst_10 : f32 to vector<8x32xf32>
    %25 = arith.select %21, %23, %24 : vector<8x32xi1>, vector<8x32xf32>
    %26 = arith.addf %19, %25 : vector<8x32xf32>
    %c0_11 = arith.constant 0 : index
    %c0_12 = arith.constant 0 : index
    %27 = vector.load %arg5[%c0_11, %c0_12] : memref<8x32xf32, #tpu.memory_space<vmem>>, vector<8x32xf32>
    tpu.vector_store %arg5[%c0_11, %c0_12], %26 {strides = array<i32>} : memref<8x32xf32, #tpu.memory_space<vmem>>, vector<8x32xf32>,
    return
  }
  func.func @transform_0(%arg0: i32) -> (i32, i32) {
    %c0_i32 = arith.constant 0 : i32
    %c0_i32_0 = arith.constant 0 : i32
    return %arg0, %c0_i32 : i32, i32
  }
  func.func @transform_1(%arg0: i32) -> (i32, i32) {
    %c0_i32 = arith.constant 0 : i32
    %c0_i32_0 = arith.constant 0 : i32
    %c0_i32_1 = arith.constant 0 : i32
    return %c0_i32, %c0_i32_0 : i32, i32
  }
  func.func @transform_2(%arg0: i32) -> (i32, i32) {
    %c0_i32 = arith.constant 0 : i32
    %c0_i32_0 = arith.constant 0 : i32
    %c0_i32_1 = arith.constant 0 : i32
    return %c0_i32, %c0_i32_0 : i32, i32
  }
  func.func @transform_3(%arg0: i32) -> (i32, i32) {
    %c0_i32 = arith.constant 0 : i32
    %c0_i32_0 = arith.constant 0 : i32
    return %arg0, %c0_i32 : i32, i32
  }
  func.func @transform_4(%arg0: i32) -> (i32, i32) {
    %c0_i32 = arith.constant 0 : i32
    %c0_i32_0 = arith.constant 0 : i32
    return %arg0, %c0_i32 : i32, i32
  }
}

module attributes {stable_mosaic.version = 11 : i64} {
  func.func @_gemm_stats_kernel(%arg0: i32, %arg1: memref<1024x32xbf16, #tpu.memory_space<vmem>>, %arg2: memref<32x32xbf16, #tpu.memory_space<vmem>>, %arg3: memref<1x32xf32, #tpu.memory_space<vmem>>, %arg4: memref<1024x32xbf16, #tpu.memory_space<vmem>>, %arg5: memref<8x32xf32, #tpu.memory_space<vmem>>) attributes {dimension_semantics = [#tpu.dimension_semantics<parallel>], iteration_bounds = array<i64: 2>, scalar_prefetch = 0 : i64, scratch_operands = 0 : i64, tpu.core_type = #tpu.core_type<tc>, window_params = [{transform_indices = @transform_0, window_bounds = array<i64: 1024, 32>}, {pipeline_mode = #tpu.pipeline_mode<synchronous>, transform_indices = @transform_1, window_bounds = array<i64: 32, 32>}, {pipeline_mode = #tpu.pipeline_mode<synchronous>, transform_indices = @transform_2, window_bounds = array<i64: 1, 32>}, {transform_indices = @transform_3, window_bounds = array<i64: 1024, 32>}, {transform_indices = @transform_4, window_bounds = array<i64: 8, 32>}]} {
    %c0 = arith.constant 0 : index
    %c0_0 = arith.constant 0 : index
    %0 = vector.load %arg1[%c0, %c0_0] : memref<1024x32xbf16, #tpu.memory_space<vmem>>, vector<1024x32xbf16>
    %c0_1 = arith.constant 0 : index
    %c0_2 = arith.constant 0 : index
    %1 = vector.load %arg2[%c0_1, %c0_2] : memref<32x32xbf16, #tpu.memory_space<vmem>>, vector<32x32xbf16>
    %cst = arith.constant dense<0.000000e+00> : vector<1024x32xf32>
    %2 = tpu.matmul %0, %1, %cst {dimension_numbers = #tpu.dot_dimension_numbers<[1], [0], [0], [1], [0, 0, 1, 1], [], []>} : vector<1024x32xbf16>, vector<32x32xbf16>, vector<1024x32xf32> -> vector<1024x32xf32>
    %c0_3 = arith.constant 0 : index
    %c0_4 = arith.constant 0 : index
    %3 = vector.load %arg3[%c0_3, %c0_4] : memref<1x32xf32, #tpu.memory_space<vmem>>, vector<1x32xf32>
    %4 = vector.broadcast %3 : vector<1x32xf32> to vector<1024x32xf32>
    %5 = arith.addf %2, %4 : vector<1024x32xf32>
    %6 = arith.truncf %5 : vector<1024x32xf32> to vector<1024x32xbf16>
    %c0_5 = arith.constant 0 : index
    %c0_6 = arith.constant 0 : index
    %7 = vector.load %arg4[%c0_5, %c0_6] : memref<1024x32xbf16, #tpu.memory_space<vmem>>, vector<1024x32xbf16>
    tpu.vector_store %arg4[%c0_5, %c0_6], %6 {strides = array<i32>} : memref<1024x32xbf16, #tpu.memory_space<vmem>>, vector<1024x32xbf16>,
    %cst_7 = arith.constant dense<0.000000e+00> : vector<32xf32>
    %8 = vector.multi_reduction <add>, %5, %cst_7 [0] : vector<1024x32xf32> to vector<32xf32>
    %9 = vector.shape_cast %8 : vector<32xf32> to vector<1x32xf32>
    %10 = arith.mulf %5, %5 : vector<1024x32xf32>
    %cst_8 = arith.constant dense<0.000000e+00> : vector<32xf32>
    %11 = vector.multi_reduction <add>, %10, %cst_8 [0] : vector<1024x32xf32> to vector<32xf32>
    %12 = vector.shape_cast %11 : vector<32xf32> to vector<1x32xf32>
    %13 = tpu.iota {dimensions = array<i32: 0>} : vector<8x32xi32>
    %c0_i32 = arith.constant 0 : i32
    %14 = vector.broadcast %c0_i32 : i32 to vector<8x32xi32>
    %15 = arith.cmpi eq, %13, %14 : vector<8x32xi32>
    %cst_9 = arith.constant 0.000000e+00 : f32
    %16 = vector.shape_cast %9 : vector<1x32xf32> to vector<1x32xf32>
    %17 = vector.broadcast %16 : vector<1x32xf32> to vector<8x32xf32>
    %18 = vector.broadcast %cst_9 : f32 to vector<8x32xf32>
    %19 = arith.select %15, %17, %18 : vector<8x32xi1>, vector<8x32xf32>
    %c1_i32 = arith.constant 1 : i32
    %20 = vector.broadcast %c1_i32 : i32 to vector<8x32xi32>
    %21 = arith.cmpi eq, %13, %20 : vector<8x32xi32>
    %cst_10 = arith.constant 0.000000e+00 : f32
    %22 = vector.shape_cast %12 : vector<1x32xf32> to vector<1x32xf32>
    %23 = vector.broadcast %22 : vector<1x32xf32> to vector<8x32xf32>
    %24 = vector.broadcast %cst_10 : f32 to vector<8x32xf32>
    %25 = arith.select %21, %23, %24 : vector<8x32xi1>, vector<8x32xf32>
    %26 = arith.addf %19, %25 : vector<8x32xf32>
    %c0_11 = arith.constant 0 : index
    %c0_12 = arith.constant 0 : index
    %27 = vector.load %arg5[%c0_11, %c0_12] : memref<8x32xf32, #tpu.memory_space<vmem>>, vector<8x32xf32>
    tpu.vector_store %arg5[%c0_11, %c0_12], %26 {strides = array<i32>} : memref<8x32xf32, #tpu.memory_space<vmem>>, vector<8x32xf32>,
    return
  }
  func.func @transform_0(%arg0: i32) -> (i32, i32) {
    %c0_i32 = arith.constant 0 : i32
    %c0_i32_0 = arith.constant 0 : i32
    return %arg0, %c0_i32 : i32, i32
  }
  func.func @transform_1(%arg0: i32) -> (i32, i32) {
    %c0_i32 = arith.constant 0 : i32
    %c0_i32_0 = arith.constant 0 : i32
    %c0_i32_1 = arith.constant 0 : i32
    return %c0_i32, %c0_i32_0 : i32, i32
  }
  func.func @transform_2(%arg0: i32) -> (i32, i32) {
    %c0_i32 = arith.constant 0 : i32
    %c0_i32_0 = arith.constant 0 : i32
    %c0_i32_1 = arith.constant 0 : i32
    return %c0_i32, %c0_i32_0 : i32, i32
  }
  func.func @transform_3(%arg0: i32) -> (i32, i32) {
    %c0_i32 = arith.constant 0 : i32
    %c0_i32_0 = arith.constant 0 : i32
    return %arg0, %c0_i32 : i32, i32
  }
  func.func @transform_4(%arg0: i32) -> (i32, i32) {
    %c0_i32 = arith.constant 0 : i32
    %c0_i32_0 = arith.constant 0 : i32
    return %arg0, %c0_i32 : i32, i32
  }
}

module attributes {stable_mosaic.version = 11 : i64} {
  func.func @_rowvec_sigmoid_kernel(%arg0: i32, %arg1: memref<8x72xbf16, #tpu.memory_space<vmem>>, %arg2: memref<72x1024xbf16, #tpu.memory_space<vmem>>, %arg3: memref<1x1xf32, #tpu.memory_space<vmem>>, %arg4: memref<8x1024xf32, #tpu.memory_space<vmem>>) attributes {dimension_semantics = [#tpu.dimension_semantics<parallel>], iteration_bounds = array<i64: 8>, scalar_prefetch = 0 : i64, scratch_operands = 0 : i64, tpu.core_type = #tpu.core_type<tc>, window_params = [{pipeline_mode = #tpu.pipeline_mode<synchronous>, transform_indices = @transform_0, window_bounds = array<i64: 8, 72>}, {transform_indices = @transform_1, window_bounds = array<i64: 72, 1024>}, {pipeline_mode = #tpu.pipeline_mode<synchronous>, transform_indices = @transform_2, window_bounds = array<i64: 1, 1>}, {transform_indices = @transform_3, window_bounds = array<i64: 8, 1024>}]} {
    %c0 = arith.constant 0 : index
    %c0_0 = arith.constant 0 : index
    %0 = vector.load %arg1[%c0, %c0_0] : memref<8x72xbf16, #tpu.memory_space<vmem>>, vector<8x72xbf16>
    %c0_1 = arith.constant 0 : index
    %c0_2 = arith.constant 0 : index
    %1 = vector.load %arg2[%c0_1, %c0_2] : memref<72x1024xbf16, #tpu.memory_space<vmem>>, vector<72x1024xbf16>
    %cst = arith.constant dense<0.000000e+00> : vector<8x1024xf32>
    %2 = tpu.matmul %0, %1, %cst {dimension_numbers = #tpu.dot_dimension_numbers<[1], [0], [0], [1], [0, 0, 1, 1], [], []>} : vector<8x72xbf16>, vector<72x1024xbf16>, vector<8x1024xf32> -> vector<8x1024xf32>
    %c0_3 = arith.constant 0 : index
    %c0_4 = arith.constant 0 : index
    %3 = vector.load %arg3[%c0_3, %c0_4] : memref<1x1xf32, #tpu.memory_space<vmem>>, vector<1x1xf32>
    %4 = vector.broadcast %3 : vector<1x1xf32> to vector<8x1024xf32>
    %5 = arith.addf %2, %4 : vector<8x1024xf32>
    %cst_5 = arith.constant -3.000000e+01 : f32
    %cst_6 = arith.constant 3.000000e+01 : f32
    %6 = vector.broadcast %cst_5 : f32 to vector<8x1024xf32>
    %7 = arith.maximumf %6, %5 : vector<8x1024xf32>
    %8 = vector.broadcast %cst_6 : f32 to vector<8x1024xf32>
    %9 = arith.minimumf %8, %7 : vector<8x1024xf32>
    %cst_7 = arith.constant 0.000000e+00 : f32
    %10 = vector.broadcast %cst_7 : f32 to vector<8x1024xf32>
    %11 = arith.subf %10, %9 : vector<8x1024xf32>
    %12 = math.exp %11 : vector<8x1024xf32>
    %cst_8 = arith.constant 1.000000e+00 : f32
    %13 = vector.broadcast %cst_8 : f32 to vector<8x1024xf32>
    %14 = arith.addf %13, %12 : vector<8x1024xf32>
    %15 = tpu.reciprocal %14 {approx = true} : vector<8x1024xf32> -> vector<8x1024xf32>
    %c0_9 = arith.constant 0 : index
    %c0_10 = arith.constant 0 : index
    %16 = vector.load %arg4[%c0_9, %c0_10] : memref<8x1024xf32, #tpu.memory_space<vmem>>, vector<8x1024xf32>
    tpu.vector_store %arg4[%c0_9, %c0_10], %15 {strides = array<i32>} : memref<8x1024xf32, #tpu.memory_space<vmem>>, vector<8x1024xf32>,
    return
  }
  func.func @transform_0(%arg0: i32) -> (i32, i32) {
    %c0_i32 = arith.constant 0 : i32
    %c0_i32_0 = arith.constant 0 : i32
    %c0_i32_1 = arith.constant 0 : i32
    return %c0_i32, %c0_i32_0 : i32, i32
  }
  func.func @transform_1(%arg0: i32) -> (i32, i32) {
    %c0_i32 = arith.constant 0 : i32
    %c0_i32_0 = arith.constant 0 : i32
    return %c0_i32, %arg0 : i32, i32
  }
  func.func @transform_2(%arg0: i32) -> (i32, i32) {
    %c0_i32 = arith.constant 0 : i32
    %c0_i32_0 = arith.constant 0 : i32
    %c0_i32_1 = arith.constant 0 : i32
    return %c0_i32, %c0_i32_0 : i32, i32
  }
  func.func @transform_3(%arg0: i32) -> (i32, i32) {
    %c0_i32 = arith.constant 0 : i32
    %c0_i32_0 = arith.constant 0 : i32
    return %c0_i32, %arg0 : i32, i32
  }
}

</mosaic_0001>

<llo_original>
// kernel: cvae_forward.10
$region0: #{cvae_forward.10}
  #allocation0 [shape = 'u32[]', space=smem, size = 0x4, offset = 0x4, fixed_abs, tag = 'smem constant byte address 0x4 - core index']
  #allocation1 [shape = 'u32[144,128]{1,0:T(1,128)}', space=vmem, size = 0x12000, scoped, tag = 'internal scratch']
  %s0 = inlined_call_operand.vmem [shape: bf16[2048,9], index: 0, kind: input, shape index: {}]
  %s1 = inlined_call_operand.vmem [shape: bf16[9,8], index: 1, kind: input, shape index: {}]
  %s2 = inlined_call_operand.vmem [shape: f32[1,8], index: 2, kind: input, shape index: {}]
  %s3 = inlined_call_operand.vmem [shape: bf16[2048,8], index: 3, kind: output, shape index: {0}]
  %s4 = inlined_call_operand.vmem [shape: f32[16,8], index: 4, kind: output, shape index: {1}]
  %5 = xla_tuple %s3, %s4
  %s6 = sld [smem:[#allocation0]]
  $region53: #{cvae_forward.10} parent=0
    _
  %s8 = ssub.s32 1, %s6
  %s9 = scalar_select 0, %s8, %s6
  loop: start=0, step=1, limit=4
  $region2: #{cvae_forward.10} parent=0 // loop_pre_header
    _
  $region3: #{cvae_forward.10} parent=0 // loop_header
    %s11 = sphi 0, %s15
    %p12 = scmp.ge.s32.totalorder %s11, 4
    %s21 = sphi 0, %s23
    %s24 = sphi 0, %s21
    %s25 = sphi 0, %s24
    %s41 = sphi 0, %s25
    %s45 = sphi 0, %s45
    %s47 = sphi 0, %s45
    %s48 = sphi 0, %s47
    %s62 = sphi 0, %s48
    %s66 = sphi 0, %s66
    %s68 = sphi 0, %s66
    %s69 = sphi 0, %s68
    %s83 = sphi 0, %s69
    %s89 = sphi 0, %s91
    %s92 = sphi 0, %s89
    %s93 = sphi 0, %s92
    %s109 = sphi 0, %s93
    %s115 = sphi 0, %s117
    %s118 = sphi 0, %s115
    %s119 = sphi 0, %s118
    %s135 = sphi 0, %s119
  $region4: #{cvae_forward.10} parent=0 // loop_header_branch
    %14 = sbr.rel (%p12) target = $region8
  $region5: #{cvae_forward.10} parent=0 // loop_body
    %s16 = ssub.s32 %s11, 1
    %s17 = ssub.s32 %s11, 2
    %s18 = sadd.s32 %s11, 1
    %s19 = ssub.s32 %s11, %s18
    %p20 = scmp.eq.s32.totalorder %s19, 0
    %s22 = sadd.s32 %s21, 1
    %s23 = scalar_select %p20, %s21, %s22
    %p26 = pneg %p20
    %p27 = scmp.eq.s32.totalorder %s11, 1
    %p28 = por %p26, %p27
    %p29 = scmp.ne.s32.totalorder %s21, %s24
    %p30 = scmp.eq.s32.totalorder %s11, 0
    %p31 = por %p29, %p30
    %p32 = scmp.ne.s32.totalorder %s21, %s24
    %p33 = scmp.eq.s32.totalorder %s16, 1
    %p34 = por %p32, %p33
    %p35 = scmp.ne.s32.totalorder %s24, %s25
    %p36 = scmp.eq.s32.totalorder %s16, 0
    %p37 = por %p35, %p36
    %p38 = scmp.ne.s32.totalorder %s24, %s25
    %p39 = scmp.eq.s32.totalorder %s17, 1
    %p40 = por %p38, %p39
    %p42 = scmp.ne.s32.totalorder %s25, %s41
    %p43 = scmp.eq.s32.totalorder %s17, 0
    %p44 = por %p42, %p43
    %s46 = sadd.s32 %s45, 1
    %p49 = scmp.eq.s32.totalorder %s11, 1
    %p50 = scmp.ne.s32.totalorder %s45, %s47
    %p51 = scmp.eq.s32.totalorder %s11, 0
    %p52 = por %p50, %p51
    %p53 = scmp.ne.s32.totalorder %s45, %s47
    %p54 = scmp.eq.s32.totalorder %s16, 1
    %p55 = por %p53, %p54
    %p56 = scmp.ne.s32.totalorder %s47, %s48
    %p57 = scmp.eq.s32.totalorder %s16, 0
    %p58 = por %p56, %p57
    %p59 = scmp.ne.s32.totalorder %s47, %s48
    %p60 = scmp.eq.s32.totalorder %s17, 1
    %p61 = por %p59, %p60
    %p63 = scmp.ne.s32.totalorder %s48, %s62
    %p64 = scmp.eq.s32.totalorder %s17, 0
    %p65 = por %p63, %p64
    %s67 = sadd.s32 %s66, 1
    %p70 = scmp.eq.s32.totalorder %s11, 1
    %p71 = scmp.ne.s32.totalorder %s66, %s68
    %p72 = scmp.eq.s32.totalorder %s11, 0
    %p73 = por %p71, %p72
    %p74 = scmp.ne.s32.totalorder %s66, %s68
    %p75 = scmp.eq.s32.totalorder %s16, 1
    %p76 = por %p74, %p75
    %p77 = scmp.ne.s32.totalorder %s68, %s69
    %p78 = scmp.eq.s32.totalorder %s16, 0
    %p79 = por %p77, %p78
    %p80 = scmp.ne.s32.totalorder %s68, %s69
    %p81 = scmp.eq.s32.totalorder %s17, 1
    %p82 = por %p80, %p81
    %p84 = scmp.ne.s32.totalorder %s69, %s83
    %p85 = scmp.eq.s32.totalorder %s17, 0
    %p86 = por %p84, %p85
    %s87 = ssub.s32 %s11, %s18
    %p88 = scmp.eq.s32.totalorder %s87, 0
    %s90 = sadd.s32 %s89, 1
    %s91 = scalar_select %p88, %s89, %s90
    %p94 = pneg %p88
    %p95 = scmp.eq.s32.totalorder %s11, 1
    %p96 = por %p94, %p95
    %p97 = scmp.ne.s32.totalorder %s89, %s92
    %p98 = scmp.eq.s32.totalorder %s11, 0
    %p99 = por %p97, %p98
    %p100 = scmp.ne.s32.totalorder %s89, %s92
    %p101 = scmp.eq.s32.totalorder %s16, 1
    %p102 = por %p100, %p101
    %p103 = scmp.ne.s32.totalorder %s92, %s93
    %p104 = scmp.eq.s32.totalorder %s16, 0
    %p105 = por %p103, %p104
    %p106 = scmp.ne.s32.totalorder %s92, %s93
    %p107 = scmp.eq.s32.totalorder %s17, 1
    %p108 = por %p106, %p107
    %p110 = scmp.ne.s32.totalorder %s93, %s109
    %p111 = scmp.eq.s32.totalorder %s17, 0
    %p112 = por %p110, %p111
    %s113 = ssub.s32 %s11, %s18
    %p114 = scmp.eq.s32.totalorder %s113, 0
    %s116 = sadd.s32 %s115, 1
    %s117 = scalar_select %p114, %s115, %s116
    %p120 = pneg %p114
    %p121 = scmp.eq.s32.totalorder %s11, 1
    %p122 = por %p120, %p121
    %p123 = scmp.ne.s32.totalorder %s115, %s118
    %p124 = scmp.eq.s32.totalorder %s11, 0
    %p125 = por %p123, %p124
    %p126 = scmp.ne.s32.totalorder %s115, %s118
    %p127 = scmp.eq.s32.totalorder %s16, 1
    %p128 = por %p126, %p127
    %p129 = scmp.ne.s32.totalorder %s118, %s119
    %p130 = scmp.eq.s32.totalorder %s16, 0
    %p131 = por %p129, %p130
    %p132 = scmp.ne.s32.totalorder %s118, %s119
    %p133 = scmp.eq.s32.totalorder %s17, 1
    %p134 = por %p132, %p133
    %p136 = scmp.ne.s32.totalorder %s119, %s135
    %p137 = scmp.eq.s32.totalorder %s17, 0
    %p138 = por %p136, %p137
    %p139 = scmp.le.s32.totalorder 1, %s11
    %p140 = scmp.lt.s32.totalorder %s11, 3
    %p141 = pnand %p139, %p140
    %p142 = pneg %p141
    // Predicated region
    $region9: #{cvae_forward.10} parent=5 // pred_check
      _
    $region10: #{cvae_forward.10} parent=5 // pred_check_branch
      %144 = sbr.rel (%p141) target = $region12
    $region11: #{cvae_forward.10} parent=5 // pred_region
      %s145 = ssub.s32 %s11, 1
      // Predicated region
      $region13: #{cvae_forward.10} parent=11 // pred_check
        %p146 = pneg %p58
      $region14: #{cvae_forward.10} parent=11 // pred_check_branch
        %148 = sbr.rel (%p146) target = $region16
      $region15: #{cvae_forward.10} parent=11 // pred_region
        _
      $region16: #{cvae_forward.10} parent=11 // pred_fallthru
        _
      // Predicated region
      $region17: #{cvae_forward.10} parent=11 // pred_check
        %p149 = pneg %p79
      $region18: #{cvae_forward.10} parent=11 // pred_check_branch
        %151 = sbr.rel (%p149) target = $region20
      $region19: #{cvae_forward.10} parent=11 // pred_region
        _
      $region20: #{cvae_forward.10} parent=11 // pred_fallthru
        _
    $region12: #{cvae_forward.10} parent=5 // pred_fallthru
      _
    %p152 = scmp.lt.s32.totalorder %s11, 2
    // Predicated region
    $region21: #{cvae_forward.10} parent=5 // pred_check
      %p153 = pneg %p152
    $region22: #{cvae_forward.10} parent=5 // pred_check_branch
      %155 = sbr.rel (%p153) target = $region24
    $region23: #{cvae_forward.10} parent=5 // pred_region
      // Predicated region
      $region25: #{cvae_forward.10} parent=23 // pred_check
        %p156 = pneg %p31
      $region26: #{cvae_forward.10} parent=23 // pred_check_branch
        %158 = sbr.rel (%p156) target = $region28
      $region27: #{cvae_forward.10} parent=23 // pred_region
        %s159 = smul.u32 128, %s11
        %p160 = scmp.lt.s32.totalorder %s159, 255
        %s161 = scalar_select %p160, %s159, 255
        %s162 = smul.addr %s161, 4
        %s163 = scalar_lea.vmem %s0, %s162
        %s164 = smul.u32 128, %s11
      $region28: #{cvae_forward.10} parent=23 // pred_fallthru
        _
    $region24: #{cvae_forward.10} parent=5 // pred_fallthru
      _
    %p165 = scmp.le.s32.totalorder 1, %s11
    %p166 = scmp.lt.s32.totalorder %s11, 3
    %p167 = pnand %p165, %p166
    %p168 = pneg %p167
    // Predicated region
    $region29: #{cvae_forward.10} parent=5 // pred_check
      _
    $region30: #{cvae_forward.10} parent=5 // pred_check_branch
      %170 = sbr.rel (%p167) target = $region32
    $region31: #{cvae_forward.10} parent=5 // pred_region
      %s171 = ssub.s32 %s11, 1
      %s172 = smul.u32 128, %s16
      %p173 = scmp.lt.s32.totalorder %s172, 255
      %s174 = scalar_select %p173, %s172, 255
      %s175 = smul.addr %s174, 4
      %s176 = scalar_lea.vmem %s0, %s175
      %p177 = pneg %p37
      %p178 = pneg %p34
      %p179 = pneg %p58
      %p180 = pneg %p55
      %p181 = pneg %p79
      %p182 = pneg %p76
      %p183 = pneg %p105
      %p184 = pneg %p102
      %s185 = smul.u32 128, %s16
      %p186 = scmp.lt.s32.totalorder %s185, 255
      %s187 = scalar_select %p186, %s185, 255
      %s188 = smul.addr %s187, 4
      %s189 = scalar_lea.vmem %s3, %s188
      %p190 = pneg %p131
      %p191 = pneg %p128
      %p192 = scmp.lt.s32.totalorder %s16, 1
      %s193 = scalar_select %p192, %s16, 1
      %s194 = smul.addr %s193, 8
      %s195 = scalar_lea.vmem %s4, %s194
      %s196 = smul.u32 128, %s16
      %p197 = scmp.lt.s32.totalorder %s196, 255
      %s198 = scalar_select %p197, %s196, 255
      %s199 = smul.addr %s198, 4
      %s200 = scalar_lea.vmem %s0, %s199
      %s201 = smul.u32 128, %s16
      %s202 = smul.u32 128, %s16
      %p203 = scmp.lt.s32.totalorder %s202, 255
      %s204 = scalar_select %p203, %s202, 255
      %s205 = smul.addr %s204, 4
      %s206 = scalar_lea.vmem %s3, %s205
      %s207 = smul.u32 128, %s16
      %p208 = scmp.lt.s32.totalorder %s16, 1
      %s209 = scalar_select %p208, %s16, 1
      %s210 = smul.addr %s209, 8
      %s211 = scalar_lea.vmem %s4, %s210
      %v213 = vld [vmem:[%s200] sm:$0xf]
      %v214 = vld [vmem:[%s200 + $0x4] sm:$0xf]
      %v215 = vld [vmem:[%s200 + $0x8] sm:$0xf]
      %v216 = vld [vmem:[%s200 + $0xc] sm:$0xf]
      %v217 = vld [vmem:[%s200 + $0x10] sm:$0xf]
      %v218 = vld [vmem:[%s200 + $0x14] sm:$0xf]
      %v219 = vld [vmem:[%s200 + $0x18] sm:$0xf]
      %v220 = vld [vmem:[%s200 + $0x1c] sm:$0xf]
      %v221 = vld [vmem:[%s200 + $0x20] sm:$0xf]
      %v222 = vld [vmem:[%s200 + $0x24] sm:$0xf]
      %v223 = vld [vmem:[%s200 + $0x28] sm:$0xf]
      %v224 = vld [vmem:[%s200 + $0x2c] sm:$0xf]
      %v225 = vld [vmem:[%s200 + $0x30] sm:$0xf]
      %v226 = vld [vmem:[%s200 + $0x34] sm:$0xf]
      %v227 = vld [vmem:[%s200 + $0x38] sm:$0xf]
      %v228 = vld [vmem:[%s200 + $0x3c] sm:$0xf]
      %v229 = vld [vmem:[%s200 + $0x40] sm:$0xf]
      %v230 = vld [vmem:[%s200 + $0x44] sm:$0xf]
      %v231 = vld [vmem:[%s200 + $0x48] sm:$0xf]
      %v232 = vld [vmem:[%s200 + $0x4c] sm:$0xf]
      %v233 = vld [vmem:[%s200 + $0x50] sm:$0xf]
      %v234 = vld [vmem:[%s200 + $0x54] sm:$0xf]
      %v235 = vld [vmem:[%s200 + $0x58] sm:$0xf]
      %v236 = vld [vmem:[%s200 + $0x5c] sm:$0xf]
      %v237 = vld [vmem:[%s200 + $0x60] sm:$0xf]
      %v238 = vld [vmem:[%s200 + $0x64] sm:$0xf]
      %v239 = vld [vmem:[%s200 + $0x68] sm:$0xf]
      %v240 = vld [vmem:[%s200 + $0x6c] sm:$0xf]
      %v241 = vld [vmem:[%s200 + $0x70] sm:$0xf]
      %v242 = vld [vmem:[%s200 + $0x74] sm:$0xf]
      %v243 = vld [vmem:[%s200 + $0x78] sm:$0xf]
      %v244 = vld [vmem:[%s200 + $0x7c] sm:$0xf]
      %v245 = vld [vmem:[%s200 + $0x80] sm:$0xf]
      %v246 = vld [vmem:[%s200 + $0x84] sm:$0xf]
      %v247 = vld [vmem:[%s200 + $0x88] sm:$0xf]
      %v248 = vld [vmem:[%s200 + $0x8c] sm:$0xf]
      %v249 = vld [vmem:[%s200 + $0x90] sm:$0xf]
      %v250 = vld [vmem:[%s200 + $0x94] sm:$0xf]
      %v251 = vld [vmem:[%s200 + $0x98] sm:$0xf]
      %v252 = vld [vmem:[%s200 + $0x9c] sm:$0xf]
      %v253 = vld [vmem:[%s200 + $0xa0] sm:$0xf]
      %v254 = vld [vmem:[%s200 + $0xa4] sm:$0xf]
      %v255 = vld [vmem:[%s200 + $0xa8] sm:$0xf]
      %v256 = vld [vmem:[%s200 + $0xac] sm:$0xf]
      %v257 = vld [vmem:[%s200 + $0xb0] sm:$0xf]
      %v258 = vld [vmem:[%s200 + $0xb4] sm:$0xf]
      %v259 = vld [vmem:[%s200 + $0xb8] sm:$0xf]
      %v260 = vld [vmem:[%s200 + $0xbc] sm:$0xf]
      %v261 = vld [vmem:[%s200 + $0xc0] sm:$0xf]
      %v262 = vld [vmem:[%s200 + $0xc4] sm:$0xf]
      %v263 = vld [vmem:[%s200 + $0xc8] sm:$0xf]
      %v264 = vld [vmem:[%s200 + $0xcc] sm:$0xf]
      %v265 = vld [vmem:[%s200 + $0xd0] sm:$0xf]
      %v266 = vld [vmem:[%s200 + $0xd4] sm:$0xf]
      %v267 = vld [vmem:[%s200 + $0xd8] sm:$0xf]
      %v268 = vld [vmem:[%s200 + $0xdc] sm:$0xf]
      %v269 = vld [vmem:[%s200 + $0xe0] sm:$0xf]
      %v270 = vld [vmem:[%s200 + $0xe4] sm:$0xf]
      %v271 = vld [vmem:[%s200 + $0xe8] sm:$0xf]
      %v272 = vld [vmem:[%s200 + $0xec] sm:$0xf]
      %v273 = vld [vmem:[%s200 + $0xf0] sm:$0xf]
      %v274 = vld [vmem:[%s200 + $0xf4] sm:$0xf]
      %v275 = vld [vmem:[%s200 + $0xf8] sm:$0xf]
      %v276 = vld [vmem:[%s200 + $0xfc] sm:$0xf]
      %v277 = vld [vmem:[%s200 + $0x100] sm:$0xf]
      %v278 = vld [vmem:[%s200 + $0x104] sm:$0xf]
      %v279 = vld [vmem:[%s200 + $0x108] sm:$0xf]
      %v280 = vld [vmem:[%s200 + $0x10c] sm:$0xf]
      %v281 = vld [vmem:[%s200 + $0x110] sm:$0xf]
      %v282 = vld [vmem:[%s200 + $0x114] sm:$0xf]
      %v283 = vld [vmem:[%s200 + $0x118] sm:$0xf]
      %v284 = vld [vmem:[%s200 + $0x11c] sm:$0xf]
      %v285 = vld [vmem:[%s200 + $0x120] sm:$0xf]
      %v286 = vld [vmem:[%s200 + $0x124] sm:$0xf]
      %v287 = vld [vmem:[%s200 + $0x128] sm:$0xf]
      %v288 = vld [vmem:[%s200 + $0x12c] sm:$0xf]
      %v289 = vld [vmem:[%s200 + $0x130] sm:$0xf]
      %v290 = vld [vmem:[%s200 + $0x134] sm:$0xf]
      %v291 = vld [vmem:[%s200 + $0x138] sm:$0xf]
      %v292 = vld [vmem:[%s200 + $0x13c] sm:$0xf]
      %v293 = vld [vmem:[%s200 + $0x140] sm:$0xf]
      %v294 = vld [vmem:[%s200 + $0x144] sm:$0xf]
      %v295 = vld [vmem:[%s200 + $0x148] sm:$0xf]
      %v296 = vld [vmem:[%s200 + $0x14c] sm:$0xf]
      %v297 = vld [vmem:[%s200 + $0x150] sm:$0xf]
      %v298 = vld [vmem:[%s200 + $0x154] sm:$0xf]
      %v299 = vld [vmem:[%s200 + $0x158] sm:$0xf]
      %v300 = vld [vmem:[%s200 + $0x15c] sm:$0xf]
      %v301 = vld [vmem:[%s200 + $0x160] sm:$0xf]
      %v302 = vld [vmem:[%s200 + $0x164] sm:$0xf]
      %v303 = vld [vmem:[%s200 + $0x168] sm:$0xf]
      %v304 = vld [vmem:[%s200 + $0x16c] sm:$0xf]
      %v305 = vld [vmem:[%s200 + $0x170] sm:$0xf]
      %v306 = vld [vmem:[%s200 + $0x174] sm:$0xf]
      %v307 = vld [vmem:[%s200 + $0x178] sm:$0xf]
      %v308 = vld [vmem:[%s200 + $0x17c] sm:$0xf]
      %v309 = vld [vmem:[%s200 + $0x180] sm:$0xf]
      %v310 = vld [vmem:[%s200 + $0x184] sm:$0xf]
      %v311 = vld [vmem:[%s200 + $0x188] sm:$0xf]
      %v312 = vld [vmem:[%s200 + $0x18c] sm:$0xf]
      %v313 = vld [vmem:[%s200 + $0x190] sm:$0xf]
      %v314 = vld [vmem:[%s200 + $0x194] sm:$0xf]
      %v315 = vld [vmem:[%s200 + $0x198] sm:$0xf]
      %v316 = vld [vmem:[%s200 + $0x19c] sm:$0xf]
      %v317 = vld [vmem:[%s200 + $0x1a0] sm:$0xf]
      %v318 = vld [vmem:[%s200 + $0x1a4] sm:$0xf]
      %v319 = vld [vmem:[%s200 + $0x1a8] sm:$0xf]
      %v320 = vld [vmem:[%s200 + $0x1ac] sm:$0xf]
      %v321 = vld [vmem:[%s200 + $0x1b0] sm:$0xf]
      %v322 = vld [vmem:[%s200 + $0x1b4] sm:$0xf]
      %v323 = vld [vmem:[%s200 + $0x1b8] sm:$0xf]
      %v324 = vld [vmem:[%s200 + $0x1bc] sm:$0xf]
      %v325 = vld [vmem:[%s200 + $0x1c0] sm:$0xf]
      %v326 = vld [vmem:[%s200 + $0x1c4] sm:$0xf]
      %v327 = vld [vmem:[%s200 + $0x1c8] sm:$0xf]
      %v328 = vld [vmem:[%s200 + $0x1cc] sm:$0xf]
      %v329 = vld [vmem:[%s200 + $0x1d0] sm:$0xf]
      %v330 = vld [vmem:[%s200 + $0x1d4] sm:$0xf]
      %v331 = vld [vmem:[%s200 + $0x1d8] sm:$0xf]
      %v332 = vld [vmem:[%s200 + $0x1dc] sm:$0xf]
      %v333 = vld [vmem:[%s200 + $0x1e0] sm:$0xf]
      %v334 = vld [vmem:[%s200 + $0x1e4] sm:$0xf]
      %v335 = vld [vmem:[%s200 + $0x1e8] sm:$0xf]
      %v336 = vld [vmem:[%s200 + $0x1ec] sm:$0xf]
      %v337 = vld [vmem:[%s200 + $0x1f0] sm:$0xf]
      %v338 = vld [vmem:[%s200 + $0x1f4] sm:$0xf]
      %v339 = vld [vmem:[%s200 + $0x1f8] sm:$0xf]
      %v340 = vld [vmem:[%s200 + $0x1fc] sm:$0xf]
      %v341 = vld [vmem:[%s1] sm:$0xf]
      %v342 = vld [vmem:[%s1 + $0x4] sm:$0x1]
      %v343 = vld [vmem:[%s2] sm:$0x1]
      %v345 = vlaneseq
      %v346 = vshrl.u32 %v345, 7
      %v347 = vsub.s32 0, %v346
      %v348 = vrot.slane %v343, %v347
      %v478 = vunpack.c.l.b16 %v213
      %v479 = vunpack.c.l.b16 %v214
      %v480 = vunpack.c.l.b16 %v215
      %v481 = vunpack.c.l.b16 %v216
      %v482 = vunpack.c.l.b16 %v217
      %v483 = vunpack.c.l.b16 %v218
      %v484 = vunpack.c.l.b16 %v219
      %v485 = vunpack.c.l.b16 %v220
      %v486 = vunpack.c.l.b16 %v221
      %v487 = vunpack.c.l.b16 %v222
      %v488 = vunpack.c.l.b16 %v223
      %v489 = vunpack.c.l.b16 %v224
      %v490 = vunpack.c.l.b16 %v225
      %v491 = vunpack.c.l.b16 %v226
      %v492 = vunpack.c.l.b16 %v227
      %v493 = vunpack.c.l.b16 %v228
      %v494 = vunpack.c.l.b16 %v229
      %v495 = vunpack.c.l.b16 %v230
      %v496 = vunpack.c.l.b16 %v231
      %v497 = vunpack.c.l.b16 %v232
      %v498 = vunpack.c.l.b16 %v233
      %v499 = vunpack.c.l.b16 %v234
      %v500 = vunpack.c.l.b16 %v235
      %v501 = vunpack.c.l.b16 %v236
      %v502 = vunpack.c.l.b16 %v237
      %v503 = vunpack.c.l.b16 %v238
      %v504 = vunpack.c.l.b16 %v239
      %v505 = vunpack.c.l.b16 %v240
      %v506 = vunpack.c.l.b16 %v241
      %v507 = vunpack.c.l.b16 %v242
      %v508 = vunpack.c.l.b16 %v243
      %v509 = vunpack.c.l.b16 %v244
      %v510 = vunpack.c.l.b16 %v245
      %v511 = vunpack.c.l.b16 %v246
      %v512 = vunpack.c.l.b16 %v247
      %v513 = vunpack.c.l.b16 %v248
      %v514 = vunpack.c.l.b16 %v249
      %v515 = vunpack.c.l.b16 %v250
      %v516 = vunpack.c.l.b16 %v251
      %v517 = vunpack.c.l.b16 %v252
      %v518 = vunpack.c.l.b16 %v253
      %v519 = vunpack.c.l.b16 %v254
      %v520 = vunpack.c.l.b16 %v255
      %v521 = vunpack.c.l.b16 %v256
      %v522 = vunpack.c.l.b16 %v257
      %v523 = vunpack.c.l.b16 %v258
      %v524 = vunpack.c.l.b16 %v259
      %v525 = vunpack.c.l.b16 %v260
      %v526 = vunpack.c.l.b16 %v261
      %v527 = vunpack.c.l.b16 %v262
      %v528 = vunpack.c.l.b16 %v263
      %v529 = vunpack.c.l.b16 %v264
      %v530 = vunpack.c.l.b16 %v265
      %v531 = vunpack.c.l.b16 %v266
      %v532 = vunpack.c.l.b16 %v267
      %v533 = vunpack.c.l.b16 %v268
      %v534 = vunpack.c.l.b16 %v269
      %v535 = vunpack.c.l.b16 %v270
      %v536 = vunpack.c.l.b16 %v271
      %v537 = vunpack.c.l.b16 %v272
      %v538 = vunpack.c.l.b16 %v273
      %v539 = vunpack.c.l.b16 %v274
      %v540 = vunpack.c.l.b16 %v275
      %v541 = vunpack.c.l.b16 %v276
      %v542 = vunpack.c.l.b16 %v277
      %v543 = vunpack.c.l.b16 %v278
      %v544 = vunpack.c.l.b16 %v279
      %v545 = vunpack.c.l.b16 %v280
      %v546 = vunpack.c.l.b16 %v281
      %v547 = vunpack.c.l.b16 %v282
      %v548 = vunpack.c.l.b16 %v283
      %v549 = vunpack.c.l.b16 %v284
      %v550 = vunpack.c.l.b16 %v285
      %v551 = vunpack.c.l.b16 %v286
      %v552 = vunpack.c.l.b16 %v287
      %v553 = vunpack.c.l.b16 %v288
      %v554 = vunpack.c.l.b16 %v289
      %v555 = vunpack.c.l.b16 %v290
      %v556 = vunpack.c.l.b16 %v291
      %v557 = vunpack.c.l.b16 %v292
      %v558 = vunpack.c.l.b16 %v293
      %v559 = vunpack.c.l.b16 %v294
      %v560 = vunpack.c.l.b16 %v295
      %v561 = vunpack.c.l.b16 %v296
      %v562 = vunpack.c.l.b16 %v297
      %v563 = vunpack.c.l.b16 %v298
      %v564 = vunpack.c.l.b16 %v299
      %v565 = vunpack.c.l.b16 %v300
      %v566 = vunpack.c.l.b16 %v301
      %v567 = vunpack.c.l.b16 %v302
      %v568 = vunpack.c.l.b16 %v303
      %v569 = vunpack.c.l.b16 %v304
      %v570 = vunpack.c.l.b16 %v305
      %v571 = vunpack.c.l.b16 %v306
      %v572 = vunpack.c.l.b16 %v307
      %v573 = vunpack.c.l.b16 %v308
      %v574 = vunpack.c.l.b16 %v309
      %v575 = vunpack.c.l.b16 %v310
      %v576 = vunpack.c.l.b16 %v311
      %v577 = vunpack.c.l.b16 %v312
      %v578 = vunpack.c.l.b16 %v313
      %v579 = vunpack.c.l.b16 %v314
      %v580 = vunpack.c.l.b16 %v315
      %v581 = vunpack.c.l.b16 %v316
      %v582 = vunpack.c.l.b16 %v317
      %v583 = vunpack.c.l.b16 %v318
      %v584 = vunpack.c.l.b16 %v319
      %v585 = vunpack.c.l.b16 %v320
      %v586 = vunpack.c.l.b16 %v321
      %v587 = vunpack.c.l.b16 %v322
      %v588 = vunpack.c.l.b16 %v323
      %v589 = vunpack.c.l.b16 %v324
      %v590 = vunpack.c.l.b16 %v325
      %v591 = vunpack.c.l.b16 %v326
      %v592 = vunpack.c.l.b16 %v327
      %v593 = vunpack.c.l.b16 %v328
      %v594 = vunpack.c.l.b16 %v329
      %v595 = vunpack.c.l.b16 %v330
      %v596 = vunpack.c.l.b16 %v331
      %v597 = vunpack.c.l.b16 %v332
      %v598 = vunpack.c.l.b16 %v333
      %v599 = vunpack.c.l.b16 %v334
      %v600 = vunpack.c.l.b16 %v335
      %v601 = vunpack.c.l.b16 %v336
      %v602 = vunpack.c.l.b16 %v337
      %v603 = vunpack.c.l.b16 %v338
      %v604 = vunpack.c.l.b16 %v339
      %v605 = vunpack.c.l.b16 %v340
      %v606 = vpack.c.b16 %v479, %v478
      %v607 = vpack.c.b16 %v481, %v480
      %v608 = vpack.c.b16 %v483, %v482
      %v609 = vpack.c.b16 %v485, %v484
      %v610 = vpack.c.b16 %v487, %v486
      %v611 = vpack.c.b16 %v489, %v488
      %v612 = vpack.c.b16 %v491, %v490
      %v613 = vpack.c.b16 %v493, %v492
      %v614 = vpack.c.b16 %v495, %v494
      %v615 = vpack.c.b16 %v497, %v496
      %v616 = vpack.c.b16 %v499, %v498
      %v617 = vpack.c.b16 %v501, %v500
      %v618 = vpack.c.b16 %v503, %v502
      %v619 = vpack.c.b16 %v505, %v504
      %v620 = vpack.c.b16 %v507, %v506
      %v621 = vpack.c.b16 %v509, %v508
      %v622 = vpack.c.b16 %v511, %v510
      %v623 = vpack.c.b16 %v513, %v512
      %v624 = vpack.c.b16 %v515, %v514
      %v625 = vpack.c.b16 %v517, %v516
      %v626 = vpack.c.b16 %v519, %v518
      %v627 = vpack.c.b16 %v521, %v520
      %v628 = vpack.c.b16 %v523, %v522
      %v629 = vpack.c.b16 %v525, %v524
      %v630 = vpack.c.b16 %v527, %v526
      %v631 = vpack.c.b16 %v529, %v528
      %v632 = vpack.c.b16 %v531, %v530
      %v633 = vpack.c.b16 %v533, %v532
      %v634 = vpack.c.b16 %v535, %v534
      %v635 = vpack.c.b16 %v537, %v536
      %v636 = vpack.c.b16 %v539, %v538
      %v637 = vpack.c.b16 %v541, %v540
      %v638 = vpack.c.b16 %v543, %v542
      %v639 = vpack.c.b16 %v545, %v544
      %v640 = vpack.c.b16 %v547, %v546
      %v641 = vpack.c.b16 %v549, %v548
      %v642 = vpack.c.b16 %v551, %v550
      %v643 = vpack.c.b16 %v553, %v552
      %v644 = vpack.c.b16 %v555, %v554
      %v645 = vpack.c.b16 %v557, %v556
      %v646 = vpack.c.b16 %v559, %v558
      %v647 = vpack.c.b16 %v561, %v560
      %v648 = vpack.c.b16 %v563, %v562
      %v649 = vpack.c.b16 %v565, %v564
      %v650 = vpack.c.b16 %v567, %v566
      %v651 = vpack.c.b16 %v569, %v568
      %v652 = vpack.c.b16 %v571, %v570
      %v653 = vpack.c.b16 %v573, %v572
      %v654 = vpack.c.b16 %v575, %v574
      %v655 = vpack.c.b16 %v577, %v576
      %v656 = vpack.c.b16 %v579, %v578
      %v657 = vpack.c.b16 %v581, %v580
      %v658 = vpack.c.b16 %v583, %v582
      %v659 = vpack.c.b16 %v585, %v584
      %v660 = vpack.c.b16 %v587, %v586
      %v661 = vpack.c.b16 %v589, %v588
      %v662 = vpack.c.b16 %v591, %v590
      %v663 = vpack.c.b16 %v593, %v592
      %v664 = vpack.c.b16 %v595, %v594
      %v665 = vpack.c.b16 %v597, %v596
      %v666 = vpack.c.b16 %v599, %v598
      %v667 = vpack.c.b16 %v601, %v600
      %v668 = vpack.c.b16 %v603, %v602
      %v669 = vpack.c.b16 %v605, %v604
      %v672 = vunpack.c.l.b16 %v341
      %v673 = vunpack.c.l.b16 %v342
      %v674 = vpack.c.b16 %v673, %v672
      %vm675 = vcmask 72704
      %v677 = vsel %vm675, %v606, 0
      %v680 = vsel %vm675, %v607, 0
      %v683 = vsel %vm675, %v608, 0
      %v686 = vsel %vm675, %v609, 0
      %v689 = vsel %vm675, %v610, 0
      %v692 = vsel %vm675, %v611, 0
      %v695 = vsel %vm675, %v612, 0
      %v698 = vsel %vm675, %v613, 0
      %v701 = vsel %vm675, %v614, 0
      %v704 = vsel %vm675, %v615, 0
      %v707 = vsel %vm675, %v616, 0
      %v710 = vsel %vm675, %v617, 0
      %v713 = vsel %vm675, %v618, 0
      %v716 = vsel %vm675, %v619, 0
      %v719 = vsel %vm675, %v620, 0
      %v722 = vsel %vm675, %v621, 0
      %v725 = vsel %vm675, %v622, 0
      %v728 = vsel %vm675, %v623, 0
      %v731 = vsel %vm675, %v624, 0
      %v734 = vsel %vm675, %v625, 0
      %v737 = vsel %vm675, %v626, 0
      %v740 = vsel %vm675, %v627, 0
      %v743 = vsel %vm675, %v628, 0
      %v746 = vsel %vm675, %v629, 0
      %v749 = vsel %vm675, %v630, 0
      %v752 = vsel %vm675, %v631, 0
      %v755 = vsel %vm675, %v632, 0
      %v758 = vsel %vm675, %v633, 0
      %v761 = vsel %vm675, %v634, 0
      %v764 = vsel %vm675, %v635, 0
      %v767 = vsel %vm675, %v636, 0
      %v770 = vsel %vm675, %v637, 0
      %v773 = vsel %vm675, %v638, 0
      %v776 = vsel %vm675, %v639, 0
      %v779 = vsel %vm675, %v640, 0
      %v782 = vsel %vm675, %v641, 0
      %v785 = vsel %vm675, %v642, 0
      %v788 = vsel %vm675, %v643, 0
      %v791 = vsel %vm675, %v644, 0
      %v794 = vsel %vm675, %v645, 0
      %v797 = vsel %vm675, %v646, 0
      %v800 = vsel %vm675, %v647, 0
      %v803 = vsel %vm675, %v648, 0
      %v806 = vsel %vm675, %v649, 0
      %v809 = vsel %vm675, %v650, 0
      %v812 = vsel %vm675, %v651, 0
      %v815 = vsel %vm675, %v652, 0
      %v818 = vsel %vm675, %v653, 0
      %v821 = vsel %vm675, %v654, 0
      %v824 = vsel %vm675, %v655, 0
      %v827 = vsel %vm675, %v656, 0
      %v830 = vsel %vm675, %v657, 0
      %v833 = vsel %vm675, %v658, 0
      %v836 = vsel %vm675, %v659, 0
      %v839 = vsel %vm675, %v660, 0
      %v842 = vsel %vm675, %v661, 0
      %v845 = vsel %vm675, %v662, 0
      %v848 = vsel %vm675, %v663, 0
      %v851 = vsel %vm675, %v664, 0
      %v854 = vsel %vm675, %v665, 0
      %v857 = vsel %vm675, %v666, 0
      %v860 = vsel %vm675, %v667, 0
      %v863 = vsel %vm675, %v668, 0
      %v866 = vsel %vm675, %v669, 0
      %vm868 = vcmask 1043456
      %vm869 = vcmask 1044480
      %v870 = vsel %vm868, 4294967295, 65535
      %v871 = vsel %vm869, %v870, 0
      %v873 = vand.u32 %v674, %v871
      %875 = vmatprep.subr.bf16.mxu0 0
      %876 = vmatpush1.bf16.msra.mxu0 0
      %877 = vmatprep.subr.bf16.mxu0 0
      %878 = vmatpush1.bf16.msra.mxu0 0
      %879 = vmatprep.subr.bf16.mxu0 0
      %880 = vmatpush1.bf16.msra.mxu0 0
      %881 = vmatprep.subr.bf16.mxu0 0
      %882 = vmatpush1.bf16.msra.mxu0 0
      %883 = vmatprep.subr.bf16.mxu0 0
      %884 = vmatpush1.bf16.msra.mxu0 0
      %885 = vmatprep.subr.bf16.mxu0 0
      %886 = vmatpush1.bf16.msra.mxu0 0
      %887 = vmatprep.subr.bf16.mxu0 0
      %888 = vmatpush1.bf16.msra.mxu0 0
      %889 = vmatprep.subr.bf16.mxu0 0
      %890 = vmatpush1.bf16.msra.mxu0 %v873
      %891 = vmatprep.subr.bf16.mxu0 0
      %892 = vmatpush2.bf16.msra.mxu0 0
      %893 = vmatprep.subr.bf16.mxu0 0
      %894 = vmatpush2.bf16.msra.mxu0 0
      %895 = vmatprep.subr.bf16.mxu0 0
      %896 = vmatpush2.bf16.msra.mxu0 0
      %897 = vmatprep.subr.bf16.mxu0 0
      %898 = vmatpush2.bf16.msra.mxu0 0
      %899 = vmatprep.subr.bf16.mxu0 0
      %900 = vmatpush2.bf16.msra.mxu0 0
      %901 = vmatprep.subr.bf16.mxu0 0
      %902 = vmatpush2.bf16.msra.mxu0 0
      %903 = vmatprep.subr.bf16.mxu0 0
      %904 = vmatpush2.bf16.msra.mxu0 0
      %905 = vmatprep.subr.bf16.mxu0 0
      %906 = vmatpush2.bf16.msra.mxu0 0
      %907 = vmatprep.mubr.bf16.mxu0 0
      %908 = vmatmul.mubr.bf16.gmra.mxu0 %v677
      %v909 = vpop.f32.mrf.mxu0
      %v910 = vadd.f32 %v348, %v909
      %v911 = vpop.f32.mrf.mxu0
      %v912 = vpop.f32.mrf.mxu0
      %v913 = vadd.f32 %v348, %v912
      %v914 = vpop.f32.mrf.mxu0
      %915 = vmatprep.mubr.bf16.mxu0 0
      %916 = vmatmul.mubr.bf16.gmra.mxu0 %v680
      %v917 = vpop.f32.mrf.mxu0
      %v918 = vadd.f32 %v348, %v917
      %v919 = vpop.f32.mrf.mxu0
      %v920 = vpop.f32.mrf.mxu0
      %v921 = vadd.f32 %v348, %v920
      %v922 = vpop.f32.mrf.mxu0
      %923 = vmatprep.mubr.bf16.mxu0 0
      %924 = vmatmul.mubr.bf16.gmra.mxu0 %v683
      %v925 = vpop.f32.mrf.mxu0
      %v926 = vadd.f32 %v348, %v925
      %v927 = vpop.f32.mrf.mxu0
      %v928 = vpop.f32.mrf.mxu0
      %v929 = vadd.f32 %v348, %v928
      %v930 = vpop.f32.mrf.mxu0
      %931 = vmatprep.mubr.bf16.mxu0 0
      %932 = vmatmul.mubr.bf16.gmra.mxu0 %v686
      %v933 = vpop.f32.mrf.mxu0
      %v934 = vadd.f32 %v348, %v933
      %v935 = vpop.f32.mrf.mxu0
      %v936 = vpop.f32.mrf.mxu0
      %v937 = vadd.f32 %v348, %v936
      %v938 = vpop.f32.mrf.mxu0
      %939 = vmatprep.mubr.bf16.mxu0 0
      %940 = vmatmul.mubr.bf16.gmra.mxu0 %v689
      %v941 = vpop.f32.mrf.mxu0
      %v942 = vadd.f32 %v348, %v941
      %v943 = vpop.f32.mrf.mxu0
      %v944 = vpop.f32.mrf.mxu0
      %v945 = vadd.f32 %v348, %v944
      %v946 = vpop.f32.mrf.mxu0
      %947 = vmatprep.mubr.bf16.mxu0 0
      %948 = vmatmul.mubr.bf16.gmra.mxu0 %v692
      %v949 = vpop.f32.mrf.mxu0
      %v950 = vadd.f32 %v348, %v949
      %v951 = vpop.f32.mrf.mxu0
      %v952 = vpop.f32.mrf.mxu0
      %v953 = vadd.f32 %v348, %v952
      %v954 = vpop.f32.mrf.mxu0
      %955 = vmatprep.mubr.bf16.mxu0 0
      %956 = vmatmul.mubr.bf16.gmra.mxu0 %v695
      %v957 = vpop.f32.mrf.mxu0
      %v958 = vadd.f32 %v348, %v957
      %v959 = vpop.f32.mrf.mxu0
      %v960 = vpop.f32.mrf.mxu0
      %v961 = vadd.f32 %v348, %v960
      %v962 = vpop.f32.mrf.mxu0
      %963 = vmatprep.mubr.bf16.mxu0 0
      %964 = vmatmul.mubr.bf16.gmra.mxu0 %v698
      %v965 = vpop.f32.mrf.mxu0
      %v966 = vadd.f32 %v348, %v965
      %v967 = vpop.f32.mrf.mxu0
      %v968 = vpop.f32.mrf.mxu0
      %v969 = vadd.f32 %v348, %v968
      %v970 = vpop.f32.mrf.mxu0
      %971 = vmatprep.mubr.bf16.mxu0 0
      %972 = vmatmul.mubr.bf16.gmra.mxu0 %v701
      %v973 = vpop.f32.mrf.mxu0
      %v974 = vadd.f32 %v348, %v973
      %v975 = vpop.f32.mrf.mxu0
      %v976 = vpop.f32.mrf.mxu0
      %v977 = vadd.f32 %v348, %v976
      %v978 = vpop.f32.mrf.mxu0
      %979 = vmatprep.mubr.bf16.mxu0 0
      %980 = vmatmul.mubr.bf16.gmra.mxu0 %v704
      %v981 = vpop.f32.mrf.mxu0
      %v982 = vadd.f32 %v348, %v981
      %v983 = vpop.f32.mrf.mxu0
      %v984 = vpop.f32.mrf.mxu0
      %v985 = vadd.f32 %v348, %v984
      %v986 = vpop.f32.mrf.mxu0
      %987 = vmatprep.mubr.bf16.mxu0 0
      %988 = vmatmul.mubr.bf16.gmra.mxu0 %v707
      %v989 = vpop.f32.mrf.mxu0
      %v990 = vadd.f32 %v348, %v989
      %v991 = vpop.f32.mrf.mxu0
      %v992 = vpop.f32.mrf.mxu0
      %v993 = vadd.f32 %v348, %v992
      %v994 = vpop.f32.mrf.mxu0
      %995 = vmatprep.mubr.bf16.mxu0 0
      %996 = vmatmul.mubr.bf16.gmra.mxu0 %v710
      %v997 = vpop.f32.mrf.mxu0
      %v998 = vadd.f32 %v348, %v997
      %v999 = vpop.f32.mrf.mxu0
      %v1000 = vpop.f32.mrf.mxu0
      %v1001 = vadd.f32 %v348, %v1000
      %v1002 = vpop.f32.mrf.mxu0
      %1003 = vmatprep.mubr.bf16.mxu0 0
      %1004 = vmatmul.mubr.bf16.gmra.mxu0 %v713
      %v1005 = vpop.f32.mrf.mxu0
      %v1006 = vadd.f32 %v348, %v1005
      %v1007 = vpop.f32.mrf.mxu0
      %v1008 = vpop.f32.mrf.mxu0
      %v1009 = vadd.f32 %v348, %v1008
      %v1010 = vpop.f32.mrf.mxu0
      %1011 = vmatprep.mubr.bf16.mxu0 0
      %1012 = vmatmul.mubr.bf16.gmra.mxu0 %v716
      %v1013 = vpop.f32.mrf.mxu0
      %v1014 = vadd.f32 %v348, %v1013
      %v1015 = vpop.f32.mrf.mxu0
      %v1016 = vpop.f32.mrf.mxu0
      %v1017 = vadd.f32 %v348, %v1016
      %v1018 = vpop.f32.mrf.mxu0
      %1019 = vmatprep.mubr.bf16.mxu0 0
      %1020 = vmatmul.mubr.bf16.gmra.mxu0 %v719
      %v1021 = vpop.f32.mrf.mxu0
      %v1022 = vadd.f32 %v348, %v1021
      %v1023 = vpop.f32.mrf.mxu0
      %v1024 = vpop.f32.mrf.mxu0
      %v1025 = vadd.f32 %v348, %v1024
      %v1026 = vpop.f32.mrf.mxu0
      %1027 = vmatprep.mubr.bf16.mxu0 0
      %1028 = vmatmul.mubr.bf16.gmra.mxu0 %v722
      %v1029 = vpop.f32.mrf.mxu0
      %v1030 = vadd.f32 %v348, %v1029
      %v1031 = vpop.f32.mrf.mxu0
      %v1032 = vpop.f32.mrf.mxu0
      %v1033 = vadd.f32 %v348, %v1032
      %v1034 = vpop.f32.mrf.mxu0
      %1035 = vmatprep.mubr.bf16.mxu0 0
      %1036 = vmatmul.mubr.bf16.gmra.mxu0 %v725
      %v1037 = vpop.f32.mrf.mxu0
      %v1038 = vadd.f32 %v348, %v1037
      %v1039 = vpop.f32.mrf.mxu0
      %v1040 = vpop.f32.mrf.mxu0
      %v1041 = vadd.f32 %v348, %v1040
      %v1042 = vpop.f32.mrf.mxu0
      %1043 = vmatprep.mubr.bf16.mxu0 0
      %1044 = vmatmul.mubr.bf16.gmra.mxu0 %v728
      %v1045 = vpop.f32.mrf.mxu0
      %v1046 = vadd.f32 %v348, %v1045
      %v1047 = vpop.f32.mrf.mxu0
      %v1048 = vpop.f32.mrf.mxu0
      %v1049 = vadd.f32 %v348, %v1048
      %v1050 = vpop.f32.mrf.mxu0
      %1051 = vmatprep.mubr.bf16.mxu0 0
      %1052 = vmatmul.mubr.bf16.gmra.mxu0 %v731
      %v1053 = vpop.f32.mrf.mxu0
      %v1054 = vadd.f32 %v348, %v1053
      %v1055 = vpop.f32.mrf.mxu0
      %v1056 = vpop.f32.mrf.mxu0
      %v1057 = vadd.f32 %v348, %v1056
      %v1058 = vpop.f32.mrf.mxu0
      %1059 = vmatprep.mubr.bf16.mxu0 0
      %1060 = vmatmul.mubr.bf16.gmra.mxu0 %v734
      %v1061 = vpop.f32.mrf.mxu0
      %v1062 = vadd.f32 %v348, %v1061
      %v1063 = vpop.f32.mrf.mxu0
      %v1064 = vpop.f32.mrf.mxu0
      %v1065 = vadd.f32 %v348, %v1064
      %v1066 = vpop.f32.mrf.mxu0
      %1067 = vmatprep.mubr.bf16.mxu0 0
      %1068 = vmatmul.mubr.bf16.gmra.mxu0 %v737
      %v1069 = vpop.f32.mrf.mxu0
      %v1070 = vadd.f32 %v348, %v1069
      %v1071 = vpop.f32.mrf.mxu0
      %v1072 = vpop.f32.mrf.mxu0
      %v1073 = vadd.f32 %v348, %v1072
      %v1074 = vpop.f32.mrf.mxu0
      %1075 = vmatprep.mubr.bf16.mxu0 0
      %1076 = vmatmul.mubr.bf16.gmra.mxu0 %v740
      %v1077 = vpop.f32.mrf.mxu0
      %v1078 = vadd.f32 %v348, %v1077
      %v1079 = vpop.f32.mrf.mxu0
      %v1080 = vpop.f32.mrf.mxu0
      %v1081 = vadd.f32 %v348, %v1080
      %v1082 = vpop.f32.mrf.mxu0
      %1083 = vmatprep.mubr.bf16.mxu0 0
      %1084 = vmatmul.mubr.bf16.gmra.mxu0 %v743
      %v1085 = vpop.f32.mrf.mxu0
      %v1086 = vadd.f32 %v348, %v1085
      %v1087 = vpop.f32.mrf.mxu0
      %v1088 = vpop.f32.mrf.mxu0
      %v1089 = vadd.f32 %v348, %v1088
      %v1090 = vpop.f32.mrf.mxu0
      %1091 = vmatprep.mubr.bf16.mxu0 0
      %1092 = vmatmul.mubr.bf16.gmra.mxu0 %v746
      %v1093 = vpop.f32.mrf.mxu0
      %v1094 = vadd.f32 %v348, %v1093
      %v1095 = vpop.f32.mrf.mxu0
      %v1096 = vpop.f32.mrf.mxu0
      %v1097 = vadd.f32 %v348, %v1096
      %v1098 = vpop.f32.mrf.mxu0
      %1099 = vmatprep.mubr.bf16.mxu0 0
      %1100 = vmatmul.mubr.bf16.gmra.mxu0 %v749
      %v1101 = vpop.f32.mrf.mxu0
      %v1102 = vadd.f32 %v348, %v1101
      %v1103 = vpop.f32.mrf.mxu0
      %v1104 = vpop.f32.mrf.mxu0
      %v1105 = vadd.f32 %v348, %v1104
      %v1106 = vpop.f32.mrf.mxu0
      %1107 = vmatprep.mubr.bf16.mxu0 0
      %1108 = vmatmul.mubr.bf16.gmra.mxu0 %v752
      %v1109 = vpop.f32.mrf.mxu0
      %v1110 = vadd.f32 %v348, %v1109
      %v1111 = vpop.f32.mrf.mxu0
      %v1112 = vpop.f32.mrf.mxu0
      %v1113 = vadd.f32 %v348, %v1112
      %v1114 = vpop.f32.mrf.mxu0
      %1115 = vmatprep.mubr.bf16.mxu0 0
      %1116 = vmatmul.mubr.bf16.gmra.mxu0 %v755
      %v1117 = vpop.f32.mrf.mxu0
      %v1118 = vadd.f32 %v348, %v1117
      %v1119 = vpop.f32.mrf.mxu0
      %v1120 = vpop.f32.mrf.mxu0
      %v1121 = vadd.f32 %v348, %v1120
      %v1122 = vpop.f32.mrf.mxu0
      %1123 = vmatprep.mubr.bf16.mxu0 0
      %1124 = vmatmul.mubr.bf16.gmra.mxu0 %v758
      %v1125 = vpop.f32.mrf.mxu0
      %v1126 = vadd.f32 %v348, %v1125
      %v1127 = vpop.f32.mrf.mxu0
      %v1128 = vpop.f32.mrf.mxu0
      %v1129 = vadd.f32 %v348, %v1128
      %v1130 = vpop.f32.mrf.mxu0
      %1131 = vmatprep.mubr.bf16.mxu0 0
      %1132 = vmatmul.mubr.bf16.gmra.mxu0 %v761
      %v1133 = vpop.f32.mrf.mxu0
      %v1134 = vadd.f32 %v348, %v1133
      %v1135 = vpop.f32.mrf.mxu0
      %v1136 = vpop.f32.mrf.mxu0
      %v1137 = vadd.f32 %v348, %v1136
      %v1138 = vpop.f32.mrf.mxu0
      %1139 = vmatprep.mubr.bf16.mxu0 0
      %1140 = vmatmul.mubr.bf16.gmra.mxu0 %v764
      %v1141 = vpop.f32.mrf.mxu0
      %v1142 = vadd.f32 %v348, %v1141
      %v1143 = vpop.f32.mrf.mxu0
      %v1144 = vpop.f32.mrf.mxu0
      %v1145 = vadd.f32 %v348, %v1144
      %v1146 = vpop.f32.mrf.mxu0
      %1147 = vmatprep.mubr.bf16.mxu0 0
      %1148 = vmatmul.mubr.bf16.gmra.mxu0 %v767
      %v1149 = vpop.f32.mrf.mxu0
      %v1150 = vadd.f32 %v348, %v1149
      %v1151 = vpop.f32.mrf.mxu0
      %v1152 = vpop.f32.mrf.mxu0
      %v1153 = vadd.f32 %v348, %v1152
      %v1154 = vpop.f32.mrf.mxu0
      %1155 = vmatprep.mubr.bf16.mxu0 0
      %1156 = vmatmul.mubr.bf16.gmra.mxu0 %v770
      %v1157 = vpop.f32.mrf.mxu0
      %v1158 = vadd.f32 %v348, %v1157
      %v1159 = vpop.f32.mrf.mxu0
      %v1160 = vpop.f32.mrf.mxu0
      %v1161 = vadd.f32 %v348, %v1160
      %v1162 = vpop.f32.mrf.mxu0
      %1163 = vmatprep.mubr.bf16.mxu0 0
      %1164 = vmatmul.mubr.bf16.gmra.mxu0 %v773
      %v1165 = vpop.f32.mrf.mxu0
      %v1166 = vadd.f32 %v348, %v1165
      %v1167 = vpop.f32.mrf.mxu0
      %v1168 = vpop.f32.mrf.mxu0
      %v1169 = vadd.f32 %v348, %v1168
      %v1170 = vpop.f32.mrf.mxu0
      %1171 = vmatprep.mubr.bf16.mxu0 0
      %1172 = vmatmul.mubr.bf16.gmra.mxu0 %v776
      %v1173 = vpop.f32.mrf.mxu0
      %v1174 = vadd.f32 %v348, %v1173
      %v1175 = vpop.f32.mrf.mxu0
      %v1176 = vpop.f32.mrf.mxu0
      %v1177 = vadd.f32 %v348, %v1176
      %v1178 = vpop.f32.mrf.mxu0
      %1179 = vmatprep.mubr.bf16.mxu0 0
      %1180 = vmatmul.mubr.bf16.gmra.mxu0 %v779
      %v1181 = vpop.f32.mrf.mxu0
      %v1182 = vadd.f32 %v348, %v1181
      %v1183 = vpop.f32.mrf.mxu0
      %v1184 = vpop.f32.mrf.mxu0
      %v1185 = vadd.f32 %v348, %v1184
      %v1186 = vpop.f32.mrf.mxu0
      %1187 = vmatprep.mubr.bf16.mxu0 0
      %1188 = vmatmul.mubr.bf16.gmra.mxu0 %v782
      %v1189 = vpop.f32.mrf.mxu0
      %v1190 = vadd.f32 %v348, %v1189
      %v1191 = vpop.f32.mrf.mxu0
      %v1192 = vpop.f32.mrf.mxu0
      %v1193 = vadd.f32 %v348, %v1192
      %v1194 = vpop.f32.mrf.mxu0
      %1195 = vmatprep.mubr.bf16.mxu0 0
      %1196 = vmatmul.mubr.bf16.gmra.mxu0 %v785
      %v1197 = vpop.f32.mrf.mxu0
      %v1198 = vadd.f32 %v348, %v1197
      %v1199 = vpop.f32.mrf.mxu0
      %v1200 = vpop.f32.mrf.mxu0
      %v1201 = vadd.f32 %v348, %v1200
      %v1202 = vpop.f32.mrf.mxu0
      %1203 = vmatprep.mubr.bf16.mxu0 0
      %1204 = vmatmul.mubr.bf16.gmra.mxu0 %v788
      %v1205 = vpop.f32.mrf.mxu0
      %v1206 = vadd.f32 %v348, %v1205
      %v1207 = vpop.f32.mrf.mxu0
      %v1208 = vpop.f32.mrf.mxu0
      %v1209 = vadd.f32 %v348, %v1208
      %v1210 = vpop.f32.mrf.mxu0
      %1211 = vmatprep.mubr.bf16.mxu0 0
      %1212 = vmatmul.mubr.bf16.gmra.mxu0 %v791
      %v1213 = vpop.f32.mrf.mxu0
      %v1214 = vadd.f32 %v348, %v1213
      %v1215 = vpop.f32.mrf.mxu0
      %v1216 = vpop.f32.mrf.mxu0
      %v1217 = vadd.f32 %v348, %v1216
      %v1218 = vpop.f32.mrf.mxu0
      %1219 = vmatprep.mubr.bf16.mxu0 0
      %1220 = vmatmul.mubr.bf16.gmra.mxu0 %v794
      %v1221 = vpop.f32.mrf.mxu0
      %v1222 = vadd.f32 %v348, %v1221
      %v1223 = vpop.f32.mrf.mxu0
      %v1224 = vpop.f32.mrf.mxu0
      %v1225 = vadd.f32 %v348, %v1224
      %v1226 = vpop.f32.mrf.mxu0
      %1227 = vmatprep.mubr.bf16.mxu0 0
      %1228 = vmatmul.mubr.bf16.gmra.mxu0 %v797
      %v1229 = vpop.f32.mrf.mxu0
      %v1230 = vadd.f32 %v348, %v1229
      %v1231 = vpop.f32.mrf.mxu0
      %v1232 = vpop.f32.mrf.mxu0
      %v1233 = vadd.f32 %v348, %v1232
      %v1234 = vpop.f32.mrf.mxu0
      %1235 = vmatprep.mubr.bf16.mxu0 0
      %1236 = vmatmul.mubr.bf16.gmra.mxu0 %v800
      %v1237 = vpop.f32.mrf.mxu0
      %v1238 = vadd.f32 %v348, %v1237
      %v1239 = vpop.f32.mrf.mxu0
      %v1240 = vpop.f32.mrf.mxu0
      %v1241 = vadd.f32 %v348, %v1240
      %v1242 = vpop.f32.mrf.mxu0
      %1243 = vmatprep.mubr.bf16.mxu0 0
      %1244 = vmatmul.mubr.bf16.gmra.mxu0 %v803
      %v1245 = vpop.f32.mrf.mxu0
      %v1246 = vadd.f32 %v348, %v1245
      %v1247 = vpop.f32.mrf.mxu0
      %v1248 = vpop.f32.mrf.mxu0
      %v1249 = vadd.f32 %v348, %v1248
      %v1250 = vpop.f32.mrf.mxu0
      %1251 = vmatprep.mubr.bf16.mxu0 0
      %1252 = vmatmul.mubr.bf16.gmra.mxu0 %v806
      %v1253 = vpop.f32.mrf.mxu0
      %v1254 = vadd.f32 %v348, %v1253
      %v1255 = vpop.f32.mrf.mxu0
      %v1256 = vpop.f32.mrf.mxu0
      %v1257 = vadd.f32 %v348, %v1256
      %v1258 = vpop.f32.mrf.mxu0
      %1259 = vmatprep.mubr.bf16.mxu0 0
      %1260 = vmatmul.mubr.bf16.gmra.mxu0 %v809
      %v1261 = vpop.f32.mrf.mxu0
      %v1262 = vadd.f32 %v348, %v1261
      %v1263 = vpop.f32.mrf.mxu0
      %v1264 = vpop.f32.mrf.mxu0
      %v1265 = vadd.f32 %v348, %v1264
      %v1266 = vpop.f32.mrf.mxu0
      %1267 = vmatprep.mubr.bf16.mxu0 0
      %1268 = vmatmul.mubr.bf16.gmra.mxu0 %v812
      %v1269 = vpop.f32.mrf.mxu0
      %v1270 = vadd.f32 %v348, %v1269
      %v1271 = vpop.f32.mrf.mxu0
      %v1272 = vpop.f32.mrf.mxu0
      %v1273 = vadd.f32 %v348, %v1272
      %v1274 = vpop.f32.mrf.mxu0
      %1275 = vmatprep.mubr.bf16.mxu0 0
      %1276 = vmatmul.mubr.bf16.gmra.mxu0 %v815
      %v1277 = vpop.f32.mrf.mxu0
      %v1278 = vadd.f32 %v348, %v1277
      %v1279 = vpop.f32.mrf.mxu0
      %v1280 = vpop.f32.mrf.mxu0
      %v1281 = vadd.f32 %v348, %v1280
      %v1282 = vpop.f32.mrf.mxu0
      %1283 = vmatprep.mubr.bf16.mxu0 0
      %1284 = vmatmul.mubr.bf16.gmra.mxu0 %v818
      %v1285 = vpop.f32.mrf.mxu0
      %v1286 = vadd.f32 %v348, %v1285
      %v1287 = vpop.f32.mrf.mxu0
      %v1288 = vpop.f32.mrf.mxu0
      %v1289 = vadd.f32 %v348, %v1288
      %v1290 = vpop.f32.mrf.mxu0
      %1291 = vmatprep.mubr.bf16.mxu0 0
      %1292 = vmatmul.mubr.bf16.gmra.mxu0 %v821
      %v1293 = vpop.f32.mrf.mxu0
      %v1294 = vadd.f32 %v348, %v1293
      %v1295 = vpop.f32.mrf.mxu0
      %v1296 = vpop.f32.mrf.mxu0
      %v1297 = vadd.f32 %v348, %v1296
      %v1298 = vpop.f32.mrf.mxu0
      %1299 = vmatprep.mubr.bf16.mxu0 0
      %1300 = vmatmul.mubr.bf16.gmra.mxu0 %v824
      %v1301 = vpop.f32.mrf.mxu0
      %v1302 = vadd.f32 %v348, %v1301
      %v1303 = vpop.f32.mrf.mxu0
      %v1304 = vpop.f32.mrf.mxu0
      %v1305 = vadd.f32 %v348, %v1304
      %v1306 = vpop.f32.mrf.mxu0
      %1307 = vmatprep.mubr.bf16.mxu0 0
      %1308 = vmatmul.mubr.bf16.gmra.mxu0 %v827
      %v1309 = vpop.f32.mrf.mxu0
      %v1310 = vadd.f32 %v348, %v1309
      %v1311 = vpop.f32.mrf.mxu0
      %v1312 = vpop.f32.mrf.mxu0
      %v1313 = vadd.f32 %v348, %v1312
      %v1314 = vpop.f32.mrf.mxu0
      %1315 = vmatprep.mubr.bf16.mxu0 0
      %1316 = vmatmul.mubr.bf16.gmra.mxu0 %v830
      %v1317 = vpop.f32.mrf.mxu0
      %v1318 = vadd.f32 %v348, %v1317
      %v1319 = vpop.f32.mrf.mxu0
      %v1320 = vpop.f32.mrf.mxu0
      %v1321 = vadd.f32 %v348, %v1320
      %v1322 = vpop.f32.mrf.mxu0
      %1323 = vmatprep.mubr.bf16.mxu0 0
      %1324 = vmatmul.mubr.bf16.gmra.mxu0 %v833
      %v1325 = vpop.f32.mrf.mxu0
      %v1326 = vadd.f32 %v348, %v1325
      %v1327 = vpop.f32.mrf.mxu0
      %v1328 = vpop.f32.mrf.mxu0
      %v1329 = vadd.f32 %v348, %v1328
      %v1330 = vpop.f32.mrf.mxu0
      %1331 = vmatprep.mubr.bf16.mxu0 0
      %1332 = vmatmul.mubr.bf16.gmra.mxu0 %v836
      %v1333 = vpop.f32.mrf.mxu0
      %v1334 = vadd.f32 %v348, %v1333
      %v1335 = vpop.f32.mrf.mxu0
      %v1336 = vpop.f32.mrf.mxu0
      %v1337 = vadd.f32 %v348, %v1336
      %v1338 = vpop.f32.mrf.mxu0
      %1339 = vmatprep.mubr.bf16.mxu0 0
      %1340 = vmatmul.mubr.bf16.gmra.mxu0 %v839
      %v1341 = vpop.f32.mrf.mxu0
      %v1342 = vadd.f32 %v348, %v1341
      %v1343 = vpop.f32.mrf.mxu0
      %v1344 = vpop.f32.mrf.mxu0
      %v1345 = vadd.f32 %v348, %v1344
      %v1346 = vpop.f32.mrf.mxu0
      %1347 = vmatprep.mubr.bf16.mxu0 0
      %1348 = vmatmul.mubr.bf16.gmra.mxu0 %v842
      %v1349 = vpop.f32.mrf.mxu0
      %v1350 = vadd.f32 %v348, %v1349
      %v1351 = vpop.f32.mrf.mxu0
      %v1352 = vpop.f32.mrf.mxu0
      %v1353 = vadd.f32 %v348, %v1352
      %v1354 = vpop.f32.mrf.mxu0
      %1355 = vmatprep.mubr.bf16.mxu0 0
      %1356 = vmatmul.mubr.bf16.gmra.mxu0 %v845
      %v1357 = vpop.f32.mrf.mxu0
      %v1358 = vadd.f32 %v348, %v1357
      %v1359 = vpop.f32.mrf.mxu0
      %v1360 = vpop.f32.mrf.mxu0
      %v1361 = vadd.f32 %v348, %v1360
      %v1362 = vpop.f32.mrf.mxu0
      %1363 = vmatprep.mubr.bf16.mxu0 0
      %1364 = vmatmul.mubr.bf16.gmra.mxu0 %v848
      %v1365 = vpop.f32.mrf.mxu0
      %v1366 = vadd.f32 %v348, %v1365
      %v1367 = vpop.f32.mrf.mxu0
      %v1368 = vpop.f32.mrf.mxu0
      %v1369 = vadd.f32 %v348, %v1368
      %v1370 = vpop.f32.mrf.mxu0
      %1371 = vmatprep.mubr.bf16.mxu0 0
      %1372 = vmatmul.mubr.bf16.gmra.mxu0 %v851
      %v1373 = vpop.f32.mrf.mxu0
      %v1374 = vadd.f32 %v348, %v1373
      %v1375 = vpop.f32.mrf.mxu0
      %v1376 = vpop.f32.mrf.mxu0
      %v1377 = vadd.f32 %v348, %v1376
      %v1378 = vpop.f32.mrf.mxu0
      %1379 = vmatprep.mubr.bf16.mxu0 0
      %1380 = vmatmul.mubr.bf16.gmra.mxu0 %v854
      %v1381 = vpop.f32.mrf.mxu0
      %v1382 = vadd.f32 %v348, %v1381
      %v1383 = vpop.f32.mrf.mxu0
      %v1384 = vpop.f32.mrf.mxu0
      %v1385 = vadd.f32 %v348, %v1384
      %v1386 = vpop.f32.mrf.mxu0
      %1387 = vmatprep.mubr.bf16.mxu0 0
      %1388 = vmatmul.mubr.bf16.gmra.mxu0 %v857
      %v1389 = vpop.f32.mrf.mxu0
      %v1390 = vadd.f32 %v348, %v1389
      %v1391 = vpop.f32.mrf.mxu0
      %v1392 = vpop.f32.mrf.mxu0
      %v1393 = vadd.f32 %v348, %v1392
      %v1394 = vpop.f32.mrf.mxu0
      %1395 = vmatprep.mubr.bf16.mxu0 0
      %1396 = vmatmul.mubr.bf16.gmra.mxu0 %v860
      %v1397 = vpop.f32.mrf.mxu0
      %v1398 = vadd.f32 %v348, %v1397
      %v1399 = vpop.f32.mrf.mxu0
      %v1400 = vpop.f32.mrf.mxu0
      %v1401 = vadd.f32 %v348, %v1400
      %v1402 = vpop.f32.mrf.mxu0
      %1403 = vmatprep.mubr.bf16.mxu0 0
      %1404 = vmatmul.mubr.bf16.gmra.mxu0 %v863
      %v1405 = vpop.f32.mrf.mxu0
      %v1406 = vadd.f32 %v348, %v1405
      %v1407 = vpop.f32.mrf.mxu0
      %v1408 = vpop.f32.mrf.mxu0
      %v1409 = vadd.f32 %v348, %v1408
      %v1410 = vpop.f32.mrf.mxu0
      %1411 = vmatprep.mubr.bf16.mxu0 0
      %1412 = vmatmul.mubr.bf16.gmra.mxu0 %v866
      %v1413 = vpop.f32.mrf.mxu0
      %v1414 = vadd.f32 %v348, %v1413
      %v1415 = vpop.f32.mrf.mxu0
      %v1416 = vpop.f32.mrf.mxu0
      %v1417 = vadd.f32 %v348, %v1416
      %v1418 = vpop.f32.mrf.mxu0
      %1419 = vdwg.mxu0
      %v1420 = vpack.c.bf16 %v913, %v910
      %v1421 = vpack.c.bf16 %v921, %v918
      %v1422 = vpack.c.bf16 %v929, %v926
      %v1423 = vpack.c.bf16 %v937, %v934
      %v1424 = vpack.c.bf16 %v945, %v942
      %v1425 = vpack.c.bf16 %v953, %v950
      %v1426 = vpack.c.bf16 %v961, %v958
      %v1427 = vpack.c.bf16 %v969, %v966
      %v1428 = vpack.c.bf16 %v977, %v974
      %v1429 = vpack.c.bf16 %v985, %v982
      %v1430 = vpack.c.bf16 %v993, %v990
      %v1431 = vpack.c.bf16 %v1001, %v998
      %v1432 = vpack.c.bf16 %v1009, %v1006
      %v1433 = vpack.c.bf16 %v1017, %v1014
      %v1434 = vpack.c.bf16 %v1025, %v1022
      %v1435 = vpack.c.bf16 %v1033, %v1030
      %v1436 = vpack.c.bf16 %v1041, %v1038
      %v1437 = vpack.c.bf16 %v1049, %v1046
      %v1438 = vpack.c.bf16 %v1057, %v1054
      %v1439 = vpack.c.bf16 %v1065, %v1062
      %v1440 = vpack.c.bf16 %v1073, %v1070
      %v1441 = vpack.c.bf16 %v1081, %v1078
      %v1442 = vpack.c.bf16 %v1089, %v1086
      %v1443 = vpack.c.bf16 %v1097, %v1094
      %v1444 = vpack.c.bf16 %v1105, %v1102
      %v1445 = vpack.c.bf16 %v1113, %v1110
      %v1446 = vpack.c.bf16 %v1121, %v1118
      %v1447 = vpack.c.bf16 %v1129, %v1126
      %v1448 = vpack.c.bf16 %v1137, %v1134
      %v1449 = vpack.c.bf16 %v1145, %v1142
      %v1450 = vpack.c.bf16 %v1153, %v1150
      %v1451 = vpack.c.bf16 %v1161, %v1158
      %v1452 = vpack.c.bf16 %v1169, %v1166
      %v1453 = vpack.c.bf16 %v1177, %v1174
      %v1454 = vpack.c.bf16 %v1185, %v1182
      %v1455 = vpack.c.bf16 %v1193, %v1190
      %v1456 = vpack.c.bf16 %v1201, %v1198
      %v1457 = vpack.c.bf16 %v1209, %v1206
      %v1458 = vpack.c.bf16 %v1217, %v1214
      %v1459 = vpack.c.bf16 %v1225, %v1222
      %v1460 = vpack.c.bf16 %v1233, %v1230
      %v1461 = vpack.c.bf16 %v1241, %v1238
      %v1462 = vpack.c.bf16 %v1249, %v1246
      %v1463 = vpack.c.bf16 %v1257, %v1254
      %v1464 = vpack.c.bf16 %v1265, %v1262
      %v1465 = vpack.c.bf16 %v1273, %v1270
      %v1466 = vpack.c.bf16 %v1281, %v1278
      %v1467 = vpack.c.bf16 %v1289, %v1286
      %v1468 = vpack.c.bf16 %v1297, %v1294
      %v1469 = vpack.c.bf16 %v1305, %v1302
      %v1470 = vpack.c.bf16 %v1313, %v1310
      %v1471 = vpack.c.bf16 %v1321, %v1318
      %v1472 = vpack.c.bf16 %v1329, %v1326
      %v1473 = vpack.c.bf16 %v1337, %v1334
      %v1474 = vpack.c.bf16 %v1345, %v1342
      %v1475 = vpack.c.bf16 %v1353, %v1350
      %v1476 = vpack.c.bf16 %v1361, %v1358
      %v1477 = vpack.c.bf16 %v1369, %v1366
      %v1478 = vpack.c.bf16 %v1377, %v1374
      %v1479 = vpack.c.bf16 %v1385, %v1382
      %v1480 = vpack.c.bf16 %v1393, %v1390
      %v1481 = vpack.c.bf16 %v1401, %v1398
      %v1482 = vpack.c.bf16 %v1409, %v1406
      %v1483 = vpack.c.bf16 %v1417, %v1414
      %v1548 = vunpack.c.l.b16 %v1420
      %v1549 = vunpack.c.h.b16 %v1420
      %v1550 = vunpack.c.l.b16 %v1421
      %v1551 = vunpack.c.h.b16 %v1421
      %v1552 = vunpack.c.l.b16 %v1422
      %v1553 = vunpack.c.h.b16 %v1422
      %v1554 = vunpack.c.l.b16 %v1423
      %v1555 = vunpack.c.h.b16 %v1423
      %v1556 = vunpack.c.l.b16 %v1424
      %v1557 = vunpack.c.h.b16 %v1424
      %v1558 = vunpack.c.l.b16 %v1425
      %v1559 = vunpack.c.h.b16 %v1425
      %v1560 = vunpack.c.l.b16 %v1426
      %v1561 = vunpack.c.h.b16 %v1426
      %v1562 = vunpack.c.l.b16 %v1427
      %v1563 = vunpack.c.h.b16 %v1427
      %v1564 = vunpack.c.l.b16 %v1428
      %v1565 = vunpack.c.h.b16 %v1428
      %v1566 = vunpack.c.l.b16 %v1429
      %v1567 = vunpack.c.h.b16 %v1429
      %v1568 = vunpack.c.l.b16 %v1430
      %v1569 = vunpack.c.h.b16 %v1430
      %v1570 = vunpack.c.l.b16 %v1431
      %v1571 = vunpack.c.h.b16 %v1431
      %v1572 = vunpack.c.l.b16 %v1432
      %v1573 = vunpack.c.h.b16 %v1432
      %v1574 = vunpack.c.l.b16 %v1433
      %v1575 = vunpack.c.h.b16 %v1433
      %v1576 = vunpack.c.l.b16 %v1434
      %v1577 = vunpack.c.h.b16 %v1434
      %v1578 = vunpack.c.l.b16 %v1435
      %v1579 = vunpack.c.h.b16 %v1435
      %v1580 = vunpack.c.l.b16 %v1436
      %v1581 = vunpack.c.h.b16 %v1436
      %v1582 = vunpack.c.l.b16 %v1437
      %v1583 = vunpack.c.h.b16 %v1437
      %v1584 = vunpack.c.l.b16 %v1438
      %v1585 = vunpack.c.h.b16 %v1438
      %v1586 = vunpack.c.l.b16 %v1439
      %v1587 = vunpack.c.h.b16 %v1439
      %v1588 = vunpack.c.l.b16 %v1440
      %v1589 = vunpack.c.h.b16 %v1440
      %v1590 = vunpack.c.l.b16 %v1441
      %v1591 = vunpack.c.h.b16 %v1441
      %v1592 = vunpack.c.l.b16 %v1442
      %v1593 = vunpack.c.h.b16 %v1442
      %v1594 = vunpack.c.l.b16 %v1443
      %v1595 = vunpack.c.h.b16 %v1443
      %v1596 = vunpack.c.l.b16 %v1444
      %v1597 = vunpack.c.h.b16 %v1444
      %v1598 = vunpack.c.l.b16 %v1445
      %v1599 = vunpack.c.h.b16 %v1445
      %v1600 = vunpack.c.l.b16 %v1446
      %v1601 = vunpack.c.h.b16 %v1446
      %v1602 = vunpack.c.l.b16 %v1447
      %v1603 = vunpack.c.h.b16 %v1447
      %v1604 = vunpack.c.l.b16 %v1448
      %v1605 = vunpack.c.h.b16 %v1448
      %v1606 = vunpack.c.l.b16 %v1449
      %v1607 = vunpack.c.h.b16 %v1449
      %v1608 = vunpack.c.l.b16 %v1450
      %v1609 = vunpack.c.h.b16 %v1450
      %v1610 = vunpack.c.l.b16 %v1451
      %v1611 = vunpack.c.h.b16 %v1451
      %v1612 = vunpack.c.l.b16 %v1452
      %v1613 = vunpack.c.h.b16 %v1452
      %v1614 = vunpack.c.l.b16 %v1453
      %v1615 = vunpack.c.h.b16 %v1453
      %v1616 = vunpack.c.l.b16 %v1454
      %v1617 = vunpack.c.h.b16 %v1454
      %v1618 = vunpack.c.l.b16 %v1455
      %v1619 = vunpack.c.h.b16 %v1455
      %v1620 = vunpack.c.l.b16 %v1456
      %v1621 = vunpack.c.h.b16 %v1456
      %v1622 = vunpack.c.l.b16 %v1457
      %v1623 = vunpack.c.h.b16 %v1457
      %v1624 = vunpack.c.l.b16 %v1458
      %v1625 = vunpack.c.h.b16 %v1458
      %v1626 = vunpack.c.l.b16 %v1459
      %v1627 = vunpack.c.h.b16 %v1459
      %v1628 = vunpack.c.l.b16 %v1460
      %v1629 = vunpack.c.h.b16 %v1460
      %v1630 = vunpack.c.l.b16 %v1461
      %v1631 = vunpack.c.h.b16 %v1461
      %v1632 = vunpack.c.l.b16 %v1462
      %v1633 = vunpack.c.h.b16 %v1462
      %v1634 = vunpack.c.l.b16 %v1463
      %v1635 = vunpack.c.h.b16 %v1463
      %v1636 = vunpack.c.l.b16 %v1464
      %v1637 = vunpack.c.h.b16 %v1464
      %v1638 = vunpack.c.l.b16 %v1465
      %v1639 = vunpack.c.h.b16 %v1465
      %v1640 = vunpack.c.l.b16 %v1466
      %v1641 = vunpack.c.h.b16 %v1466
      %v1642 = vunpack.c.l.b16 %v1467
      %v1643 = vunpack.c.h.b16 %v1467
      %v1644 = vunpack.c.l.b16 %v1468
      %v1645 = vunpack.c.h.b16 %v1468
      %v1646 = vunpack.c.l.b16 %v1469
      %v1647 = vunpack.c.h.b16 %v1469
      %v1648 = vunpack.c.l.b16 %v1470
      %v1649 = vunpack.c.h.b16 %v1470
      %v1650 = vunpack.c.l.b16 %v1471
      %v1651 = vunpack.c.h.b16 %v1471
      %v1652 = vunpack.c.l.b16 %v1472
      %v1653 = vunpack.c.h.b16 %v1472
      %v1654 = vunpack.c.l.b16 %v1473
      %v1655 = vunpack.c.h.b16 %v1473
      %v1656 = vunpack.c.l.b16 %v1474
      %v1657 = vunpack.c.h.b16 %v1474
      %v1658 = vunpack.c.l.b16 %v1475
      %v1659 = vunpack.c.h.b16 %v1475
      %v1660 = vunpack.c.l.b16 %v1476
      %v1661 = vunpack.c.h.b16 %v1476
      %v1662 = vunpack.c.l.b16 %v1477
      %v1663 = vunpack.c.h.b16 %v1477
      %v1664 = vunpack.c.l.b16 %v1478
      %v1665 = vunpack.c.h.b16 %v1478
      %v1666 = vunpack.c.l.b16 %v1479
      %v1667 = vunpack.c.h.b16 %v1479
      %v1668 = vunpack.c.l.b16 %v1480
      %v1669 = vunpack.c.h.b16 %v1480
      %v1670 = vunpack.c.l.b16 %v1481
      %v1671 = vunpack.c.h.b16 %v1481
      %v1672 = vunpack.c.l.b16 %v1482
      %v1673 = vunpack.c.h.b16 %v1482
      %v1674 = vunpack.c.l.b16 %v1483
      %v1675 = vunpack.c.h.b16 %v1483
      %v1676 = vpack.c.b16 %v1548, %v1548
      %v1677 = vpack.c.b16 %v1549, %v1549
      %v1678 = vpack.c.b16 %v1550, %v1550
      %v1679 = vpack.c.b16 %v1551, %v1551
      %v1680 = vpack.c.b16 %v1552, %v1552
      %v1681 = vpack.c.b16 %v1553, %v1553
      %v1682 = vpack.c.b16 %v1554, %v1554
      %v1683 = vpack.c.b16 %v1555, %v1555
      %v1684 = vpack.c.b16 %v1556, %v1556
      %v1685 = vpack.c.b16 %v1557, %v1557
      %v1686 = vpack.c.b16 %v1558, %v1558
      %v1687 = vpack.c.b16 %v1559, %v1559
      %v1688 = vpack.c.b16 %v1560, %v1560
      %v1689 = vpack.c.b16 %v1561, %v1561
      %v1690 = vpack.c.b16 %v1562, %v1562
      %v1691 = vpack.c.b16 %v1563, %v1563
      %v1692 = vpack.c.b16 %v1564, %v1564
      %v1693 = vpack.c.b16 %v1565, %v1565
      %v1694 = vpack.c.b16 %v1566, %v1566
      %v1695 = vpack.c.b16 %v1567, %v1567
      %v1696 = vpack.c.b16 %v1568, %v1568
      %v1697 = vpack.c.b16 %v1569, %v1569
      %v1698 = vpack.c.b16 %v1570, %v1570
      %v1699 = vpack.c.b16 %v1571, %v1571
      %v1700 = vpack.c.b16 %v1572, %v1572
      %v1701 = vpack.c.b16 %v1573, %v1573
      %v1702 = vpack.c.b16 %v1574, %v1574
      %v1703 = vpack.c.b16 %v1575, %v1575
      %v1704 = vpack.c.b16 %v1576, %v1576
      %v1705 = vpack.c.b16 %v1577, %v1577
      %v1706 = vpack.c.b16 %v1578, %v1578
      %v1707 = vpack.c.b16 %v1579, %v1579
      %v1708 = vpack.c.b16 %v1580, %v1580
      %v1709 = vpack.c.b16 %v1581, %v1581
      %v1710 = vpack.c.b16 %v1582, %v1582
      %v1711 = vpack.c.b16 %v1583, %v1583
      %v1712 = vpack.c.b16 %v1584, %v1584
      %v1713 = vpack.c.b16 %v1585, %v1585
      %v1714 = vpack.c.b16 %v1586, %v1586
      %v1715 = vpack.c.b16 %v1587, %v1587
      %v1716 = vpack.c.b16 %v1588, %v1588
      %v1717 = vpack.c.b16 %v1589, %v1589
      %v1718 = vpack.c.b16 %v1590, %v1590
      %v1719 = vpack.c.b16 %v1591, %v1591
      %v1720 = vpack.c.b16 %v1592, %v1592
      %v1721 = vpack.c.b16 %v1593, %v1593
      %v1722 = vpack.c.b16 %v1594, %v1594
      %v1723 = vpack.c.b16 %v1595, %v1595
      %v1724 = vpack.c.b16 %v1596, %v1596
      %v1725 = vpack.c.b16 %v1597, %v1597
      %v1726 = vpack.c.b16 %v1598, %v1598
      %v1727 = vpack.c.b16 %v1599, %v1599
      %v1728 = vpack.c.b16 %v1600, %v1600
      %v1729 = vpack.c.b16 %v1601, %v1601
      %v1730 = vpack.c.b16 %v1602, %v1602
      %v1731 = vpack.c.b16 %v1603, %v1603
      %v1732 = vpack.c.b16 %v1604, %v1604
      %v1733 = vpack.c.b16 %v1605, %v1605
      %v1734 = vpack.c.b16 %v1606, %v1606
      %v1735 = vpack.c.b16 %v1607, %v1607
      %v1736 = vpack.c.b16 %v1608, %v1608
      %v1737 = vpack.c.b16 %v1609, %v1609
      %v1738 = vpack.c.b16 %v1610, %v1610
      %v1739 = vpack.c.b16 %v1611, %v1611
      %v1740 = vpack.c.b16 %v1612, %v1612
      %v1741 = vpack.c.b16 %v1613, %v1613
      %v1742 = vpack.c.b16 %v1614, %v1614
      %v1743 = vpack.c.b16 %v1615, %v1615
      %v1744 = vpack.c.b16 %v1616, %v1616
      %v1745 = vpack.c.b16 %v1617, %v1617
      %v1746 = vpack.c.b16 %v1618, %v1618
      %v1747 = vpack.c.b16 %v1619, %v1619
      %v1748 = vpack.c.b16 %v1620, %v1620
      %v1749 = vpack.c.b16 %v1621, %v1621
      %v1750 = vpack.c.b16 %v1622, %v1622
      %v1751 = vpack.c.b16 %v1623, %v1623
      %v1752 = vpack.c.b16 %v1624, %v1624
      %v1753 = vpack.c.b16 %v1625, %v1625
      %v1754 = vpack.c.b16 %v1626, %v1626
      %v1755 = vpack.c.b16 %v1627, %v1627
      %v1756 = vpack.c.b16 %v1628, %v1628
      %v1757 = vpack.c.b16 %v1629, %v1629
      %v1758 = vpack.c.b16 %v1630, %v1630
      %v1759 = vpack.c.b16 %v1631, %v1631
      %v1760 = vpack.c.b16 %v1632, %v1632
      %v1761 = vpack.c.b16 %v1633, %v1633
      %v1762 = vpack.c.b16 %v1634, %v1634
      %v1763 = vpack.c.b16 %v1635, %v1635
      %v1764 = vpack.c.b16 %v1636, %v1636
      %v1765 = vpack.c.b16 %v1637, %v1637
      %v1766 = vpack.c.b16 %v1638, %v1638
      %v1767 = vpack.c.b16 %v1639, %v1639
      %v1768 = vpack.c.b16 %v1640, %v1640
      %v1769 = vpack.c.b16 %v1641, %v1641
      %v1770 = vpack.c.b16 %v1642, %v1642
      %v1771 = vpack.c.b16 %v1643, %v1643
      %v1772 = vpack.c.b16 %v1644, %v1644
      %v1773 = vpack.c.b16 %v1645, %v1645
      %v1774 = vpack.c.b16 %v1646, %v1646
      %v1775 = vpack.c.b16 %v1647, %v1647
      %v1776 = vpack.c.b16 %v1648, %v1648
      %v1777 = vpack.c.b16 %v1649, %v1649
      %v1778 = vpack.c.b16 %v1650, %v1650
      %v1779 = vpack.c.b16 %v1651, %v1651
      %v1780 = vpack.c.b16 %v1652, %v1652
      %v1781 = vpack.c.b16 %v1653, %v1653
      %v1782 = vpack.c.b16 %v1654, %v1654
      %v1783 = vpack.c.b16 %v1655, %v1655
      %v1784 = vpack.c.b16 %v1656, %v1656
      %v1785 = vpack.c.b16 %v1657, %v1657
      %v1786 = vpack.c.b16 %v1658, %v1658
      %v1787 = vpack.c.b16 %v1659, %v1659
      %v1788 = vpack.c.b16 %v1660, %v1660
      %v1789 = vpack.c.b16 %v1661, %v1661
      %v1790 = vpack.c.b16 %v1662, %v1662
      %v1791 = vpack.c.b16 %v1663, %v1663
      %v1792 = vpack.c.b16 %v1664, %v1664
      %v1793 = vpack.c.b16 %v1665, %v1665
      %v1794 = vpack.c.b16 %v1666, %v1666
      %v1795 = vpack.c.b16 %v1667, %v1667
      %v1796 = vpack.c.b16 %v1668, %v1668
      %v1797 = vpack.c.b16 %v1669, %v1669
      %v1798 = vpack.c.b16 %v1670, %v1670
      %v1799 = vpack.c.b16 %v1671, %v1671
      %v1800 = vpack.c.b16 %v1672, %v1672
      %v1801 = vpack.c.b16 %v1673, %v1673
      %v1802 = vpack.c.b16 %v1674, %v1674
      %v1803 = vpack.c.b16 %v1675, %v1675
      %vm1932 = vcmask 60416
      %1933 = vst.msk [vmem:[%s206] sm:$0xf] %vm1932, %v1676
      %1934 = vst.msk [vmem:[%s206 + $0x4] sm:$0xf] %vm1932, %v1677
      %1935 = vst.msk [vmem:[%s206 + $0x8] sm:$0xf] %vm1932, %v1678
      %1936 = vst.msk [vmem:[%s206 + $0xc] sm:$0xf] %vm1932, %v1679
      %1937 = vst.msk [vmem:[%s206 + $0x10] sm:$0xf] %vm1932, %v1680
      %1938 = vst.msk [vmem:[%s206 + $0x14] sm:$0xf] %vm1932, %v1681
      %1939 = vst.msk [vmem:[%s206 + $0x18] sm:$0xf] %vm1932, %v1682
      %1940 = vst.msk [vmem:[%s206 + $0x1c] sm:$0xf] %vm1932, %v1683
      %1941 = vst.msk [vmem:[%s206 + $0x20] sm:$0xf] %vm1932, %v1684
      %1942 = vst.msk [vmem:[%s206 + $0x24] sm:$0xf] %vm1932, %v1685
      %1943 = vst.msk [vmem:[%s206 + $0x28] sm:$0xf] %vm1932, %v1686
      %1944 = vst.msk [vmem:[%s206 + $0x2c] sm:$0xf] %vm1932, %v1687
      %1945 = vst.msk [vmem:[%s206 + $0x30] sm:$0xf] %vm1932, %v1688
      %1946 = vst.msk [vmem:[%s206 + $0x34] sm:$0xf] %vm1932, %v1689
      %1947 = vst.msk [vmem:[%s206 + $0x38] sm:$0xf] %vm1932, %v1690
      %1948 = vst.msk [vmem:[%s206 + $0x3c] sm:$0xf] %vm1932, %v1691
      %1949 = vst.msk [vmem:[%s206 + $0x40] sm:$0xf] %vm1932, %v1692
      %1950 = vst.msk [vmem:[%s206 + $0x44] sm:$0xf] %vm1932, %v1693
      %1951 = vst.msk [vmem:[%s206 + $0x48] sm:$0xf] %vm1932, %v1694
      %1952 = vst.msk [vmem:[%s206 + $0x4c] sm:$0xf] %vm1932, %v1695
      %1953 = vst.msk [vmem:[%s206 + $0x50] sm:$0xf] %vm1932, %v1696
      %1954 = vst.msk [vmem:[%s206 + $0x54] sm:$0xf] %vm1932, %v1697
      %1955 = vst.msk [vmem:[%s206 + $0x58] sm:$0xf] %vm1932, %v1698
      %1956 = vst.msk [vmem:[%s206 + $0x5c] sm:$0xf] %vm1932, %v1699
      %1957 = vst.msk [vmem:[%s206 + $0x60] sm:$0xf] %vm1932, %v1700
      %1958 = vst.msk [vmem:[%s206 + $0x64] sm:$0xf] %vm1932, %v1701
      %1959 = vst.msk [vmem:[%s206 + $0x68] sm:$0xf] %vm1932, %v1702
      %1960 = vst.msk [vmem:[%s206 + $0x6c] sm:$0xf] %vm1932, %v1703
      %1961 = vst.msk [vmem:[%s206 + $0x70] sm:$0xf] %vm1932, %v1704
      %1962 = vst.msk [vmem:[%s206 + $0x74] sm:$0xf] %vm1932, %v1705
      %1963 = vst.msk [vmem:[%s206 + $0x78] sm:$0xf] %vm1932, %v1706
      %1964 = vst.msk [vmem:[%s206 + $0x7c] sm:$0xf] %vm1932, %v1707
      %1965 = vst.msk [vmem:[%s206 + $0x80] sm:$0xf] %vm1932, %v1708
      %1966 = vst.msk [vmem:[%s206 + $0x84] sm:$0xf] %vm1932, %v1709
      %1967 = vst.msk [vmem:[%s206 + $0x88] sm:$0xf] %vm1932, %v1710
      %1968 = vst.msk [vmem:[%s206 + $0x8c] sm:$0xf] %vm1932, %v1711
      %1969 = vst.msk [vmem:[%s206 + $0x90] sm:$0xf] %vm1932, %v1712
      %1970 = vst.msk [vmem:[%s206 + $0x94] sm:$0xf] %vm1932, %v1713
      %1971 = vst.msk [vmem:[%s206 + $0x98] sm:$0xf] %vm1932, %v1714
      %1972 = vst.msk [vmem:[%s206 + $0x9c] sm:$0xf] %vm1932, %v1715
      %1973 = vst.msk [vmem:[%s206 + $0xa0] sm:$0xf] %vm1932, %v1716
      %1974 = vst.msk [vmem:[%s206 + $0xa4] sm:$0xf] %vm1932, %v1717
      %1975 = vst.msk [vmem:[%s206 + $0xa8] sm:$0xf] %vm1932, %v1718
      %1976 = vst.msk [vmem:[%s206 + $0xac] sm:$0xf] %vm1932, %v1719
      %1977 = vst.msk [vmem:[%s206 + $0xb0] sm:$0xf] %vm1932, %v1720
      %1978 = vst.msk [vmem:[%s206 + $0xb4] sm:$0xf] %vm1932, %v1721
      %1979 = vst.msk [vmem:[%s206 + $0xb8] sm:$0xf] %vm1932, %v1722
      %1980 = vst.msk [vmem:[%s206 + $0xbc] sm:$0xf] %vm1932, %v1723
      %1981 = vst.msk [vmem:[%s206 + $0xc0] sm:$0xf] %vm1932, %v1724
      %1982 = vst.msk [vmem:[%s206 + $0xc4] sm:$0xf] %vm1932, %v1725
      %1983 = vst.msk [vmem:[%s206 + $0xc8] sm:$0xf] %vm1932, %v1726
      %1984 = vst.msk [vmem:[%s206 + $0xcc] sm:$0xf] %vm1932, %v1727
      %1985 = vst.msk [vmem:[%s206 + $0xd0] sm:$0xf] %vm1932, %v1728
      %1986 = vst.msk [vmem:[%s206 + $0xd4] sm:$0xf] %vm1932, %v1729
      %1987 = vst.msk [vmem:[%s206 + $0xd8] sm:$0xf] %vm1932, %v1730
      %1988 = vst.msk [vmem:[%s206 + $0xdc] sm:$0xf] %vm1932, %v1731
      %1989 = vst.msk [vmem:[%s206 + $0xe0] sm:$0xf] %vm1932, %v1732
      %1990 = vst.msk [vmem:[%s206 + $0xe4] sm:$0xf] %vm1932, %v1733
      %1991 = vst.msk [vmem:[%s206 + $0xe8] sm:$0xf] %vm1932, %v1734
      %1992 = vst.msk [vmem:[%s206 + $0xec] sm:$0xf] %vm1932, %v1735
      %1993 = vst.msk [vmem:[%s206 + $0xf0] sm:$0xf] %vm1932, %v1736
      %1994 = vst.msk [vmem:[%s206 + $0xf4] sm:$0xf] %vm1932, %v1737
      %1995 = vst.msk [vmem:[%s206 + $0xf8] sm:$0xf] %vm1932, %v1738
      %1996 = vst.msk [vmem:[%s206 + $0xfc] sm:$0xf] %vm1932, %v1739
      %1997 = vst.msk [vmem:[%s206 + $0x100] sm:$0xf] %vm1932, %v1740
      %1998 = vst.msk [vmem:[%s206 + $0x104] sm:$0xf] %vm1932, %v1741
      %1999 = vst.msk [vmem:[%s206 + $0x108] sm:$0xf] %vm1932, %v1742
      %2000 = vst.msk [vmem:[%s206 + $0x10c] sm:$0xf] %vm1932, %v1743
      %2001 = vst.msk [vmem:[%s206 + $0x110] sm:$0xf] %vm1932, %v1744
      %2002 = vst.msk [vmem:[%s206 + $0x114] sm:$0xf] %vm1932, %v1745
      %2003 = vst.msk [vmem:[%s206 + $0x118] sm:$0xf] %vm1932, %v1746
      %2004 = vst.msk [vmem:[%s206 + $0x11c] sm:$0xf] %vm1932, %v1747
      %2005 = vst.msk [vmem:[%s206 + $0x120] sm:$0xf] %vm1932, %v1748
      %2006 = vst.msk [vmem:[%s206 + $0x124] sm:$0xf] %vm1932, %v1749
      %2007 = vst.msk [vmem:[%s206 + $0x128] sm:$0xf] %vm1932, %v1750
      %2008 = vst.msk [vmem:[%s206 + $0x12c] sm:$0xf] %vm1932, %v1751
      %2009 = vst.msk [vmem:[%s206 + $0x130] sm:$0xf] %vm1932, %v1752
      %2010 = vst.msk [vmem:[%s206 + $0x134] sm:$0xf] %vm1932, %v1753
      %2011 = vst.msk [vmem:[%s206 + $0x138] sm:$0xf] %vm1932, %v1754
      %2012 = vst.msk [vmem:[%s206 + $0x13c] sm:$0xf] %vm1932, %v1755
      %2013 = vst.msk [vmem:[%s206 + $0x140] sm:$0xf] %vm1932, %v1756
      %2014 = vst.msk [vmem:[%s206 + $0x144] sm:$0xf] %vm1932, %v1757
      %2015 = vst.msk [vmem:[%s206 + $0x148] sm:$0xf] %vm1932, %v1758
      %2016 = vst.msk [vmem:[%s206 + $0x14c] sm:$0xf] %vm1932, %v1759
      %2017 = vst.msk [vmem:[%s206 + $0x150] sm:$0xf] %vm1932, %v1760
      %2018 = vst.msk [vmem:[%s206 + $0x154] sm:$0xf] %vm1932, %v1761
      %2019 = vst.msk [vmem:[%s206 + $0x158] sm:$0xf] %vm1932, %v1762
      %2020 = vst.msk [vmem:[%s206 + $0x15c] sm:$0xf] %vm1932, %v1763
      %2021 = vst.msk [vmem:[%s206 + $0x160] sm:$0xf] %vm1932, %v1764
      %2022 = vst.msk [vmem:[%s206 + $0x164] sm:$0xf] %vm1932, %v1765
      %2023 = vst.msk [vmem:[%s206 + $0x168] sm:$0xf] %vm1932, %v1766
      %2024 = vst.msk [vmem:[%s206 + $0x16c] sm:$0xf] %vm1932, %v1767
      %2025 = vst.msk [vmem:[%s206 + $0x170] sm:$0xf] %vm1932, %v1768
      %2026 = vst.msk [vmem:[%s206 + $0x174] sm:$0xf] %vm1932, %v1769
      %2027 = vst.msk [vmem:[%s206 + $0x178] sm:$0xf] %vm1932, %v1770
      %2028 = vst.msk [vmem:[%s206 + $0x17c] sm:$0xf] %vm1932, %v1771
      %2029 = vst.msk [vmem:[%s206 + $0x180] sm:$0xf] %vm1932, %v1772
      %2030 = vst.msk [vmem:[%s206 + $0x184] sm:$0xf] %vm1932, %v1773
      %2031 = vst.msk [vmem:[%s206 + $0x188] sm:$0xf] %vm1932, %v1774
      %2032 = vst.msk [vmem:[%s206 + $0x18c] sm:$0xf] %vm1932, %v1775
      %2033 = vst.msk [vmem:[%s206 + $0x190] sm:$0xf] %vm1932, %v1776
      %2034 = vst.msk [vmem:[%s206 + $0x194] sm:$0xf] %vm1932, %v1777
      %2035 = vst.msk [vmem:[%s206 + $0x198] sm:$0xf] %vm1932, %v1778
      %2036 = vst.msk [vmem:[%s206 + $0x19c] sm:$0xf] %vm1932, %v1779
      %2037 = vst.msk [vmem:[%s206 + $0x1a0] sm:$0xf] %vm1932, %v1780
      %2038 = vst.msk [vmem:[%s206 + $0x1a4] sm:$0xf] %vm1932, %v1781
      %2039 = vst.msk [vmem:[%s206 + $0x1a8] sm:$0xf] %vm1932, %v1782
      %2040 = vst.msk [vmem:[%s206 + $0x1ac] sm:$0xf] %vm1932, %v1783
      %2041 = vst.msk [vmem:[%s206 + $0x1b0] sm:$0xf] %vm1932, %v1784
      %2042 = vst.msk [vmem:[%s206 + $0x1b4] sm:$0xf] %vm1932, %v1785
      %2043 = vst.msk [vmem:[%s206 + $0x1b8] sm:$0xf] %vm1932, %v1786
      %2044 = vst.msk [vmem:[%s206 + $0x1bc] sm:$0xf] %vm1932, %v1787
      %2045 = vst.msk [vmem:[%s206 + $0x1c0] sm:$0xf] %vm1932, %v1788
      %2046 = vst.msk [vmem:[%s206 + $0x1c4] sm:$0xf] %vm1932, %v1789
      %2047 = vst.msk [vmem:[%s206 + $0x1c8] sm:$0xf] %vm1932, %v1790
      %2048 = vst.msk [vmem:[%s206 + $0x1cc] sm:$0xf] %vm1932, %v1791
      %2049 = vst.msk [vmem:[%s206 + $0x1d0] sm:$0xf] %vm1932, %v1792
      %2050 = vst.msk [vmem:[%s206 + $0x1d4] sm:$0xf] %vm1932, %v1793
      %2051 = vst.msk [vmem:[%s206 + $0x1d8] sm:$0xf] %vm1932, %v1794
      %2052 = vst.msk [vmem:[%s206 + $0x1dc] sm:$0xf] %vm1932, %v1795
      %2053 = vst.msk [vmem:[%s206 + $0x1e0] sm:$0xf] %vm1932, %v1796
      %2054 = vst.msk [vmem:[%s206 + $0x1e4] sm:$0xf] %vm1932, %v1797
      %2055 = vst.msk [vmem:[%s206 + $0x1e8] sm:$0xf] %vm1932, %v1798
      %2056 = vst.msk [vmem:[%s206 + $0x1ec] sm:$0xf] %vm1932, %v1799
      %2057 = vst.msk [vmem:[%s206 + $0x1f0] sm:$0xf] %vm1932, %v1800
      %2058 = vst.msk [vmem:[%s206 + $0x1f4] sm:$0xf] %vm1932, %v1801
      %2059 = vst.msk [vmem:[%s206 + $0x1f8] sm:$0xf] %vm1932, %v1802
      %2060 = vst.msk [vmem:[%s206 + $0x1fc] sm:$0xf] %vm1932, %v1803
      %vm2061 = vcmask 64512
      %v2062 = vsel %vm2061, %v910, 0.0
      %v2063 = vsel %vm2061, %v913, 0.0
      %v2064 = vadd.f32 %v2062, %v2063
      %v2065 = vsel %vm2061, %v918, 0.0
      %v2066 = vadd.f32 %v2064, %v2065
      %v2067 = vsel %vm2061, %v921, 0.0
      %v2068 = vadd.f32 %v2066, %v2067
      %v2069 = vsel %vm2061, %v926, 0.0
      %v2070 = vadd.f32 %v2068, %v2069
      %v2071 = vsel %vm2061, %v929, 0.0
      %v2072 = vadd.f32 %v2070, %v2071
      %v2073 = vsel %vm2061, %v934, 0.0
      %v2074 = vadd.f32 %v2072, %v2073
      %v2075 = vsel %vm2061, %v937, 0.0
      %v2076 = vadd.f32 %v2074, %v2075
      %v2077 = vsel %vm2061, %v942, 0.0
      %v2078 = vadd.f32 %v2076, %v2077
      %v2079 = vsel %vm2061, %v945, 0.0
      %v2080 = vadd.f32 %v2078, %v2079
      %v2081 = vsel %vm2061, %v950, 0.0
      %v2082 = vadd.f32 %v2080, %v2081
      %v2083 = vsel %vm2061, %v953, 0.0
      %v2084 = vadd.f32 %v2082, %v2083
      %v2085 = vsel %vm2061, %v958, 0.0
      %v2086 = vadd.f32 %v2084, %v2085
      %v2087 = vsel %vm2061, %v961, 0.0
      %v2088 = vadd.f32 %v2086, %v2087
      %v2089 = vsel %vm2061, %v966, 0.0
      %v2090 = vadd.f32 %v2088, %v2089
      %v2091 = vsel %vm2061, %v969, 0.0
      %v2092 = vadd.f32 %v2090, %v2091
      %v2093 = vsel %vm2061, %v974, 0.0
      %v2094 = vadd.f32 %v2092, %v2093
      %v2095 = vsel %vm2061, %v977, 0.0
      %v2096 = vadd.f32 %v2094, %v2095
      %v2097 = vsel %vm2061, %v982, 0.0
      %v2098 = vadd.f32 %v2096, %v2097
      %v2099 = vsel %vm2061, %v985, 0.0
      %v2100 = vadd.f32 %v2098, %v2099
      %v2101 = vsel %vm2061, %v990, 0.0
      %v2102 = vadd.f32 %v2100, %v2101
      %v2103 = vsel %vm2061, %v993, 0.0
      %v2104 = vadd.f32 %v2102, %v2103
      %v2105 = vsel %vm2061, %v998, 0.0
      %v2106 = vadd.f32 %v2104, %v2105
      %v2107 = vsel %vm2061, %v1001, 0.0
      %v2108 = vadd.f32 %v2106, %v2107
      %v2109 = vsel %vm2061, %v1006, 0.0
      %v2110 = vadd.f32 %v2108, %v2109
      %v2111 = vsel %vm2061, %v1009, 0.0
      %v2112 = vadd.f32 %v2110, %v2111
      %v2113 = vsel %vm2061, %v1014, 0.0
      %v2114 = vadd.f32 %v2112, %v2113
      %v2115 = vsel %vm2061, %v1017, 0.0
      %v2116 = vadd.f32 %v2114, %v2115
      %v2117 = vsel %vm2061, %v1022, 0.0
      %v2118 = vadd.f32 %v2116, %v2117
      %v2119 = vsel %vm2061, %v1025, 0.0
      %v2120 = vadd.f32 %v2118, %v2119
      %v2121 = vsel %vm2061, %v1030, 0.0
      %v2122 = vadd.f32 %v2120, %v2121
      %v2123 = vsel %vm2061, %v1033, 0.0
      %v2124 = vadd.f32 %v2122, %v2123
      %v2125 = vsel %vm2061, %v1038, 0.0
      %v2126 = vadd.f32 %v2124, %v2125
      %v2127 = vsel %vm2061, %v1041, 0.0
      %v2128 = vadd.f32 %v2126, %v2127
      %v2129 = vsel %vm2061, %v1046, 0.0
      %v2130 = vadd.f32 %v2128, %v2129
      %v2131 = vsel %vm2061, %v1049, 0.0
      %v2132 = vadd.f32 %v2130, %v2131
      %v2133 = vsel %vm2061, %v1054, 0.0
      %v2134 = vadd.f32 %v2132, %v2133
      %v2135 = vsel %vm2061, %v1057, 0.0
      %v2136 = vadd.f32 %v2134, %v2135
      %v2137 = vsel %vm2061, %v1062, 0.0
      %v2138 = vadd.f32 %v2136, %v2137
      %v2139 = vsel %vm2061, %v1065, 0.0
      %v2140 = vadd.f32 %v2138, %v2139
      %v2141 = vsel %vm2061, %v1070, 0.0
      %v2142 = vadd.f32 %v2140, %v2141
      %v2143 = vsel %vm2061, %v1073, 0.0
      %v2144 = vadd.f32 %v2142, %v2143
      %v2145 = vsel %vm2061, %v1078, 0.0
      %v2146 = vadd.f32 %v2144, %v2145
      %v2147 = vsel %vm2061, %v1081, 0.0
      %v2148 = vadd.f32 %v2146, %v2147
      %v2149 = vsel %vm2061, %v1086, 0.0
      %v2150 = vadd.f32 %v2148, %v2149
      %v2151 = vsel %vm2061, %v1089, 0.0
      %v2152 = vadd.f32 %v2150, %v2151
      %v2153 = vsel %vm2061, %v1094, 0.0
      %v2154 = vadd.f32 %v2152, %v2153
      %v2155 = vsel %vm2061, %v1097, 0.0
      %v2156 = vadd.f32 %v2154, %v2155
      %v2157 = vsel %vm2061, %v1102, 0.0
      %v2158 = vadd.f32 %v2156, %v2157
      %v2159 = vsel %vm2061, %v1105, 0.0
      %v2160 = vadd.f32 %v2158, %v2159
      %v2161 = vsel %vm2061, %v1110, 0.0
      %v2162 = vadd.f32 %v2160, %v2161
      %v2163 = vsel %vm2061, %v1113, 0.0
      %v2164 = vadd.f32 %v2162, %v2163
      %v2165 = vsel %vm2061, %v1118, 0.0
      %v2166 = vadd.f32 %v2164, %v2165
      %v2167 = vsel %vm2061, %v1121, 0.0
      %v2168 = vadd.f32 %v2166, %v2167
      %v2169 = vsel %vm2061, %v1126, 0.0
      %v2170 = vadd.f32 %v2168, %v2169
      %v2171 = vsel %vm2061, %v1129, 0.0
      %v2172 = vadd.f32 %v2170, %v2171
      %v2173 = vsel %vm2061, %v1134, 0.0
      %v2174 = vadd.f32 %v2172, %v2173
      %v2175 = vsel %vm2061, %v1137, 0.0
      %v2176 = vadd.f32 %v2174, %v2175
      %v2177 = vsel %vm2061, %v1142, 0.0
      %v2178 = vadd.f32 %v2176, %v2177
      %v2179 = vsel %vm2061, %v1145, 0.0
      %v2180 = vadd.f32 %v2178, %v2179
      %v2181 = vsel %vm2061, %v1150, 0.0
      %v2182 = vadd.f32 %v2180, %v2181
      %v2183 = vsel %vm2061, %v1153, 0.0
      %v2184 = vadd.f32 %v2182, %v2183
      %v2185 = vsel %vm2061, %v1158, 0.0
      %v2186 = vadd.f32 %v2184, %v2185
      %v2187 = vsel %vm2061, %v1161, 0.0
      %v2188 = vadd.f32 %v2186, %v2187
      %v2189 = vsel %vm2061, %v1166, 0.0
      %v2190 = vadd.f32 %v2188, %v2189
      %v2191 = vsel %vm2061, %v1169, 0.0
      %v2192 = vadd.f32 %v2190, %v2191
      %v2193 = vsel %vm2061, %v1174, 0.0
      %v2194 = vadd.f32 %v2192, %v2193
      %v2195 = vsel %vm2061, %v1177, 0.0
      %v2196 = vadd.f32 %v2194, %v2195
      %v2197 = vsel %vm2061, %v1182, 0.0
      %v2198 = vadd.f32 %v2196, %v2197
      %v2199 = vsel %vm2061, %v1185, 0.0
      %v2200 = vadd.f32 %v2198, %v2199
      %v2201 = vsel %vm2061, %v1190, 0.0
      %v2202 = vadd.f32 %v2200, %v2201
      %v2203 = vsel %vm2061, %v1193, 0.0
      %v2204 = vadd.f32 %v2202, %v2203
      %v2205 = vsel %vm2061, %v1198, 0.0
      %v2206 = vadd.f32 %v2204, %v2205
      %v2207 = vsel %vm2061, %v1201, 0.0
      %v2208 = vadd.f32 %v2206, %v2207
      %v2209 = vsel %vm2061, %v1206, 0.0
      %v2210 = vadd.f32 %v2208, %v2209
      %v2211 = vsel %vm2061, %v1209, 0.0
      %v2212 = vadd.f32 %v2210, %v2211
      %v2213 = vsel %vm2061, %v1214, 0.0
      %v2214 = vadd.f32 %v2212, %v2213
      %v2215 = vsel %vm2061, %v1217, 0.0
      %v2216 = vadd.f32 %v2214, %v2215
      %v2217 = vsel %vm2061, %v1222, 0.0
      %v2218 = vadd.f32 %v2216, %v2217
      %v2219 = vsel %vm2061, %v1225, 0.0
      %v2220 = vadd.f32 %v2218, %v2219
      %v2221 = vsel %vm2061, %v1230, 0.0
      %v2222 = vadd.f32 %v2220, %v2221
      %v2223 = vsel %vm2061, %v1233, 0.0
      %v2224 = vadd.f32 %v2222, %v2223
      %v2225 = vsel %vm2061, %v1238, 0.0
      %v2226 = vadd.f32 %v2224, %v2225
      %v2227 = vsel %vm2061, %v1241, 0.0
      %v2228 = vadd.f32 %v2226, %v2227
      %v2229 = vsel %vm2061, %v1246, 0.0
      %v2230 = vadd.f32 %v2228, %v2229
      %v2231 = vsel %vm2061, %v1249, 0.0
      %v2232 = vadd.f32 %v2230, %v2231
      %v2233 = vsel %vm2061, %v1254, 0.0
      %v2234 = vadd.f32 %v2232, %v2233
      %v2235 = vsel %vm2061, %v1257, 0.0
      %v2236 = vadd.f32 %v2234, %v2235
      %v2237 = vsel %vm2061, %v1262, 0.0
      %v2238 = vadd.f32 %v2236, %v2237
      %v2239 = vsel %vm2061, %v1265, 0.0
      %v2240 = vadd.f32 %v2238, %v2239
      %v2241 = vsel %vm2061, %v1270, 0.0
      %v2242 = vadd.f32 %v2240, %v2241
      %v2243 = vsel %vm2061, %v1273, 0.0
      %v2244 = vadd.f32 %v2242, %v2243
      %v2245 = vsel %vm2061, %v1278, 0.0
      %v2246 = vadd.f32 %v2244, %v2245
      %v2247 = vsel %vm2061, %v1281, 0.0
      %v2248 = vadd.f32 %v2246, %v2247
      %v2249 = vsel %vm2061, %v1286, 0.0
      %v2250 = vadd.f32 %v2248, %v2249
      %v2251 = vsel %vm2061, %v1289, 0.0
      %v2252 = vadd.f32 %v2250, %v2251
      %v2253 = vsel %vm2061, %v1294, 0.0
      %v2254 = vadd.f32 %v2252, %v2253
      %v2255 = vsel %vm2061, %v1297, 0.0
      %v2256 = vadd.f32 %v2254, %v2255
      %v2257 = vsel %vm2061, %v1302, 0.0
      %v2258 = vadd.f32 %v2256, %v2257
      %v2259 = vsel %vm2061, %v1305, 0.0
      %v2260 = vadd.f32 %v2258, %v2259
      %v2261 = vsel %vm2061, %v1310, 0.0
      %v2262 = vadd.f32 %v2260, %v2261
      %v2263 = vsel %vm2061, %v1313, 0.0
      %v2264 = vadd.f32 %v2262, %v2263
      %v2265 = vsel %vm2061, %v1318, 0.0
      %v2266 = vadd.f32 %v2264, %v2265
      %v2267 = vsel %vm2061, %v1321, 0.0
      %v2268 = vadd.f32 %v2266, %v2267
      %v2269 = vsel %vm2061, %v1326, 0.0
      %v2270 = vadd.f32 %v2268, %v2269
      %v2271 = vsel %vm2061, %v1329, 0.0
      %v2272 = vadd.f32 %v2270, %v2271
      %v2273 = vsel %vm2061, %v1334, 0.0
      %v2274 = vadd.f32 %v2272, %v2273
      %v2275 = vsel %vm2061, %v1337, 0.0
      %v2276 = vadd.f32 %v2274, %v2275
      %v2277 = vsel %vm2061, %v1342, 0.0
      %v2278 = vadd.f32 %v2276, %v2277
      %v2279 = vsel %vm2061, %v1345, 0.0
      %v2280 = vadd.f32 %v2278, %v2279
      %v2281 = vsel %vm2061, %v1350, 0.0
      %v2282 = vadd.f32 %v2280, %v2281
      %v2283 = vsel %vm2061, %v1353, 0.0
      %v2284 = vadd.f32 %v2282, %v2283
      %v2285 = vsel %vm2061, %v1358, 0.0
      %v2286 = vadd.f32 %v2284, %v2285
      %v2287 = vsel %vm2061, %v1361, 0.0
      %v2288 = vadd.f32 %v2286, %v2287
      %v2289 = vsel %vm2061, %v1366, 0.0
      %v2290 = vadd.f32 %v2288, %v2289
      %v2291 = vsel %vm2061, %v1369, 0.0
      %v2292 = vadd.f32 %v2290, %v2291
      %v2293 = vsel %vm2061, %v1374, 0.0
      %v2294 = vadd.f32 %v2292, %v2293
      %v2295 = vsel %vm2061, %v1377, 0.0
      %v2296 = vadd.f32 %v2294, %v2295
      %v2297 = vsel %vm2061, %v1382, 0.0
      %v2298 = vadd.f32 %v2296, %v2297
      %v2299 = vsel %vm2061, %v1385, 0.0
      %v2300 = vadd.f32 %v2298, %v2299
      %v2301 = vsel %vm2061, %v1390, 0.0
      %v2302 = vadd.f32 %v2300, %v2301
      %v2303 = vsel %vm2061, %v1393, 0.0
      %v2304 = vadd.f32 %v2302, %v2303
      %v2305 = vsel %vm2061, %v1398, 0.0
      %v2306 = vadd.f32 %v2304, %v2305
      %v2307 = vsel %vm2061, %v1401, 0.0
      %v2308 = vadd.f32 %v2306, %v2307
      %v2309 = vsel %vm2061, %v1406, 0.0
      %v2310 = vadd.f32 %v2308, %v2309
      %v2311 = vsel %vm2061, %v1409, 0.0
      %v2312 = vadd.f32 %v2310, %v2311
      %v2313 = vsel %vm2061, %v1414, 0.0
      %v2314 = vadd.f32 %v2312, %v2313
      %v2315 = vsel %vm2061, %v1417, 0.0
      %v2316 = vadd.f32 %v2314, %v2315
      %v2317 = vrot.slane %v2316, 4
      %v2318 = vadd.f32 %v2316, %v2317
      %v2319 = vrot.slane %v2318, 2
      %v2320 = vadd.f32 %v2318, %v2319
      %v2321 = vrot.slane %v2320, 1
      %v2322 = vadd.f32 %v2320, %v2321
      %v2323 = vmul.f32 %v910, %v910
      %v2324 = vmul.f32 %v913, %v913
      %v2325 = vmul.f32 %v918, %v918
      %v2326 = vmul.f32 %v921, %v921
      %v2327 = vmul.f32 %v926, %v926
      %v2328 = vmul.f32 %v929, %v929
      %v2329 = vmul.f32 %v934, %v934
      %v2330 = vmul.f32 %v937, %v937
      %v2331 = vmul.f32 %v942, %v942
      %v2332 = vmul.f32 %v945, %v945
      %v2333 = vmul.f32 %v950, %v950
      %v2334 = vmul.f32 %v953, %v953
      %v2335 = vmul.f32 %v958, %v958
      %v2336 = vmul.f32 %v961, %v961
      %v2337 = vmul.f32 %v966, %v966
      %v2338 = vmul.f32 %v969, %v969
      %v2339 = vmul.f32 %v974, %v974
      %v2340 = vmul.f32 %v977, %v977
      %v2341 = vmul.f32 %v982, %v982
      %v2342 = vmul.f32 %v985, %v985
      %v2343 = vmul.f32 %v990, %v990
      %v2344 = vmul.f32 %v993, %v993
      %v2345 = vmul.f32 %v998, %v998
      %v2346 = vmul.f32 %v1001, %v1001
      %v2347 = vmul.f32 %v1006, %v1006
      %v2348 = vmul.f32 %v1009, %v1009
      %v2349 = vmul.f32 %v1014, %v1014
      %v2350 = vmul.f32 %v1017, %v1017
      %v2351 = vmul.f32 %v1022, %v1022
      %v2352 = vmul.f32 %v1025, %v1025
      %v2353 = vmul.f32 %v1030, %v1030
      %v2354 = vmul.f32 %v1033, %v1033
      %v2355 = vmul.f32 %v1038, %v1038
      %v2356 = vmul.f32 %v1041, %v1041
      %v2357 = vmul.f32 %v1046, %v1046
      %v2358 = vmul.f32 %v1049, %v1049
      %v2359 = vmul.f32 %v1054, %v1054
      %v2360 = vmul.f32 %v1057, %v1057
      %v2361 = vmul.f32 %v1062, %v1062
      %v2362 = vmul.f32 %v1065, %v1065
      %v2363 = vmul.f32 %v1070, %v1070
      %v2364 = vmul.f32 %v1073, %v1073
      %v2365 = vmul.f32 %v1078, %v1078
      %v2366 = vmul.f32 %v1081, %v1081
      %v2367 = vmul.f32 %v1086, %v1086
      %v2368 = vmul.f32 %v1089, %v1089
      %v2369 = vmul.f32 %v1094, %v1094
      %v2370 = vmul.f32 %v1097, %v1097
      %v2371 = vmul.f32 %v1102, %v1102
      %v2372 = vmul.f32 %v1105, %v1105
      %v2373 = vmul.f32 %v1110, %v1110
      %v2374 = vmul.f32 %v1113, %v1113
      %v2375 = vmul.f32 %v1118, %v1118
      %v2376 = vmul.f32 %v1121, %v1121
      %v2377 = vmul.f32 %v1126, %v1126
      %v2378 = vmul.f32 %v1129, %v1129
      %v2379 = vmul.f32 %v1134, %v1134
      %v2380 = vmul.f32 %v1137, %v1137
      %v2381 = vmul.f32 %v1142, %v1142
      %v2382 = vmul.f32 %v1145, %v1145
      %v2383 = vmul.f32 %v1150, %v1150
      %v2384 = vmul.f32 %v1153, %v1153
      %v2385 = vmul.f32 %v1158, %v1158
      %v2386 = vmul.f32 %v1161, %v1161
      %v2387 = vmul.f32 %v1166, %v1166
      %v2388 = vmul.f32 %v1169, %v1169
      %v2389 = vmul.f32 %v1174, %v1174
      %v2390 = vmul.f32 %v1177, %v1177
      %v2391 = vmul.f32 %v1182, %v1182
      %v2392 = vmul.f32 %v1185, %v1185
      %v2393 = vmul.f32 %v1190, %v1190
      %v2394 = vmul.f32 %v1193, %v1193
      %v2395 = vmul.f32 %v1198, %v1198
      %v2396 = vmul.f32 %v1201, %v1201
      %v2397 = vmul.f32 %v1206, %v1206
      %v2398 = vmul.f32 %v1209, %v1209
      %v2399 = vmul.f32 %v1214, %v1214
      %v2400 = vmul.f32 %v1217, %v1217
      %v2401 = vmul.f32 %v1222, %v1222
      %v2402 = vmul.f32 %v1225, %v1225
      %v2403 = vmul.f32 %v1230, %v1230
      %v2404 = vmul.f32 %v1233, %v1233
      %v2405 = vmul.f32 %v1238, %v1238
      %v2406 = vmul.f32 %v1241, %v1241
      %v2407 = vmul.f32 %v1246, %v1246
      %v2408 = vmul.f32 %v1249, %v1249
      %v2409 = vmul.f32 %v1254, %v1254
      %v2410 = vmul.f32 %v1257, %v1257
      %v2411 = vmul.f32 %v1262, %v1262
      %v2412 = vmul.f32 %v1265, %v1265
      %v2413 = vmul.f32 %v1270, %v1270
      %v2414 = vmul.f32 %v1273, %v1273
      %v2415 = vmul.f32 %v1278, %v1278
      %v2416 = vmul.f32 %v1281, %v1281
      %v2417 = vmul.f32 %v1286, %v1286
      %v2418 = vmul.f32 %v1289, %v1289
      %v2419 = vmul.f32 %v1294, %v1294
      %v2420 = vmul.f32 %v1297, %v1297
      %v2421 = vmul.f32 %v1302, %v1302
      %v2422 = vmul.f32 %v1305, %v1305
      %v2423 = vmul.f32 %v1310, %v1310
      %v2424 = vmul.f32 %v1313, %v1313
      %v2425 = vmul.f32 %v1318, %v1318
      %v2426 = vmul.f32 %v1321, %v1321
      %v2427 = vmul.f32 %v1326, %v1326
      %v2428 = vmul.f32 %v1329, %v1329
      %v2429 = vmul.f32 %v1334, %v1334
      %v2430 = vmul.f32 %v1337, %v1337
      %v2431 = vmul.f32 %v1342, %v1342
      %v2432 = vmul.f32 %v1345, %v1345
      %v2433 = vmul.f32 %v1350, %v1350
      %v2434 = vmul.f32 %v1353, %v1353
      %v2435 = vmul.f32 %v1358, %v1358
      %v2436 = vmul.f32 %v1361, %v1361
      %v2437 = vmul.f32 %v1366, %v1366
      %v2438 = vmul.f32 %v1369, %v1369
      %v2439 = vmul.f32 %v1374, %v1374
      %v2440 = vmul.f32 %v1377, %v1377
      %v2441 = vmul.f32 %v1382, %v1382
      %v2442 = vmul.f32 %v1385, %v1385
      %v2443 = vmul.f32 %v1390, %v1390
      %v2444 = vmul.f32 %v1393, %v1393
      %v2445 = vmul.f32 %v1398, %v1398
      %v2446 = vmul.f32 %v1401, %v1401
      %v2447 = vmul.f32 %v1406, %v1406
      %v2448 = vmul.f32 %v1409, %v1409
      %v2449 = vmul.f32 %v1414, %v1414
      %v2450 = vmul.f32 %v1417, %v1417
      %v2451 = vsel %vm2061, %v2323, 0.0
      %v2452 = vsel %vm2061, %v2324, 0.0
      %v2453 = vadd.f32 %v2451, %v2452
      %v2454 = vsel %vm2061, %v2325, 0.0
      %v2455 = vadd.f32 %v2453, %v2454
      %v2456 = vsel %vm2061, %v2326, 0.0
      %v2457 = vadd.f32 %v2455, %v2456
      %v2458 = vsel %vm2061, %v2327, 0.0
      %v2459 = vadd.f32 %v2457, %v2458
      %v2460 = vsel %vm2061, %v2328, 0.0
      %v2461 = vadd.f32 %v2459, %v2460
      %v2462 = vsel %vm2061, %v2329, 0.0
      %v2463 = vadd.f32 %v2461, %v2462
      %v2464 = vsel %vm2061, %v2330, 0.0
      %v2465 = vadd.f32 %v2463, %v2464
      %v2466 = vsel %vm2061, %v2331, 0.0
      %v2467 = vadd.f32 %v2465, %v2466
      %v2468 = vsel %vm2061, %v2332, 0.0
      %v2469 = vadd.f32 %v2467, %v2468
      %v2470 = vsel %vm2061, %v2333, 0.0
      %v2471 = vadd.f32 %v2469, %v2470
      %v2472 = vsel %vm2061, %v2334, 0.0
      %v2473 = vadd.f32 %v2471, %v2472
      %v2474 = vsel %vm2061, %v2335, 0.0
      %v2475 = vadd.f32 %v2473, %v2474
      %v2476 = vsel %vm2061, %v2336, 0.0
      %v2477 = vadd.f32 %v2475, %v2476
      %v2478 = vsel %vm2061, %v2337, 0.0
      %v2479 = vadd.f32 %v2477, %v2478
      %v2480 = vsel %vm2061, %v2338, 0.0
      %v2481 = vadd.f32 %v2479, %v2480
      %v2482 = vsel %vm2061, %v2339, 0.0
      %v2483 = vadd.f32 %v2481, %v2482
      %v2484 = vsel %vm2061, %v2340, 0.0
      %v2485 = vadd.f32 %v2483, %v2484
      %v2486 = vsel %vm2061, %v2341, 0.0
      %v2487 = vadd.f32 %v2485, %v2486
      %v2488 = vsel %vm2061, %v2342, 0.0
      %v2489 = vadd.f32 %v2487, %v2488
      %v2490 = vsel %vm2061, %v2343, 0.0
      %v2491 = vadd.f32 %v2489, %v2490
      %v2492 = vsel %vm2061, %v2344, 0.0
      %v2493 = vadd.f32 %v2491, %v2492
      %v2494 = vsel %vm2061, %v2345, 0.0
      %v2495 = vadd.f32 %v2493, %v2494
      %v2496 = vsel %vm2061, %v2346, 0.0
      %v2497 = vadd.f32 %v2495, %v2496
      %v2498 = vsel %vm2061, %v2347, 0.0
      %v2499 = vadd.f32 %v2497, %v2498
      %v2500 = vsel %vm2061, %v2348, 0.0
      %v2501 = vadd.f32 %v2499, %v2500
      %v2502 = vsel %vm2061, %v2349, 0.0
      %v2503 = vadd.f32 %v2501, %v2502
      %v2504 = vsel %vm2061, %v2350, 0.0
      %v2505 = vadd.f32 %v2503, %v2504
      %v2506 = vsel %vm2061, %v2351, 0.0
      %v2507 = vadd.f32 %v2505, %v2506
      %v2508 = vsel %vm2061, %v2352, 0.0
      %v2509 = vadd.f32 %v2507, %v2508
      %v2510 = vsel %vm2061, %v2353, 0.0
      %v2511 = vadd.f32 %v2509, %v2510
      %v2512 = vsel %vm2061, %v2354, 0.0
      %v2513 = vadd.f32 %v2511, %v2512
      %v2514 = vsel %vm2061, %v2355, 0.0
      %v2515 = vadd.f32 %v2513, %v2514
      %v2516 = vsel %vm2061, %v2356, 0.0
      %v2517 = vadd.f32 %v2515, %v2516
      %v2518 = vsel %vm2061, %v2357, 0.0
      %v2519 = vadd.f32 %v2517, %v2518
      %v2520 = vsel %vm2061, %v2358, 0.0
      %v2521 = vadd.f32 %v2519, %v2520
      %v2522 = vsel %vm2061, %v2359, 0.0
      %v2523 = vadd.f32 %v2521, %v2522
      %v2524 = vsel %vm2061, %v2360, 0.0
      %v2525 = vadd.f32 %v2523, %v2524
      %v2526 = vsel %vm2061, %v2361, 0.0
      %v2527 = vadd.f32 %v2525, %v2526
      %v2528 = vsel %vm2061, %v2362, 0.0
      %v2529 = vadd.f32 %v2527, %v2528
      %v2530 = vsel %vm2061, %v2363, 0.0
      %v2531 = vadd.f32 %v2529, %v2530
      %v2532 = vsel %vm2061, %v2364, 0.0
      %v2533 = vadd.f32 %v2531, %v2532
      %v2534 = vsel %vm2061, %v2365, 0.0
      %v2535 = vadd.f32 %v2533, %v2534
      %v2536 = vsel %vm2061, %v2366, 0.0
      %v2537 = vadd.f32 %v2535, %v2536
      %v2538 = vsel %vm2061, %v2367, 0.0
      %v2539 = vadd.f32 %v2537, %v2538
      %v2540 = vsel %vm2061, %v2368, 0.0
      %v2541 = vadd.f32 %v2539, %v2540
      %v2542 = vsel %vm2061, %v2369, 0.0
      %v2543 = vadd.f32 %v2541, %v2542
      %v2544 = vsel %vm2061, %v2370, 0.0
      %v2545 = vadd.f32 %v2543, %v2544
      %v2546 = vsel %vm2061, %v2371, 0.0
      %v2547 = vadd.f32 %v2545, %v2546
      %v2548 = vsel %vm2061, %v2372, 0.0
      %v2549 = vadd.f32 %v2547, %v2548
      %v2550 = vsel %vm2061, %v2373, 0.0
      %v2551 = vadd.f32 %v2549, %v2550
      %v2552 = vsel %vm2061, %v2374, 0.0
      %v2553 = vadd.f32 %v2551, %v2552
      %v2554 = vsel %vm2061, %v2375, 0.0
      %v2555 = vadd.f32 %v2553, %v2554
      %v2556 = vsel %vm2061, %v2376, 0.0
      %v2557 = vadd.f32 %v2555, %v2556
      %v2558 = vsel %vm2061, %v2377, 0.0
      %v2559 = vadd.f32 %v2557, %v2558
      %v2560 = vsel %vm2061, %v2378, 0.0
      %v2561 = vadd.f32 %v2559, %v2560
      %v2562 = vsel %vm2061, %v2379, 0.0
      %v2563 = vadd.f32 %v2561, %v2562
      %v2564 = vsel %vm2061, %v2380, 0.0
      %v2565 = vadd.f32 %v2563, %v2564
      %v2566 = vsel %vm2061, %v2381, 0.0
      %v2567 = vadd.f32 %v2565, %v2566
      %v2568 = vsel %vm2061, %v2382, 0.0
      %v2569 = vadd.f32 %v2567, %v2568
      %v2570 = vsel %vm2061, %v2383, 0.0
      %v2571 = vadd.f32 %v2569, %v2570
      %v2572 = vsel %vm2061, %v2384, 0.0
      %v2573 = vadd.f32 %v2571, %v2572
      %v2574 = vsel %vm2061, %v2385, 0.0
      %v2575 = vadd.f32 %v2573, %v2574
      %v2576 = vsel %vm2061, %v2386, 0.0
      %v2577 = vadd.f32 %v2575, %v2576
      %v2578 = vsel %vm2061, %v2387, 0.0
      %v2579 = vadd.f32 %v2577, %v2578
      %v2580 = vsel %vm2061, %v2388, 0.0
      %v2581 = vadd.f32 %v2579, %v2580
      %v2582 = vsel %vm2061, %v2389, 0.0
      %v2583 = vadd.f32 %v2581, %v2582
      %v2584 = vsel %vm2061, %v2390, 0.0
      %v2585 = vadd.f32 %v2583, %v2584
      %v2586 = vsel %vm2061, %v2391, 0.0
      %v2587 = vadd.f32 %v2585, %v2586
      %v2588 = vsel %vm2061, %v2392, 0.0
      %v2589 = vadd.f32 %v2587, %v2588
      %v2590 = vsel %vm2061, %v2393, 0.0
      %v2591 = vadd.f32 %v2589, %v2590
      %v2592 = vsel %vm2061, %v2394, 0.0
      %v2593 = vadd.f32 %v2591, %v2592
      %v2594 = vsel %vm2061, %v2395, 0.0
      %v2595 = vadd.f32 %v2593, %v2594
      %v2596 = vsel %vm2061, %v2396, 0.0
      %v2597 = vadd.f32 %v2595, %v2596
      %v2598 = vsel %vm2061, %v2397, 0.0
      %v2599 = vadd.f32 %v2597, %v2598
      %v2600 = vsel %vm2061, %v2398, 0.0
      %v2601 = vadd.f32 %v2599, %v2600
      %v2602 = vsel %vm2061, %v2399, 0.0
      %v2603 = vadd.f32 %v2601, %v2602
      %v2604 = vsel %vm2061, %v2400, 0.0
      %v2605 = vadd.f32 %v2603, %v2604
      %v2606 = vsel %vm2061, %v2401, 0.0
      %v2607 = vadd.f32 %v2605, %v2606
      %v2608 = vsel %vm2061, %v2402, 0.0
      %v2609 = vadd.f32 %v2607, %v2608
      %v2610 = vsel %vm2061, %v2403, 0.0
      %v2611 = vadd.f32 %v2609, %v2610
      %v2612 = vsel %vm2061, %v2404, 0.0
      %v2613 = vadd.f32 %v2611, %v2612
      %v2614 = vsel %vm2061, %v2405, 0.0
      %v2615 = vadd.f32 %v2613, %v2614
      %v2616 = vsel %vm2061, %v2406, 0.0
      %v2617 = vadd.f32 %v2615, %v2616
      %v2618 = vsel %vm2061, %v2407, 0.0
      %v2619 = vadd.f32 %v2617, %v2618
      %v2620 = vsel %vm2061, %v2408, 0.0
      %v2621 = vadd.f32 %v2619, %v2620
      %v2622 = vsel %vm2061, %v2409, 0.0
      %v2623 = vadd.f32 %v2621, %v2622
      %v2624 = vsel %vm2061, %v2410, 0.0
      %v2625 = vadd.f32 %v2623, %v2624
      %v2626 = vsel %vm2061, %v2411, 0.0
      %v2627 = vadd.f32 %v2625, %v2626
      %v2628 = vsel %vm2061, %v2412, 0.0
      %v2629 = vadd.f32 %v2627, %v2628
      %v2630 = vsel %vm2061, %v2413, 0.0
      %v2631 = vadd.f32 %v2629, %v2630
      %v2632 = vsel %vm2061, %v2414, 0.0
      %v2633 = vadd.f32 %v2631, %v2632
      %v2634 = vsel %vm2061, %v2415, 0.0
      %v2635 = vadd.f32 %v2633, %v2634
      %v2636 = vsel %vm2061, %v2416, 0.0
      %v2637 = vadd.f32 %v2635, %v2636
      %v2638 = vsel %vm2061, %v2417, 0.0
      %v2639 = vadd.f32 %v2637, %v2638
      %v2640 = vsel %vm2061, %v2418, 0.0
      %v2641 = vadd.f32 %v2639, %v2640
      %v2642 = vsel %vm2061, %v2419, 0.0
      %v2643 = vadd.f32 %v2641, %v2642
      %v2644 = vsel %vm2061, %v2420, 0.0
      %v2645 = vadd.f32 %v2643, %v2644
      %v2646 = vsel %vm2061, %v2421, 0.0
      %v2647 = vadd.f32 %v2645, %v2646
      %v2648 = vsel %vm2061, %v2422, 0.0
      %v2649 = vadd.f32 %v2647, %v2648
      %v2650 = vsel %vm2061, %v2423, 0.0
      %v2651 = vadd.f32 %v2649, %v2650
      %v2652 = vsel %vm2061, %v2424, 0.0
      %v2653 = vadd.f32 %v2651, %v2652
      %v2654 = vsel %vm2061, %v2425, 0.0
      %v2655 = vadd.f32 %v2653, %v2654
      %v2656 = vsel %vm2061, %v2426, 0.0
      %v2657 = vadd.f32 %v2655, %v2656
      %v2658 = vsel %vm2061, %v2427, 0.0
      %v2659 = vadd.f32 %v2657, %v2658
      %v2660 = vsel %vm2061, %v2428, 0.0
      %v2661 = vadd.f32 %v2659, %v2660
      %v2662 = vsel %vm2061, %v2429, 0.0
      %v2663 = vadd.f32 %v2661, %v2662
      %v2664 = vsel %vm2061, %v2430, 0.0
      %v2665 = vadd.f32 %v2663, %v2664
      %v2666 = vsel %vm2061, %v2431, 0.0
      %v2667 = vadd.f32 %v2665, %v2666
      %v2668 = vsel %vm2061, %v2432, 0.0
      %v2669 = vadd.f32 %v2667, %v2668
      %v2670 = vsel %vm2061, %v2433, 0.0
      %v2671 = vadd.f32 %v2669, %v2670
      %v2672 = vsel %vm2061, %v2434, 0.0
      %v2673 = vadd.f32 %v2671, %v2672
      %v2674 = vsel %vm2061, %v2435, 0.0
      %v2675 = vadd.f32 %v2673, %v2674
      %v2676 = vsel %vm2061, %v2436, 0.0
      %v2677 = vadd.f32 %v2675, %v2676
      %v2678 = vsel %vm2061, %v2437, 0.0
      %v2679 = vadd.f32 %v2677, %v2678
      %v2680 = vsel %vm2061, %v2438, 0.0
      %v2681 = vadd.f32 %v2679, %v2680
      %v2682 = vsel %vm2061, %v2439, 0.0
      %v2683 = vadd.f32 %v2681, %v2682
      %v2684 = vsel %vm2061, %v2440, 0.0
      %v2685 = vadd.f32 %v2683, %v2684
      %v2686 = vsel %vm2061, %v2441, 0.0
      %v2687 = vadd.f32 %v2685, %v2686
      %v2688 = vsel %vm2061, %v2442, 0.0
      %v2689 = vadd.f32 %v2687, %v2688
      %v2690 = vsel %vm2061, %v2443, 0.0
      %v2691 = vadd.f32 %v2689, %v2690
      %v2692 = vsel %vm2061, %v2444, 0.0
      %v2693 = vadd.f32 %v2691, %v2692
      %v2694 = vsel %vm2061, %v2445, 0.0
      %v2695 = vadd.f32 %v2693, %v2694
      %v2696 = vsel %vm2061, %v2446, 0.0
      %v2697 = vadd.f32 %v2695, %v2696
      %v2698 = vsel %vm2061, %v2447, 0.0
      %v2699 = vadd.f32 %v2697, %v2698
      %v2700 = vsel %vm2061, %v2448, 0.0
      %v2701 = vadd.f32 %v2699, %v2700
      %v2702 = vsel %vm2061, %v2449, 0.0
      %v2703 = vadd.f32 %v2701, %v2702
      %v2704 = vsel %vm2061, %v2450, 0.0
      %v2705 = vadd.f32 %v2703, %v2704
      %v2706 = vrot.slane %v2705, 4
      %v2707 = vadd.f32 %v2705, %v2706
      %v2708 = vrot.slane %v2707, 2
      %v2709 = vadd.f32 %v2707, %v2708
      %v2710 = vrot.slane %v2709, 1
      %v2711 = vadd.f32 %v2709, %v2710
      %v2712 = vlaneseq
      %v2713 = vshrl.u32 %v2712, 7
      %vm2714 = vcmp.eq.s32.totalorder %v2713, 0
      %v2715 = vsel %vm2714, %v2322, 0.0
      %vm2716 = vcmp.eq.s32.totalorder %v2713, 1
      %v2717 = vsel %vm2716, %v2711, 0.0
      %v2718 = vadd.f32 %v2715, %v2717
      %2719 = vst.msk [vmem:[%s211] sm:$0xff] %vm2061, %v2718
      %s2720 = smul.u32 128, %s16
      %p2721 = scmp.lt.s32.totalorder %s2720, 255
      %s2722 = scalar_select %p2721, %s2720, 255
      %s2723 = smul.addr %s2722, 4
      %s2724 = scalar_lea.vmem %s3, %s2723
      %p2725 = scmp.lt.s32.totalorder %s16, 1
      %s2726 = scalar_select %p2725, %s16, 1
      %s2727 = smul.addr %s2726, 8
      %s2728 = scalar_lea.vmem %s4, %s2727
      // Predicated region
      $region33: #{cvae_forward.10} parent=31 // pred_check
        %p2729 = pneg %p102
      $region34: #{cvae_forward.10} parent=31 // pred_check_branch
        %2731 = sbr.rel (%p2729) target = $region36
      $region35: #{cvae_forward.10} parent=31 // pred_region
        %s2732 = smul.u32 128, %s16
      $region36: #{cvae_forward.10} parent=31 // pred_fallthru
        _
      // Predicated region
      $region37: #{cvae_forward.10} parent=31 // pred_check
        %p2733 = pneg %p128
      $region38: #{cvae_forward.10} parent=31 // pred_check_branch
        %2735 = sbr.rel (%p2733) target = $region40
      $region39: #{cvae_forward.10} parent=31 // pred_region
        _
      $region40: #{cvae_forward.10} parent=31 // pred_fallthru
        _
    $region32: #{cvae_forward.10} parent=5 // pred_fallthru
      _
    %p2736 = scmp.le.s32.totalorder 2, %s11
    // Predicated region
    $region41: #{cvae_forward.10} parent=5 // pred_check
      %p2737 = pneg %p2736
    $region42: #{cvae_forward.10} parent=5 // pred_check_branch
      %2739 = sbr.rel (%p2737) target = $region44
    $region43: #{cvae_forward.10} parent=5 // pred_region
      %s2740 = ssub.s32 %s11, 2
      // Predicated region
      $region45: #{cvae_forward.10} parent=43 // pred_check
        %p2741 = pneg %p108
      $region46: #{cvae_forward.10} parent=43 // pred_check_branch
        %2743 = sbr.rel (%p2741) target = $region48
      $region47: #{cvae_forward.10} parent=43 // pred_region
        %s2744 = smul.u32 128, %s17
        %p2745 = scmp.lt.s32.totalorder %s2744, 255
        %s2746 = scalar_select %p2745, %s2744, 255
        %s2747 = smul.addr %s2746, 4
        %s2748 = scalar_lea.vmem %s3, %s2747
      $region48: #{cvae_forward.10} parent=43 // pred_fallthru
        _
      // Predicated region
      $region49: #{cvae_forward.10} parent=43 // pred_check
        %p2749 = pneg %p134
      $region50: #{cvae_forward.10} parent=43 // pred_check_branch
        %2751 = sbr.rel (%p2749) target = $region52
      $region51: #{cvae_forward.10} parent=43 // pred_region
        %p2752 = scmp.lt.s32.totalorder %s17, 1
        %s2753 = scalar_select %p2752, %s17, 1
        %s2754 = smul.addr %s2753, 8
        %s2755 = scalar_lea.vmem %s4, %s2754
      $region52: #{cvae_forward.10} parent=43 // pred_fallthru
        _
    $region44: #{cvae_forward.10} parent=5 // pred_fallthru
      _
  $region6: #{cvae_forward.10} parent=0 // loop_footer
    %s15 = sadd.s32 1, %s11
  $region7: #{cvae_forward.10} parent=0 // loop_footer_branch
    %10 = sbr.rel target = $region3
  $region8: #{cvae_forward.10} parent=0 // loop_exit
    _

// kernel: cvae_forward.11
$region0: #{cvae_forward.11}
  #allocation0 [shape = 'u32[]', space=smem, size = 0x4, offset = 0x4, fixed_abs, tag = 'smem constant byte address 0x4 - core index']
  #allocation1 [shape = 'u32[144,128]{1,0:T(1,128)}', space=vmem, size = 0x12000, scoped, tag = 'internal scratch']
  %s0 = inlined_call_operand.vmem [shape: bf16[512,72], index: 0, kind: input, shape index: {}]
  %s1 = inlined_call_operand.vmem [shape: bf16[72,16], index: 1, kind: input, shape index: {}]
  %s2 = inlined_call_operand.vmem [shape: f32[1,16], index: 2, kind: input, shape index: {}]
  %s3 = inlined_call_operand.vmem [shape: bf16[512,16], index: 3, kind: output, shape index: {0}]
  %s4 = inlined_call_operand.vmem [shape: f32[8,16], index: 4, kind: output, shape index: {1}]
  %5 = xla_tuple %s3, %s4
  %s6 = sld [smem:[#allocation0]]
  $region30: #{cvae_forward.11} parent=0
    _
  %s8 = ssub.s32 1, %s6
  %s9 = scalar_select 0, %s8, %s6
  // Predicated region
  $region2: #{cvae_forward.11} parent=0 // pred_check
    _
  $region3: #{cvae_forward.11} parent=0 // pred_check_branch
    %11 = sbr.rel (0) target = $region5
  $region4: #{cvae_forward.11} parent=0 // pred_region
    _
  $region5: #{cvae_forward.11} parent=0 // pred_fallthru
    _
  // Predicated region
  $region6: #{cvae_forward.11} parent=0 // pred_check
    _
  $region7: #{cvae_forward.11} parent=0 // pred_check_branch
    %13 = sbr.rel (0) target = $region9
  $region8: #{cvae_forward.11} parent=0 // pred_region
    _
  $region9: #{cvae_forward.11} parent=0 // pred_fallthru
    _
  // Predicated region
  $region10: #{cvae_forward.11} parent=0 // pred_check
    _
  $region11: #{cvae_forward.11} parent=0 // pred_check_branch
    %15 = sbr.rel (0) target = $region13
  $region12: #{cvae_forward.11} parent=0 // pred_region
    _
  $region13: #{cvae_forward.11} parent=0 // pred_fallthru
    _
  %v17 = vld [vmem:[%s0] sm:$0xf]
  %v18 = vld [vmem:[%s0 + $0x4] sm:$0xf]
  %v19 = vld [vmem:[%s0 + $0x8] sm:$0xf]
  %v20 = vld [vmem:[%s0 + $0xc] sm:$0xf]
  %v21 = vld [vmem:[%s0 + $0x10] sm:$0xf]
  %v22 = vld [vmem:[%s0 + $0x14] sm:$0xf]
  %v23 = vld [vmem:[%s0 + $0x18] sm:$0xf]
  %v24 = vld [vmem:[%s0 + $0x1c] sm:$0xf]
  %v25 = vld [vmem:[%s0 + $0x20] sm:$0xf]
  %v26 = vld [vmem:[%s0 + $0x24] sm:$0xf]
  %v27 = vld [vmem:[%s0 + $0x28] sm:$0xf]
  %v28 = vld [vmem:[%s0 + $0x2c] sm:$0xf]
  %v29 = vld [vmem:[%s0 + $0x30] sm:$0xf]
  %v30 = vld [vmem:[%s0 + $0x34] sm:$0xf]
  %v31 = vld [vmem:[%s0 + $0x38] sm:$0xf]
  %v32 = vld [vmem:[%s0 + $0x3c] sm:$0xf]
  %v33 = vld [vmem:[%s0 + $0x40] sm:$0xf]
  %v34 = vld [vmem:[%s0 + $0x44] sm:$0xf]
  %v35 = vld [vmem:[%s0 + $0x48] sm:$0xf]
  %v36 = vld [vmem:[%s0 + $0x4c] sm:$0xf]
  %v37 = vld [vmem:[%s0 + $0x50] sm:$0xf]
  %v38 = vld [vmem:[%s0 + $0x54] sm:$0xf]
  %v39 = vld [vmem:[%s0 + $0x58] sm:$0xf]
  %v40 = vld [vmem:[%s0 + $0x5c] sm:$0xf]
  %v41 = vld [vmem:[%s0 + $0x60] sm:$0xf]
  %v42 = vld [vmem:[%s0 + $0x64] sm:$0xf]
  %v43 = vld [vmem:[%s0 + $0x68] sm:$0xf]
  %v44 = vld [vmem:[%s0 + $0x6c] sm:$0xf]
  %v45 = vld [vmem:[%s0 + $0x70] sm:$0xf]
  %v46 = vld [vmem:[%s0 + $0x74] sm:$0xf]
  %v47 = vld [vmem:[%s0 + $0x78] sm:$0xf]
  %v48 = vld [vmem:[%s0 + $0x7c] sm:$0xf]
  %v49 = vld [vmem:[%s0 + $0x80] sm:$0xf]
  %v50 = vld [vmem:[%s0 + $0x84] sm:$0xf]
  %v51 = vld [vmem:[%s0 + $0x88] sm:$0xf]
  %v52 = vld [vmem:[%s0 + $0x8c] sm:$0xf]
  %v53 = vld [vmem:[%s0 + $0x90] sm:$0xf]
  %v54 = vld [vmem:[%s0 + $0x94] sm:$0xf]
  %v55 = vld [vmem:[%s0 + $0x98] sm:$0xf]
  %v56 = vld [vmem:[%s0 + $0x9c] sm:$0xf]
  %v57 = vld [vmem:[%s0 + $0xa0] sm:$0xf]
  %v58 = vld [vmem:[%s0 + $0xa4] sm:$0xf]
  %v59 = vld [vmem:[%s0 + $0xa8] sm:$0xf]
  %v60 = vld [vmem:[%s0 + $0xac] sm:$0xf]
  %v61 = vld [vmem:[%s0 + $0xb0] sm:$0xf]
  %v62 = vld [vmem:[%s0 + $0xb4] sm:$0xf]
  %v63 = vld [vmem:[%s0 + $0xb8] sm:$0xf]
  %v64 = vld [vmem:[%s0 + $0xbc] sm:$0xf]
  %v65 = vld [vmem:[%s0 + $0xc0] sm:$0xf]
  %v66 = vld [vmem:[%s0 + $0xc4] sm:$0xf]
  %v67 = vld [vmem:[%s0 + $0xc8] sm:$0xf]
  %v68 = vld [vmem:[%s0 + $0xcc] sm:$0xf]
  %v69 = vld [vmem:[%s0 + $0xd0] sm:$0xf]
  %v70 = vld [vmem:[%s0 + $0xd4] sm:$0xf]
  %v71 = vld [vmem:[%s0 + $0xd8] sm:$0xf]
  %v72 = vld [vmem:[%s0 + $0xdc] sm:$0xf]
  %v73 = vld [vmem:[%s0 + $0xe0] sm:$0xf]
  %v74 = vld [vmem:[%s0 + $0xe4] sm:$0xf]
  %v75 = vld [vmem:[%s0 + $0xe8] sm:$0xf]
  %v76 = vld [vmem:[%s0 + $0xec] sm:$0xf]
  %v77 = vld [vmem:[%s0 + $0xf0] sm:$0xf]
  %v78 = vld [vmem:[%s0 + $0xf4] sm:$0xf]
  %v79 = vld [vmem:[%s0 + $0xf8] sm:$0xf]
  %v80 = vld [vmem:[%s0 + $0xfc] sm:$0xf]
  %v81 = vld [vmem:[%s1] sm:$0xf]
  %v82 = vld [vmem:[%s1 + $0x4] sm:$0xf]
  %v83 = vld [vmem:[%s1 + $0x8] sm:$0xf]
  %v84 = vld [vmem:[%s1 + $0xc] sm:$0xf]
  %v85 = vld [vmem:[%s1 + $0x10] sm:$0xf]
  %v86 = vld [vmem:[%s1 + $0x14] sm:$0xf]
  %v87 = vld [vmem:[%s1 + $0x18] sm:$0xf]
  %v88 = vld [vmem:[%s1 + $0x1c] sm:$0xf]
  %v89 = vld [vmem:[%s1 + $0x20] sm:$0xf]
  %v90 = vld [vmem:[%s2] sm:$0x1]
  %v92 = vlaneseq
  %v93 = vshrl.u32 %v92, 7
  %v94 = vsub.s32 0, %v93
  %v95 = vrot.slane %v90, %v94
  %v161 = vunpack.c.l.b16 %v17
  %v162 = vunpack.c.l.b16 %v18
  %v163 = vunpack.c.l.b16 %v19
  %v164 = vunpack.c.l.b16 %v20
  %v165 = vunpack.c.l.b16 %v21
  %v166 = vunpack.c.l.b16 %v22
  %v167 = vunpack.c.l.b16 %v23
  %v168 = vunpack.c.l.b16 %v24
  %v169 = vunpack.c.l.b16 %v25
  %v170 = vunpack.c.l.b16 %v26
  %v171 = vunpack.c.l.b16 %v27
  %v172 = vunpack.c.l.b16 %v28
  %v173 = vunpack.c.l.b16 %v29
  %v174 = vunpack.c.l.b16 %v30
  %v175 = vunpack.c.l.b16 %v31
  %v176 = vunpack.c.l.b16 %v32
  %v177 = vunpack.c.l.b16 %v33
  %v178 = vunpack.c.l.b16 %v34
  %v179 = vunpack.c.l.b16 %v35
  %v180 = vunpack.c.l.b16 %v36
  %v181 = vunpack.c.l.b16 %v37
  %v182 = vunpack.c.l.b16 %v38
  %v183 = vunpack.c.l.b16 %v39
  %v184 = vunpack.c.l.b16 %v40
  %v185 = vunpack.c.l.b16 %v41
  %v186 = vunpack.c.l.b16 %v42
  %v187 = vunpack.c.l.b16 %v43
  %v188 = vunpack.c.l.b16 %v44
  %v189 = vunpack.c.l.b16 %v45
  %v190 = vunpack.c.l.b16 %v46
  %v191 = vunpack.c.l.b16 %v47
  %v192 = vunpack.c.l.b16 %v48
  %v193 = vunpack.c.l.b16 %v49
  %v194 = vunpack.c.l.b16 %v50
  %v195 = vunpack.c.l.b16 %v51
  %v196 = vunpack.c.l.b16 %v52
  %v197 = vunpack.c.l.b16 %v53
  %v198 = vunpack.c.l.b16 %v54
  %v199 = vunpack.c.l.b16 %v55
  %v200 = vunpack.c.l.b16 %v56
  %v201 = vunpack.c.l.b16 %v57
  %v202 = vunpack.c.l.b16 %v58
  %v203 = vunpack.c.l.b16 %v59
  %v204 = vunpack.c.l.b16 %v60
  %v205 = vunpack.c.l.b16 %v61
  %v206 = vunpack.c.l.b16 %v62
  %v207 = vunpack.c.l.b16 %v63
  %v208 = vunpack.c.l.b16 %v64
  %v209 = vunpack.c.l.b16 %v65
  %v210 = vunpack.c.l.b16 %v66
  %v211 = vunpack.c.l.b16 %v67
  %v212 = vunpack.c.l.b16 %v68
  %v213 = vunpack.c.l.b16 %v69
  %v214 = vunpack.c.l.b16 %v70
  %v215 = vunpack.c.l.b16 %v71
  %v216 = vunpack.c.l.b16 %v72
  %v217 = vunpack.c.l.b16 %v73
  %v218 = vunpack.c.l.b16 %v74
  %v219 = vunpack.c.l.b16 %v75
  %v220 = vunpack.c.l.b16 %v76
  %v221 = vunpack.c.l.b16 %v77
  %v222 = vunpack.c.l.b16 %v78
  %v223 = vunpack.c.l.b16 %v79
  %v224 = vunpack.c.l.b16 %v80
  %v225 = vpack.c.b16 %v162, %v161
  %v226 = vpack.c.b16 %v164, %v163
  %v227 = vpack.c.b16 %v166, %v165
  %v228 = vpack.c.b16 %v168, %v167
  %v229 = vpack.c.b16 %v170, %v169
  %v230 = vpack.c.b16 %v172, %v171
  %v231 = vpack.c.b16 %v174, %v173
  %v232 = vpack.c.b16 %v176, %v175
  %v233 = vpack.c.b16 %v178, %v177
  %v234 = vpack.c.b16 %v180, %v179
  %v235 = vpack.c.b16 %v182, %v181
  %v236 = vpack.c.b16 %v184, %v183
  %v237 = vpack.c.b16 %v186, %v185
  %v238 = vpack.c.b16 %v188, %v187
  %v239 = vpack.c.b16 %v190, %v189
  %v240 = vpack.c.b16 %v192, %v191
  %v241 = vpack.c.b16 %v194, %v193
  %v242 = vpack.c.b16 %v196, %v195
  %v243 = vpack.c.b16 %v198, %v197
  %v244 = vpack.c.b16 %v200, %v199
  %v245 = vpack.c.b16 %v202, %v201
  %v246 = vpack.c.b16 %v204, %v203
  %v247 = vpack.c.b16 %v206, %v205
  %v248 = vpack.c.b16 %v208, %v207
  %v249 = vpack.c.b16 %v210, %v209
  %v250 = vpack.c.b16 %v212, %v211
  %v251 = vpack.c.b16 %v214, %v213
  %v252 = vpack.c.b16 %v216, %v215
  %v253 = vpack.c.b16 %v218, %v217
  %v254 = vpack.c.b16 %v220, %v219
  %v255 = vpack.c.b16 %v222, %v221
  %v256 = vpack.c.b16 %v224, %v223
  %v266 = vunpack.c.l.b16 %v81
  %v267 = vunpack.c.l.b16 %v82
  %v268 = vunpack.c.l.b16 %v83
  %v269 = vunpack.c.l.b16 %v84
  %v270 = vunpack.c.l.b16 %v85
  %v271 = vunpack.c.l.b16 %v86
  %v272 = vunpack.c.l.b16 %v87
  %v273 = vunpack.c.l.b16 %v88
  %v274 = vunpack.c.l.b16 %v89
  %v275 = vpack.c.b16 %v267, %v266
  %v276 = vpack.c.b16 %v269, %v268
  %v277 = vpack.c.b16 %v271, %v270
  %v278 = vpack.c.b16 %v273, %v272
  %v279 = vpack.c.b16 %v274, %v274
  %vm284 = vcmask 588800
  %v286 = vsel %vm284, %v225, 0
  %v289 = vsel %vm284, %v226, 0
  %v292 = vsel %vm284, %v227, 0
  %v295 = vsel %vm284, %v228, 0
  %v298 = vsel %vm284, %v229, 0
  %v301 = vsel %vm284, %v230, 0
  %v304 = vsel %vm284, %v231, 0
  %v307 = vsel %vm284, %v232, 0
  %v310 = vsel %vm284, %v233, 0
  %v313 = vsel %vm284, %v234, 0
  %v316 = vsel %vm284, %v235, 0
  %v319 = vsel %vm284, %v236, 0
  %v322 = vsel %vm284, %v237, 0
  %v325 = vsel %vm284, %v238, 0
  %v328 = vsel %vm284, %v239, 0
  %v331 = vsel %vm284, %v240, 0
  %v334 = vsel %vm284, %v241, 0
  %v337 = vsel %vm284, %v242, 0
  %v340 = vsel %vm284, %v243, 0
  %v343 = vsel %vm284, %v244, 0
  %v346 = vsel %vm284, %v245, 0
  %v349 = vsel %vm284, %v246, 0
  %v352 = vsel %vm284, %v247, 0
  %v355 = vsel %vm284, %v248, 0
  %v358 = vsel %vm284, %v249, 0
  %v361 = vsel %vm284, %v250, 0
  %v364 = vsel %vm284, %v251, 0
  %v367 = vsel %vm284, %v252, 0
  %v370 = vsel %vm284, %v253, 0
  %v373 = vsel %vm284, %v254, 0
  %v376 = vsel %vm284, %v255, 0
  %v379 = vsel %vm284, %v256, 0
  %vm381 = vcmask 1043456
  %v383 = vsel %vm381, %v279, 0
  %385 = vmatprep.subr.bf16.mxu0 0
  %386 = vmatpush1.bf16.msra.mxu0 0
  %387 = vmatprep.subr.bf16.mxu0 0
  %388 = vmatpush1.bf16.msra.mxu0 0
  %389 = vmatprep.subr.bf16.mxu0 0
  %390 = vmatpush1.bf16.msra.mxu0 0
  %391 = vmatprep.subr.bf16.mxu0 0
  %392 = vmatpush1.bf16.msra.mxu0 %v383
  %393 = vmatprep.subr.bf16.mxu0 0
  %394 = vmatpush1.bf16.msra.mxu0 %v278
  %395 = vmatprep.subr.bf16.mxu0 0
  %396 = vmatpush1.bf16.msra.mxu0 %v277
  %397 = vmatprep.subr.bf16.mxu0 0
  %398 = vmatpush1.bf16.msra.mxu0 %v276
  %399 = vmatprep.subr.bf16.mxu0 0
  %400 = vmatpush1.bf16.msra.mxu0 %v275
  %401 = vmatprep.subr.bf16.mxu0 0
  %402 = vmatpush2.bf16.msra.mxu0 0
  %403 = vmatprep.subr.bf16.mxu0 0
  %404 = vmatpush2.bf16.msra.mxu0 0
  %405 = vmatprep.subr.bf16.mxu0 0
  %406 = vmatpush2.bf16.msra.mxu0 0
  %407 = vmatprep.subr.bf16.mxu0 0
  %408 = vmatpush2.bf16.msra.mxu0 0
  %409 = vmatprep.subr.bf16.mxu0 0
  %410 = vmatpush2.bf16.msra.mxu0 0
  %411 = vmatprep.subr.bf16.mxu0 0
  %412 = vmatpush2.bf16.msra.mxu0 0
  %413 = vmatprep.subr.bf16.mxu0 0
  %414 = vmatpush2.bf16.msra.mxu0 0
  %415 = vmatprep.subr.bf16.mxu0 0
  %416 = vmatpush2.bf16.msra.mxu0 0
  %417 = vmatprep.mubr.bf16.mxu0 0
  %418 = vmatmul.mubr.bf16.gmra.mxu0 %v286
  %v419 = vpop.f32.mrf.mxu0
  %v420 = vadd.f32 %v95, %v419
  %v421 = vpop.f32.mrf.mxu0
  %v422 = vpop.f32.mrf.mxu0
  %v423 = vadd.f32 %v95, %v422
  %v424 = vpop.f32.mrf.mxu0
  %425 = vmatprep.mubr.bf16.mxu0 0
  %426 = vmatmul.mubr.bf16.gmra.mxu0 %v289
  %v427 = vpop.f32.mrf.mxu0
  %v428 = vadd.f32 %v95, %v427
  %v429 = vpop.f32.mrf.mxu0
  %v430 = vpop.f32.mrf.mxu0
  %v431 = vadd.f32 %v95, %v430
  %v432 = vpop.f32.mrf.mxu0
  %433 = vmatprep.mubr.bf16.mxu0 0
  %434 = vmatmul.mubr.bf16.gmra.mxu0 %v292
  %v435 = vpop.f32.mrf.mxu0
  %v436 = vadd.f32 %v95, %v435
  %v437 = vpop.f32.mrf.mxu0
  %v438 = vpop.f32.mrf.mxu0
  %v439 = vadd.f32 %v95, %v438
  %v440 = vpop.f32.mrf.mxu0
  %441 = vmatprep.mubr.bf16.mxu0 0
  %442 = vmatmul.mubr.bf16.gmra.mxu0 %v295
  %v443 = vpop.f32.mrf.mxu0
  %v444 = vadd.f32 %v95, %v443
  %v445 = vpop.f32.mrf.mxu0
  %v446 = vpop.f32.mrf.mxu0
  %v447 = vadd.f32 %v95, %v446
  %v448 = vpop.f32.mrf.mxu0
  %449 = vmatprep.mubr.bf16.mxu0 0
  %450 = vmatmul.mubr.bf16.gmra.mxu0 %v298
  %v451 = vpop.f32.mrf.mxu0
  %v452 = vadd.f32 %v95, %v451
  %v453 = vpop.f32.mrf.mxu0
  %v454 = vpop.f32.mrf.mxu0
  %v455 = vadd.f32 %v95, %v454
  %v456 = vpop.f32.mrf.mxu0
  %457 = vmatprep.mubr.bf16.mxu0 0
  %458 = vmatmul.mubr.bf16.gmra.mxu0 %v301
  %v459 = vpop.f32.mrf.mxu0
  %v460 = vadd.f32 %v95, %v459
  %v461 = vpop.f32.mrf.mxu0
  %v462 = vpop.f32.mrf.mxu0
  %v463 = vadd.f32 %v95, %v462
  %v464 = vpop.f32.mrf.mxu0
  %465 = vmatprep.mubr.bf16.mxu0 0
  %466 = vmatmul.mubr.bf16.gmra.mxu0 %v304
  %v467 = vpop.f32.mrf.mxu0
  %v468 = vadd.f32 %v95, %v467
  %v469 = vpop.f32.mrf.mxu0
  %v470 = vpop.f32.mrf.mxu0
  %v471 = vadd.f32 %v95, %v470
  %v472 = vpop.f32.mrf.mxu0
  %473 = vmatprep.mubr.bf16.mxu0 0
  %474 = vmatmul.mubr.bf16.gmra.mxu0 %v307
  %v475 = vpop.f32.mrf.mxu0
  %v476 = vadd.f32 %v95, %v475
  %v477 = vpop.f32.mrf.mxu0
  %v478 = vpop.f32.mrf.mxu0
  %v479 = vadd.f32 %v95, %v478
  %v480 = vpop.f32.mrf.mxu0
  %481 = vmatprep.mubr.bf16.mxu0 0
  %482 = vmatmul.mubr.bf16.gmra.mxu0 %v310
  %v483 = vpop.f32.mrf.mxu0
  %v484 = vadd.f32 %v95, %v483
  %v485 = vpop.f32.mrf.mxu0
  %v486 = vpop.f32.mrf.mxu0
  %v487 = vadd.f32 %v95, %v486
  %v488 = vpop.f32.mrf.mxu0
  %489 = vmatprep.mubr.bf16.mxu0 0
  %490 = vmatmul.mubr.bf16.gmra.mxu0 %v313
  %v491 = vpop.f32.mrf.mxu0
  %v492 = vadd.f32 %v95, %v491
  %v493 = vpop.f32.mrf.mxu0
  %v494 = vpop.f32.mrf.mxu0
  %v495 = vadd.f32 %v95, %v494
  %v496 = vpop.f32.mrf.mxu0
  %497 = vmatprep.mubr.bf16.mxu0 0
  %498 = vmatmul.mubr.bf16.gmra.mxu0 %v316
  %v499 = vpop.f32.mrf.mxu0
  %v500 = vadd.f32 %v95, %v499
  %v501 = vpop.f32.mrf.mxu0
  %v502 = vpop.f32.mrf.mxu0
  %v503 = vadd.f32 %v95, %v502
  %v504 = vpop.f32.mrf.mxu0
  %505 = vmatprep.mubr.bf16.mxu0 0
  %506 = vmatmul.mubr.bf16.gmra.mxu0 %v319
  %v507 = vpop.f32.mrf.mxu0
  %v508 = vadd.f32 %v95, %v507
  %v509 = vpop.f32.mrf.mxu0
  %v510 = vpop.f32.mrf.mxu0
  %v511 = vadd.f32 %v95, %v510
  %v512 = vpop.f32.mrf.mxu0
  %513 = vmatprep.mubr.bf16.mxu0 0
  %514 = vmatmul.mubr.bf16.gmra.mxu0 %v322
  %v515 = vpop.f32.mrf.mxu0
  %v516 = vadd.f32 %v95, %v515
  %v517 = vpop.f32.mrf.mxu0
  %v518 = vpop.f32.mrf.mxu0
  %v519 = vadd.f32 %v95, %v518
  %v520 = vpop.f32.mrf.mxu0
  %521 = vmatprep.mubr.bf16.mxu0 0
  %522 = vmatmul.mubr.bf16.gmra.mxu0 %v325
  %v523 = vpop.f32.mrf.mxu0
  %v524 = vadd.f32 %v95, %v523
  %v525 = vpop.f32.mrf.mxu0
  %v526 = vpop.f32.mrf.mxu0
  %v527 = vadd.f32 %v95, %v526
  %v528 = vpop.f32.mrf.mxu0
  %529 = vmatprep.mubr.bf16.mxu0 0
  %530 = vmatmul.mubr.bf16.gmra.mxu0 %v328
  %v531 = vpop.f32.mrf.mxu0
  %v532 = vadd.f32 %v95, %v531
  %v533 = vpop.f32.mrf.mxu0
  %v534 = vpop.f32.mrf.mxu0
  %v535 = vadd.f32 %v95, %v534
  %v536 = vpop.f32.mrf.mxu0
  %537 = vmatprep.mubr.bf16.mxu0 0
  %538 = vmatmul.mubr.bf16.gmra.mxu0 %v331
  %v539 = vpop.f32.mrf.mxu0
  %v540 = vadd.f32 %v95, %v539
  %v541 = vpop.f32.mrf.mxu0
  %v542 = vpop.f32.mrf.mxu0
  %v543 = vadd.f32 %v95, %v542
  %v544 = vpop.f32.mrf.mxu0
  %545 = vmatprep.mubr.bf16.mxu0 0
  %546 = vmatmul.mubr.bf16.gmra.mxu0 %v334
  %v547 = vpop.f32.mrf.mxu0
  %v548 = vadd.f32 %v95, %v547
  %v549 = vpop.f32.mrf.mxu0
  %v550 = vpop.f32.mrf.mxu0
  %v551 = vadd.f32 %v95, %v550
  %v552 = vpop.f32.mrf.mxu0
  %553 = vmatprep.mubr.bf16.mxu0 0
  %554 = vmatmul.mubr.bf16.gmra.mxu0 %v337
  %v555 = vpop.f32.mrf.mxu0
  %v556 = vadd.f32 %v95, %v555
  %v557 = vpop.f32.mrf.mxu0
  %v558 = vpop.f32.mrf.mxu0
  %v559 = vadd.f32 %v95, %v558
  %v560 = vpop.f32.mrf.mxu0
  %561 = vmatprep.mubr.bf16.mxu0 0
  %562 = vmatmul.mubr.bf16.gmra.mxu0 %v340
  %v563 = vpop.f32.mrf.mxu0
  %v564 = vadd.f32 %v95, %v563
  %v565 = vpop.f32.mrf.mxu0
  %v566 = vpop.f32.mrf.mxu0
  %v567 = vadd.f32 %v95, %v566
  %v568 = vpop.f32.mrf.mxu0
  %569 = vmatprep.mubr.bf16.mxu0 0
  %570 = vmatmul.mubr.bf16.gmra.mxu0 %v343
  %v571 = vpop.f32.mrf.mxu0
  %v572 = vadd.f32 %v95, %v571
  %v573 = vpop.f32.mrf.mxu0
  %v574 = vpop.f32.mrf.mxu0
  %v575 = vadd.f32 %v95, %v574
  %v576 = vpop.f32.mrf.mxu0
  %577 = vmatprep.mubr.bf16.mxu0 0
  %578 = vmatmul.mubr.bf16.gmra.mxu0 %v346
  %v579 = vpop.f32.mrf.mxu0
  %v580 = vadd.f32 %v95, %v579
  %v581 = vpop.f32.mrf.mxu0
  %v582 = vpop.f32.mrf.mxu0
  %v583 = vadd.f32 %v95, %v582
  %v584 = vpop.f32.mrf.mxu0
  %585 = vmatprep.mubr.bf16.mxu0 0
  %586 = vmatmul.mubr.bf16.gmra.mxu0 %v349
  %v587 = vpop.f32.mrf.mxu0
  %v588 = vadd.f32 %v95, %v587
  %v589 = vpop.f32.mrf.mxu0
  %v590 = vpop.f32.mrf.mxu0
  %v591 = vadd.f32 %v95, %v590
  %v592 = vpop.f32.mrf.mxu0
  %593 = vmatprep.mubr.bf16.mxu0 0
  %594 = vmatmul.mubr.bf16.gmra.mxu0 %v352
  %v595 = vpop.f32.mrf.mxu0
  %v596 = vadd.f32 %v95, %v595
  %v597 = vpop.f32.mrf.mxu0
  %v598 = vpop.f32.mrf.mxu0
  %v599 = vadd.f32 %v95, %v598
  %v600 = vpop.f32.mrf.mxu0
  %601 = vmatprep.mubr.bf16.mxu0 0
  %602 = vmatmul.mubr.bf16.gmra.mxu0 %v355
  %v603 = vpop.f32.mrf.mxu0
  %v604 = vadd.f32 %v95, %v603
  %v605 = vpop.f32.mrf.mxu0
  %v606 = vpop.f32.mrf.mxu0
  %v607 = vadd.f32 %v95, %v606
  %v608 = vpop.f32.mrf.mxu0
  %609 = vmatprep.mubr.bf16.mxu0 0
  %610 = vmatmul.mubr.bf16.gmra.mxu0 %v358
  %v611 = vpop.f32.mrf.mxu0
  %v612 = vadd.f32 %v95, %v611
  %v613 = vpop.f32.mrf.mxu0
  %v614 = vpop.f32.mrf.mxu0
  %v615 = vadd.f32 %v95, %v614
  %v616 = vpop.f32.mrf.mxu0
  %617 = vmatprep.mubr.bf16.mxu0 0
  %618 = vmatmul.mubr.bf16.gmra.mxu0 %v361
  %v619 = vpop.f32.mrf.mxu0
  %v620 = vadd.f32 %v95, %v619
  %v621 = vpop.f32.mrf.mxu0
  %v622 = vpop.f32.mrf.mxu0
  %v623 = vadd.f32 %v95, %v622
  %v624 = vpop.f32.mrf.mxu0
  %625 = vmatprep.mubr.bf16.mxu0 0
  %626 = vmatmul.mubr.bf16.gmra.mxu0 %v364
  %v627 = vpop.f32.mrf.mxu0
  %v628 = vadd.f32 %v95, %v627
  %v629 = vpop.f32.mrf.mxu0
  %v630 = vpop.f32.mrf.mxu0
  %v631 = vadd.f32 %v95, %v630
  %v632 = vpop.f32.mrf.mxu0
  %633 = vmatprep.mubr.bf16.mxu0 0
  %634 = vmatmul.mubr.bf16.gmra.mxu0 %v367
  %v635 = vpop.f32.mrf.mxu0
  %v636 = vadd.f32 %v95, %v635
  %v637 = vpop.f32.mrf.mxu0
  %v638 = vpop.f32.mrf.mxu0
  %v639 = vadd.f32 %v95, %v638
  %v640 = vpop.f32.mrf.mxu0
  %641 = vmatprep.mubr.bf16.mxu0 0
  %642 = vmatmul.mubr.bf16.gmra.mxu0 %v370
  %v643 = vpop.f32.mrf.mxu0
  %v644 = vadd.f32 %v95, %v643
  %v645 = vpop.f32.mrf.mxu0
  %v646 = vpop.f32.mrf.mxu0
  %v647 = vadd.f32 %v95, %v646
  %v648 = vpop.f32.mrf.mxu0
  %649 = vmatprep.mubr.bf16.mxu0 0
  %650 = vmatmul.mubr.bf16.gmra.mxu0 %v373
  %v651 = vpop.f32.mrf.mxu0
  %v652 = vadd.f32 %v95, %v651
  %v653 = vpop.f32.mrf.mxu0
  %v654 = vpop.f32.mrf.mxu0
  %v655 = vadd.f32 %v95, %v654
  %v656 = vpop.f32.mrf.mxu0
  %657 = vmatprep.mubr.bf16.mxu0 0
  %658 = vmatmul.mubr.bf16.gmra.mxu0 %v376
  %v659 = vpop.f32.mrf.mxu0
  %v660 = vadd.f32 %v95, %v659
  %v661 = vpop.f32.mrf.mxu0
  %v662 = vpop.f32.mrf.mxu0
  %v663 = vadd.f32 %v95, %v662
  %v664 = vpop.f32.mrf.mxu0
  %665 = vmatprep.mubr.bf16.mxu0 0
  %666 = vmatmul.mubr.bf16.gmra.mxu0 %v379
  %v667 = vpop.f32.mrf.mxu0
  %v668 = vadd.f32 %v95, %v667
  %v669 = vpop.f32.mrf.mxu0
  %v670 = vpop.f32.mrf.mxu0
  %v671 = vadd.f32 %v95, %v670
  %v672 = vpop.f32.mrf.mxu0
  %673 = vdwg.mxu0
  %v674 = vpack.c.bf16 %v423, %v420
  %v675 = vpack.c.bf16 %v431, %v428
  %v676 = vpack.c.bf16 %v439, %v436
  %v677 = vpack.c.bf16 %v447, %v444
  %v678 = vpack.c.bf16 %v455, %v452
  %v679 = vpack.c.bf16 %v463, %v460
  %v680 = vpack.c.bf16 %v471, %v468
  %v681 = vpack.c.bf16 %v479, %v476
  %v682 = vpack.c.bf16 %v487, %v484
  %v683 = vpack.c.bf16 %v495, %v492
  %v684 = vpack.c.bf16 %v503, %v500
  %v685 = vpack.c.bf16 %v511, %v508
  %v686 = vpack.c.bf16 %v519, %v516
  %v687 = vpack.c.bf16 %v527, %v524
  %v688 = vpack.c.bf16 %v535, %v532
  %v689 = vpack.c.bf16 %v543, %v540
  %v690 = vpack.c.bf16 %v551, %v548
  %v691 = vpack.c.bf16 %v559, %v556
  %v692 = vpack.c.bf16 %v567, %v564
  %v693 = vpack.c.bf16 %v575, %v572
  %v694 = vpack.c.bf16 %v583, %v580
  %v695 = vpack.c.bf16 %v591, %v588
  %v696 = vpack.c.bf16 %v599, %v596
  %v697 = vpack.c.bf16 %v607, %v604
  %v698 = vpack.c.bf16 %v615, %v612
  %v699 = vpack.c.bf16 %v623, %v620
  %v700 = vpack.c.bf16 %v631, %v628
  %v701 = vpack.c.bf16 %v639, %v636
  %v702 = vpack.c.bf16 %v647, %v644
  %v703 = vpack.c.bf16 %v655, %v652
  %v704 = vpack.c.bf16 %v663, %v660
  %v705 = vpack.c.bf16 %v671, %v668
  %v738 = vunpack.c.l.b16 %v674
  %v739 = vunpack.c.h.b16 %v674
  %v740 = vunpack.c.l.b16 %v675
  %v741 = vunpack.c.h.b16 %v675
  %v742 = vunpack.c.l.b16 %v676
  %v743 = vunpack.c.h.b16 %v676
  %v744 = vunpack.c.l.b16 %v677
  %v745 = vunpack.c.h.b16 %v677
  %v746 = vunpack.c.l.b16 %v678
  %v747 = vunpack.c.h.b16 %v678
  %v748 = vunpack.c.l.b16 %v679
  %v749 = vunpack.c.h.b16 %v679
  %v750 = vunpack.c.l.b16 %v680
  %v751 = vunpack.c.h.b16 %v680
  %v752 = vunpack.c.l.b16 %v681
  %v753 = vunpack.c.h.b16 %v681
  %v754 = vunpack.c.l.b16 %v682
  %v755 = vunpack.c.h.b16 %v682
  %v756 = vunpack.c.l.b16 %v683
  %v757 = vunpack.c.h.b16 %v683
  %v758 = vunpack.c.l.b16 %v684
  %v759 = vunpack.c.h.b16 %v684
  %v760 = vunpack.c.l.b16 %v685
  %v761 = vunpack.c.h.b16 %v685
  %v762 = vunpack.c.l.b16 %v686
  %v763 = vunpack.c.h.b16 %v686
  %v764 = vunpack.c.l.b16 %v687
  %v765 = vunpack.c.h.b16 %v687
  %v766 = vunpack.c.l.b16 %v688
  %v767 = vunpack.c.h.b16 %v688
  %v768 = vunpack.c.l.b16 %v689
  %v769 = vunpack.c.h.b16 %v689
  %v770 = vunpack.c.l.b16 %v690
  %v771 = vunpack.c.h.b16 %v690
  %v772 = vunpack.c.l.b16 %v691
  %v773 = vunpack.c.h.b16 %v691
  %v774 = vunpack.c.l.b16 %v692
  %v775 = vunpack.c.h.b16 %v692
  %v776 = vunpack.c.l.b16 %v693
  %v777 = vunpack.c.h.b16 %v693
  %v778 = vunpack.c.l.b16 %v694
  %v779 = vunpack.c.h.b16 %v694
  %v780 = vunpack.c.l.b16 %v695
  %v781 = vunpack.c.h.b16 %v695
  %v782 = vunpack.c.l.b16 %v696
  %v783 = vunpack.c.h.b16 %v696
  %v784 = vunpack.c.l.b16 %v697
  %v785 = vunpack.c.h.b16 %v697
  %v786 = vunpack.c.l.b16 %v698
  %v787 = vunpack.c.h.b16 %v698
  %v788 = vunpack.c.l.b16 %v699
  %v789 = vunpack.c.h.b16 %v699
  %v790 = vunpack.c.l.b16 %v700
  %v791 = vunpack.c.h.b16 %v700
  %v792 = vunpack.c.l.b16 %v701
  %v793 = vunpack.c.h.b16 %v701
  %v794 = vunpack.c.l.b16 %v702
  %v795 = vunpack.c.h.b16 %v702
  %v796 = vunpack.c.l.b16 %v703
  %v797 = vunpack.c.h.b16 %v703
  %v798 = vunpack.c.l.b16 %v704
  %v799 = vunpack.c.h.b16 %v704
  %v800 = vunpack.c.l.b16 %v705
  %v801 = vunpack.c.h.b16 %v705
  %v802 = vpack.c.b16 %v738, %v738
  %v803 = vpack.c.b16 %v739, %v739
  %v804 = vpack.c.b16 %v740, %v740
  %v805 = vpack.c.b16 %v741, %v741
  %v806 = vpack.c.b16 %v742, %v742
  %v807 = vpack.c.b16 %v743, %v743
  %v808 = vpack.c.b16 %v744, %v744
  %v809 = vpack.c.b16 %v745, %v745
  %v810 = vpack.c.b16 %v746, %v746
  %v811 = vpack.c.b16 %v747, %v747
  %v812 = vpack.c.b16 %v748, %v748
  %v813 = vpack.c.b16 %v749, %v749
  %v814 = vpack.c.b16 %v750, %v750
  %v815 = vpack.c.b16 %v751, %v751
  %v816 = vpack.c.b16 %v752, %v752
  %v817 = vpack.c.b16 %v753, %v753
  %v818 = vpack.c.b16 %v754, %v754
  %v819 = vpack.c.b16 %v755, %v755
  %v820 = vpack.c.b16 %v756, %v756
  %v821 = vpack.c.b16 %v757, %v757
  %v822 = vpack.c.b16 %v758, %v758
  %v823 = vpack.c.b16 %v759, %v759
  %v824 = vpack.c.b16 %v760, %v760
  %v825 = vpack.c.b16 %v761, %v761
  %v826 = vpack.c.b16 %v762, %v762
  %v827 = vpack.c.b16 %v763, %v763
  %v828 = vpack.c.b16 %v764, %v764
  %v829 = vpack.c.b16 %v765, %v765
  %v830 = vpack.c.b16 %v766, %v766
  %v831 = vpack.c.b16 %v767, %v767
  %v832 = vpack.c.b16 %v768, %v768
  %v833 = vpack.c.b16 %v769, %v769
  %v834 = vpack.c.b16 %v770, %v770
  %v835 = vpack.c.b16 %v771, %v771
  %v836 = vpack.c.b16 %v772, %v772
  %v837 = vpack.c.b16 %v773, %v773
  %v838 = vpack.c.b16 %v774, %v774
  %v839 = vpack.c.b16 %v775, %v775
  %v840 = vpack.c.b16 %v776, %v776
  %v841 = vpack.c.b16 %v777, %v777
  %v842 = vpack.c.b16 %v778, %v778
  %v843 = vpack.c.b16 %v779, %v779
  %v844 = vpack.c.b16 %v780, %v780
  %v845 = vpack.c.b16 %v781, %v781
  %v846 = vpack.c.b16 %v782, %v782
  %v847 = vpack.c.b16 %v783, %v783
  %v848 = vpack.c.b16 %v784, %v784
  %v849 = vpack.c.b16 %v785, %v785
  %v850 = vpack.c.b16 %v786, %v786
  %v851 = vpack.c.b16 %v787, %v787
  %v852 = vpack.c.b16 %v788, %v788
  %v853 = vpack.c.b16 %v789, %v789
  %v854 = vpack.c.b16 %v790, %v790
  %v855 = vpack.c.b16 %v791, %v791
  %v856 = vpack.c.b16 %v792, %v792
  %v857 = vpack.c.b16 %v793, %v793
  %v858 = vpack.c.b16 %v794, %v794
  %v859 = vpack.c.b16 %v795, %v795
  %v860 = vpack.c.b16 %v796, %v796
  %v861 = vpack.c.b16 %v797, %v797
  %v862 = vpack.c.b16 %v798, %v798
  %v863 = vpack.c.b16 %v799, %v799
  %v864 = vpack.c.b16 %v800, %v800
  %v865 = vpack.c.b16 %v801, %v801
  %vm930 = vcmask 125952
  %931 = vst.msk [vmem:[%s3] sm:$0xf] %vm930, %v802
  %932 = vst.msk [vmem:[%s3 + $0x4] sm:$0xf] %vm930, %v803
  %933 = vst.msk [vmem:[%s3 + $0x8] sm:$0xf] %vm930, %v804
  %934 = vst.msk [vmem:[%s3 + $0xc] sm:$0xf] %vm930, %v805
  %935 = vst.msk [vmem:[%s3 + $0x10] sm:$0xf] %vm930, %v806
  %936 = vst.msk [vmem:[%s3 + $0x14] sm:$0xf] %vm930, %v807
  %937 = vst.msk [vmem:[%s3 + $0x18] sm:$0xf] %vm930, %v808
  %938 = vst.msk [vmem:[%s3 + $0x1c] sm:$0xf] %vm930, %v809
  %939 = vst.msk [vmem:[%s3 + $0x20] sm:$0xf] %vm930, %v810
  %940 = vst.msk [vmem:[%s3 + $0x24] sm:$0xf] %vm930, %v811
  %941 = vst.msk [vmem:[%s3 + $0x28] sm:$0xf] %vm930, %v812
  %942 = vst.msk [vmem:[%s3 + $0x2c] sm:$0xf] %vm930, %v813
  %943 = vst.msk [vmem:[%s3 + $0x30] sm:$0xf] %vm930, %v814
  %944 = vst.msk [vmem:[%s3 + $0x34] sm:$0xf] %vm930, %v815
  %945 = vst.msk [vmem:[%s3 + $0x38] sm:$0xf] %vm930, %v816
  %946 = vst.msk [vmem:[%s3 + $0x3c] sm:$0xf] %vm930, %v817
  %947 = vst.msk [vmem:[%s3 + $0x40] sm:$0xf] %vm930, %v818
  %948 = vst.msk [vmem:[%s3 + $0x44] sm:$0xf] %vm930, %v819
  %949 = vst.msk [vmem:[%s3 + $0x48] sm:$0xf] %vm930, %v820
  %950 = vst.msk [vmem:[%s3 + $0x4c] sm:$0xf] %vm930, %v821
  %951 = vst.msk [vmem:[%s3 + $0x50] sm:$0xf] %vm930, %v822
  %952 = vst.msk [vmem:[%s3 + $0x54] sm:$0xf] %vm930, %v823
  %953 = vst.msk [vmem:[%s3 + $0x58] sm:$0xf] %vm930, %v824
  %954 = vst.msk [vmem:[%s3 + $0x5c] sm:$0xf] %vm930, %v825
  %955 = vst.msk [vmem:[%s3 + $0x60] sm:$0xf] %vm930, %v826
  %956 = vst.msk [vmem:[%s3 + $0x64] sm:$0xf] %vm930, %v827
  %957 = vst.msk [vmem:[%s3 + $0x68] sm:$0xf] %vm930, %v828
  %958 = vst.msk [vmem:[%s3 + $0x6c] sm:$0xf] %vm930, %v829
  %959 = vst.msk [vmem:[%s3 + $0x70] sm:$0xf] %vm930, %v830
  %960 = vst.msk [vmem:[%s3 + $0x74] sm:$0xf] %vm930, %v831
  %961 = vst.msk [vmem:[%s3 + $0x78] sm:$0xf] %vm930, %v832
  %962 = vst.msk [vmem:[%s3 + $0x7c] sm:$0xf] %vm930, %v833
  %963 = vst.msk [vmem:[%s3 + $0x80] sm:$0xf] %vm930, %v834
  %964 = vst.msk [vmem:[%s3 + $0x84] sm:$0xf] %vm930, %v835
  %965 = vst.msk [vmem:[%s3 + $0x88] sm:$0xf] %vm930, %v836
  %966 = vst.msk [vmem:[%s3 + $0x8c] sm:$0xf] %vm930, %v837
  %967 = vst.msk [vmem:[%s3 + $0x90] sm:$0xf] %vm930, %v838
  %968 = vst.msk [vmem:[%s3 + $0x94] sm:$0xf] %vm930, %v839
  %969 = vst.msk [vmem:[%s3 + $0x98] sm:$0xf] %vm930, %v840
  %970 = vst.msk [vmem:[%s3 + $0x9c] sm:$0xf] %vm930, %v841
  %971 = vst.msk [vmem:[%s3 + $0xa0] sm:$0xf] %vm930, %v842
  %972 = vst.msk [vmem:[%s3 + $0xa4] sm:$0xf] %vm930, %v843
  %973 = vst.msk [vmem:[%s3 + $0xa8] sm:$0xf] %vm930, %v844
  %974 = vst.msk [vmem:[%s3 + $0xac] sm:$0xf] %vm930, %v845
  %975 = vst.msk [vmem:[%s3 + $0xb0] sm:$0xf] %vm930, %v846
  %976 = vst.msk [vmem:[%s3 + $0xb4] sm:$0xf] %vm930, %v847
  %977 = vst.msk [vmem:[%s3 + $0xb8] sm:$0xf] %vm930, %v848
  %978 = vst.msk [vmem:[%s3 + $0xbc] sm:$0xf] %vm930, %v849
  %979 = vst.msk [vmem:[%s3 + $0xc0] sm:$0xf] %vm930, %v850
  %980 = vst.msk [vmem:[%s3 + $0xc4] sm:$0xf] %vm930, %v851
  %981 = vst.msk [vmem:[%s3 + $0xc8] sm:$0xf] %vm930, %v852
  %982 = vst.msk [vmem:[%s3 + $0xcc] sm:$0xf] %vm930, %v853
  %983 = vst.msk [vmem:[%s3 + $0xd0] sm:$0xf] %vm930, %v854
  %984 = vst.msk [vmem:[%s3 + $0xd4] sm:$0xf] %vm930, %v855
  %985 = vst.msk [vmem:[%s3 + $0xd8] sm:$0xf] %vm930, %v856
  %986 = vst.msk [vmem:[%s3 + $0xdc] sm:$0xf] %vm930, %v857
  %987 = vst.msk [vmem:[%s3 + $0xe0] sm:$0xf] %vm930, %v858
  %988 = vst.msk [vmem:[%s3 + $0xe4] sm:$0xf] %vm930, %v859
  %989 = vst.msk [vmem:[%s3 + $0xe8] sm:$0xf] %vm930, %v860
  %990 = vst.msk [vmem:[%s3 + $0xec] sm:$0xf] %vm930, %v861
  %991 = vst.msk [vmem:[%s3 + $0xf0] sm:$0xf] %vm930, %v862
  %992 = vst.msk [vmem:[%s3 + $0xf4] sm:$0xf] %vm930, %v863
  %993 = vst.msk [vmem:[%s3 + $0xf8] sm:$0xf] %vm930, %v864
  %994 = vst.msk [vmem:[%s3 + $0xfc] sm:$0xf] %vm930, %v865
  %vm995 = vcmask 130048
  %v996 = vsel %vm995, %v420, 0.0
  %v997 = vsel %vm995, %v423, 0.0
  %v998 = vadd.f32 %v996, %v997
  %v999 = vsel %vm995, %v428, 0.0
  %v1000 = vadd.f32 %v998, %v999
  %v1001 = vsel %vm995, %v431, 0.0
  %v1002 = vadd.f32 %v1000, %v1001
  %v1003 = vsel %vm995, %v436, 0.0
  %v1004 = vadd.f32 %v1002, %v1003
  %v1005 = vsel %vm995, %v439, 0.0
  %v1006 = vadd.f32 %v1004, %v1005
  %v1007 = vsel %vm995, %v444, 0.0
  %v1008 = vadd.f32 %v1006, %v1007
  %v1009 = vsel %vm995, %v447, 0.0
  %v1010 = vadd.f32 %v1008, %v1009
  %v1011 = vsel %vm995, %v452, 0.0
  %v1012 = vadd.f32 %v1010, %v1011
  %v1013 = vsel %vm995, %v455, 0.0
  %v1014 = vadd.f32 %v1012, %v1013
  %v1015 = vsel %vm995, %v460, 0.0
  %v1016 = vadd.f32 %v1014, %v1015
  %v1017 = vsel %vm995, %v463, 0.0
  %v1018 = vadd.f32 %v1016, %v1017
  %v1019 = vsel %vm995, %v468, 0.0
  %v1020 = vadd.f32 %v1018, %v1019
  %v1021 = vsel %vm995, %v471, 0.0
  %v1022 = vadd.f32 %v1020, %v1021
  %v1023 = vsel %vm995, %v476, 0.0
  %v1024 = vadd.f32 %v1022, %v1023
  %v1025 = vsel %vm995, %v479, 0.0
  %v1026 = vadd.f32 %v1024, %v1025
  %v1027 = vsel %vm995, %v484, 0.0
  %v1028 = vadd.f32 %v1026, %v1027
  %v1029 = vsel %vm995, %v487, 0.0
  %v1030 = vadd.f32 %v1028, %v1029
  %v1031 = vsel %vm995, %v492, 0.0
  %v1032 = vadd.f32 %v1030, %v1031
  %v1033 = vsel %vm995, %v495, 0.0
  %v1034 = vadd.f32 %v1032, %v1033
  %v1035 = vsel %vm995, %v500, 0.0
  %v1036 = vadd.f32 %v1034, %v1035
  %v1037 = vsel %vm995, %v503, 0.0
  %v1038 = vadd.f32 %v1036, %v1037
  %v1039 = vsel %vm995, %v508, 0.0
  %v1040 = vadd.f32 %v1038, %v1039
  %v1041 = vsel %vm995, %v511, 0.0
  %v1042 = vadd.f32 %v1040, %v1041
  %v1043 = vsel %vm995, %v516, 0.0
  %v1044 = vadd.f32 %v1042, %v1043
  %v1045 = vsel %vm995, %v519, 0.0
  %v1046 = vadd.f32 %v1044, %v1045
  %v1047 = vsel %vm995, %v524, 0.0
  %v1048 = vadd.f32 %v1046, %v1047
  %v1049 = vsel %vm995, %v527, 0.0
  %v1050 = vadd.f32 %v1048, %v1049
  %v1051 = vsel %vm995, %v532, 0.0
  %v1052 = vadd.f32 %v1050, %v1051
  %v1053 = vsel %vm995, %v535, 0.0
  %v1054 = vadd.f32 %v1052, %v1053
  %v1055 = vsel %vm995, %v540, 0.0
  %v1056 = vadd.f32 %v1054, %v1055
  %v1057 = vsel %vm995, %v543, 0.0
  %v1058 = vadd.f32 %v1056, %v1057
  %v1059 = vsel %vm995, %v548, 0.0
  %v1060 = vadd.f32 %v1058, %v1059
  %v1061 = vsel %vm995, %v551, 0.0
  %v1062 = vadd.f32 %v1060, %v1061
  %v1063 = vsel %vm995, %v556, 0.0
  %v1064 = vadd.f32 %v1062, %v1063
  %v1065 = vsel %vm995, %v559, 0.0
  %v1066 = vadd.f32 %v1064, %v1065
  %v1067 = vsel %vm995, %v564, 0.0
  %v1068 = vadd.f32 %v1066, %v1067
  %v1069 = vsel %vm995, %v567, 0.0
  %v1070 = vadd.f32 %v1068, %v1069
  %v1071 = vsel %vm995, %v572, 0.0
  %v1072 = vadd.f32 %v1070, %v1071
  %v1073 = vsel %vm995, %v575, 0.0
  %v1074 = vadd.f32 %v1072, %v1073
  %v1075 = vsel %vm995, %v580, 0.0
  %v1076 = vadd.f32 %v1074, %v1075
  %v1077 = vsel %vm995, %v583, 0.0
  %v1078 = vadd.f32 %v1076, %v1077
  %v1079 = vsel %vm995, %v588, 0.0
  %v1080 = vadd.f32 %v1078, %v1079
  %v1081 = vsel %vm995, %v591, 0.0
  %v1082 = vadd.f32 %v1080, %v1081
  %v1083 = vsel %vm995, %v596, 0.0
  %v1084 = vadd.f32 %v1082, %v1083
  %v1085 = vsel %vm995, %v599, 0.0
  %v1086 = vadd.f32 %v1084, %v1085
  %v1087 = vsel %vm995, %v604, 0.0
  %v1088 = vadd.f32 %v1086, %v1087
  %v1089 = vsel %vm995, %v607, 0.0
  %v1090 = vadd.f32 %v1088, %v1089
  %v1091 = vsel %vm995, %v612, 0.0
  %v1092 = vadd.f32 %v1090, %v1091
  %v1093 = vsel %vm995, %v615, 0.0
  %v1094 = vadd.f32 %v1092, %v1093
  %v1095 = vsel %vm995, %v620, 0.0
  %v1096 = vadd.f32 %v1094, %v1095
  %v1097 = vsel %vm995, %v623, 0.0
  %v1098 = vadd.f32 %v1096, %v1097
  %v1099 = vsel %vm995, %v628, 0.0
  %v1100 = vadd.f32 %v1098, %v1099
  %v1101 = vsel %vm995, %v631, 0.0
  %v1102 = vadd.f32 %v1100, %v1101
  %v1103 = vsel %vm995, %v636, 0.0
  %v1104 = vadd.f32 %v1102, %v1103
  %v1105 = vsel %vm995, %v639, 0.0
  %v1106 = vadd.f32 %v1104, %v1105
  %v1107 = vsel %vm995, %v644, 0.0
  %v1108 = vadd.f32 %v1106, %v1107
  %v1109 = vsel %vm995, %v647, 0.0
  %v1110 = vadd.f32 %v1108, %v1109
  %v1111 = vsel %vm995, %v652, 0.0
  %v1112 = vadd.f32 %v1110, %v1111
  %v1113 = vsel %vm995, %v655, 0.0
  %v1114 = vadd.f32 %v1112, %v1113
  %v1115 = vsel %vm995, %v660, 0.0
  %v1116 = vadd.f32 %v1114, %v1115
  %v1117 = vsel %vm995, %v663, 0.0
  %v1118 = vadd.f32 %v1116, %v1117
  %v1119 = vsel %vm995, %v668, 0.0
  %v1120 = vadd.f32 %v1118, %v1119
  %v1121 = vsel %vm995, %v671, 0.0
  %v1122 = vadd.f32 %v1120, %v1121
  %v1123 = vrot.slane %v1122, 4
  %v1124 = vadd.f32 %v1122, %v1123
  %v1125 = vrot.slane %v1124, 2
  %v1126 = vadd.f32 %v1124, %v1125
  %v1127 = vrot.slane %v1126, 1
  %v1128 = vadd.f32 %v1126, %v1127
  %v1129 = vmul.f32 %v420, %v420
  %v1130 = vmul.f32 %v423, %v423
  %v1131 = vmul.f32 %v428, %v428
  %v1132 = vmul.f32 %v431, %v431
  %v1133 = vmul.f32 %v436, %v436
  %v1134 = vmul.f32 %v439, %v439
  %v1135 = vmul.f32 %v444, %v444
  %v1136 = vmul.f32 %v447, %v447
  %v1137 = vmul.f32 %v452, %v452
  %v1138 = vmul.f32 %v455, %v455
  %v1139 = vmul.f32 %v460, %v460
  %v1140 = vmul.f32 %v463, %v463
  %v1141 = vmul.f32 %v468, %v468
  %v1142 = vmul.f32 %v471, %v471
  %v1143 = vmul.f32 %v476, %v476
  %v1144 = vmul.f32 %v479, %v479
  %v1145 = vmul.f32 %v484, %v484
  %v1146 = vmul.f32 %v487, %v487
  %v1147 = vmul.f32 %v492, %v492
  %v1148 = vmul.f32 %v495, %v495
  %v1149 = vmul.f32 %v500, %v500
  %v1150 = vmul.f32 %v503, %v503
  %v1151 = vmul.f32 %v508, %v508
  %v1152 = vmul.f32 %v511, %v511
  %v1153 = vmul.f32 %v516, %v516
  %v1154 = vmul.f32 %v519, %v519
  %v1155 = vmul.f32 %v524, %v524
  %v1156 = vmul.f32 %v527, %v527
  %v1157 = vmul.f32 %v532, %v532
  %v1158 = vmul.f32 %v535, %v535
  %v1159 = vmul.f32 %v540, %v540
  %v1160 = vmul.f32 %v543, %v543
  %v1161 = vmul.f32 %v548, %v548
  %v1162 = vmul.f32 %v551, %v551
  %v1163 = vmul.f32 %v556, %v556
  %v1164 = vmul.f32 %v559, %v559
  %v1165 = vmul.f32 %v564, %v564
  %v1166 = vmul.f32 %v567, %v567
  %v1167 = vmul.f32 %v572, %v572
  %v1168 = vmul.f32 %v575, %v575
  %v1169 = vmul.f32 %v580, %v580
  %v1170 = vmul.f32 %v583, %v583
  %v1171 = vmul.f32 %v588, %v588
  %v1172 = vmul.f32 %v591, %v591
  %v1173 = vmul.f32 %v596, %v596
  %v1174 = vmul.f32 %v599, %v599
  %v1175 = vmul.f32 %v604, %v604
  %v1176 = vmul.f32 %v607, %v607
  %v1177 = vmul.f32 %v612, %v612
  %v1178 = vmul.f32 %v615, %v615
  %v1179 = vmul.f32 %v620, %v620
  %v1180 = vmul.f32 %v623, %v623
  %v1181 = vmul.f32 %v628, %v628
  %v1182 = vmul.f32 %v631, %v631
  %v1183 = vmul.f32 %v636, %v636
  %v1184 = vmul.f32 %v639, %v639
  %v1185 = vmul.f32 %v644, %v644
  %v1186 = vmul.f32 %v647, %v647
  %v1187 = vmul.f32 %v652, %v652
  %v1188 = vmul.f32 %v655, %v655
  %v1189 = vmul.f32 %v660, %v660
  %v1190 = vmul.f32 %v663, %v663
  %v1191 = vmul.f32 %v668, %v668
  %v1192 = vmul.f32 %v671, %v671
  %v1193 = vsel %vm995, %v1129, 0.0
  %v1194 = vsel %vm995, %v1130, 0.0
  %v1195 = vadd.f32 %v1193, %v1194
  %v1196 = vsel %vm995, %v1131, 0.0
  %v1197 = vadd.f32 %v1195, %v1196
  %v1198 = vsel %vm995, %v1132, 0.0
  %v1199 = vadd.f32 %v1197, %v1198
  %v1200 = vsel %vm995, %v1133, 0.0
  %v1201 = vadd.f32 %v1199, %v1200
  %v1202 = vsel %vm995, %v1134, 0.0
  %v1203 = vadd.f32 %v1201, %v1202
  %v1204 = vsel %vm995, %v1135, 0.0
  %v1205 = vadd.f32 %v1203, %v1204
  %v1206 = vsel %vm995, %v1136, 0.0
  %v1207 = vadd.f32 %v1205, %v1206
  %v1208 = vsel %vm995, %v1137, 0.0
  %v1209 = vadd.f32 %v1207, %v1208
  %v1210 = vsel %vm995, %v1138, 0.0
  %v1211 = vadd.f32 %v1209, %v1210
  %v1212 = vsel %vm995, %v1139, 0.0
  %v1213 = vadd.f32 %v1211, %v1212
  %v1214 = vsel %vm995, %v1140, 0.0
  %v1215 = vadd.f32 %v1213, %v1214
  %v1216 = vsel %vm995, %v1141, 0.0
  %v1217 = vadd.f32 %v1215, %v1216
  %v1218 = vsel %vm995, %v1142, 0.0
  %v1219 = vadd.f32 %v1217, %v1218
  %v1220 = vsel %vm995, %v1143, 0.0
  %v1221 = vadd.f32 %v1219, %v1220
  %v1222 = vsel %vm995, %v1144, 0.0
  %v1223 = vadd.f32 %v1221, %v1222
  %v1224 = vsel %vm995, %v1145, 0.0
  %v1225 = vadd.f32 %v1223, %v1224
  %v1226 = vsel %vm995, %v1146, 0.0
  %v1227 = vadd.f32 %v1225, %v1226
  %v1228 = vsel %vm995, %v1147, 0.0
  %v1229 = vadd.f32 %v1227, %v1228
  %v1230 = vsel %vm995, %v1148, 0.0
  %v1231 = vadd.f32 %v1229, %v1230
  %v1232 = vsel %vm995, %v1149, 0.0
  %v1233 = vadd.f32 %v1231, %v1232
  %v1234 = vsel %vm995, %v1150, 0.0
  %v1235 = vadd.f32 %v1233, %v1234
  %v1236 = vsel %vm995, %v1151, 0.0
  %v1237 = vadd.f32 %v1235, %v1236
  %v1238 = vsel %vm995, %v1152, 0.0
  %v1239 = vadd.f32 %v1237, %v1238
  %v1240 = vsel %vm995, %v1153, 0.0
  %v1241 = vadd.f32 %v1239, %v1240
  %v1242 = vsel %vm995, %v1154, 0.0
  %v1243 = vadd.f32 %v1241, %v1242
  %v1244 = vsel %vm995, %v1155, 0.0
  %v1245 = vadd.f32 %v1243, %v1244
  %v1246 = vsel %vm995, %v1156, 0.0
  %v1247 = vadd.f32 %v1245, %v1246
  %v1248 = vsel %vm995, %v1157, 0.0
  %v1249 = vadd.f32 %v1247, %v1248
  %v1250 = vsel %vm995, %v1158, 0.0
  %v1251 = vadd.f32 %v1249, %v1250
  %v1252 = vsel %vm995, %v1159, 0.0
  %v1253 = vadd.f32 %v1251, %v1252
  %v1254 = vsel %vm995, %v1160, 0.0
  %v1255 = vadd.f32 %v1253, %v1254
  %v1256 = vsel %vm995, %v1161, 0.0
  %v1257 = vadd.f32 %v1255, %v1256
  %v1258 = vsel %vm995, %v1162, 0.0
  %v1259 = vadd.f32 %v1257, %v1258
  %v1260 = vsel %vm995, %v1163, 0.0
  %v1261 = vadd.f32 %v1259, %v1260
  %v1262 = vsel %vm995, %v1164, 0.0
  %v1263 = vadd.f32 %v1261, %v1262
  %v1264 = vsel %vm995, %v1165, 0.0
  %v1265 = vadd.f32 %v1263, %v1264
  %v1266 = vsel %vm995, %v1166, 0.0
  %v1267 = vadd.f32 %v1265, %v1266
  %v1268 = vsel %vm995, %v1167, 0.0
  %v1269 = vadd.f32 %v1267, %v1268
  %v1270 = vsel %vm995, %v1168, 0.0
  %v1271 = vadd.f32 %v1269, %v1270
  %v1272 = vsel %vm995, %v1169, 0.0
  %v1273 = vadd.f32 %v1271, %v1272
  %v1274 = vsel %vm995, %v1170, 0.0
  %v1275 = vadd.f32 %v1273, %v1274
  %v1276 = vsel %vm995, %v1171, 0.0
  %v1277 = vadd.f32 %v1275, %v1276
  %v1278 = vsel %vm995, %v1172, 0.0
  %v1279 = vadd.f32 %v1277, %v1278
  %v1280 = vsel %vm995, %v1173, 0.0
  %v1281 = vadd.f32 %v1279, %v1280
  %v1282 = vsel %vm995, %v1174, 0.0
  %v1283 = vadd.f32 %v1281, %v1282
  %v1284 = vsel %vm995, %v1175, 0.0
  %v1285 = vadd.f32 %v1283, %v1284
  %v1286 = vsel %vm995, %v1176, 0.0
  %v1287 = vadd.f32 %v1285, %v1286
  %v1288 = vsel %vm995, %v1177, 0.0
  %v1289 = vadd.f32 %v1287, %v1288
  %v1290 = vsel %vm995, %v1178, 0.0
  %v1291 = vadd.f32 %v1289, %v1290
  %v1292 = vsel %vm995, %v1179, 0.0
  %v1293 = vadd.f32 %v1291, %v1292
  %v1294 = vsel %vm995, %v1180, 0.0
  %v1295 = vadd.f32 %v1293, %v1294
  %v1296 = vsel %vm995, %v1181, 0.0
  %v1297 = vadd.f32 %v1295, %v1296
  %v1298 = vsel %vm995, %v1182, 0.0
  %v1299 = vadd.f32 %v1297, %v1298
  %v1300 = vsel %vm995, %v1183, 0.0
  %v1301 = vadd.f32 %v1299, %v1300
  %v1302 = vsel %vm995, %v1184, 0.0
  %v1303 = vadd.f32 %v1301, %v1302
  %v1304 = vsel %vm995, %v1185, 0.0
  %v1305 = vadd.f32 %v1303, %v1304
  %v1306 = vsel %vm995, %v1186, 0.0
  %v1307 = vadd.f32 %v1305, %v1306
  %v1308 = vsel %vm995, %v1187, 0.0
  %v1309 = vadd.f32 %v1307, %v1308
  %v1310 = vsel %vm995, %v1188, 0.0
  %v1311 = vadd.f32 %v1309, %v1310
  %v1312 = vsel %vm995, %v1189, 0.0
  %v1313 = vadd.f32 %v1311, %v1312
  %v1314 = vsel %vm995, %v1190, 0.0
  %v1315 = vadd.f32 %v1313, %v1314
  %v1316 = vsel %vm995, %v1191, 0.0
  %v1317 = vadd.f32 %v1315, %v1316
  %v1318 = vsel %vm995, %v1192, 0.0
  %v1319 = vadd.f32 %v1317, %v1318
  %v1320 = vrot.slane %v1319, 4
  %v1321 = vadd.f32 %v1319, %v1320
  %v1322 = vrot.slane %v1321, 2
  %v1323 = vadd.f32 %v1321, %v1322
  %v1324 = vrot.slane %v1323, 1
  %v1325 = vadd.f32 %v1323, %v1324
  %v1326 = vlaneseq
  %v1327 = vshrl.u32 %v1326, 7
  %vm1328 = vcmp.eq.s32.totalorder %v1327, 0
  %v1329 = vsel %vm1328, %v1128, 0.0
  %vm1330 = vcmp.eq.s32.totalorder %v1327, 1
  %v1331 = vsel %vm1330, %v1325, 0.0
  %v1332 = vadd.f32 %v1329, %v1331
  %1333 = vst.msk [vmem:[%s4] sm:$0xff] %vm995, %v1332
  // Predicated region
  $region14: #{cvae_forward.11} parent=0 // pred_check
    _
  $region15: #{cvae_forward.11} parent=0 // pred_check_branch
    %1335 = sbr.rel (0) target = $region17
  $region16: #{cvae_forward.11} parent=0 // pred_region
    _
  $region17: #{cvae_forward.11} parent=0 // pred_fallthru
    _
  // Predicated region
  $region18: #{cvae_forward.11} parent=0 // pred_check
    _
  $region19: #{cvae_forward.11} parent=0 // pred_check_branch
    %1337 = sbr.rel (0) target = $region21
  $region20: #{cvae_forward.11} parent=0 // pred_region
    _
  $region21: #{cvae_forward.11} parent=0 // pred_fallthru
    _
  // Predicated region
  $region22: #{cvae_forward.11} parent=0 // pred_check
    _
  $region23: #{cvae_forward.11} parent=0 // pred_check_branch
    %1339 = sbr.rel (0) target = $region25
  $region24: #{cvae_forward.11} parent=0 // pred_region
    _
  $region25: #{cvae_forward.11} parent=0 // pred_fallthru
    _
  // Predicated region
  $region26: #{cvae_forward.11} parent=0 // pred_check
    _
  $region27: #{cvae_forward.11} parent=0 // pred_check_branch
    %1341 = sbr.rel (0) target = $region29
  $region28: #{cvae_forward.11} parent=0 // pred_region
    _
  $region29: #{cvae_forward.11} parent=0 // pred_fallthru
    _

// kernel: cvae_forward.12
$region0: #{cvae_forward.12}
  #allocation0 [shape = 'u32[]', space=smem, size = 0x4, offset = 0x4, fixed_abs, tag = 'smem constant byte address 0x4 - core index']
  #allocation1 [shape = 'u32[144,128]{1,0:T(1,128)}', space=vmem, size = 0x12000, scoped, tag = 'internal scratch']
  %s0 = inlined_call_operand.vmem [shape: bf16[128,144], index: 0, kind: input, shape index: {}]
  %s1 = inlined_call_operand.vmem [shape: bf16[144,32], index: 1, kind: input, shape index: {}]
  %s2 = inlined_call_operand.vmem [shape: f32[1,32], index: 2, kind: input, shape index: {}]
  %s3 = inlined_call_operand.vmem [shape: bf16[128,32], index: 3, kind: output, shape index: {0}]
  %s4 = inlined_call_operand.vmem [shape: f32[8,32], index: 4, kind: output, shape index: {1}]
  %5 = xla_tuple %s3, %s4
  %s6 = sld [smem:[#allocation0]]
  $region30: #{cvae_forward.12} parent=0
    _
  %s8 = ssub.s32 1, %s6
  %s9 = scalar_select 0, %s8, %s6
  // Predicated region
  $region2: #{cvae_forward.12} parent=0 // pred_check
    _
  $region3: #{cvae_forward.12} parent=0 // pred_check_branch
    %11 = sbr.rel (0) target = $region5
  $region4: #{cvae_forward.12} parent=0 // pred_region
    _
  $region5: #{cvae_forward.12} parent=0 // pred_fallthru
    _
  // Predicated region
  $region6: #{cvae_forward.12} parent=0 // pred_check
    _
  $region7: #{cvae_forward.12} parent=0 // pred_check_branch
    %13 = sbr.rel (0) target = $region9
  $region8: #{cvae_forward.12} parent=0 // pred_region
    _
  $region9: #{cvae_forward.12} parent=0 // pred_fallthru
    _
  // Predicated region
  $region10: #{cvae_forward.12} parent=0 // pred_check
    _
  $region11: #{cvae_forward.12} parent=0 // pred_check_branch
    %15 = sbr.rel (0) target = $region13
  $region12: #{cvae_forward.12} parent=0 // pred_region
    _
  $region13: #{cvae_forward.12} parent=0 // pred_fallthru
    _
  %v17 = vld [vmem:[%s0] sm:$0xff]
  %v18 = vld [vmem:[%s0 + $0x8] sm:$0xff]
  %v19 = vld [vmem:[%s0 + $0x10] sm:$0xff]
  %v20 = vld [vmem:[%s0 + $0x18] sm:$0xff]
  %v21 = vld [vmem:[%s0 + $0x20] sm:$0xff]
  %v22 = vld [vmem:[%s0 + $0x28] sm:$0xff]
  %v23 = vld [vmem:[%s0 + $0x30] sm:$0xff]
  %v24 = vld [vmem:[%s0 + $0x38] sm:$0xff]
  %v25 = vld [vmem:[%s0 + $0x40] sm:$0xff]
  %v26 = vld [vmem:[%s0 + $0x48] sm:$0xff]
  %v27 = vld [vmem:[%s0 + $0x50] sm:$0xff]
  %v28 = vld [vmem:[%s0 + $0x58] sm:$0xff]
  %v29 = vld [vmem:[%s0 + $0x60] sm:$0xff]
  %v30 = vld [vmem:[%s0 + $0x68] sm:$0xff]
  %v31 = vld [vmem:[%s0 + $0x70] sm:$0xff]
  %v32 = vld [vmem:[%s0 + $0x78] sm:$0xff]
  %v33 = vld [vmem:[%s1] sm:$0xf]
  %v34 = vld [vmem:[%s1 + $0x4] sm:$0xf]
  %v35 = vld [vmem:[%s1 + $0x8] sm:$0xf]
  %v36 = vld [vmem:[%s1 + $0xc] sm:$0xf]
  %v37 = vld [vmem:[%s1 + $0x10] sm:$0xf]
  %v38 = vld [vmem:[%s1 + $0x14] sm:$0xf]
  %v39 = vld [vmem:[%s1 + $0x18] sm:$0xf]
  %v40 = vld [vmem:[%s1 + $0x1c] sm:$0xf]
  %v41 = vld [vmem:[%s1 + $0x20] sm:$0xf]
  %v42 = vld [vmem:[%s1 + $0x24] sm:$0xf]
  %v43 = vld [vmem:[%s1 + $0x28] sm:$0xf]
  %v44 = vld [vmem:[%s1 + $0x2c] sm:$0xf]
  %v45 = vld [vmem:[%s1 + $0x30] sm:$0xf]
  %v46 = vld [vmem:[%s1 + $0x34] sm:$0xf]
  %v47 = vld [vmem:[%s1 + $0x38] sm:$0xf]
  %v48 = vld [vmem:[%s1 + $0x3c] sm:$0xf]
  %v49 = vld [vmem:[%s1 + $0x40] sm:$0xf]
  %v50 = vld [vmem:[%s1 + $0x44] sm:$0xf]
  %v51 = vld [vmem:[%s2] sm:$0x1]
  %v53 = vlaneseq
  %v54 = vshrl.u32 %v53, 7
  %v55 = vsub.s32 0, %v54
  %v56 = vrot.slane %v51, %v55
  %v74 = vunpack.c.l.b16 %v17
  %v75 = vunpack.c.h.b16 %v17
  %v76 = vunpack.c.l.b16 %v18
  %v77 = vunpack.c.h.b16 %v18
  %v78 = vunpack.c.l.b16 %v19
  %v79 = vunpack.c.h.b16 %v19
  %v80 = vunpack.c.l.b16 %v20
  %v81 = vunpack.c.h.b16 %v20
  %v82 = vunpack.c.l.b16 %v21
  %v83 = vunpack.c.h.b16 %v21
  %v84 = vunpack.c.l.b16 %v22
  %v85 = vunpack.c.h.b16 %v22
  %v86 = vunpack.c.l.b16 %v23
  %v87 = vunpack.c.h.b16 %v23
  %v88 = vunpack.c.l.b16 %v24
  %v89 = vunpack.c.h.b16 %v24
  %v90 = vunpack.c.l.b16 %v25
  %v91 = vunpack.c.h.b16 %v25
  %v92 = vunpack.c.l.b16 %v26
  %v93 = vunpack.c.h.b16 %v26
  %v94 = vunpack.c.l.b16 %v27
  %v95 = vunpack.c.h.b16 %v27
  %v96 = vunpack.c.l.b16 %v28
  %v97 = vunpack.c.h.b16 %v28
  %v98 = vunpack.c.l.b16 %v29
  %v99 = vunpack.c.h.b16 %v29
  %v100 = vunpack.c.l.b16 %v30
  %v101 = vunpack.c.h.b16 %v30
  %v102 = vunpack.c.l.b16 %v31
  %v103 = vunpack.c.h.b16 %v31
  %v104 = vunpack.c.l.b16 %v32
  %v105 = vunpack.c.h.b16 %v32
  %v106 = vpack.c.b16 %v76, %v74
  %v107 = vpack.c.b16 %v77, %v75
  %v108 = vpack.c.b16 %v80, %v78
  %v109 = vpack.c.b16 %v81, %v79
  %v110 = vpack.c.b16 %v84, %v82
  %v111 = vpack.c.b16 %v85, %v83
  %v112 = vpack.c.b16 %v88, %v86
  %v113 = vpack.c.b16 %v89, %v87
  %v114 = vpack.c.b16 %v92, %v90
  %v115 = vpack.c.b16 %v93, %v91
  %v116 = vpack.c.b16 %v96, %v94
  %v117 = vpack.c.b16 %v97, %v95
  %v118 = vpack.c.b16 %v100, %v98
  %v119 = vpack.c.b16 %v101, %v99
  %v120 = vpack.c.b16 %v104, %v102
  %v121 = vpack.c.b16 %v105, %v103
  %v148 = vunpack.c.l.b16 %v33
  %v149 = vunpack.c.l.b16 %v34
  %v150 = vunpack.c.l.b16 %v35
  %v151 = vunpack.c.l.b16 %v36
  %v152 = vunpack.c.l.b16 %v37
  %v153 = vunpack.c.l.b16 %v38
  %v154 = vunpack.c.l.b16 %v39
  %v155 = vunpack.c.l.b16 %v40
  %v156 = vunpack.c.l.b16 %v41
  %v157 = vunpack.c.l.b16 %v42
  %v158 = vunpack.c.l.b16 %v43
  %v159 = vunpack.c.l.b16 %v44
  %v160 = vunpack.c.l.b16 %v45
  %v161 = vunpack.c.l.b16 %v46
  %v162 = vunpack.c.l.b16 %v47
  %v163 = vunpack.c.l.b16 %v48
  %v164 = vunpack.c.l.b16 %v49
  %v165 = vunpack.c.l.b16 %v50
  %v166 = vpack.c.b16 %v149, %v148
  %v167 = vpack.c.b16 %v151, %v150
  %v168 = vpack.c.b16 %v153, %v152
  %v169 = vpack.c.b16 %v155, %v154
  %v170 = vpack.c.b16 %v157, %v156
  %v171 = vpack.c.b16 %v159, %v158
  %v172 = vpack.c.b16 %v161, %v160
  %v173 = vpack.c.b16 %v163, %v162
  %v174 = vpack.c.b16 %v165, %v164
  %vm184 = vcmask 130048
  %v186 = vsel %vm184, %v107, 0
  %v189 = vsel %vm184, %v109, 0
  %v192 = vsel %vm184, %v111, 0
  %v195 = vsel %vm184, %v113, 0
  %v198 = vsel %vm184, %v115, 0
  %v201 = vsel %vm184, %v117, 0
  %v204 = vsel %vm184, %v119, 0
  %v207 = vsel %vm184, %v121, 0
  %209 = vmatprep.subr.bf16.mxu0 0
  %210 = vmatpush1.bf16.msra.mxu0 %v173
  %211 = vmatprep.subr.bf16.mxu0 0
  %212 = vmatpush1.bf16.msra.mxu0 %v172
  %213 = vmatprep.subr.bf16.mxu0 0
  %214 = vmatpush1.bf16.msra.mxu0 %v171
  %215 = vmatprep.subr.bf16.mxu0 0
  %216 = vmatpush1.bf16.msra.mxu0 %v170
  %217 = vmatprep.subr.bf16.mxu0 0
  %218 = vmatpush1.bf16.msra.mxu0 %v169
  %219 = vmatprep.subr.bf16.mxu0 0
  %220 = vmatpush1.bf16.msra.mxu0 %v168
  %221 = vmatprep.subr.bf16.mxu0 0
  %222 = vmatpush1.bf16.msra.mxu0 %v167
  %223 = vmatprep.subr.bf16.mxu0 0
  %224 = vmatpush1.bf16.msra.mxu0 %v166
  %225 = vmatprep.subr.bf16.mxu0 0
  %226 = vmatpush2.bf16.msra.mxu0 0
  %227 = vmatprep.subr.bf16.mxu0 0
  %228 = vmatpush2.bf16.msra.mxu0 0
  %229 = vmatprep.subr.bf16.mxu0 0
  %230 = vmatpush2.bf16.msra.mxu0 0
  %231 = vmatprep.subr.bf16.mxu0 0
  %232 = vmatpush2.bf16.msra.mxu0 0
  %233 = vmatprep.subr.bf16.mxu0 0
  %234 = vmatpush2.bf16.msra.mxu0 0
  %235 = vmatprep.subr.bf16.mxu0 0
  %236 = vmatpush2.bf16.msra.mxu0 0
  %237 = vmatprep.subr.bf16.mxu0 0
  %238 = vmatpush2.bf16.msra.mxu0 0
  %239 = vmatprep.subr.bf16.mxu0 0
  %240 = vmatpush2.bf16.msra.mxu0 %v174
  %241 = vmatprep.mubr.bf16.mxu0 %v186
  %242 = vmatmul.mubr.bf16.gmra.mxu0 %v106
  %v243 = vpop.f32.mrf.mxu0
  %v244 = vadd.f32 %v56, %v243
  %v245 = vpop.f32.mrf.mxu0
  %v246 = vpop.f32.mrf.mxu0
  %v247 = vadd.f32 %v56, %v246
  %v248 = vpop.f32.mrf.mxu0
  %249 = vmatprep.mubr.bf16.mxu0 %v189
  %250 = vmatmul.mubr.bf16.gmra.mxu0 %v108
  %v251 = vpop.f32.mrf.mxu0
  %v252 = vadd.f32 %v56, %v251
  %v253 = vpop.f32.mrf.mxu0
  %v254 = vpop.f32.mrf.mxu0
  %v255 = vadd.f32 %v56, %v254
  %v256 = vpop.f32.mrf.mxu0
  %257 = vmatprep.mubr.bf16.mxu0 %v192
  %258 = vmatmul.mubr.bf16.gmra.mxu0 %v110
  %v259 = vpop.f32.mrf.mxu0
  %v260 = vadd.f32 %v56, %v259
  %v261 = vpop.f32.mrf.mxu0
  %v262 = vpop.f32.mrf.mxu0
  %v263 = vadd.f32 %v56, %v262
  %v264 = vpop.f32.mrf.mxu0
  %265 = vmatprep.mubr.bf16.mxu0 %v195
  %266 = vmatmul.mubr.bf16.gmra.mxu0 %v112
  %v267 = vpop.f32.mrf.mxu0
  %v268 = vadd.f32 %v56, %v267
  %v269 = vpop.f32.mrf.mxu0
  %v270 = vpop.f32.mrf.mxu0
  %v271 = vadd.f32 %v56, %v270
  %v272 = vpop.f32.mrf.mxu0
  %273 = vmatprep.mubr.bf16.mxu0 %v198
  %274 = vmatmul.mubr.bf16.gmra.mxu0 %v114
  %v275 = vpop.f32.mrf.mxu0
  %v276 = vadd.f32 %v56, %v275
  %v277 = vpop.f32.mrf.mxu0
  %v278 = vpop.f32.mrf.mxu0
  %v279 = vadd.f32 %v56, %v278
  %v280 = vpop.f32.mrf.mxu0
  %281 = vmatprep.mubr.bf16.mxu0 %v201
  %282 = vmatmul.mubr.bf16.gmra.mxu0 %v116
  %v283 = vpop.f32.mrf.mxu0
  %v284 = vadd.f32 %v56, %v283
  %v285 = vpop.f32.mrf.mxu0
  %v286 = vpop.f32.mrf.mxu0
  %v287 = vadd.f32 %v56, %v286
  %v288 = vpop.f32.mrf.mxu0
  %289 = vmatprep.mubr.bf16.mxu0 %v204
  %290 = vmatmul.mubr.bf16.gmra.mxu0 %v118
  %v291 = vpop.f32.mrf.mxu0
  %v292 = vadd.f32 %v56, %v291
  %v293 = vpop.f32.mrf.mxu0
  %v294 = vpop.f32.mrf.mxu0
  %v295 = vadd.f32 %v56, %v294
  %v296 = vpop.f32.mrf.mxu0
  %297 = vmatprep.mubr.bf16.mxu0 %v207
  %298 = vmatmul.mubr.bf16.gmra.mxu0 %v120
  %v299 = vpop.f32.mrf.mxu0
  %v300 = vadd.f32 %v56, %v299
  %v301 = vpop.f32.mrf.mxu0
  %v302 = vpop.f32.mrf.mxu0
  %v303 = vadd.f32 %v56, %v302
  %v304 = vpop.f32.mrf.mxu0
  %305 = vdwg.mxu0
  %v306 = vpack.c.bf16 %v247, %v244
  %v307 = vpack.c.bf16 %v255, %v252
  %v308 = vpack.c.bf16 %v263, %v260
  %v309 = vpack.c.bf16 %v271, %v268
  %v310 = vpack.c.bf16 %v279, %v276
  %v311 = vpack.c.bf16 %v287, %v284
  %v312 = vpack.c.bf16 %v295, %v292
  %v313 = vpack.c.bf16 %v303, %v300
  %v322 = vunpack.c.l.b16 %v306
  %v323 = vunpack.c.h.b16 %v306
  %v324 = vunpack.c.l.b16 %v307
  %v325 = vunpack.c.h.b16 %v307
  %v326 = vunpack.c.l.b16 %v308
  %v327 = vunpack.c.h.b16 %v308
  %v328 = vunpack.c.l.b16 %v309
  %v329 = vunpack.c.h.b16 %v309
  %v330 = vunpack.c.l.b16 %v310
  %v331 = vunpack.c.h.b16 %v310
  %v332 = vunpack.c.l.b16 %v311
  %v333 = vunpack.c.h.b16 %v311
  %v334 = vunpack.c.l.b16 %v312
  %v335 = vunpack.c.h.b16 %v312
  %v336 = vunpack.c.l.b16 %v313
  %v337 = vunpack.c.h.b16 %v313
  %v338 = vpack.c.b16 %v322, %v322
  %v339 = vpack.c.b16 %v323, %v323
  %v340 = vpack.c.b16 %v324, %v324
  %v341 = vpack.c.b16 %v325, %v325
  %v342 = vpack.c.b16 %v326, %v326
  %v343 = vpack.c.b16 %v327, %v327
  %v344 = vpack.c.b16 %v328, %v328
  %v345 = vpack.c.b16 %v329, %v329
  %v346 = vpack.c.b16 %v330, %v330
  %v347 = vpack.c.b16 %v331, %v331
  %v348 = vpack.c.b16 %v332, %v332
  %v349 = vpack.c.b16 %v333, %v333
  %v350 = vpack.c.b16 %v334, %v334
  %v351 = vpack.c.b16 %v335, %v335
  %v352 = vpack.c.b16 %v336, %v336
  %v353 = vpack.c.b16 %v337, %v337
  %vm370 = vcmask 257024
  %371 = vst.msk [vmem:[%s3] sm:$0xf] %vm370, %v338
  %372 = vst.msk [vmem:[%s3 + $0x4] sm:$0xf] %vm370, %v339
  %373 = vst.msk [vmem:[%s3 + $0x8] sm:$0xf] %vm370, %v340
  %374 = vst.msk [vmem:[%s3 + $0xc] sm:$0xf] %vm370, %v341
  %375 = vst.msk [vmem:[%s3 + $0x10] sm:$0xf] %vm370, %v342
  %376 = vst.msk [vmem:[%s3 + $0x14] sm:$0xf] %vm370, %v343
  %377 = vst.msk [vmem:[%s3 + $0x18] sm:$0xf] %vm370, %v344
  %378 = vst.msk [vmem:[%s3 + $0x1c] sm:$0xf] %vm370, %v345
  %379 = vst.msk [vmem:[%s3 + $0x20] sm:$0xf] %vm370, %v346
  %380 = vst.msk [vmem:[%s3 + $0x24] sm:$0xf] %vm370, %v347
  %381 = vst.msk [vmem:[%s3 + $0x28] sm:$0xf] %vm370, %v348
  %382 = vst.msk [vmem:[%s3 + $0x2c] sm:$0xf] %vm370, %v349
  %383 = vst.msk [vmem:[%s3 + $0x30] sm:$0xf] %vm370, %v350
  %384 = vst.msk [vmem:[%s3 + $0x34] sm:$0xf] %vm370, %v351
  %385 = vst.msk [vmem:[%s3 + $0x38] sm:$0xf] %vm370, %v352
  %386 = vst.msk [vmem:[%s3 + $0x3c] sm:$0xf] %vm370, %v353
  %vm387 = vcmask 261120
  %v388 = vsel %vm387, %v244, 0.0
  %v389 = vsel %vm387, %v247, 0.0
  %v390 = vadd.f32 %v388, %v389
  %v391 = vsel %vm387, %v252, 0.0
  %v392 = vadd.f32 %v390, %v391
  %v393 = vsel %vm387, %v255, 0.0
  %v394 = vadd.f32 %v392, %v393
  %v395 = vsel %vm387, %v260, 0.0
  %v396 = vadd.f32 %v394, %v395
  %v397 = vsel %vm387, %v263, 0.0
  %v398 = vadd.f32 %v396, %v397
  %v399 = vsel %vm387, %v268, 0.0
  %v400 = vadd.f32 %v398, %v399
  %v401 = vsel %vm387, %v271, 0.0
  %v402 = vadd.f32 %v400, %v401
  %v403 = vsel %vm387, %v276, 0.0
  %v404 = vadd.f32 %v402, %v403
  %v405 = vsel %vm387, %v279, 0.0
  %v406 = vadd.f32 %v404, %v405
  %v407 = vsel %vm387, %v284, 0.0
  %v408 = vadd.f32 %v406, %v407
  %v409 = vsel %vm387, %v287, 0.0
  %v410 = vadd.f32 %v408, %v409
  %v411 = vsel %vm387, %v292, 0.0
  %v412 = vadd.f32 %v410, %v411
  %v413 = vsel %vm387, %v295, 0.0
  %v414 = vadd.f32 %v412, %v413
  %v415 = vsel %vm387, %v300, 0.0
  %v416 = vadd.f32 %v414, %v415
  %v417 = vsel %vm387, %v303, 0.0
  %v418 = vadd.f32 %v416, %v417
  %v419 = vrot.slane %v418, 4
  %v420 = vadd.f32 %v418, %v419
  %v421 = vrot.slane %v420, 2
  %v422 = vadd.f32 %v420, %v421
  %v423 = vrot.slane %v422, 1
  %v424 = vadd.f32 %v422, %v423
  %v425 = vmul.f32 %v244, %v244
  %v426 = vmul.f32 %v247, %v247
  %v427 = vmul.f32 %v252, %v252
  %v428 = vmul.f32 %v255, %v255
  %v429 = vmul.f32 %v260, %v260
  %v430 = vmul.f32 %v263, %v263
  %v431 = vmul.f32 %v268, %v268
  %v432 = vmul.f32 %v271, %v271
  %v433 = vmul.f32 %v276, %v276
  %v434 = vmul.f32 %v279, %v279
  %v435 = vmul.f32 %v284, %v284
  %v436 = vmul.f32 %v287, %v287
  %v437 = vmul.f32 %v292, %v292
  %v438 = vmul.f32 %v295, %v295
  %v439 = vmul.f32 %v300, %v300
  %v440 = vmul.f32 %v303, %v303
  %v441 = vsel %vm387, %v425, 0.0
  %v442 = vsel %vm387, %v426, 0.0
  %v443 = vadd.f32 %v441, %v442
  %v444 = vsel %vm387, %v427, 0.0
  %v445 = vadd.f32 %v443, %v444
  %v446 = vsel %vm387, %v428, 0.0
  %v447 = vadd.f32 %v445, %v446
  %v448 = vsel %vm387, %v429, 0.0
  %v449 = vadd.f32 %v447, %v448
  %v450 = vsel %vm387, %v430, 0.0
  %v451 = vadd.f32 %v449, %v450
  %v452 = vsel %vm387, %v431, 0.0
  %v453 = vadd.f32 %v451, %v452
  %v454 = vsel %vm387, %v432, 0.0
  %v455 = vadd.f32 %v453, %v454
  %v456 = vsel %vm387, %v433, 0.0
  %v457 = vadd.f32 %v455, %v456
  %v458 = vsel %vm387, %v434, 0.0
  %v459 = vadd.f32 %v457, %v458
  %v460 = vsel %vm387, %v435, 0.0
  %v461 = vadd.f32 %v459, %v460
  %v462 = vsel %vm387, %v436, 0.0
  %v463 = vadd.f32 %v461, %v462
  %v464 = vsel %vm387, %v437, 0.0
  %v465 = vadd.f32 %v463, %v464
  %v466 = vsel %vm387, %v438, 0.0
  %v467 = vadd.f32 %v465, %v466
  %v468 = vsel %vm387, %v439, 0.0
  %v469 = vadd.f32 %v467, %v468
  %v470 = vsel %vm387, %v440, 0.0
  %v471 = vadd.f32 %v469, %v470
  %v472 = vrot.slane %v471, 4
  %v473 = vadd.f32 %v471, %v472
  %v474 = vrot.slane %v473, 2
  %v475 = vadd.f32 %v473, %v474
  %v476 = vrot.slane %v475, 1
  %v477 = vadd.f32 %v475, %v476
  %v478 = vlaneseq
  %v479 = vshrl.u32 %v478, 7
  %vm480 = vcmp.eq.s32.totalorder %v479, 0
  %v481 = vsel %vm480, %v424, 0.0
  %vm482 = vcmp.eq.s32.totalorder %v479, 1
  %v483 = vsel %vm482, %v477, 0.0
  %v484 = vadd.f32 %v481, %v483
  %485 = vst.msk [vmem:[%s4] sm:$0xff] %vm387, %v484
  // Predicated region
  $region14: #{cvae_forward.12} parent=0 // pred_check
    _
  $region15: #{cvae_forward.12} parent=0 // pred_check_branch
    %487 = sbr.rel (0) target = $region17
  $region16: #{cvae_forward.12} parent=0 // pred_region
    _
  $region17: #{cvae_forward.12} parent=0 // pred_fallthru
    _
  // Predicated region
  $region18: #{cvae_forward.12} parent=0 // pred_check
    _
  $region19: #{cvae_forward.12} parent=0 // pred_check_branch
    %489 = sbr.rel (0) target = $region21
  $region20: #{cvae_forward.12} parent=0 // pred_region
    _
  $region21: #{cvae_forward.12} parent=0 // pred_fallthru
    _
  // Predicated region
  $region22: #{cvae_forward.12} parent=0 // pred_check
    _
  $region23: #{cvae_forward.12} parent=0 // pred_check_branch
    %491 = sbr.rel (0) target = $region25
  $region24: #{cvae_forward.12} parent=0 // pred_region
    _
  $region25: #{cvae_forward.12} parent=0 // pred_fallthru
    _
  // Predicated region
  $region26: #{cvae_forward.12} parent=0 // pred_check
    _
  $region27: #{cvae_forward.12} parent=0 // pred_check_branch
    %493 = sbr.rel (0) target = $region29
  $region28: #{cvae_forward.12} parent=0 // pred_region
    _
  $region29: #{cvae_forward.12} parent=0 // pred_fallthru
    _

// kernel: cvae_forward.13
$region0: #{cvae_forward.13}
  #allocation0 [shape = 'u32[]', space=smem, size = 0x4, offset = 0x4, fixed_abs, tag = 'smem constant byte address 0x4 - core index']
  #allocation1 [shape = 'u32[144,128]{1,0:T(1,128)}', space=vmem, size = 0x12000, scoped, tag = 'internal scratch']
  %s0 = inlined_call_operand.vmem [shape: bf16[32,288], index: 0, kind: input, shape index: {}]
  %s1 = inlined_call_operand.vmem [shape: bf16[288,32], index: 1, kind: input, shape index: {}]
  %s2 = inlined_call_operand.vmem [shape: f32[1,32], index: 2, kind: input, shape index: {}]
  %s3 = inlined_call_operand.vmem [shape: bf16[32,32], index: 3, kind: output, shape index: {0}]
  %s4 = inlined_call_operand.vmem [shape: f32[8,32], index: 4, kind: output, shape index: {1}]
  %5 = xla_tuple %s3, %s4
  %s6 = sld [smem:[#allocation0]]
  $region30: #{cvae_forward.13} parent=0
    _
  %s8 = ssub.s32 1, %s6
  %s9 = scalar_select 0, %s8, %s6
  // Predicated region
  $region2: #{cvae_forward.13} parent=0 // pred_check
    _
  $region3: #{cvae_forward.13} parent=0 // pred_check_branch
    %11 = sbr.rel (0) target = $region5
  $region4: #{cvae_forward.13} parent=0 // pred_region
    _
  $region5: #{cvae_forward.13} parent=0 // pred_fallthru
    _
  // Predicated region
  $region6: #{cvae_forward.13} parent=0 // pred_check
    _
  $region7: #{cvae_forward.13} parent=0 // pred_check_branch
    %13 = sbr.rel (0) target = $region9
  $region8: #{cvae_forward.13} parent=0 // pred_region
    _
  $region9: #{cvae_forward.13} parent=0 // pred_fallthru
    _
  // Predicated region
  $region10: #{cvae_forward.13} parent=0 // pred_check
    _
  $region11: #{cvae_forward.13} parent=0 // pred_check_branch
    %15 = sbr.rel (0) target = $region13
  $region12: #{cvae_forward.13} parent=0 // pred_region
    _
  $region13: #{cvae_forward.13} parent=0 // pred_fallthru
    _
  %v17 = vld [vmem:[%s0] sm:$0xff]
  %v18 = vld [vmem:[%s0 + $0x8] sm:$0xf]
  %v19 = vld [vmem:[%s0 + $0xc] sm:$0xff]
  %v20 = vld [vmem:[%s0 + $0x14] sm:$0xf]
  %v21 = vld [vmem:[%s0 + $0x18] sm:$0xff]
  %v22 = vld [vmem:[%s0 + $0x20] sm:$0xf]
  %v23 = vld [vmem:[%s0 + $0x24] sm:$0xff]
  %v24 = vld [vmem:[%s0 + $0x2c] sm:$0xf]
  %v25 = vld [vmem:[%s1] sm:$0xf]
  %v26 = vld [vmem:[%s1 + $0x4] sm:$0xf]
  %v27 = vld [vmem:[%s1 + $0x8] sm:$0xf]
  %v28 = vld [vmem:[%s1 + $0xc] sm:$0xf]
  %v29 = vld [vmem:[%s1 + $0x10] sm:$0xf]
  %v30 = vld [vmem:[%s1 + $0x14] sm:$0xf]
  %v31 = vld [vmem:[%s1 + $0x18] sm:$0xf]
  %v32 = vld [vmem:[%s1 + $0x1c] sm:$0xf]
  %v33 = vld [vmem:[%s1 + $0x20] sm:$0xf]
  %v34 = vld [vmem:[%s1 + $0x24] sm:$0xf]
  %v35 = vld [vmem:[%s1 + $0x28] sm:$0xf]
  %v36 = vld [vmem:[%s1 + $0x2c] sm:$0xf]
  %v37 = vld [vmem:[%s1 + $0x30] sm:$0xf]
  %v38 = vld [vmem:[%s1 + $0x34] sm:$0xf]
  %v39 = vld [vmem:[%s1 + $0x38] sm:$0xf]
  %v40 = vld [vmem:[%s1 + $0x3c] sm:$0xf]
  %v41 = vld [vmem:[%s1 + $0x40] sm:$0xf]
  %v42 = vld [vmem:[%s1 + $0x44] sm:$0xf]
  %v43 = vld [vmem:[%s1 + $0x48] sm:$0xf]
  %v44 = vld [vmem:[%s1 + $0x4c] sm:$0xf]
  %v45 = vld [vmem:[%s1 + $0x50] sm:$0xf]
  %v46 = vld [vmem:[%s1 + $0x54] sm:$0xf]
  %v47 = vld [vmem:[%s1 + $0x58] sm:$0xf]
  %v48 = vld [vmem:[%s1 + $0x5c] sm:$0xf]
  %v49 = vld [vmem:[%s1 + $0x60] sm:$0xf]
  %v50 = vld [vmem:[%s1 + $0x64] sm:$0xf]
  %v51 = vld [vmem:[%s1 + $0x68] sm:$0xf]
  %v52 = vld [vmem:[%s1 + $0x6c] sm:$0xf]
  %v53 = vld [vmem:[%s1 + $0x70] sm:$0xf]
  %v54 = vld [vmem:[%s1 + $0x74] sm:$0xf]
  %v55 = vld [vmem:[%s1 + $0x78] sm:$0xf]
  %v56 = vld [vmem:[%s1 + $0x7c] sm:$0xf]
  %v57 = vld [vmem:[%s1 + $0x80] sm:$0xf]
  %v58 = vld [vmem:[%s1 + $0x84] sm:$0xf]
  %v59 = vld [vmem:[%s1 + $0x88] sm:$0xf]
  %v60 = vld [vmem:[%s1 + $0x8c] sm:$0xf]
  %v61 = vld [vmem:[%s2] sm:$0x1]
  %v63 = vlaneseq
  %v64 = vshrl.u32 %v63, 7
  %v65 = vsub.s32 0, %v64
  %v66 = vrot.slane %v61, %v65
  %v76 = vunpack.c.l.b16 %v17
  %v77 = vunpack.c.h.b16 %v17
  %v78 = vunpack.c.l.b16 %v18
  %v79 = vunpack.c.l.b16 %v19
  %v80 = vunpack.c.h.b16 %v19
  %v81 = vunpack.c.l.b16 %v20
  %v82 = vunpack.c.l.b16 %v21
  %v83 = vunpack.c.h.b16 %v21
  %v84 = vunpack.c.l.b16 %v22
  %v85 = vunpack.c.l.b16 %v23
  %v86 = vunpack.c.h.b16 %v23
  %v87 = vunpack.c.l.b16 %v24
  %v88 = vpack.c.b16 %v79, %v76
  %v89 = vpack.c.b16 %v80, %v77
  %v90 = vpack.c.b16 %v81, %v78
  %v91 = vpack.c.b16 %v85, %v82
  %v92 = vpack.c.b16 %v86, %v83
  %v93 = vpack.c.b16 %v87, %v84
  %v134 = vunpack.c.l.b16 %v25
  %v135 = vunpack.c.l.b16 %v26
  %v136 = vunpack.c.l.b16 %v27
  %v137 = vunpack.c.l.b16 %v28
  %v138 = vunpack.c.l.b16 %v29
  %v139 = vunpack.c.l.b16 %v30
  %v140 = vunpack.c.l.b16 %v31
  %v141 = vunpack.c.l.b16 %v32
  %v142 = vunpack.c.l.b16 %v33
  %v143 = vunpack.c.l.b16 %v34
  %v144 = vunpack.c.l.b16 %v35
  %v145 = vunpack.c.l.b16 %v36
  %v146 = vunpack.c.l.b16 %v37
  %v147 = vunpack.c.l.b16 %v38
  %v148 = vunpack.c.l.b16 %v39
  %v149 = vunpack.c.l.b16 %v40
  %v150 = vunpack.c.l.b16 %v41
  %v151 = vunpack.c.l.b16 %v42
  %v152 = vunpack.c.l.b16 %v43
  %v153 = vunpack.c.l.b16 %v44
  %v154 = vunpack.c.l.b16 %v45
  %v155 = vunpack.c.l.b16 %v46
  %v156 = vunpack.c.l.b16 %v47
  %v157 = vunpack.c.l.b16 %v48
  %v158 = vunpack.c.l.b16 %v49
  %v159 = vunpack.c.l.b16 %v50
  %v160 = vunpack.c.l.b16 %v51
  %v161 = vunpack.c.l.b16 %v52
  %v162 = vunpack.c.l.b16 %v53
  %v163 = vunpack.c.l.b16 %v54
  %v164 = vunpack.c.l.b16 %v55
  %v165 = vunpack.c.l.b16 %v56
  %v166 = vunpack.c.l.b16 %v57
  %v167 = vunpack.c.l.b16 %v58
  %v168 = vunpack.c.l.b16 %v59
  %v169 = vunpack.c.l.b16 %v60
  %v170 = vpack.c.b16 %v135, %v134
  %v171 = vpack.c.b16 %v137, %v136
  %v172 = vpack.c.b16 %v139, %v138
  %v173 = vpack.c.b16 %v141, %v140
  %v174 = vpack.c.b16 %v143, %v142
  %v175 = vpack.c.b16 %v145, %v144
  %v176 = vpack.c.b16 %v147, %v146
  %v177 = vpack.c.b16 %v149, %v148
  %v178 = vpack.c.b16 %v151, %v150
  %v179 = vpack.c.b16 %v153, %v152
  %v180 = vpack.c.b16 %v155, %v154
  %v181 = vpack.c.b16 %v157, %v156
  %v182 = vpack.c.b16 %v159, %v158
  %v183 = vpack.c.b16 %v161, %v160
  %v184 = vpack.c.b16 %v163, %v162
  %v185 = vpack.c.b16 %v165, %v164
  %v186 = vpack.c.b16 %v167, %v166
  %v187 = vpack.c.b16 %v169, %v168
  %vm206 = vcmask 261120
  %v208 = vsel %vm206, %v90, 0
  %v211 = vsel %vm206, %v93, 0
  %213 = vmatprep.subr.bf16.mxu0 0
  %214 = vmatpush1.bf16.msra.mxu0 %v177
  %215 = vmatprep.subr.bf16.mxu0 0
  %216 = vmatpush1.bf16.msra.mxu0 %v176
  %217 = vmatprep.subr.bf16.mxu0 0
  %218 = vmatpush1.bf16.msra.mxu0 %v175
  %219 = vmatprep.subr.bf16.mxu0 0
  %220 = vmatpush1.bf16.msra.mxu0 %v174
  %221 = vmatprep.subr.bf16.mxu0 0
  %222 = vmatpush1.bf16.msra.mxu0 %v173
  %223 = vmatprep.subr.bf16.mxu0 0
  %224 = vmatpush1.bf16.msra.mxu0 %v172
  %225 = vmatprep.subr.bf16.mxu0 0
  %226 = vmatpush1.bf16.msra.mxu0 %v171
  %227 = vmatprep.subr.bf16.mxu0 0
  %228 = vmatpush1.bf16.msra.mxu0 %v170
  %229 = vmatprep.subr.bf16.mxu0 0
  %230 = vmatpush2.bf16.msra.mxu0 %v185
  %231 = vmatprep.subr.bf16.mxu0 0
  %232 = vmatpush2.bf16.msra.mxu0 %v184
  %233 = vmatprep.subr.bf16.mxu0 0
  %234 = vmatpush2.bf16.msra.mxu0 %v183
  %235 = vmatprep.subr.bf16.mxu0 0
  %236 = vmatpush2.bf16.msra.mxu0 %v182
  %237 = vmatprep.subr.bf16.mxu0 0
  %238 = vmatpush2.bf16.msra.mxu0 %v181
  %239 = vmatprep.subr.bf16.mxu0 0
  %240 = vmatpush2.bf16.msra.mxu0 %v180
  %241 = vmatprep.subr.bf16.mxu0 0
  %242 = vmatpush2.bf16.msra.mxu0 %v179
  %243 = vmatprep.subr.bf16.mxu0 0
  %244 = vmatpush2.bf16.msra.mxu0 %v178
  %245 = vmatprep.mubr.bf16.mxu0 %v89
  %246 = vmatmul.mubr.bf16.gmra.mxu0 %v88
  %v247 = vpop.f32.mrf.mxu0
  %v248 = vadd.f32 %v66, %v247
  %v249 = vpop.f32.mrf.mxu0
  %v250 = vpop.f32.mrf.mxu0
  %v251 = vadd.f32 %v66, %v250
  %v252 = vpop.f32.mrf.mxu0
  %253 = vmatprep.mubr.bf16.mxu0 %v92
  %254 = vmatmul.mubr.bf16.gmra.mxu0 %v91
  %v255 = vpop.f32.mrf.mxu0
  %v256 = vadd.f32 %v66, %v255
  %v257 = vpop.f32.mrf.mxu0
  %v258 = vpop.f32.mrf.mxu0
  %v259 = vadd.f32 %v66, %v258
  %v260 = vpop.f32.mrf.mxu0
  %261 = vdwg.mxu0
  %262 = vmatprep.subr.bf16.mxu0 0
  %263 = vmatpush1.bf16.msra.mxu0 0
  %264 = vmatprep.subr.bf16.mxu0 0
  %265 = vmatpush1.bf16.msra.mxu0 0
  %266 = vmatprep.subr.bf16.mxu0 0
  %267 = vmatpush1.bf16.msra.mxu0 0
  %268 = vmatprep.subr.bf16.mxu0 0
  %269 = vmatpush1.bf16.msra.mxu0 0
  %270 = vmatprep.subr.bf16.mxu0 0
  %271 = vmatpush1.bf16.msra.mxu0 0
  %272 = vmatprep.subr.bf16.mxu0 0
  %273 = vmatpush1.bf16.msra.mxu0 0
  %274 = vmatprep.subr.bf16.mxu0 0
  %275 = vmatpush1.bf16.msra.mxu0 %v187
  %276 = vmatprep.subr.bf16.mxu0 0
  %277 = vmatpush1.bf16.msra.mxu0 %v186
  %278 = vmatprep.subr.bf16.mxu0 0
  %279 = vmatpush2.bf16.msra.mxu0 0
  %280 = vmatprep.subr.bf16.mxu0 0
  %281 = vmatpush2.bf16.msra.mxu0 0
  %282 = vmatprep.subr.bf16.mxu0 0
  %283 = vmatpush2.bf16.msra.mxu0 0
  %284 = vmatprep.subr.bf16.mxu0 0
  %285 = vmatpush2.bf16.msra.mxu0 0
  %286 = vmatprep.subr.bf16.mxu0 0
  %287 = vmatpush2.bf16.msra.mxu0 0
  %288 = vmatprep.subr.bf16.mxu0 0
  %289 = vmatpush2.bf16.msra.mxu0 0
  %290 = vmatprep.subr.bf16.mxu0 0
  %291 = vmatpush2.bf16.msra.mxu0 0
  %292 = vmatprep.subr.bf16.mxu0 0
  %293 = vmatpush2.bf16.msra.mxu0 0
  %294 = vmatprep.mubr.bf16.mxu0 0
  %295 = vmatmul.mubr.bf16.gmra.mxu0 %v208
  %v296 = vpop.f32.mrf.mxu0
  %v297 = vadd.f32 %v248, %v296
  %v298 = vpop.f32.mrf.mxu0
  %v299 = vpop.f32.mrf.mxu0
  %v300 = vadd.f32 %v251, %v299
  %v301 = vpop.f32.mrf.mxu0
  %302 = vmatprep.mubr.bf16.mxu0 0
  %303 = vmatmul.mubr.bf16.gmra.mxu0 %v211
  %v304 = vpop.f32.mrf.mxu0
  %v305 = vadd.f32 %v256, %v304
  %v306 = vpop.f32.mrf.mxu0
  %v307 = vpop.f32.mrf.mxu0
  %v308 = vadd.f32 %v259, %v307
  %v309 = vpop.f32.mrf.mxu0
  %310 = vdwg.mxu0
  %v311 = vpack.c.bf16 %v300, %v297
  %v312 = vpack.c.bf16 %v308, %v305
  %v315 = vunpack.c.l.b16 %v311
  %v316 = vunpack.c.h.b16 %v311
  %v317 = vunpack.c.l.b16 %v312
  %v318 = vunpack.c.h.b16 %v312
  %v319 = vpack.c.b16 %v315, %v315
  %v320 = vpack.c.b16 %v316, %v316
  %v321 = vpack.c.b16 %v317, %v317
  %v322 = vpack.c.b16 %v318, %v318
  %vm327 = vcmask 257024
  %328 = vst.msk [vmem:[%s3] sm:$0xf] %vm327, %v319
  %329 = vst.msk [vmem:[%s3 + $0x4] sm:$0xf] %vm327, %v320
  %330 = vst.msk [vmem:[%s3 + $0x8] sm:$0xf] %vm327, %v321
  %331 = vst.msk [vmem:[%s3 + $0xc] sm:$0xf] %vm327, %v322
  %v332 = vsel %vm206, %v297, 0.0
  %v333 = vsel %vm206, %v300, 0.0
  %v334 = vadd.f32 %v332, %v333
  %v335 = vsel %vm206, %v305, 0.0
  %v336 = vadd.f32 %v334, %v335
  %v337 = vsel %vm206, %v308, 0.0
  %v338 = vadd.f32 %v336, %v337
  %v339 = vrot.slane %v338, 4
  %v340 = vadd.f32 %v338, %v339
  %v341 = vrot.slane %v340, 2
  %v342 = vadd.f32 %v340, %v341
  %v343 = vrot.slane %v342, 1
  %v344 = vadd.f32 %v342, %v343
  %v345 = vmul.f32 %v297, %v297
  %v346 = vmul.f32 %v300, %v300
  %v347 = vmul.f32 %v305, %v305
  %v348 = vmul.f32 %v308, %v308
  %v349 = vsel %vm206, %v345, 0.0
  %v350 = vsel %vm206, %v346, 0.0
  %v351 = vadd.f32 %v349, %v350
  %v352 = vsel %vm206, %v347, 0.0
  %v353 = vadd.f32 %v351, %v352
  %v354 = vsel %vm206, %v348, 0.0
  %v355 = vadd.f32 %v353, %v354
  %v356 = vrot.slane %v355, 4
  %v357 = vadd.f32 %v355, %v356
  %v358 = vrot.slane %v357, 2
  %v359 = vadd.f32 %v357, %v358
  %v360 = vrot.slane %v359, 1
  %v361 = vadd.f32 %v359, %v360
  %v362 = vlaneseq
  %v363 = vshrl.u32 %v362, 7
  %vm364 = vcmp.eq.s32.totalorder %v363, 0
  %v365 = vsel %vm364, %v344, 0.0
  %vm366 = vcmp.eq.s32.totalorder %v363, 1
  %v367 = vsel %vm366, %v361, 0.0
  %v368 = vadd.f32 %v365, %v367
  %369 = vst.msk [vmem:[%s4] sm:$0xff] %vm206, %v368
  // Predicated region
  $region14: #{cvae_forward.13} parent=0 // pred_check
    _
  $region15: #{cvae_forward.13} parent=0 // pred_check_branch
    %371 = sbr.rel (0) target = $region17
  $region16: #{cvae_forward.13} parent=0 // pred_region
    _
  $region17: #{cvae_forward.13} parent=0 // pred_fallthru
    _
  // Predicated region
  $region18: #{cvae_forward.13} parent=0 // pred_check
    _
  $region19: #{cvae_forward.13} parent=0 // pred_check_branch
    %373 = sbr.rel (0) target = $region21
  $region20: #{cvae_forward.13} parent=0 // pred_region
    _
  $region21: #{cvae_forward.13} parent=0 // pred_fallthru
    _
  // Predicated region
  $region22: #{cvae_forward.13} parent=0 // pred_check
    _
  $region23: #{cvae_forward.13} parent=0 // pred_check_branch
    %375 = sbr.rel (0) target = $region25
  $region24: #{cvae_forward.13} parent=0 // pred_region
    _
  $region25: #{cvae_forward.13} parent=0 // pred_fallthru
    _
  // Predicated region
  $region26: #{cvae_forward.13} parent=0 // pred_check
    _
  $region27: #{cvae_forward.13} parent=0 // pred_check_branch
    %377 = sbr.rel (0) target = $region29
  $region28: #{cvae_forward.13} parent=0 // pred_region
    _
  $region29: #{cvae_forward.13} parent=0 // pred_fallthru
    _

// kernel: tile.47
$region0: #{tile.47}
  #allocation0 [shape = 's32[1]{0}', space=sflag, size = 0x4, scoped, tag = 'scoped memory for tile.47']
  %s0 = inlined_call_operand.vmem [shape: f32[32], index: 0, kind: input, shape index: {}]
  %s1 = inlined_call_operand.vmem [shape: f32[4,32], index: 1, kind: output, shape index: {}]
  // Predicated region
  $region2: #{tile.47} parent=0 // pred_check
    _
  $region3: #{tile.47} parent=0 // pred_check_branch
    %3 = sbr.rel (0) target = $region5
  $region4: #{tile.47} parent=0 // pred_region
    _
  $region5: #{tile.47} parent=0 // pred_fallthru
    _
  %v4 = vld [vmem:[%s0] ss:$0 sm:$0xff]
  %5 = vst [vmem:[%s1] sm:$0xf] %v4

// kernel: cvae_forward.15
$region0: #{cvae_forward.15}
  #allocation0 [shape = 'u32[]', space=smem, size = 0x4, offset = 0x4, fixed_abs, tag = 'smem constant byte address 0x4 - core index']
  #allocation1 [shape = 'u32[144,128]{1,0:T(1,128)}', space=vmem, size = 0x12000, scoped, tag = 'internal scratch']
  %s0 = inlined_call_operand.vmem [shape: bf16[32,128], index: 0, kind: input, shape index: {}]
  %s1 = inlined_call_operand.vmem [shape: bf16[128,128], index: 1, kind: input, shape index: {}]
  %s2 = inlined_call_operand.vmem [shape: f32[1,128], index: 2, kind: input, shape index: {}]
  %s3 = inlined_call_operand.vmem [shape: bf16[32,128], index: 3, kind: output, shape index: {0}]
  %s4 = inlined_call_operand.vmem [shape: f32[8,128], index: 4, kind: output, shape index: {1}]
  %5 = xla_tuple %s3, %s4
  %s6 = sld [smem:[#allocation0]]
  $region30: #{cvae_forward.15} parent=0
    _
  %s8 = ssub.s32 1, %s6
  %s9 = scalar_select 0, %s8, %s6
  // Predicated region
  $region2: #{cvae_forward.15} parent=0 // pred_check
    _
  $region3: #{cvae_forward.15} parent=0 // pred_check_branch
    %11 = sbr.rel (0) target = $region5
  $region4: #{cvae_forward.15} parent=0 // pred_region
    _
  $region5: #{cvae_forward.15} parent=0 // pred_fallthru
    _
  // Predicated region
  $region6: #{cvae_forward.15} parent=0 // pred_check
    _
  $region7: #{cvae_forward.15} parent=0 // pred_check_branch
    %13 = sbr.rel (0) target = $region9
  $region8: #{cvae_forward.15} parent=0 // pred_region
    _
  $region9: #{cvae_forward.15} parent=0 // pred_fallthru
    _
  // Predicated region
  $region10: #{cvae_forward.15} parent=0 // pred_check
    _
  $region11: #{cvae_forward.15} parent=0 // pred_check_branch
    %15 = sbr.rel (0) target = $region13
  $region12: #{cvae_forward.15} parent=0 // pred_region
    _
  $region13: #{cvae_forward.15} parent=0 // pred_fallthru
    _
  %v17 = vld [vmem:[%s0] sm:$0xf]
  %v18 = vld [vmem:[%s0 + $0x4] sm:$0xf]
  %v19 = vld [vmem:[%s0 + $0x8] sm:$0xf]
  %v20 = vld [vmem:[%s0 + $0xc] sm:$0xf]
  %v21 = vld [vmem:[%s1] sm:$0xf]
  %v22 = vld [vmem:[%s1 + $0x4] sm:$0xf]
  %v23 = vld [vmem:[%s1 + $0x8] sm:$0xf]
  %v24 = vld [vmem:[%s1 + $0xc] sm:$0xf]
  %v25 = vld [vmem:[%s1 + $0x10] sm:$0xf]
  %v26 = vld [vmem:[%s1 + $0x14] sm:$0xf]
  %v27 = vld [vmem:[%s1 + $0x18] sm:$0xf]
  %v28 = vld [vmem:[%s1 + $0x1c] sm:$0xf]
  %v29 = vld [vmem:[%s1 + $0x20] sm:$0xf]
  %v30 = vld [vmem:[%s1 + $0x24] sm:$0xf]
  %v31 = vld [vmem:[%s1 + $0x28] sm:$0xf]
  %v32 = vld [vmem:[%s1 + $0x2c] sm:$0xf]
  %v33 = vld [vmem:[%s1 + $0x30] sm:$0xf]
  %v34 = vld [vmem:[%s1 + $0x34] sm:$0xf]
  %v35 = vld [vmem:[%s1 + $0x38] sm:$0xf]
  %v36 = vld [vmem:[%s1 + $0x3c] sm:$0xf]
  %v37 = vld [vmem:[%s2] sm:$0x1]
  %v39 = vlaneseq
  %v40 = vshrl.u32 %v39, 7
  %v41 = vsub.s32 0, %v40
  %v42 = vrot.slane %v37, %v41
  %v48 = vunpack.c.l.b16 %v17
  %v49 = vunpack.c.l.b16 %v18
  %v50 = vunpack.c.l.b16 %v19
  %v51 = vunpack.c.l.b16 %v20
  %v52 = vpack.c.b16 %v49, %v48
  %v53 = vpack.c.b16 %v51, %v50
  %v72 = vunpack.c.l.b16 %v21
  %v73 = vunpack.c.l.b16 %v22
  %v74 = vunpack.c.l.b16 %v23
  %v75 = vunpack.c.l.b16 %v24
  %v76 = vunpack.c.l.b16 %v25
  %v77 = vunpack.c.l.b16 %v26
  %v78 = vunpack.c.l.b16 %v27
  %v79 = vunpack.c.l.b16 %v28
  %v80 = vunpack.c.l.b16 %v29
  %v81 = vunpack.c.l.b16 %v30
  %v82 = vunpack.c.l.b16 %v31
  %v83 = vunpack.c.l.b16 %v32
  %v84 = vunpack.c.l.b16 %v33
  %v85 = vunpack.c.l.b16 %v34
  %v86 = vunpack.c.l.b16 %v35
  %v87 = vunpack.c.l.b16 %v36
  %v88 = vpack.c.b16 %v73, %v72
  %v89 = vpack.c.b16 %v75, %v74
  %v90 = vpack.c.b16 %v77, %v76
  %v91 = vpack.c.b16 %v79, %v78
  %v92 = vpack.c.b16 %v81, %v80
  %v93 = vpack.c.b16 %v83, %v82
  %v94 = vpack.c.b16 %v85, %v84
  %v95 = vpack.c.b16 %v87, %v86
  %104 = vmatprep.subr.bf16.mxu0 0
  %105 = vmatpush1.bf16.msra.mxu0 %v95
  %106 = vmatprep.subr.bf16.mxu0 0
  %107 = vmatpush1.bf16.msra.mxu0 %v94
  %108 = vmatprep.subr.bf16.mxu0 0
  %109 = vmatpush1.bf16.msra.mxu0 %v93
  %110 = vmatprep.subr.bf16.mxu0 0
  %111 = vmatpush1.bf16.msra.mxu0 %v92
  %112 = vmatprep.subr.bf16.mxu0 0
  %113 = vmatpush1.bf16.msra.mxu0 %v91
  %114 = vmatprep.subr.bf16.mxu0 0
  %115 = vmatpush1.bf16.msra.mxu0 %v90
  %116 = vmatprep.subr.bf16.mxu0 0
  %117 = vmatpush1.bf16.msra.mxu0 %v89
  %118 = vmatprep.subr.bf16.mxu0 0
  %119 = vmatpush1.bf16.msra.mxu0 %v88
  %120 = vmatprep.subr.bf16.mxu0 0
  %121 = vmatpush2.bf16.msra.mxu0 0
  %122 = vmatprep.subr.bf16.mxu0 0
  %123 = vmatpush2.bf16.msra.mxu0 0
  %124 = vmatprep.subr.bf16.mxu0 0
  %125 = vmatpush2.bf16.msra.mxu0 0
  %126 = vmatprep.subr.bf16.mxu0 0
  %127 = vmatpush2.bf16.msra.mxu0 0
  %128 = vmatprep.subr.bf16.mxu0 0
  %129 = vmatpush2.bf16.msra.mxu0 0
  %130 = vmatprep.subr.bf16.mxu0 0
  %131 = vmatpush2.bf16.msra.mxu0 0
  %132 = vmatprep.subr.bf16.mxu0 0
  %133 = vmatpush2.bf16.msra.mxu0 0
  %134 = vmatprep.subr.bf16.mxu0 0
  %135 = vmatpush2.bf16.msra.mxu0 0
  %136 = vmatprep.mubr.bf16.mxu0 0
  %137 = vmatmul.mubr.bf16.gmra.mxu0 %v52
  %v138 = vpop.f32.mrf.mxu0
  %v139 = vadd.f32 %v42, %v138
  %v140 = vpop.f32.mrf.mxu0
  %v141 = vpop.f32.mrf.mxu0
  %v142 = vadd.f32 %v42, %v141
  %v143 = vpop.f32.mrf.mxu0
  %144 = vmatprep.mubr.bf16.mxu0 0
  %145 = vmatmul.mubr.bf16.gmra.mxu0 %v53
  %v146 = vpop.f32.mrf.mxu0
  %v147 = vadd.f32 %v42, %v146
  %v148 = vpop.f32.mrf.mxu0
  %v149 = vpop.f32.mrf.mxu0
  %v150 = vadd.f32 %v42, %v149
  %v151 = vpop.f32.mrf.mxu0
  %152 = vdwg.mxu0
  %v153 = vpack.c.bf16 %v142, %v139
  %v154 = vpack.c.bf16 %v150, %v147
  %v157 = vunpack.c.l.b16 %v153
  %v158 = vunpack.c.h.b16 %v153
  %v159 = vunpack.c.l.b16 %v154
  %v160 = vunpack.c.h.b16 %v154
  %v161 = vpack.c.b16 %v157, %v157
  %v162 = vpack.c.b16 %v158, %v158
  %v163 = vpack.c.b16 %v159, %v159
  %v164 = vpack.c.b16 %v160, %v160
  %169 = vst [vmem:[%s3] sm:$0xf] %v161
  %170 = vst [vmem:[%s3 + $0x4] sm:$0xf] %v162
  %171 = vst [vmem:[%s3 + $0x8] sm:$0xf] %v163
  %172 = vst [vmem:[%s3 + $0xc] sm:$0xf] %v164
  %v173 = vadd.f32 %v139, %v142
  %v174 = vadd.f32 %v173, %v147
  %v175 = vadd.f32 %v174, %v150
  %v176 = vrot.slane %v175, 4
  %v177 = vadd.f32 %v175, %v176
  %v178 = vrot.slane %v177, 2
  %v179 = vadd.f32 %v177, %v178
  %v180 = vrot.slane %v179, 1
  %v181 = vadd.f32 %v179, %v180
  %v182 = vmul.f32 %v139, %v139
  %v183 = vmul.f32 %v142, %v142
  %v184 = vmul.f32 %v147, %v147
  %v185 = vmul.f32 %v150, %v150
  %v186 = vadd.f32 %v182, %v183
  %v187 = vadd.f32 %v186, %v184
  %v188 = vadd.f32 %v187, %v185
  %v189 = vrot.slane %v188, 4
  %v190 = vadd.f32 %v188, %v189
  %v191 = vrot.slane %v190, 2
  %v192 = vadd.f32 %v190, %v191
  %v193 = vrot.slane %v192, 1
  %v194 = vadd.f32 %v192, %v193
  %v195 = vlaneseq
  %v196 = vshrl.u32 %v195, 7
  %vm197 = vcmp.eq.s32.totalorder %v196, 0
  %v198 = vsel %vm197, %v181, 0.0
  %vm199 = vcmp.eq.s32.totalorder %v196, 1
  %v200 = vsel %vm199, %v194, 0.0
  %v201 = vadd.f32 %v198, %v200
  %202 = vst [vmem:[%s4] sm:$0xff] %v201
  // Predicated region
  $region14: #{cvae_forward.15} parent=0 // pred_check
    _
  $region15: #{cvae_forward.15} parent=0 // pred_check_branch
    %204 = sbr.rel (0) target = $region17
  $region16: #{cvae_forward.15} parent=0 // pred_region
    _
  $region17: #{cvae_forward.15} parent=0 // pred_fallthru
    _
  // Predicated region
  $region18: #{cvae_forward.15} parent=0 // pred_check
    _
  $region19: #{cvae_forward.15} parent=0 // pred_check_branch
    %206 = sbr.rel (0) target = $region21
  $region20: #{cvae_forward.15} parent=0 // pred_region
    _
  $region21: #{cvae_forward.15} parent=0 // pred_fallthru
    _
  // Predicated region
  $region22: #{cvae_forward.15} parent=0 // pred_check
    _
  $region23: #{cvae_forward.15} parent=0 // pred_check_branch
    %208 = sbr.rel (0) target = $region25
  $region24: #{cvae_forward.15} parent=0 // pred_region
    _
  $region25: #{cvae_forward.15} parent=0 // pred_fallthru
    _
  // Predicated region
  $region26: #{cvae_forward.15} parent=0 // pred_check
    _
  $region27: #{cvae_forward.15} parent=0 // pred_check_branch
    %210 = sbr.rel (0) target = $region29
  $region28: #{cvae_forward.15} parent=0 // pred_region
    _
  $region29: #{cvae_forward.15} parent=0 // pred_fallthru
    _

// kernel: cvae_forward.14
$region0: #{cvae_forward.14}
  #allocation0 [shape = 'u32[]', space=smem, size = 0x4, offset = 0x4, fixed_abs, tag = 'smem constant byte address 0x4 - core index']
  #allocation1 [shape = 'u32[144,128]{1,0:T(1,128)}', space=vmem, size = 0x12000, scoped, tag = 'internal scratch']
  %s0 = inlined_call_operand.vmem [shape: f32[8,512], index: 0, kind: input, shape index: {}]
  %s1 = inlined_call_operand.vmem [shape: f32[8,10], index: 1, kind: input, shape index: {}]
  %s2 = inlined_call_operand.vmem [shape: f32[8,16], index: 2, kind: input, shape index: {}]
  %s3 = inlined_call_operand.vmem [shape: f32[10,64], index: 3, kind: input, shape index: {}]
  %s4 = inlined_call_operand.vmem [shape: f32[1,64], index: 4, kind: input, shape index: {}]
  %s5 = inlined_call_operand.vmem [shape: f32[64,128], index: 5, kind: input, shape index: {}]
  %s6 = inlined_call_operand.vmem [shape: f32[1,128], index: 6, kind: input, shape index: {}]
  %s7 = inlined_call_operand.vmem [shape: f32[512,16], index: 7, kind: input, shape index: {}]
  %s8 = inlined_call_operand.vmem [shape: f32[128,16], index: 8, kind: input, shape index: {}]
  %s9 = inlined_call_operand.vmem [shape: f32[1,16], index: 9, kind: input, shape index: {}]
  %s10 = inlined_call_operand.vmem [shape: f32[512,16], index: 10, kind: input, shape index: {}]
  %s11 = inlined_call_operand.vmem [shape: f32[128,16], index: 11, kind: input, shape index: {}]
  %s12 = inlined_call_operand.vmem [shape: f32[1,16], index: 12, kind: input, shape index: {}]
  %s13 = inlined_call_operand.vmem [shape: f32[16,512], index: 13, kind: input, shape index: {}]
  %s14 = inlined_call_operand.vmem [shape: f32[10,512], index: 14, kind: input, shape index: {}]
  %s15 = inlined_call_operand.vmem [shape: f32[1,512], index: 15, kind: input, shape index: {}]
  %s16 = inlined_call_operand.vmem [shape: f32[8,16], index: 16, kind: output, shape index: {0}]
  %s17 = inlined_call_operand.vmem [shape: f32[8,16], index: 17, kind: output, shape index: {1}]
  %s18 = inlined_call_operand.vmem [shape: f32[8,512], index: 18, kind: output, shape index: {2}]
  %19 = xla_tuple %s16, %s17, %s18
  %s20 = sld [smem:[#allocation0]]
  $region90: #{cvae_forward.14} parent=0
    _
  %s22 = ssub.s32 1, %s20
  %s23 = scalar_select 0, %s22, %s20
  // Predicated region
  $region2: #{cvae_forward.14} parent=0 // pred_check
    _
  $region3: #{cvae_forward.14} parent=0 // pred_check_branch
    %25 = sbr.rel (0) target = $region5
  $region4: #{cvae_forward.14} parent=0 // pred_region
    _
  $region5: #{cvae_forward.14} parent=0 // pred_fallthru
    _
  // Predicated region
  $region6: #{cvae_forward.14} parent=0 // pred_check
    _
  $region7: #{cvae_forward.14} parent=0 // pred_check_branch
    %27 = sbr.rel (0) target = $region9
  $region8: #{cvae_forward.14} parent=0 // pred_region
    _
  $region9: #{cvae_forward.14} parent=0 // pred_fallthru
    _
  // Predicated region
  $region10: #{cvae_forward.14} parent=0 // pred_check
    _
  $region11: #{cvae_forward.14} parent=0 // pred_check_branch
    %29 = sbr.rel (0) target = $region13
  $region12: #{cvae_forward.14} parent=0 // pred_region
    _
  $region13: #{cvae_forward.14} parent=0 // pred_fallthru
    _
  // Predicated region
  $region14: #{cvae_forward.14} parent=0 // pred_check
    _
  $region15: #{cvae_forward.14} parent=0 // pred_check_branch
    %31 = sbr.rel (0) target = $region17
  $region16: #{cvae_forward.14} parent=0 // pred_region
    _
  $region17: #{cvae_forward.14} parent=0 // pred_fallthru
    _
  // Predicated region
  $region18: #{cvae_forward.14} parent=0 // pred_check
    _
  $region19: #{cvae_forward.14} parent=0 // pred_check_branch
    %33 = sbr.rel (0) target = $region21
  $region20: #{cvae_forward.14} parent=0 // pred_region
    _
  $region21: #{cvae_forward.14} parent=0 // pred_fallthru
    _
  // Predicated region
  $region22: #{cvae_forward.14} parent=0 // pred_check
    _
  $region23: #{cvae_forward.14} parent=0 // pred_check_branch
    %35 = sbr.rel (0) target = $region25
  $region24: #{cvae_forward.14} parent=0 // pred_region
    _
  $region25: #{cvae_forward.14} parent=0 // pred_fallthru
    _
  // Predicated region
  $region26: #{cvae_forward.14} parent=0 // pred_check
    _
  $region27: #{cvae_forward.14} parent=0 // pred_check_branch
    %37 = sbr.rel (0) target = $region29
  $region28: #{cvae_forward.14} parent=0 // pred_region
    _
  $region29: #{cvae_forward.14} parent=0 // pred_fallthru
    _
  // Predicated region
  $region30: #{cvae_forward.14} parent=0 // pred_check
    _
  $region31: #{cvae_forward.14} parent=0 // pred_check_branch
    %39 = sbr.rel (0) target = $region33
  $region32: #{cvae_forward.14} parent=0 // pred_region
    _
  $region33: #{cvae_forward.14} parent=0 // pred_fallthru
    _
  // Predicated region
  $region34: #{cvae_forward.14} parent=0 // pred_check
    _
  $region35: #{cvae_forward.14} parent=0 // pred_check_branch
    %41 = sbr.rel (0) target = $region37
  $region36: #{cvae_forward.14} parent=0 // pred_region
    _
  $region37: #{cvae_forward.14} parent=0 // pred_fallthru
    _
  // Predicated region
  $region38: #{cvae_forward.14} parent=0 // pred_check
    _
  $region39: #{cvae_forward.14} parent=0 // pred_check_branch
    %43 = sbr.rel (0) target = $region41
  $region40: #{cvae_forward.14} parent=0 // pred_region
    _
  $region41: #{cvae_forward.14} parent=0 // pred_fallthru
    _
  // Predicated region
  $region42: #{cvae_forward.14} parent=0 // pred_check
    _
  $region43: #{cvae_forward.14} parent=0 // pred_check_branch
    %45 = sbr.rel (0) target = $region45
  $region44: #{cvae_forward.14} parent=0 // pred_region
    _
  $region45: #{cvae_forward.14} parent=0 // pred_fallthru
    _
  // Predicated region
  $region46: #{cvae_forward.14} parent=0 // pred_check
    _
  $region47: #{cvae_forward.14} parent=0 // pred_check_branch
    %47 = sbr.rel (0) target = $region49
  $region48: #{cvae_forward.14} parent=0 // pred_region
    _
  $region49: #{cvae_forward.14} parent=0 // pred_fallthru
    _
  // Predicated region
  $region50: #{cvae_forward.14} parent=0 // pred_check
    _
  $region51: #{cvae_forward.14} parent=0 // pred_check_branch
    %49 = sbr.rel (0) target = $region53
  $region52: #{cvae_forward.14} parent=0 // pred_region
    _
  $region53: #{cvae_forward.14} parent=0 // pred_fallthru
    _
  // Predicated region
  $region54: #{cvae_forward.14} parent=0 // pred_check
    _
  $region55: #{cvae_forward.14} parent=0 // pred_check_branch
    %51 = sbr.rel (0) target = $region57
  $region56: #{cvae_forward.14} parent=0 // pred_region
    _
  $region57: #{cvae_forward.14} parent=0 // pred_fallthru
    _
  // Predicated region
  $region58: #{cvae_forward.14} parent=0 // pred_check
    _
  $region59: #{cvae_forward.14} parent=0 // pred_check_branch
    %53 = sbr.rel (0) target = $region61
  $region60: #{cvae_forward.14} parent=0 // pred_region
    _
  $region61: #{cvae_forward.14} parent=0 // pred_fallthru
    _
  // Predicated region
  $region62: #{cvae_forward.14} parent=0 // pred_check
    _
  $region63: #{cvae_forward.14} parent=0 // pred_check_branch
    %55 = sbr.rel (0) target = $region65
  $region64: #{cvae_forward.14} parent=0 // pred_region
    _
  $region65: #{cvae_forward.14} parent=0 // pred_fallthru
    _
  %v56 = vld [vmem:[%s1] sm:$0xff]
  %v57 = vld [vmem:[%s0] sm:$0xff]
  %v58 = vld [vmem:[%s0 + $0x8] sm:$0xff]
  %v59 = vld [vmem:[%s0 + $0x10] sm:$0xff]
  %v60 = vld [vmem:[%s0 + $0x18] sm:$0xff]
  %v61 = vld [vmem:[%s3] sm:$0xff]
  %v62 = vld [vmem:[%s3 + $0x8] sm:$0x3]
  %v63 = vld [vmem:[%s4] sm:$0x1]
  %v65 = vlaneseq
  %v66 = vshrl.u32 %v65, 7
  %v67 = vsub.s32 0, %v66
  %v68 = vrot.slane %v63, %v67
  %vm70 = vcmask 80896
  %v72 = vsel %vm70, %v56, 0
  %vm74 = vcmask 1041408
  %v76 = vsel %vm74, %v62, 0
  %78 = vmatprep.subr.mxu0 0.0
  %79 = vmatpush1.msra.mxu0 0.0
  %80 = vmatprep.subr.mxu0 0.0
  %81 = vmatpush1.msra.mxu0 0.0
  %82 = vmatprep.subr.mxu0 0.0
  %83 = vmatpush1.msra.mxu0 0.0
  %84 = vmatprep.subr.mxu0 0.0
  %85 = vmatpush1.msra.mxu0 0.0
  %86 = vmatprep.subr.mxu0 0.0
  %87 = vmatpush1.msra.mxu0 0.0
  %88 = vmatprep.subr.mxu0 0.0
  %89 = vmatpush1.msra.mxu0 0.0
  %90 = vmatprep.subr.mxu0 0.0
  %91 = vmatpush1.msra.mxu0 0.0
  %92 = vmatprep.subr.mxu0 0.0
  %93 = vmatpush1.msra.mxu0 0.0
  %94 = vmatprep.subr.mxu0 0.0
  %95 = vmatpush1.msra.mxu0 0.0
  %96 = vmatprep.subr.mxu0 0.0
  %97 = vmatpush1.msra.mxu0 0.0
  %98 = vmatprep.subr.mxu0 0.0
  %99 = vmatpush1.msra.mxu0 0.0
  %100 = vmatprep.subr.mxu0 0.0
  %101 = vmatpush1.msra.mxu0 0.0
  %102 = vmatprep.subr.mxu0 0.0
  %103 = vmatpush1.msra.mxu0 0.0
  %104 = vmatprep.subr.mxu0 0.0
  %105 = vmatpush1.msra.mxu0 0.0
  %106 = vmatprep.subr.mxu0 0.0
  %107 = vmatpush1.msra.mxu0 %v76
  %108 = vmatprep.subr.mxu0 0.0
  %109 = vmatpush1.msra.mxu0 %v61
  %110 = vmatprep.subr.mxu0 0.0
  %111 = vmatpush2.msra.mxu0 0.0
  %112 = vmatprep.subr.mxu0 0.0
  %113 = vmatpush2.msra.mxu0 0.0
  %114 = vmatprep.subr.mxu0 0.0
  %115 = vmatpush2.msra.mxu0 0.0
  %116 = vmatprep.subr.mxu0 0.0
  %117 = vmatpush2.msra.mxu0 0.0
  %118 = vmatprep.subr.mxu0 0.0
  %119 = vmatpush2.msra.mxu0 0.0
  %120 = vmatprep.subr.mxu0 0.0
  %121 = vmatpush2.msra.mxu0 0.0
  %122 = vmatprep.subr.mxu0 0.0
  %123 = vmatpush2.msra.mxu0 0.0
  %124 = vmatprep.subr.mxu0 0.0
  %125 = vmatpush2.msra.mxu0 0.0
  %126 = vmatprep.subr.mxu0 0.0
  %127 = vmatpush2.msra.mxu0 0.0
  %128 = vmatprep.subr.mxu0 0.0
  %129 = vmatpush2.msra.mxu0 0.0
  %130 = vmatprep.subr.mxu0 0.0
  %131 = vmatpush2.msra.mxu0 0.0
  %132 = vmatprep.subr.mxu0 0.0
  %133 = vmatpush2.msra.mxu0 0.0
  %134 = vmatprep.subr.mxu0 0.0
  %135 = vmatpush2.msra.mxu0 0.0
  %136 = vmatprep.subr.mxu0 0.0
  %137 = vmatpush2.msra.mxu0 0.0
  %138 = vmatprep.subr.mxu0 0.0
  %139 = vmatpush2.msra.mxu0 0.0
  %140 = vmatprep.subr.mxu0 0.0
  %141 = vmatpush2.msra.mxu0 0.0
  %142 = vmatprep.mubr.f32.mxu0 0.0
  %143 = vmatmul.mubr.f32.gmra.mxu0 %v72
  %v144 = vpop.f32.mrf.mxu0
  %v145 = vadd.f32 %v68, %v144
  %v146 = vpop.f32.mrf.mxu0
  %147 = vdwg.mxu0
  %v148 = vmax.f32 %v145, 0.0
  %v149 = vld [vmem:[%s5] sm:$0xff]
  %v150 = vld [vmem:[%s5 + $0x8] sm:$0xff]
  %v151 = vld [vmem:[%s5 + $0x10] sm:$0xff]
  %v152 = vld [vmem:[%s5 + $0x18] sm:$0xff]
  %v153 = vld [vmem:[%s5 + $0x20] sm:$0xff]
  %v154 = vld [vmem:[%s5 + $0x28] sm:$0xff]
  %v155 = vld [vmem:[%s5 + $0x30] sm:$0xff]
  %v156 = vld [vmem:[%s5 + $0x38] sm:$0xff]
  %v157 = vld [vmem:[%s6] sm:$0x1]
  %v159 = vlaneseq
  %v160 = vshrl.u32 %v159, 7
  %v161 = vsub.s32 0, %v160
  %v162 = vrot.slane %v157, %v161
  %vm164 = vcmask 523264
  %v166 = vsel %vm164, %v148, 0
  %168 = vmatprep.subr.mxu0 0.0
  %169 = vmatpush1.msra.mxu0 0.0
  %170 = vmatprep.subr.mxu0 0.0
  %171 = vmatpush1.msra.mxu0 0.0
  %172 = vmatprep.subr.mxu0 0.0
  %173 = vmatpush1.msra.mxu0 0.0
  %174 = vmatprep.subr.mxu0 0.0
  %175 = vmatpush1.msra.mxu0 0.0
  %176 = vmatprep.subr.mxu0 0.0
  %177 = vmatpush1.msra.mxu0 0.0
  %178 = vmatprep.subr.mxu0 0.0
  %179 = vmatpush1.msra.mxu0 0.0
  %180 = vmatprep.subr.mxu0 0.0
  %181 = vmatpush1.msra.mxu0 0.0
  %182 = vmatprep.subr.mxu0 0.0
  %183 = vmatpush1.msra.mxu0 0.0
  %184 = vmatprep.subr.mxu0 0.0
  %185 = vmatpush1.msra.mxu0 %v156
  %186 = vmatprep.subr.mxu0 0.0
  %187 = vmatpush1.msra.mxu0 %v155
  %188 = vmatprep.subr.mxu0 0.0
  %189 = vmatpush1.msra.mxu0 %v154
  %190 = vmatprep.subr.mxu0 0.0
  %191 = vmatpush1.msra.mxu0 %v153
  %192 = vmatprep.subr.mxu0 0.0
  %193 = vmatpush1.msra.mxu0 %v152
  %194 = vmatprep.subr.mxu0 0.0
  %195 = vmatpush1.msra.mxu0 %v151
  %196 = vmatprep.subr.mxu0 0.0
  %197 = vmatpush1.msra.mxu0 %v150
  %198 = vmatprep.subr.mxu0 0.0
  %199 = vmatpush1.msra.mxu0 %v149
  %200 = vmatprep.subr.mxu0 0.0
  %201 = vmatpush2.msra.mxu0 0.0
  %202 = vmatprep.subr.mxu0 0.0
  %203 = vmatpush2.msra.mxu0 0.0
  %204 = vmatprep.subr.mxu0 0.0
  %205 = vmatpush2.msra.mxu0 0.0
  %206 = vmatprep.subr.mxu0 0.0
  %207 = vmatpush2.msra.mxu0 0.0
  %208 = vmatprep.subr.mxu0 0.0
  %209 = vmatpush2.msra.mxu0 0.0
  %210 = vmatprep.subr.mxu0 0.0
  %211 = vmatpush2.msra.mxu0 0.0
  %212 = vmatprep.subr.mxu0 0.0
  %213 = vmatpush2.msra.mxu0 0.0
  %214 = vmatprep.subr.mxu0 0.0
  %215 = vmatpush2.msra.mxu0 0.0
  %216 = vmatprep.subr.mxu0 0.0
  %217 = vmatpush2.msra.mxu0 0.0
  %218 = vmatprep.subr.mxu0 0.0
  %219 = vmatpush2.msra.mxu0 0.0
  %220 = vmatprep.subr.mxu0 0.0
  %221 = vmatpush2.msra.mxu0 0.0
  %222 = vmatprep.subr.mxu0 0.0
  %223 = vmatpush2.msra.mxu0 0.0
  %224 = vmatprep.subr.mxu0 0.0
  %225 = vmatpush2.msra.mxu0 0.0
  %226 = vmatprep.subr.mxu0 0.0
  %227 = vmatpush2.msra.mxu0 0.0
  %228 = vmatprep.subr.mxu0 0.0
  %229 = vmatpush2.msra.mxu0 0.0
  %230 = vmatprep.subr.mxu0 0.0
  %231 = vmatpush2.msra.mxu0 0.0
  %232 = vmatprep.mubr.f32.mxu0 0.0
  %233 = vmatmul.mubr.f32.gmra.mxu0 %v166
  %v234 = vpop.f32.mrf.mxu0
  %v235 = vadd.f32 %v162, %v234
  %v236 = vpop.f32.mrf.mxu0
  %237 = vdwg.mxu0
  %v238 = vmax.f32 %v235, 0.0
  %v239 = vld [vmem:[%s7] sm:$0xff]
  %v240 = vld [vmem:[%s7 + $0x8] sm:$0xff]
  %v241 = vld [vmem:[%s7 + $0x10] sm:$0xff]
  %v242 = vld [vmem:[%s7 + $0x18] sm:$0xff]
  %v243 = vld [vmem:[%s7 + $0x20] sm:$0xff]
  %v244 = vld [vmem:[%s7 + $0x28] sm:$0xff]
  %v245 = vld [vmem:[%s7 + $0x30] sm:$0xff]
  %v246 = vld [vmem:[%s7 + $0x38] sm:$0xff]
  %v247 = vld [vmem:[%s7 + $0x40] sm:$0xff]
  %v248 = vld [vmem:[%s7 + $0x48] sm:$0xff]
  %v249 = vld [vmem:[%s7 + $0x50] sm:$0xff]
  %v250 = vld [vmem:[%s7 + $0x58] sm:$0xff]
  %v251 = vld [vmem:[%s7 + $0x60] sm:$0xff]
  %v252 = vld [vmem:[%s7 + $0x68] sm:$0xff]
  %v253 = vld [vmem:[%s7 + $0x70] sm:$0xff]
  %v254 = vld [vmem:[%s7 + $0x78] sm:$0xff]
  %v255 = vld [vmem:[%s7 + $0x80] sm:$0xff]
  %v256 = vld [vmem:[%s7 + $0x88] sm:$0xff]
  %v257 = vld [vmem:[%s7 + $0x90] sm:$0xff]
  %v258 = vld [vmem:[%s7 + $0x98] sm:$0xff]
  %v259 = vld [vmem:[%s7 + $0xa0] sm:$0xff]
  %v260 = vld [vmem:[%s7 + $0xa8] sm:$0xff]
  %v261 = vld [vmem:[%s7 + $0xb0] sm:$0xff]
  %v262 = vld [vmem:[%s7 + $0xb8] sm:$0xff]
  %v263 = vld [vmem:[%s7 + $0xc0] sm:$0xff]
  %v264 = vld [vmem:[%s7 + $0xc8] sm:$0xff]
  %v265 = vld [vmem:[%s7 + $0xd0] sm:$0xff]
  %v266 = vld [vmem:[%s7 + $0xd8] sm:$0xff]
  %v267 = vld [vmem:[%s7 + $0xe0] sm:$0xff]
  %v268 = vld [vmem:[%s7 + $0xe8] sm:$0xff]
  %v269 = vld [vmem:[%s7 + $0xf0] sm:$0xff]
  %v270 = vld [vmem:[%s7 + $0xf8] sm:$0xff]
  %v271 = vld [vmem:[%s7 + $0x100] sm:$0xff]
  %v272 = vld [vmem:[%s7 + $0x108] sm:$0xff]
  %v273 = vld [vmem:[%s7 + $0x110] sm:$0xff]
  %v274 = vld [vmem:[%s7 + $0x118] sm:$0xff]
  %v275 = vld [vmem:[%s7 + $0x120] sm:$0xff]
  %v276 = vld [vmem:[%s7 + $0x128] sm:$0xff]
  %v277 = vld [vmem:[%s7 + $0x130] sm:$0xff]
  %v278 = vld [vmem:[%s7 + $0x138] sm:$0xff]
  %v279 = vld [vmem:[%s7 + $0x140] sm:$0xff]
  %v280 = vld [vmem:[%s7 + $0x148] sm:$0xff]
  %v281 = vld [vmem:[%s7 + $0x150] sm:$0xff]
  %v282 = vld [vmem:[%s7 + $0x158] sm:$0xff]
  %v283 = vld [vmem:[%s7 + $0x160] sm:$0xff]
  %v284 = vld [vmem:[%s7 + $0x168] sm:$0xff]
  %v285 = vld [vmem:[%s7 + $0x170] sm:$0xff]
  %v286 = vld [vmem:[%s7 + $0x178] sm:$0xff]
  %v287 = vld [vmem:[%s7 + $0x180] sm:$0xff]
  %v288 = vld [vmem:[%s7 + $0x188] sm:$0xff]
  %v289 = vld [vmem:[%s7 + $0x190] sm:$0xff]
  %v290 = vld [vmem:[%s7 + $0x198] sm:$0xff]
  %v291 = vld [vmem:[%s7 + $0x1a0] sm:$0xff]
  %v292 = vld [vmem:[%s7 + $0x1a8] sm:$0xff]
  %v293 = vld [vmem:[%s7 + $0x1b0] sm:$0xff]
  %v294 = vld [vmem:[%s7 + $0x1b8] sm:$0xff]
  %v295 = vld [vmem:[%s7 + $0x1c0] sm:$0xff]
  %v296 = vld [vmem:[%s7 + $0x1c8] sm:$0xff]
  %v297 = vld [vmem:[%s7 + $0x1d0] sm:$0xff]
  %v298 = vld [vmem:[%s7 + $0x1d8] sm:$0xff]
  %v299 = vld [vmem:[%s7 + $0x1e0] sm:$0xff]
  %v300 = vld [vmem:[%s7 + $0x1e8] sm:$0xff]
  %v301 = vld [vmem:[%s7 + $0x1f0] sm:$0xff]
  %v302 = vld [vmem:[%s7 + $0x1f8] sm:$0xff]
  %v303 = vld [vmem:[%s8] sm:$0xff]
  %v304 = vld [vmem:[%s8 + $0x8] sm:$0xff]
  %v305 = vld [vmem:[%s8 + $0x10] sm:$0xff]
  %v306 = vld [vmem:[%s8 + $0x18] sm:$0xff]
  %v307 = vld [vmem:[%s8 + $0x20] sm:$0xff]
  %v308 = vld [vmem:[%s8 + $0x28] sm:$0xff]
  %v309 = vld [vmem:[%s8 + $0x30] sm:$0xff]
  %v310 = vld [vmem:[%s8 + $0x38] sm:$0xff]
  %v311 = vld [vmem:[%s8 + $0x40] sm:$0xff]
  %v312 = vld [vmem:[%s8 + $0x48] sm:$0xff]
  %v313 = vld [vmem:[%s8 + $0x50] sm:$0xff]
  %v314 = vld [vmem:[%s8 + $0x58] sm:$0xff]
  %v315 = vld [vmem:[%s8 + $0x60] sm:$0xff]
  %v316 = vld [vmem:[%s8 + $0x68] sm:$0xff]
  %v317 = vld [vmem:[%s8 + $0x70] sm:$0xff]
  %v318 = vld [vmem:[%s8 + $0x78] sm:$0xff]
  %319 = vmatprep.subr.mxu0 0.0
  %320 = vmatpush1.msra.mxu0 %v318
  %321 = vmatprep.subr.mxu0 0.0
  %322 = vmatpush1.msra.mxu0 %v317
  %323 = vmatprep.subr.mxu0 0.0
  %324 = vmatpush1.msra.mxu0 %v316
  %325 = vmatprep.subr.mxu0 0.0
  %326 = vmatpush1.msra.mxu0 %v315
  %327 = vmatprep.subr.mxu0 0.0
  %328 = vmatpush1.msra.mxu0 %v314
  %329 = vmatprep.subr.mxu0 0.0
  %330 = vmatpush1.msra.mxu0 %v313
  %331 = vmatprep.subr.mxu0 0.0
  %332 = vmatpush1.msra.mxu0 %v312
  %333 = vmatprep.subr.mxu0 0.0
  %334 = vmatpush1.msra.mxu0 %v311
  %335 = vmatprep.subr.mxu0 0.0
  %336 = vmatpush1.msra.mxu0 %v310
  %337 = vmatprep.subr.mxu0 0.0
  %338 = vmatpush1.msra.mxu0 %v309
  %339 = vmatprep.subr.mxu0 0.0
  %340 = vmatpush1.msra.mxu0 %v308
  %341 = vmatprep.subr.mxu0 0.0
  %342 = vmatpush1.msra.mxu0 %v307
  %343 = vmatprep.subr.mxu0 0.0
  %344 = vmatpush1.msra.mxu0 %v306
  %345 = vmatprep.subr.mxu0 0.0
  %346 = vmatpush1.msra.mxu0 %v305
  %347 = vmatprep.subr.mxu0 0.0
  %348 = vmatpush1.msra.mxu0 %v304
  %349 = vmatprep.subr.mxu0 0.0
  %350 = vmatpush1.msra.mxu0 %v303
  %351 = vmatprep.subr.mxu0 0.0
  %352 = vmatpush2.msra.mxu0 0.0
  %353 = vmatprep.subr.mxu0 0.0
  %354 = vmatpush2.msra.mxu0 0.0
  %355 = vmatprep.subr.mxu0 0.0
  %356 = vmatpush2.msra.mxu0 0.0
  %357 = vmatprep.subr.mxu0 0.0
  %358 = vmatpush2.msra.mxu0 0.0
  %359 = vmatprep.subr.mxu0 0.0
  %360 = vmatpush2.msra.mxu0 0.0
  %361 = vmatprep.subr.mxu0 0.0
  %362 = vmatpush2.msra.mxu0 0.0
  %363 = vmatprep.subr.mxu0 0.0
  %364 = vmatpush2.msra.mxu0 0.0
  %365 = vmatprep.subr.mxu0 0.0
  %366 = vmatpush2.msra.mxu0 0.0
  %367 = vmatprep.subr.mxu0 0.0
  %368 = vmatpush2.msra.mxu0 0.0
  %369 = vmatprep.subr.mxu0 0.0
  %370 = vmatpush2.msra.mxu0 0.0
  %371 = vmatprep.subr.mxu0 0.0
  %372 = vmatpush2.msra.mxu0 0.0
  %373 = vmatprep.subr.mxu0 0.0
  %374 = vmatpush2.msra.mxu0 0.0
  %375 = vmatprep.subr.mxu0 0.0
  %376 = vmatpush2.msra.mxu0 0.0
  %377 = vmatprep.subr.mxu0 0.0
  %378 = vmatpush2.msra.mxu0 0.0
  %379 = vmatprep.subr.mxu0 0.0
  %380 = vmatpush2.msra.mxu0 0.0
  %381 = vmatprep.subr.mxu0 0.0
  %382 = vmatpush2.msra.mxu0 0.0
  %383 = vmatprep.mubr.f32.mxu0 0.0
  %384 = vmatmul.mubr.f32.gmra.mxu0 %v238
  %v385 = vpop.f32.mrf.mxu0
  %v386 = vadd.f32 0.0, %v385
  %v387 = vpop.f32.mrf.mxu0
  %388 = vdwg.mxu0
  %389 = vmatprep.subr.mxu0 0.0
  %390 = vmatpush1.msra.mxu0 %v254
  %391 = vmatprep.subr.mxu0 0.0
  %392 = vmatpush1.msra.mxu0 %v253
  %393 = vmatprep.subr.mxu0 0.0
  %394 = vmatpush1.msra.mxu0 %v252
  %395 = vmatprep.subr.mxu0 0.0
  %396 = vmatpush1.msra.mxu0 %v251
  %397 = vmatprep.subr.mxu0 0.0
  %398 = vmatpush1.msra.mxu0 %v250
  %399 = vmatprep.subr.mxu0 0.0
  %400 = vmatpush1.msra.mxu0 %v249
  %401 = vmatprep.subr.mxu0 0.0
  %402 = vmatpush1.msra.mxu0 %v248
  %403 = vmatprep.subr.mxu0 0.0
  %404 = vmatpush1.msra.mxu0 %v247
  %405 = vmatprep.subr.mxu0 0.0
  %406 = vmatpush1.msra.mxu0 %v246
  %407 = vmatprep.subr.mxu0 0.0
  %408 = vmatpush1.msra.mxu0 %v245
  %409 = vmatprep.subr.mxu0 0.0
  %410 = vmatpush1.msra.mxu0 %v244
  %411 = vmatprep.subr.mxu0 0.0
  %412 = vmatpush1.msra.mxu0 %v243
  %413 = vmatprep.subr.mxu0 0.0
  %414 = vmatpush1.msra.mxu0 %v242
  %415 = vmatprep.subr.mxu0 0.0
  %416 = vmatpush1.msra.mxu0 %v241
  %417 = vmatprep.subr.mxu0 0.0
  %418 = vmatpush1.msra.mxu0 %v240
  %419 = vmatprep.subr.mxu0 0.0
  %420 = vmatpush1.msra.mxu0 %v239
  %421 = vmatprep.subr.mxu0 0.0
  %422 = vmatpush2.msra.mxu0 %v270
  %423 = vmatprep.subr.mxu0 0.0
  %424 = vmatpush2.msra.mxu0 %v269
  %425 = vmatprep.subr.mxu0 0.0
  %426 = vmatpush2.msra.mxu0 %v268
  %427 = vmatprep.subr.mxu0 0.0
  %428 = vmatpush2.msra.mxu0 %v267
  %429 = vmatprep.subr.mxu0 0.0
  %430 = vmatpush2.msra.mxu0 %v266
  %431 = vmatprep.subr.mxu0 0.0
  %432 = vmatpush2.msra.mxu0 %v265
  %433 = vmatprep.subr.mxu0 0.0
  %434 = vmatpush2.msra.mxu0 %v264
  %435 = vmatprep.subr.mxu0 0.0
  %436 = vmatpush2.msra.mxu0 %v263
  %437 = vmatprep.subr.mxu0 0.0
  %438 = vmatpush2.msra.mxu0 %v262
  %439 = vmatprep.subr.mxu0 0.0
  %440 = vmatpush2.msra.mxu0 %v261
  %441 = vmatprep.subr.mxu0 0.0
  %442 = vmatpush2.msra.mxu0 %v260
  %443 = vmatprep.subr.mxu0 0.0
  %444 = vmatpush2.msra.mxu0 %v259
  %445 = vmatprep.subr.mxu0 0.0
  %446 = vmatpush2.msra.mxu0 %v258
  %447 = vmatprep.subr.mxu0 0.0
  %448 = vmatpush2.msra.mxu0 %v257
  %449 = vmatprep.subr.mxu0 0.0
  %450 = vmatpush2.msra.mxu0 %v256
  %451 = vmatprep.subr.mxu0 0.0
  %452 = vmatpush2.msra.mxu0 %v255
  %453 = vmatprep.mubr.f32.mxu0 %v58
  %454 = vmatmul.mubr.f32.gmra.mxu0 %v57
  %v455 = vpop.f32.mrf.mxu0
  %v456 = vadd.f32 %v386, %v455
  %v457 = vpop.f32.mrf.mxu0
  %458 = vdwg.mxu0
  %459 = vmatprep.subr.mxu0 0.0
  %460 = vmatpush1.msra.mxu0 %v286
  %461 = vmatprep.subr.mxu0 0.0
  %462 = vmatpush1.msra.mxu0 %v285
  %463 = vmatprep.subr.mxu0 0.0
  %464 = vmatpush1.msra.mxu0 %v284
  %465 = vmatprep.subr.mxu0 0.0
  %466 = vmatpush1.msra.mxu0 %v283
  %467 = vmatprep.subr.mxu0 0.0
  %468 = vmatpush1.msra.mxu0 %v282
  %469 = vmatprep.subr.mxu0 0.0
  %470 = vmatpush1.msra.mxu0 %v281
  %471 = vmatprep.subr.mxu0 0.0
  %472 = vmatpush1.msra.mxu0 %v280
  %473 = vmatprep.subr.mxu0 0.0
  %474 = vmatpush1.msra.mxu0 %v279
  %475 = vmatprep.subr.mxu0 0.0
  %476 = vmatpush1.msra.mxu0 %v278
  %477 = vmatprep.subr.mxu0 0.0
  %478 = vmatpush1.msra.mxu0 %v277
  %479 = vmatprep.subr.mxu0 0.0
  %480 = vmatpush1.msra.mxu0 %v276
  %481 = vmatprep.subr.mxu0 0.0
  %482 = vmatpush1.msra.mxu0 %v275
  %483 = vmatprep.subr.mxu0 0.0
  %484 = vmatpush1.msra.mxu0 %v274
  %485 = vmatprep.subr.mxu0 0.0
  %486 = vmatpush1.msra.mxu0 %v273
  %487 = vmatprep.subr.mxu0 0.0
  %488 = vmatpush1.msra.mxu0 %v272
  %489 = vmatprep.subr.mxu0 0.0
  %490 = vmatpush1.msra.mxu0 %v271
  %491 = vmatprep.subr.mxu0 0.0
  %492 = vmatpush2.msra.mxu0 %v302
  %493 = vmatprep.subr.mxu0 0.0
  %494 = vmatpush2.msra.mxu0 %v301
  %495 = vmatprep.subr.mxu0 0.0
  %496 = vmatpush2.msra.mxu0 %v300
  %497 = vmatprep.subr.mxu0 0.0
  %498 = vmatpush2.msra.mxu0 %v299
  %499 = vmatprep.subr.mxu0 0.0
  %500 = vmatpush2.msra.mxu0 %v298
  %501 = vmatprep.subr.mxu0 0.0
  %502 = vmatpush2.msra.mxu0 %v297
  %503 = vmatprep.subr.mxu0 0.0
  %504 = vmatpush2.msra.mxu0 %v296
  %505 = vmatprep.subr.mxu0 0.0
  %506 = vmatpush2.msra.mxu0 %v295
  %507 = vmatprep.subr.mxu0 0.0
  %508 = vmatpush2.msra.mxu0 %v294
  %509 = vmatprep.subr.mxu0 0.0
  %510 = vmatpush2.msra.mxu0 %v293
  %511 = vmatprep.subr.mxu0 0.0
  %512 = vmatpush2.msra.mxu0 %v292
  %513 = vmatprep.subr.mxu0 0.0
  %514 = vmatpush2.msra.mxu0 %v291
  %515 = vmatprep.subr.mxu0 0.0
  %516 = vmatpush2.msra.mxu0 %v290
  %517 = vmatprep.subr.mxu0 0.0
  %518 = vmatpush2.msra.mxu0 %v289
  %519 = vmatprep.subr.mxu0 0.0
  %520 = vmatpush2.msra.mxu0 %v288
  %521 = vmatprep.subr.mxu0 0.0
  %522 = vmatpush2.msra.mxu0 %v287
  %523 = vmatprep.mubr.f32.mxu0 %v60
  %524 = vmatmul.mubr.f32.gmra.mxu0 %v59
  %v525 = vpop.f32.mrf.mxu0
  %v526 = vadd.f32 %v456, %v525
  %v527 = vpop.f32.mrf.mxu0
  %528 = vdwg.mxu0
  %v529 = vld [vmem:[%s9] sm:$0x1]
  %v531 = vlaneseq
  %v532 = vshrl.u32 %v531, 7
  %v533 = vsub.s32 0, %v532
  %v534 = vrot.slane %v529, %v533
  %v536 = vadd.f32 %v526, %v534
  %v537 = vld [vmem:[%s10] sm:$0xff]
  %v538 = vld [vmem:[%s10 + $0x8] sm:$0xff]
  %v539 = vld [vmem:[%s10 + $0x10] sm:$0xff]
  %v540 = vld [vmem:[%s10 + $0x18] sm:$0xff]
  %v541 = vld [vmem:[%s10 + $0x20] sm:$0xff]
  %v542 = vld [vmem:[%s10 + $0x28] sm:$0xff]
  %v543 = vld [vmem:[%s10 + $0x30] sm:$0xff]
  %v544 = vld [vmem:[%s10 + $0x38] sm:$0xff]
  %v545 = vld [vmem:[%s10 + $0x40] sm:$0xff]
  %v546 = vld [vmem:[%s10 + $0x48] sm:$0xff]
  %v547 = vld [vmem:[%s10 + $0x50] sm:$0xff]
  %v548 = vld [vmem:[%s10 + $0x58] sm:$0xff]
  %v549 = vld [vmem:[%s10 + $0x60] sm:$0xff]
  %v550 = vld [vmem:[%s10 + $0x68] sm:$0xff]
  %v551 = vld [vmem:[%s10 + $0x70] sm:$0xff]
  %v552 = vld [vmem:[%s10 + $0x78] sm:$0xff]
  %v553 = vld [vmem:[%s10 + $0x80] sm:$0xff]
  %v554 = vld [vmem:[%s10 + $0x88] sm:$0xff]
  %v555 = vld [vmem:[%s10 + $0x90] sm:$0xff]
  %v556 = vld [vmem:[%s10 + $0x98] sm:$0xff]
  %v557 = vld [vmem:[%s10 + $0xa0] sm:$0xff]
  %v558 = vld [vmem:[%s10 + $0xa8] sm:$0xff]
  %v559 = vld [vmem:[%s10 + $0xb0] sm:$0xff]
  %v560 = vld [vmem:[%s10 + $0xb8] sm:$0xff]
  %v561 = vld [vmem:[%s10 + $0xc0] sm:$0xff]
  %v562 = vld [vmem:[%s10 + $0xc8] sm:$0xff]
  %v563 = vld [vmem:[%s10 + $0xd0] sm:$0xff]
  %v564 = vld [vmem:[%s10 + $0xd8] sm:$0xff]
  %v565 = vld [vmem:[%s10 + $0xe0] sm:$0xff]
  %v566 = vld [vmem:[%s10 + $0xe8] sm:$0xff]
  %v567 = vld [vmem:[%s10 + $0xf0] sm:$0xff]
  %v568 = vld [vmem:[%s10 + $0xf8] sm:$0xff]
  %v569 = vld [vmem:[%s10 + $0x100] sm:$0xff]
  %v570 = vld [vmem:[%s10 + $0x108] sm:$0xff]
  %v571 = vld [vmem:[%s10 + $0x110] sm:$0xff]
  %v572 = vld [vmem:[%s10 + $0x118] sm:$0xff]
  %v573 = vld [vmem:[%s10 + $0x120] sm:$0xff]
  %v574 = vld [vmem:[%s10 + $0x128] sm:$0xff]
  %v575 = vld [vmem:[%s10 + $0x130] sm:$0xff]
  %v576 = vld [vmem:[%s10 + $0x138] sm:$0xff]
  %v577 = vld [vmem:[%s10 + $0x140] sm:$0xff]
  %v578 = vld [vmem:[%s10 + $0x148] sm:$0xff]
  %v579 = vld [vmem:[%s10 + $0x150] sm:$0xff]
  %v580 = vld [vmem:[%s10 + $0x158] sm:$0xff]
  %v581 = vld [vmem:[%s10 + $0x160] sm:$0xff]
  %v582 = vld [vmem:[%s10 + $0x168] sm:$0xff]
  %v583 = vld [vmem:[%s10 + $0x170] sm:$0xff]
  %v584 = vld [vmem:[%s10 + $0x178] sm:$0xff]
  %v585 = vld [vmem:[%s10 + $0x180] sm:$0xff]
  %v586 = vld [vmem:[%s10 + $0x188] sm:$0xff]
  %v587 = vld [vmem:[%s10 + $0x190] sm:$0xff]
  %v588 = vld [vmem:[%s10 + $0x198] sm:$0xff]
  %v589 = vld [vmem:[%s10 + $0x1a0] sm:$0xff]
  %v590 = vld [vmem:[%s10 + $0x1a8] sm:$0xff]
  %v591 = vld [vmem:[%s10 + $0x1b0] sm:$0xff]
  %v592 = vld [vmem:[%s10 + $0x1b8] sm:$0xff]
  %v593 = vld [vmem:[%s10 + $0x1c0] sm:$0xff]
  %v594 = vld [vmem:[%s10 + $0x1c8] sm:$0xff]
  %v595 = vld [vmem:[%s10 + $0x1d0] sm:$0xff]
  %v596 = vld [vmem:[%s10 + $0x1d8] sm:$0xff]
  %v597 = vld [vmem:[%s10 + $0x1e0] sm:$0xff]
  %v598 = vld [vmem:[%s10 + $0x1e8] sm:$0xff]
  %v599 = vld [vmem:[%s10 + $0x1f0] sm:$0xff]
  %v600 = vld [vmem:[%s10 + $0x1f8] sm:$0xff]
  %v601 = vld [vmem:[%s11] sm:$0xff]
  %v602 = vld [vmem:[%s11 + $0x8] sm:$0xff]
  %v603 = vld [vmem:[%s11 + $0x10] sm:$0xff]
  %v604 = vld [vmem:[%s11 + $0x18] sm:$0xff]
  %v605 = vld [vmem:[%s11 + $0x20] sm:$0xff]
  %v606 = vld [vmem:[%s11 + $0x28] sm:$0xff]
  %v607 = vld [vmem:[%s11 + $0x30] sm:$0xff]
  %v608 = vld [vmem:[%s11 + $0x38] sm:$0xff]
  %v609 = vld [vmem:[%s11 + $0x40] sm:$0xff]
  %v610 = vld [vmem:[%s11 + $0x48] sm:$0xff]
  %v611 = vld [vmem:[%s11 + $0x50] sm:$0xff]
  %v612 = vld [vmem:[%s11 + $0x58] sm:$0xff]
  %v613 = vld [vmem:[%s11 + $0x60] sm:$0xff]
  %v614 = vld [vmem:[%s11 + $0x68] sm:$0xff]
  %v615 = vld [vmem:[%s11 + $0x70] sm:$0xff]
  %v616 = vld [vmem:[%s11 + $0x78] sm:$0xff]
  %617 = vmatprep.subr.mxu0 0.0
  %618 = vmatpush1.msra.mxu0 %v616
  %619 = vmatprep.subr.mxu0 0.0
  %620 = vmatpush1.msra.mxu0 %v615
  %621 = vmatprep.subr.mxu0 0.0
  %622 = vmatpush1.msra.mxu0 %v614
  %623 = vmatprep.subr.mxu0 0.0
  %624 = vmatpush1.msra.mxu0 %v613
  %625 = vmatprep.subr.mxu0 0.0
  %626 = vmatpush1.msra.mxu0 %v612
  %627 = vmatprep.subr.mxu0 0.0
  %628 = vmatpush1.msra.mxu0 %v611
  %629 = vmatprep.subr.mxu0 0.0
  %630 = vmatpush1.msra.mxu0 %v610
  %631 = vmatprep.subr.mxu0 0.0
  %632 = vmatpush1.msra.mxu0 %v609
  %633 = vmatprep.subr.mxu0 0.0
  %634 = vmatpush1.msra.mxu0 %v608
  %635 = vmatprep.subr.mxu0 0.0
  %636 = vmatpush1.msra.mxu0 %v607
  %637 = vmatprep.subr.mxu0 0.0
  %638 = vmatpush1.msra.mxu0 %v606
  %639 = vmatprep.subr.mxu0 0.0
  %640 = vmatpush1.msra.mxu0 %v605
  %641 = vmatprep.subr.mxu0 0.0
  %642 = vmatpush1.msra.mxu0 %v604
  %643 = vmatprep.subr.mxu0 0.0
  %644 = vmatpush1.msra.mxu0 %v603
  %645 = vmatprep.subr.mxu0 0.0
  %646 = vmatpush1.msra.mxu0 %v602
  %647 = vmatprep.subr.mxu0 0.0
  %648 = vmatpush1.msra.mxu0 %v601
  %649 = vmatprep.subr.mxu0 0.0
  %650 = vmatpush2.msra.mxu0 0.0
  %651 = vmatprep.subr.mxu0 0.0
  %652 = vmatpush2.msra.mxu0 0.0
  %653 = vmatprep.subr.mxu0 0.0
  %654 = vmatpush2.msra.mxu0 0.0
  %655 = vmatprep.subr.mxu0 0.0
  %656 = vmatpush2.msra.mxu0 0.0
  %657 = vmatprep.subr.mxu0 0.0
  %658 = vmatpush2.msra.mxu0 0.0
  %659 = vmatprep.subr.mxu0 0.0
  %660 = vmatpush2.msra.mxu0 0.0
  %661 = vmatprep.subr.mxu0 0.0
  %662 = vmatpush2.msra.mxu0 0.0
  %663 = vmatprep.subr.mxu0 0.0
  %664 = vmatpush2.msra.mxu0 0.0
  %665 = vmatprep.subr.mxu0 0.0
  %666 = vmatpush2.msra.mxu0 0.0
  %667 = vmatprep.subr.mxu0 0.0
  %668 = vmatpush2.msra.mxu0 0.0
  %669 = vmatprep.subr.mxu0 0.0
  %670 = vmatpush2.msra.mxu0 0.0
  %671 = vmatprep.subr.mxu0 0.0
  %672 = vmatpush2.msra.mxu0 0.0
  %673 = vmatprep.subr.mxu0 0.0
  %674 = vmatpush2.msra.mxu0 0.0
  %675 = vmatprep.subr.mxu0 0.0
  %676 = vmatpush2.msra.mxu0 0.0
  %677 = vmatprep.subr.mxu0 0.0
  %678 = vmatpush2.msra.mxu0 0.0
  %679 = vmatprep.subr.mxu0 0.0
  %680 = vmatpush2.msra.mxu0 0.0
  %681 = vmatprep.mubr.f32.mxu0 0.0
  %682 = vmatmul.mubr.f32.gmra.mxu0 %v238
  %v683 = vpop.f32.mrf.mxu0
  %v684 = vadd.f32 0.0, %v683
  %v685 = vpop.f32.mrf.mxu0
  %686 = vdwg.mxu0
  %687 = vmatprep.subr.mxu0 0.0
  %688 = vmatpush1.msra.mxu0 %v552
  %689 = vmatprep.subr.mxu0 0.0
  %690 = vmatpush1.msra.mxu0 %v551
  %691 = vmatprep.subr.mxu0 0.0
  %692 = vmatpush1.msra.mxu0 %v550
  %693 = vmatprep.subr.mxu0 0.0
  %694 = vmatpush1.msra.mxu0 %v549
  %695 = vmatprep.subr.mxu0 0.0
  %696 = vmatpush1.msra.mxu0 %v548
  %697 = vmatprep.subr.mxu0 0.0
  %698 = vmatpush1.msra.mxu0 %v547
  %699 = vmatprep.subr.mxu0 0.0
  %700 = vmatpush1.msra.mxu0 %v546
  %701 = vmatprep.subr.mxu0 0.0
  %702 = vmatpush1.msra.mxu0 %v545
  %703 = vmatprep.subr.mxu0 0.0
  %704 = vmatpush1.msra.mxu0 %v544
  %705 = vmatprep.subr.mxu0 0.0
  %706 = vmatpush1.msra.mxu0 %v543
  %707 = vmatprep.subr.mxu0 0.0
  %708 = vmatpush1.msra.mxu0 %v542
  %709 = vmatprep.subr.mxu0 0.0
  %710 = vmatpush1.msra.mxu0 %v541
  %711 = vmatprep.subr.mxu0 0.0
  %712 = vmatpush1.msra.mxu0 %v540
  %713 = vmatprep.subr.mxu0 0.0
  %714 = vmatpush1.msra.mxu0 %v539
  %715 = vmatprep.subr.mxu0 0.0
  %716 = vmatpush1.msra.mxu0 %v538
  %717 = vmatprep.subr.mxu0 0.0
  %718 = vmatpush1.msra.mxu0 %v537
  %719 = vmatprep.subr.mxu0 0.0
  %720 = vmatpush2.msra.mxu0 %v568
  %721 = vmatprep.subr.mxu0 0.0
  %722 = vmatpush2.msra.mxu0 %v567
  %723 = vmatprep.subr.mxu0 0.0
  %724 = vmatpush2.msra.mxu0 %v566
  %725 = vmatprep.subr.mxu0 0.0
  %726 = vmatpush2.msra.mxu0 %v565
  %727 = vmatprep.subr.mxu0 0.0
  %728 = vmatpush2.msra.mxu0 %v564
  %729 = vmatprep.subr.mxu0 0.0
  %730 = vmatpush2.msra.mxu0 %v563
  %731 = vmatprep.subr.mxu0 0.0
  %732 = vmatpush2.msra.mxu0 %v562
  %733 = vmatprep.subr.mxu0 0.0
  %734 = vmatpush2.msra.mxu0 %v561
  %735 = vmatprep.subr.mxu0 0.0
  %736 = vmatpush2.msra.mxu0 %v560
  %737 = vmatprep.subr.mxu0 0.0
  %738 = vmatpush2.msra.mxu0 %v559
  %739 = vmatprep.subr.mxu0 0.0
  %740 = vmatpush2.msra.mxu0 %v558
  %741 = vmatprep.subr.mxu0 0.0
  %742 = vmatpush2.msra.mxu0 %v557
  %743 = vmatprep.subr.mxu0 0.0
  %744 = vmatpush2.msra.mxu0 %v556
  %745 = vmatprep.subr.mxu0 0.0
  %746 = vmatpush2.msra.mxu0 %v555
  %747 = vmatprep.subr.mxu0 0.0
  %748 = vmatpush2.msra.mxu0 %v554
  %749 = vmatprep.subr.mxu0 0.0
  %750 = vmatpush2.msra.mxu0 %v553
  %751 = vmatprep.mubr.f32.mxu0 %v58
  %752 = vmatmul.mubr.f32.gmra.mxu0 %v57
  %v753 = vpop.f32.mrf.mxu0
  %v754 = vadd.f32 %v684, %v753
  %v755 = vpop.f32.mrf.mxu0
  %756 = vdwg.mxu0
  %757 = vmatprep.subr.mxu0 0.0
  %758 = vmatpush1.msra.mxu0 %v584
  %759 = vmatprep.subr.mxu0 0.0
  %760 = vmatpush1.msra.mxu0 %v583
  %761 = vmatprep.subr.mxu0 0.0
  %762 = vmatpush1.msra.mxu0 %v582
  %763 = vmatprep.subr.mxu0 0.0
  %764 = vmatpush1.msra.mxu0 %v581
  %765 = vmatprep.subr.mxu0 0.0
  %766 = vmatpush1.msra.mxu0 %v580
  %767 = vmatprep.subr.mxu0 0.0
  %768 = vmatpush1.msra.mxu0 %v579
  %769 = vmatprep.subr.mxu0 0.0
  %770 = vmatpush1.msra.mxu0 %v578
  %771 = vmatprep.subr.mxu0 0.0
  %772 = vmatpush1.msra.mxu0 %v577
  %773 = vmatprep.subr.mxu0 0.0
  %774 = vmatpush1.msra.mxu0 %v576
  %775 = vmatprep.subr.mxu0 0.0
  %776 = vmatpush1.msra.mxu0 %v575
  %777 = vmatprep.subr.mxu0 0.0
  %778 = vmatpush1.msra.mxu0 %v574
  %779 = vmatprep.subr.mxu0 0.0
  %780 = vmatpush1.msra.mxu0 %v573
  %781 = vmatprep.subr.mxu0 0.0
  %782 = vmatpush1.msra.mxu0 %v572
  %783 = vmatprep.subr.mxu0 0.0
  %784 = vmatpush1.msra.mxu0 %v571
  %785 = vmatprep.subr.mxu0 0.0
  %786 = vmatpush1.msra.mxu0 %v570
  %787 = vmatprep.subr.mxu0 0.0
  %788 = vmatpush1.msra.mxu0 %v569
  %789 = vmatprep.subr.mxu0 0.0
  %790 = vmatpush2.msra.mxu0 %v600
  %791 = vmatprep.subr.mxu0 0.0
  %792 = vmatpush2.msra.mxu0 %v599
  %793 = vmatprep.subr.mxu0 0.0
  %794 = vmatpush2.msra.mxu0 %v598
  %795 = vmatprep.subr.mxu0 0.0
  %796 = vmatpush2.msra.mxu0 %v597
  %797 = vmatprep.subr.mxu0 0.0
  %798 = vmatpush2.msra.mxu0 %v596
  %799 = vmatprep.subr.mxu0 0.0
  %800 = vmatpush2.msra.mxu0 %v595
  %801 = vmatprep.subr.mxu0 0.0
  %802 = vmatpush2.msra.mxu0 %v594
  %803 = vmatprep.subr.mxu0 0.0
  %804 = vmatpush2.msra.mxu0 %v593
  %805 = vmatprep.subr.mxu0 0.0
  %806 = vmatpush2.msra.mxu0 %v592
  %807 = vmatprep.subr.mxu0 0.0
  %808 = vmatpush2.msra.mxu0 %v591
  %809 = vmatprep.subr.mxu0 0.0
  %810 = vmatpush2.msra.mxu0 %v590
  %811 = vmatprep.subr.mxu0 0.0
  %812 = vmatpush2.msra.mxu0 %v589
  %813 = vmatprep.subr.mxu0 0.0
  %814 = vmatpush2.msra.mxu0 %v588
  %815 = vmatprep.subr.mxu0 0.0
  %816 = vmatpush2.msra.mxu0 %v587
  %817 = vmatprep.subr.mxu0 0.0
  %818 = vmatpush2.msra.mxu0 %v586
  %819 = vmatprep.subr.mxu0 0.0
  %820 = vmatpush2.msra.mxu0 %v585
  %821 = vmatprep.mubr.f32.mxu0 %v60
  %822 = vmatmul.mubr.f32.gmra.mxu0 %v59
  %v823 = vpop.f32.mrf.mxu0
  %v824 = vadd.f32 %v754, %v823
  %v825 = vpop.f32.mrf.mxu0
  %826 = vdwg.mxu0
  %v827 = vld [vmem:[%s12] sm:$0x1]
  %v829 = vlaneseq
  %v830 = vshrl.u32 %v829, 7
  %v831 = vsub.s32 0, %v830
  %v832 = vrot.slane %v827, %v831
  %v834 = vadd.f32 %v824, %v832
  %v835 = vld [vmem:[%s2] sm:$0xff]
  %v836 = vmul.f32 %v834, 0.5
  %v837 = vmul.f32 %v836, 1.442695
  %v838 = vpow.pop %v837
  %v839 = vmul.f32 %v835, %v838
  %v840 = vadd.f32 %v839, %v536
  %v841 = vld [vmem:[%s13] sm:$0xff]
  %v842 = vld [vmem:[%s13 + $0x8] sm:$0xff]
  %v843 = vld [vmem:[%s13 + $0x10] sm:$0xff]
  %v844 = vld [vmem:[%s13 + $0x18] sm:$0xff]
  %v845 = vld [vmem:[%s13 + $0x20] sm:$0xff]
  %v846 = vld [vmem:[%s13 + $0x28] sm:$0xff]
  %v847 = vld [vmem:[%s13 + $0x30] sm:$0xff]
  %v848 = vld [vmem:[%s13 + $0x38] sm:$0xff]
  %v849 = vld [vmem:[%s14] sm:$0xff]
  %v850 = vld [vmem:[%s14 + $0x8] sm:$0xff]
  %v851 = vld [vmem:[%s14 + $0x10] sm:$0xff]
  %v852 = vld [vmem:[%s14 + $0x18] sm:$0xff]
  %v853 = vld [vmem:[%s14 + $0x20] sm:$0x3]
  %v854 = vld [vmem:[%s14 + $0x28] sm:$0x3]
  %v855 = vld [vmem:[%s14 + $0x30] sm:$0x3]
  %v856 = vld [vmem:[%s14 + $0x38] sm:$0x3]
  %v858 = vsel %vm74, %v853, 0
  %v861 = vsel %vm74, %v854, 0
  %v864 = vsel %vm74, %v855, 0
  %v867 = vsel %vm74, %v856, 0
  %869 = vmatprep.subr.mxu0 0.0
  %870 = vmatpush1.msra.mxu0 0.0
  %871 = vmatprep.subr.mxu0 0.0
  %872 = vmatpush1.msra.mxu0 0.0
  %873 = vmatprep.subr.mxu0 0.0
  %874 = vmatpush1.msra.mxu0 0.0
  %875 = vmatprep.subr.mxu0 0.0
  %876 = vmatpush1.msra.mxu0 0.0
  %877 = vmatprep.subr.mxu0 0.0
  %878 = vmatpush1.msra.mxu0 0.0
  %879 = vmatprep.subr.mxu0 0.0
  %880 = vmatpush1.msra.mxu0 0.0
  %881 = vmatprep.subr.mxu0 0.0
  %882 = vmatpush1.msra.mxu0 0.0
  %883 = vmatprep.subr.mxu0 0.0
  %884 = vmatpush1.msra.mxu0 0.0
  %885 = vmatprep.subr.mxu0 0.0
  %886 = vmatpush1.msra.mxu0 0.0
  %887 = vmatprep.subr.mxu0 0.0
  %888 = vmatpush1.msra.mxu0 0.0
  %889 = vmatprep.subr.mxu0 0.0
  %890 = vmatpush1.msra.mxu0 0.0
  %891 = vmatprep.subr.mxu0 0.0
  %892 = vmatpush1.msra.mxu0 0.0
  %893 = vmatprep.subr.mxu0 0.0
  %894 = vmatpush1.msra.mxu0 0.0
  %895 = vmatprep.subr.mxu0 0.0
  %896 = vmatpush1.msra.mxu0 0.0
  %897 = vmatprep.subr.mxu0 %v861
  %898 = vmatpush1.msra.mxu0 %v858
  %899 = vmatprep.subr.mxu0 %v850
  %900 = vmatpush1.msra.mxu0 %v849
  %901 = vmatprep.subr.mxu0 0.0
  %902 = vmatpush2.msra.mxu0 0.0
  %903 = vmatprep.subr.mxu0 0.0
  %904 = vmatpush2.msra.mxu0 0.0
  %905 = vmatprep.subr.mxu0 0.0
  %906 = vmatpush2.msra.mxu0 0.0
  %907 = vmatprep.subr.mxu0 0.0
  %908 = vmatpush2.msra.mxu0 0.0
  %909 = vmatprep.subr.mxu0 0.0
  %910 = vmatpush2.msra.mxu0 0.0
  %911 = vmatprep.subr.mxu0 0.0
  %912 = vmatpush2.msra.mxu0 0.0
  %913 = vmatprep.subr.mxu0 0.0
  %914 = vmatpush2.msra.mxu0 0.0
  %915 = vmatprep.subr.mxu0 0.0
  %916 = vmatpush2.msra.mxu0 0.0
  %917 = vmatprep.subr.mxu0 0.0
  %918 = vmatpush2.msra.mxu0 0.0
  %919 = vmatprep.subr.mxu0 0.0
  %920 = vmatpush2.msra.mxu0 0.0
  %921 = vmatprep.subr.mxu0 0.0
  %922 = vmatpush2.msra.mxu0 0.0
  %923 = vmatprep.subr.mxu0 0.0
  %924 = vmatpush2.msra.mxu0 0.0
  %925 = vmatprep.subr.mxu0 0.0
  %926 = vmatpush2.msra.mxu0 0.0
  %927 = vmatprep.subr.mxu0 0.0
  %928 = vmatpush2.msra.mxu0 0.0
  %929 = vmatprep.subr.mxu0 0.0
  %930 = vmatpush2.msra.mxu0 0.0
  %931 = vmatprep.subr.mxu0 0.0
  %932 = vmatpush2.msra.mxu0 0.0
  %933 = vmatprep.mubr.f32.mxu0 0.0
  %934 = vmatmul.mubr.f32.gmra.mxu0 %v72
  %v935 = vpop.f32.mrf.mxu0
  %v936 = vadd.f32 0.0, %v935
  %v937 = vpop.f32.mrf.mxu0
  %v938 = vadd.f32 0.0, %v937
  %939 = vdwg.mxu0
  %940 = vmatprep.subr.mxu0 0.0
  %941 = vmatpush1.msra.mxu0 0.0
  %942 = vmatprep.subr.mxu0 0.0
  %943 = vmatpush1.msra.mxu0 0.0
  %944 = vmatprep.subr.mxu0 0.0
  %945 = vmatpush1.msra.mxu0 0.0
  %946 = vmatprep.subr.mxu0 0.0
  %947 = vmatpush1.msra.mxu0 0.0
  %948 = vmatprep.subr.mxu0 0.0
  %949 = vmatpush1.msra.mxu0 0.0
  %950 = vmatprep.subr.mxu0 0.0
  %951 = vmatpush1.msra.mxu0 0.0
  %952 = vmatprep.subr.mxu0 0.0
  %953 = vmatpush1.msra.mxu0 0.0
  %954 = vmatprep.subr.mxu0 0.0
  %955 = vmatpush1.msra.mxu0 0.0
  %956 = vmatprep.subr.mxu0 0.0
  %957 = vmatpush1.msra.mxu0 0.0
  %958 = vmatprep.subr.mxu0 0.0
  %959 = vmatpush1.msra.mxu0 0.0
  %960 = vmatprep.subr.mxu0 0.0
  %961 = vmatpush1.msra.mxu0 0.0
  %962 = vmatprep.subr.mxu0 0.0
  %963 = vmatpush1.msra.mxu0 0.0
  %964 = vmatprep.subr.mxu0 0.0
  %965 = vmatpush1.msra.mxu0 0.0
  %966 = vmatprep.subr.mxu0 0.0
  %967 = vmatpush1.msra.mxu0 0.0
  %968 = vmatprep.subr.mxu0 %v867
  %969 = vmatpush1.msra.mxu0 %v864
  %970 = vmatprep.subr.mxu0 %v852
  %971 = vmatpush1.msra.mxu0 %v851
  %972 = vmatprep.subr.mxu0 0.0
  %973 = vmatpush2.msra.mxu0 0.0
  %974 = vmatprep.subr.mxu0 0.0
  %975 = vmatpush2.msra.mxu0 0.0
  %976 = vmatprep.subr.mxu0 0.0
  %977 = vmatpush2.msra.mxu0 0.0
  %978 = vmatprep.subr.mxu0 0.0
  %979 = vmatpush2.msra.mxu0 0.0
  %980 = vmatprep.subr.mxu0 0.0
  %981 = vmatpush2.msra.mxu0 0.0
  %982 = vmatprep.subr.mxu0 0.0
  %983 = vmatpush2.msra.mxu0 0.0
  %984 = vmatprep.subr.mxu0 0.0
  %985 = vmatpush2.msra.mxu0 0.0
  %986 = vmatprep.subr.mxu0 0.0
  %987 = vmatpush2.msra.mxu0 0.0
  %988 = vmatprep.subr.mxu0 0.0
  %989 = vmatpush2.msra.mxu0 0.0
  %990 = vmatprep.subr.mxu0 0.0
  %991 = vmatpush2.msra.mxu0 0.0
  %992 = vmatprep.subr.mxu0 0.0
  %993 = vmatpush2.msra.mxu0 0.0
  %994 = vmatprep.subr.mxu0 0.0
  %995 = vmatpush2.msra.mxu0 0.0
  %996 = vmatprep.subr.mxu0 0.0
  %997 = vmatpush2.msra.mxu0 0.0
  %998 = vmatprep.subr.mxu0 0.0
  %999 = vmatpush2.msra.mxu0 0.0
  %1000 = vmatprep.subr.mxu0 0.0
  %1001 = vmatpush2.msra.mxu0 0.0
  %1002 = vmatprep.subr.mxu0 0.0
  %1003 = vmatpush2.msra.mxu0 0.0
  %1004 = vmatprep.mubr.f32.mxu0 0.0
  %1005 = vmatmul.mubr.f32.gmra.mxu0 %v72
  %v1006 = vpop.f32.mrf.mxu0
  %v1007 = vadd.f32 0.0, %v1006
  %v1008 = vpop.f32.mrf.mxu0
  %v1009 = vadd.f32 0.0, %v1008
  %1010 = vdwg.mxu0
  %vm1011 = vcmask 130048
  %v1013 = vsel %vm1011, %v840, 0
  %1015 = vmatprep.subr.mxu0 0.0
  %1016 = vmatpush1.msra.mxu0 0.0
  %1017 = vmatprep.subr.mxu0 0.0
  %1018 = vmatpush1.msra.mxu0 0.0
  %1019 = vmatprep.subr.mxu0 0.0
  %1020 = vmatpush1.msra.mxu0 0.0
  %1021 = vmatprep.subr.mxu0 0.0
  %1022 = vmatpush1.msra.mxu0 0.0
  %1023 = vmatprep.subr.mxu0 0.0
  %1024 = vmatpush1.msra.mxu0 0.0
  %1025 = vmatprep.subr.mxu0 0.0
  %1026 = vmatpush1.msra.mxu0 0.0
  %1027 = vmatprep.subr.mxu0 0.0
  %1028 = vmatpush1.msra.mxu0 0.0
  %1029 = vmatprep.subr.mxu0 0.0
  %1030 = vmatpush1.msra.mxu0 0.0
  %1031 = vmatprep.subr.mxu0 0.0
  %1032 = vmatpush1.msra.mxu0 0.0
  %1033 = vmatprep.subr.mxu0 0.0
  %1034 = vmatpush1.msra.mxu0 0.0
  %1035 = vmatprep.subr.mxu0 0.0
  %1036 = vmatpush1.msra.mxu0 0.0
  %1037 = vmatprep.subr.mxu0 0.0
  %1038 = vmatpush1.msra.mxu0 0.0
  %1039 = vmatprep.subr.mxu0 0.0
  %1040 = vmatpush1.msra.mxu0 0.0
  %1041 = vmatprep.subr.mxu0 0.0
  %1042 = vmatpush1.msra.mxu0 0.0
  %1043 = vmatprep.subr.mxu0 %v846
  %1044 = vmatpush1.msra.mxu0 %v845
  %1045 = vmatprep.subr.mxu0 %v842
  %1046 = vmatpush1.msra.mxu0 %v841
  %1047 = vmatprep.subr.mxu0 0.0
  %1048 = vmatpush2.msra.mxu0 0.0
  %1049 = vmatprep.subr.mxu0 0.0
  %1050 = vmatpush2.msra.mxu0 0.0
  %1051 = vmatprep.subr.mxu0 0.0
  %1052 = vmatpush2.msra.mxu0 0.0
  %1053 = vmatprep.subr.mxu0 0.0
  %1054 = vmatpush2.msra.mxu0 0.0
  %1055 = vmatprep.subr.mxu0 0.0
  %1056 = vmatpush2.msra.mxu0 0.0
  %1057 = vmatprep.subr.mxu0 0.0
  %1058 = vmatpush2.msra.mxu0 0.0
  %1059 = vmatprep.subr.mxu0 0.0
  %1060 = vmatpush2.msra.mxu0 0.0
  %1061 = vmatprep.subr.mxu0 0.0
  %1062 = vmatpush2.msra.mxu0 0.0
  %1063 = vmatprep.subr.mxu0 0.0
  %1064 = vmatpush2.msra.mxu0 0.0
  %1065 = vmatprep.subr.mxu0 0.0
  %1066 = vmatpush2.msra.mxu0 0.0
  %1067 = vmatprep.subr.mxu0 0.0
  %1068 = vmatpush2.msra.mxu0 0.0
  %1069 = vmatprep.subr.mxu0 0.0
  %1070 = vmatpush2.msra.mxu0 0.0
  %1071 = vmatprep.subr.mxu0 0.0
  %1072 = vmatpush2.msra.mxu0 0.0
  %1073 = vmatprep.subr.mxu0 0.0
  %1074 = vmatpush2.msra.mxu0 0.0
  %1075 = vmatprep.subr.mxu0 0.0
  %1076 = vmatpush2.msra.mxu0 0.0
  %1077 = vmatprep.subr.mxu0 0.0
  %1078 = vmatpush2.msra.mxu0 0.0
  %1079 = vmatprep.mubr.f32.mxu0 0.0
  %1080 = vmatmul.mubr.f32.gmra.mxu0 %v1013
  %v1081 = vpop.f32.mrf.mxu0
  %v1082 = vadd.f32 %v936, %v1081
  %v1083 = vpop.f32.mrf.mxu0
  %v1084 = vadd.f32 %v938, %v1083
  %1085 = vdwg.mxu0
  %1086 = vmatprep.subr.mxu0 0.0
  %1087 = vmatpush1.msra.mxu0 0.0
  %1088 = vmatprep.subr.mxu0 0.0
  %1089 = vmatpush1.msra.mxu0 0.0
  %1090 = vmatprep.subr.mxu0 0.0
  %1091 = vmatpush1.msra.mxu0 0.0
  %1092 = vmatprep.subr.mxu0 0.0
  %1093 = vmatpush1.msra.mxu0 0.0
  %1094 = vmatprep.subr.mxu0 0.0
  %1095 = vmatpush1.msra.mxu0 0.0
  %1096 = vmatprep.subr.mxu0 0.0
  %1097 = vmatpush1.msra.mxu0 0.0
  %1098 = vmatprep.subr.mxu0 0.0
  %1099 = vmatpush1.msra.mxu0 0.0
  %1100 = vmatprep.subr.mxu0 0.0
  %1101 = vmatpush1.msra.mxu0 0.0
  %1102 = vmatprep.subr.mxu0 0.0
  %1103 = vmatpush1.msra.mxu0 0.0
  %1104 = vmatprep.subr.mxu0 0.0
  %1105 = vmatpush1.msra.mxu0 0.0
  %1106 = vmatprep.subr.mxu0 0.0
  %1107 = vmatpush1.msra.mxu0 0.0
  %1108 = vmatprep.subr.mxu0 0.0
  %1109 = vmatpush1.msra.mxu0 0.0
  %1110 = vmatprep.subr.mxu0 0.0
  %1111 = vmatpush1.msra.mxu0 0.0
  %1112 = vmatprep.subr.mxu0 0.0
  %1113 = vmatpush1.msra.mxu0 0.0
  %1114 = vmatprep.subr.mxu0 %v848
  %1115 = vmatpush1.msra.mxu0 %v847
  %1116 = vmatprep.subr.mxu0 %v844
  %1117 = vmatpush1.msra.mxu0 %v843
  %1118 = vmatprep.subr.mxu0 0.0
  %1119 = vmatpush2.msra.mxu0 0.0
  %1120 = vmatprep.subr.mxu0 0.0
  %1121 = vmatpush2.msra.mxu0 0.0
  %1122 = vmatprep.subr.mxu0 0.0
  %1123 = vmatpush2.msra.mxu0 0.0
  %1124 = vmatprep.subr.mxu0 0.0
  %1125 = vmatpush2.msra.mxu0 0.0
  %1126 = vmatprep.subr.mxu0 0.0
  %1127 = vmatpush2.msra.mxu0 0.0
  %1128 = vmatprep.subr.mxu0 0.0
  %1129 = vmatpush2.msra.mxu0 0.0
  %1130 = vmatprep.subr.mxu0 0.0
  %1131 = vmatpush2.msra.mxu0 0.0
  %1132 = vmatprep.subr.mxu0 0.0
  %1133 = vmatpush2.msra.mxu0 0.0
  %1134 = vmatprep.subr.mxu0 0.0
  %1135 = vmatpush2.msra.mxu0 0.0
  %1136 = vmatprep.subr.mxu0 0.0
  %1137 = vmatpush2.msra.mxu0 0.0
  %1138 = vmatprep.subr.mxu0 0.0
  %1139 = vmatpush2.msra.mxu0 0.0
  %1140 = vmatprep.subr.mxu0 0.0
  %1141 = vmatpush2.msra.mxu0 0.0
  %1142 = vmatprep.subr.mxu0 0.0
  %1143 = vmatpush2.msra.mxu0 0.0
  %1144 = vmatprep.subr.mxu0 0.0
  %1145 = vmatpush2.msra.mxu0 0.0
  %1146 = vmatprep.subr.mxu0 0.0
  %1147 = vmatpush2.msra.mxu0 0.0
  %1148 = vmatprep.subr.mxu0 0.0
  %1149 = vmatpush2.msra.mxu0 0.0
  %1150 = vmatprep.mubr.f32.mxu0 0.0
  %1151 = vmatmul.mubr.f32.gmra.mxu0 %v1013
  %v1152 = vpop.f32.mrf.mxu0
  %v1153 = vadd.f32 %v1007, %v1152
  %v1154 = vpop.f32.mrf.mxu0
  %v1155 = vadd.f32 %v1009, %v1154
  %1156 = vdwg.mxu0
  %v1157 = vld [vmem:[%s15] sm:$0xf]
  %v1159 = vlaneseq
  %v1160 = vshrl.u32 %v1159, 7
  %v1161 = vsub.s32 0, %v1160
  %v1162 = vrot.slane %v1157, %v1161
  %v1163 = vlaneseq
  %v1164 = vshrl.u32 %v1163, 7
  %v1165 = vsub.s32 1, %v1164
  %v1166 = vrot.slane %v1157, %v1165
  %v1167 = vlaneseq
  %v1168 = vshrl.u32 %v1167, 7
  %v1169 = vsub.s32 2, %v1168
  %v1170 = vrot.slane %v1157, %v1169
  %v1171 = vlaneseq
  %v1172 = vshrl.u32 %v1171, 7
  %v1173 = vsub.s32 3, %v1172
  %v1174 = vrot.slane %v1157, %v1173
  %v1179 = vadd.f32 %v1082, %v1162
  %v1180 = vadd.f32 %v1084, %v1166
  %v1181 = vadd.f32 %v1153, %v1170
  %v1182 = vadd.f32 %v1155, %v1174
  %1183 = vst.msk [vmem:[%s16] sm:$0xff] %vm1011, %v536
  %1184 = vst.msk [vmem:[%s17] sm:$0xff] %vm1011, %v834
  %1185 = vst [vmem:[%s18] sm:$0xff] %v1179
  %1186 = vst [vmem:[%s18 + $0x8] sm:$0xff] %v1180
  %1187 = vst [vmem:[%s18 + $0x10] sm:$0xff] %v1181
  %1188 = vst [vmem:[%s18 + $0x18] sm:$0xff] %v1182
  // Predicated region
  $region66: #{cvae_forward.14} parent=0 // pred_check
    _
  $region67: #{cvae_forward.14} parent=0 // pred_check_branch
    %1190 = sbr.rel (0) target = $region69
  $region68: #{cvae_forward.14} parent=0 // pred_region
    _
  $region69: #{cvae_forward.14} parent=0 // pred_fallthru
    _
  // Predicated region
  $region70: #{cvae_forward.14} parent=0 // pred_check
    _
  $region71: #{cvae_forward.14} parent=0 // pred_check_branch
    %1192 = sbr.rel (0) target = $region73
  $region72: #{cvae_forward.14} parent=0 // pred_region
    _
  $region73: #{cvae_forward.14} parent=0 // pred_fallthru
    _
  // Predicated region
  $region74: #{cvae_forward.14} parent=0 // pred_check
    _
  $region75: #{cvae_forward.14} parent=0 // pred_check_branch
    %1194 = sbr.rel (0) target = $region77
  $region76: #{cvae_forward.14} parent=0 // pred_region
    _
  $region77: #{cvae_forward.14} parent=0 // pred_fallthru
    _
  // Predicated region
  $region78: #{cvae_forward.14} parent=0 // pred_check
    _
  $region79: #{cvae_forward.14} parent=0 // pred_check_branch
    %1196 = sbr.rel (0) target = $region81
  $region80: #{cvae_forward.14} parent=0 // pred_region
    _
  $region81: #{cvae_forward.14} parent=0 // pred_fallthru
    _
  // Predicated region
  $region82: #{cvae_forward.14} parent=0 // pred_check
    _
  $region83: #{cvae_forward.14} parent=0 // pred_check_branch
    %1198 = sbr.rel (0) target = $region85
  $region84: #{cvae_forward.14} parent=0 // pred_region
    _
  $region85: #{cvae_forward.14} parent=0 // pred_fallthru
    _
  // Predicated region
  $region86: #{cvae_forward.14} parent=0 // pred_check
    _
  $region87: #{cvae_forward.14} parent=0 // pred_check_branch
    %1200 = sbr.rel (0) target = $region89
  $region88: #{cvae_forward.14} parent=0 // pred_region
    _
  $region89: #{cvae_forward.14} parent=0 // pred_fallthru
    _

// kernel: tile.57
$region0: #{tile.57}
  #allocation0 [shape = 's32[1]{0}', space=sflag, size = 0x4, scoped, tag = 'scoped memory for tile.57']
  %s0 = inlined_call_operand.vmem [shape: f32[16], index: 0, kind: input, shape index: {}]
  %s1 = inlined_call_operand.vmem [shape: f32[4,16], index: 1, kind: output, shape index: {}]
  // Predicated region
  $region2: #{tile.57} parent=0 // pred_check
    _
  $region3: #{tile.57} parent=0 // pred_check_branch
    %3 = sbr.rel (0) target = $region5
  $region4: #{tile.57} parent=0 // pred_region
    _
  $region5: #{tile.57} parent=0 // pred_fallthru
    _
  %v4 = vld [vmem:[%s0] ss:$0 sm:$0xff]
  %5 = vst [vmem:[%s1] sm:$0xf] %v4

// kernel: cvae_forward.16
$region0: #{cvae_forward.16}
  #allocation0 [shape = 'u32[]', space=smem, size = 0x4, offset = 0x4, fixed_abs, tag = 'smem constant byte address 0x4 - core index']
  #allocation1 [shape = 'u32[144,128]{1,0:T(1,128)}', space=vmem, size = 0x12000, scoped, tag = 'internal scratch']
  %s0 = inlined_call_operand.vmem [shape: bf16[128,128], index: 0, kind: input, shape index: {}]
  %s1 = inlined_call_operand.vmem [shape: bf16[128,64], index: 1, kind: input, shape index: {}]
  %s2 = inlined_call_operand.vmem [shape: f32[1,64], index: 2, kind: input, shape index: {}]
  %s3 = inlined_call_operand.vmem [shape: bf16[128,64], index: 3, kind: output, shape index: {0}]
  %s4 = inlined_call_operand.vmem [shape: f32[8,64], index: 4, kind: output, shape index: {1}]
  %5 = xla_tuple %s3, %s4
  %s6 = sld [smem:[#allocation0]]
  $region30: #{cvae_forward.16} parent=0
    _
  %s8 = ssub.s32 1, %s6
  %s9 = scalar_select 0, %s8, %s6
  // Predicated region
  $region2: #{cvae_forward.16} parent=0 // pred_check
    _
  $region3: #{cvae_forward.16} parent=0 // pred_check_branch
    %11 = sbr.rel (0) target = $region5
  $region4: #{cvae_forward.16} parent=0 // pred_region
    _
  $region5: #{cvae_forward.16} parent=0 // pred_fallthru
    _
  // Predicated region
  $region6: #{cvae_forward.16} parent=0 // pred_check
    _
  $region7: #{cvae_forward.16} parent=0 // pred_check_branch
    %13 = sbr.rel (0) target = $region9
  $region8: #{cvae_forward.16} parent=0 // pred_region
    _
  $region9: #{cvae_forward.16} parent=0 // pred_fallthru
    _
  // Predicated region
  $region10: #{cvae_forward.16} parent=0 // pred_check
    _
  $region11: #{cvae_forward.16} parent=0 // pred_check_branch
    %15 = sbr.rel (0) target = $region13
  $region12: #{cvae_forward.16} parent=0 // pred_region
    _
  $region13: #{cvae_forward.16} parent=0 // pred_fallthru
    _
  %v17 = vld [vmem:[%s0] sm:$0xf]
  %v18 = vld [vmem:[%s0 + $0x4] sm:$0xf]
  %v19 = vld [vmem:[%s0 + $0x8] sm:$0xf]
  %v20 = vld [vmem:[%s0 + $0xc] sm:$0xf]
  %v21 = vld [vmem:[%s0 + $0x10] sm:$0xf]
  %v22 = vld [vmem:[%s0 + $0x14] sm:$0xf]
  %v23 = vld [vmem:[%s0 + $0x18] sm:$0xf]
  %v24 = vld [vmem:[%s0 + $0x1c] sm:$0xf]
  %v25 = vld [vmem:[%s0 + $0x20] sm:$0xf]
  %v26 = vld [vmem:[%s0 + $0x24] sm:$0xf]
  %v27 = vld [vmem:[%s0 + $0x28] sm:$0xf]
  %v28 = vld [vmem:[%s0 + $0x2c] sm:$0xf]
  %v29 = vld [vmem:[%s0 + $0x30] sm:$0xf]
  %v30 = vld [vmem:[%s0 + $0x34] sm:$0xf]
  %v31 = vld [vmem:[%s0 + $0x38] sm:$0xf]
  %v32 = vld [vmem:[%s0 + $0x3c] sm:$0xf]
  %v33 = vld [vmem:[%s1] sm:$0xf]
  %v34 = vld [vmem:[%s1 + $0x4] sm:$0xf]
  %v35 = vld [vmem:[%s1 + $0x8] sm:$0xf]
  %v36 = vld [vmem:[%s1 + $0xc] sm:$0xf]
  %v37 = vld [vmem:[%s1 + $0x10] sm:$0xf]
  %v38 = vld [vmem:[%s1 + $0x14] sm:$0xf]
  %v39 = vld [vmem:[%s1 + $0x18] sm:$0xf]
  %v40 = vld [vmem:[%s1 + $0x1c] sm:$0xf]
  %v41 = vld [vmem:[%s1 + $0x20] sm:$0xf]
  %v42 = vld [vmem:[%s1 + $0x24] sm:$0xf]
  %v43 = vld [vmem:[%s1 + $0x28] sm:$0xf]
  %v44 = vld [vmem:[%s1 + $0x2c] sm:$0xf]
  %v45 = vld [vmem:[%s1 + $0x30] sm:$0xf]
  %v46 = vld [vmem:[%s1 + $0x34] sm:$0xf]
  %v47 = vld [vmem:[%s1 + $0x38] sm:$0xf]
  %v48 = vld [vmem:[%s1 + $0x3c] sm:$0xf]
  %v49 = vld [vmem:[%s2] sm:$0x1]
  %v51 = vlaneseq
  %v52 = vshrl.u32 %v51, 7
  %v53 = vsub.s32 0, %v52
  %v54 = vrot.slane %v49, %v53
  %v72 = vunpack.c.l.b16 %v17
  %v73 = vunpack.c.l.b16 %v18
  %v74 = vunpack.c.l.b16 %v19
  %v75 = vunpack.c.l.b16 %v20
  %v76 = vunpack.c.l.b16 %v21
  %v77 = vunpack.c.l.b16 %v22
  %v78 = vunpack.c.l.b16 %v23
  %v79 = vunpack.c.l.b16 %v24
  %v80 = vunpack.c.l.b16 %v25
  %v81 = vunpack.c.l.b16 %v26
  %v82 = vunpack.c.l.b16 %v27
  %v83 = vunpack.c.l.b16 %v28
  %v84 = vunpack.c.l.b16 %v29
  %v85 = vunpack.c.l.b16 %v30
  %v86 = vunpack.c.l.b16 %v31
  %v87 = vunpack.c.l.b16 %v32
  %v88 = vpack.c.b16 %v73, %v72
  %v89 = vpack.c.b16 %v75, %v74
  %v90 = vpack.c.b16 %v77, %v76
  %v91 = vpack.c.b16 %v79, %v78
  %v92 = vpack.c.b16 %v81, %v80
  %v93 = vpack.c.b16 %v83, %v82
  %v94 = vpack.c.b16 %v85, %v84
  %v95 = vpack.c.b16 %v87, %v86
  %v120 = vunpack.c.l.b16 %v33
  %v121 = vunpack.c.l.b16 %v34
  %v122 = vunpack.c.l.b16 %v35
  %v123 = vunpack.c.l.b16 %v36
  %v124 = vunpack.c.l.b16 %v37
  %v125 = vunpack.c.l.b16 %v38
  %v126 = vunpack.c.l.b16 %v39
  %v127 = vunpack.c.l.b16 %v40
  %v128 = vunpack.c.l.b16 %v41
  %v129 = vunpack.c.l.b16 %v42
  %v130 = vunpack.c.l.b16 %v43
  %v131 = vunpack.c.l.b16 %v44
  %v132 = vunpack.c.l.b16 %v45
  %v133 = vunpack.c.l.b16 %v46
  %v134 = vunpack.c.l.b16 %v47
  %v135 = vunpack.c.l.b16 %v48
  %v136 = vpack.c.b16 %v121, %v120
  %v137 = vpack.c.b16 %v123, %v122
  %v138 = vpack.c.b16 %v125, %v124
  %v139 = vpack.c.b16 %v127, %v126
  %v140 = vpack.c.b16 %v129, %v128
  %v141 = vpack.c.b16 %v131, %v130
  %v142 = vpack.c.b16 %v133, %v132
  %v143 = vpack.c.b16 %v135, %v134
  %152 = vmatprep.subr.bf16.mxu0 0
  %153 = vmatpush1.bf16.msra.mxu0 %v143
  %154 = vmatprep.subr.bf16.mxu0 0
  %155 = vmatpush1.bf16.msra.mxu0 %v142
  %156 = vmatprep.subr.bf16.mxu0 0
  %157 = vmatpush1.bf16.msra.mxu0 %v141
  %158 = vmatprep.subr.bf16.mxu0 0
  %159 = vmatpush1.bf16.msra.mxu0 %v140
  %160 = vmatprep.subr.bf16.mxu0 0
  %161 = vmatpush1.bf16.msra.mxu0 %v139
  %162 = vmatprep.subr.bf16.mxu0 0
  %163 = vmatpush1.bf16.msra.mxu0 %v138
  %164 = vmatprep.subr.bf16.mxu0 0
  %165 = vmatpush1.bf16.msra.mxu0 %v137
  %166 = vmatprep.subr.bf16.mxu0 0
  %167 = vmatpush1.bf16.msra.mxu0 %v136
  %168 = vmatprep.subr.bf16.mxu0 0
  %169 = vmatpush2.bf16.msra.mxu0 0
  %170 = vmatprep.subr.bf16.mxu0 0
  %171 = vmatpush2.bf16.msra.mxu0 0
  %172 = vmatprep.subr.bf16.mxu0 0
  %173 = vmatpush2.bf16.msra.mxu0 0
  %174 = vmatprep.subr.bf16.mxu0 0
  %175 = vmatpush2.bf16.msra.mxu0 0
  %176 = vmatprep.subr.bf16.mxu0 0
  %177 = vmatpush2.bf16.msra.mxu0 0
  %178 = vmatprep.subr.bf16.mxu0 0
  %179 = vmatpush2.bf16.msra.mxu0 0
  %180 = vmatprep.subr.bf16.mxu0 0
  %181 = vmatpush2.bf16.msra.mxu0 0
  %182 = vmatprep.subr.bf16.mxu0 0
  %183 = vmatpush2.bf16.msra.mxu0 0
  %184 = vmatprep.mubr.bf16.mxu0 0
  %185 = vmatmul.mubr.bf16.gmra.mxu0 %v88
  %v186 = vpop.f32.mrf.mxu0
  %v187 = vadd.f32 %v54, %v186
  %v188 = vpop.f32.mrf.mxu0
  %v189 = vpop.f32.mrf.mxu0
  %v190 = vadd.f32 %v54, %v189
  %v191 = vpop.f32.mrf.mxu0
  %192 = vmatprep.mubr.bf16.mxu0 0
  %193 = vmatmul.mubr.bf16.gmra.mxu0 %v89
  %v194 = vpop.f32.mrf.mxu0
  %v195 = vadd.f32 %v54, %v194
  %v196 = vpop.f32.mrf.mxu0
  %v197 = vpop.f32.mrf.mxu0
  %v198 = vadd.f32 %v54, %v197
  %v199 = vpop.f32.mrf.mxu0
  %200 = vmatprep.mubr.bf16.mxu0 0
  %201 = vmatmul.mubr.bf16.gmra.mxu0 %v90
  %v202 = vpop.f32.mrf.mxu0
  %v203 = vadd.f32 %v54, %v202
  %v204 = vpop.f32.mrf.mxu0
  %v205 = vpop.f32.mrf.mxu0
  %v206 = vadd.f32 %v54, %v205
  %v207 = vpop.f32.mrf.mxu0
  %208 = vmatprep.mubr.bf16.mxu0 0
  %209 = vmatmul.mubr.bf16.gmra.mxu0 %v91
  %v210 = vpop.f32.mrf.mxu0
  %v211 = vadd.f32 %v54, %v210
  %v212 = vpop.f32.mrf.mxu0
  %v213 = vpop.f32.mrf.mxu0
  %v214 = vadd.f32 %v54, %v213
  %v215 = vpop.f32.mrf.mxu0
  %216 = vmatprep.mubr.bf16.mxu0 0
  %217 = vmatmul.mubr.bf16.gmra.mxu0 %v92
  %v218 = vpop.f32.mrf.mxu0
  %v219 = vadd.f32 %v54, %v218
  %v220 = vpop.f32.mrf.mxu0
  %v221 = vpop.f32.mrf.mxu0
  %v222 = vadd.f32 %v54, %v221
  %v223 = vpop.f32.mrf.mxu0
  %224 = vmatprep.mubr.bf16.mxu0 0
  %225 = vmatmul.mubr.bf16.gmra.mxu0 %v93
  %v226 = vpop.f32.mrf.mxu0
  %v227 = vadd.f32 %v54, %v226
  %v228 = vpop.f32.mrf.mxu0
  %v229 = vpop.f32.mrf.mxu0
  %v230 = vadd.f32 %v54, %v229
  %v231 = vpop.f32.mrf.mxu0
  %232 = vmatprep.mubr.bf16.mxu0 0
  %233 = vmatmul.mubr.bf16.gmra.mxu0 %v94
  %v234 = vpop.f32.mrf.mxu0
  %v235 = vadd.f32 %v54, %v234
  %v236 = vpop.f32.mrf.mxu0
  %v237 = vpop.f32.mrf.mxu0
  %v238 = vadd.f32 %v54, %v237
  %v239 = vpop.f32.mrf.mxu0
  %240 = vmatprep.mubr.bf16.mxu0 0
  %241 = vmatmul.mubr.bf16.gmra.mxu0 %v95
  %v242 = vpop.f32.mrf.mxu0
  %v243 = vadd.f32 %v54, %v242
  %v244 = vpop.f32.mrf.mxu0
  %v245 = vpop.f32.mrf.mxu0
  %v246 = vadd.f32 %v54, %v245
  %v247 = vpop.f32.mrf.mxu0
  %248 = vdwg.mxu0
  %v249 = vpack.c.bf16 %v190, %v187
  %v250 = vpack.c.bf16 %v198, %v195
  %v251 = vpack.c.bf16 %v206, %v203
  %v252 = vpack.c.bf16 %v214, %v211
  %v253 = vpack.c.bf16 %v222, %v219
  %v254 = vpack.c.bf16 %v230, %v227
  %v255 = vpack.c.bf16 %v238, %v235
  %v256 = vpack.c.bf16 %v246, %v243
  %v265 = vunpack.c.l.b16 %v249
  %v266 = vunpack.c.h.b16 %v249
  %v267 = vunpack.c.l.b16 %v250
  %v268 = vunpack.c.h.b16 %v250
  %v269 = vunpack.c.l.b16 %v251
  %v270 = vunpack.c.h.b16 %v251
  %v271 = vunpack.c.l.b16 %v252
  %v272 = vunpack.c.h.b16 %v252
  %v273 = vunpack.c.l.b16 %v253
  %v274 = vunpack.c.h.b16 %v253
  %v275 = vunpack.c.l.b16 %v254
  %v276 = vunpack.c.h.b16 %v254
  %v277 = vunpack.c.l.b16 %v255
  %v278 = vunpack.c.h.b16 %v255
  %v279 = vunpack.c.l.b16 %v256
  %v280 = vunpack.c.h.b16 %v256
  %v281 = vpack.c.b16 %v265, %v265
  %v282 = vpack.c.b16 %v266, %v266
  %v283 = vpack.c.b16 %v267, %v267
  %v284 = vpack.c.b16 %v268, %v268
  %v285 = vpack.c.b16 %v269, %v269
  %v286 = vpack.c.b16 %v270, %v270
  %v287 = vpack.c.b16 %v271, %v271
  %v288 = vpack.c.b16 %v272, %v272
  %v289 = vpack.c.b16 %v273, %v273
  %v290 = vpack.c.b16 %v274, %v274
  %v291 = vpack.c.b16 %v275, %v275
  %v292 = vpack.c.b16 %v276, %v276
  %v293 = vpack.c.b16 %v277, %v277
  %v294 = vpack.c.b16 %v278, %v278
  %v295 = vpack.c.b16 %v279, %v279
  %v296 = vpack.c.b16 %v280, %v280
  %vm313 = vcmask 519168
  %314 = vst.msk [vmem:[%s3] sm:$0xf] %vm313, %v281
  %315 = vst.msk [vmem:[%s3 + $0x4] sm:$0xf] %vm313, %v282
  %316 = vst.msk [vmem:[%s3 + $0x8] sm:$0xf] %vm313, %v283
  %317 = vst.msk [vmem:[%s3 + $0xc] sm:$0xf] %vm313, %v284
  %318 = vst.msk [vmem:[%s3 + $0x10] sm:$0xf] %vm313, %v285
  %319 = vst.msk [vmem:[%s3 + $0x14] sm:$0xf] %vm313, %v286
  %320 = vst.msk [vmem:[%s3 + $0x18] sm:$0xf] %vm313, %v287
  %321 = vst.msk [vmem:[%s3 + $0x1c] sm:$0xf] %vm313, %v288
  %322 = vst.msk [vmem:[%s3 + $0x20] sm:$0xf] %vm313, %v289
  %323 = vst.msk [vmem:[%s3 + $0x24] sm:$0xf] %vm313, %v290
  %324 = vst.msk [vmem:[%s3 + $0x28] sm:$0xf] %vm313, %v291
  %325 = vst.msk [vmem:[%s3 + $0x2c] sm:$0xf] %vm313, %v292
  %326 = vst.msk [vmem:[%s3 + $0x30] sm:$0xf] %vm313, %v293
  %327 = vst.msk [vmem:[%s3 + $0x34] sm:$0xf] %vm313, %v294
  %328 = vst.msk [vmem:[%s3 + $0x38] sm:$0xf] %vm313, %v295
  %329 = vst.msk [vmem:[%s3 + $0x3c] sm:$0xf] %vm313, %v296
  %vm330 = vcmask 523264
  %v331 = vsel %vm330, %v187, 0.0
  %v332 = vsel %vm330, %v190, 0.0
  %v333 = vadd.f32 %v331, %v332
  %v334 = vsel %vm330, %v195, 0.0
  %v335 = vadd.f32 %v333, %v334
  %v336 = vsel %vm330, %v198, 0.0
  %v337 = vadd.f32 %v335, %v336
  %v338 = vsel %vm330, %v203, 0.0
  %v339 = vadd.f32 %v337, %v338
  %v340 = vsel %vm330, %v206, 0.0
  %v341 = vadd.f32 %v339, %v340
  %v342 = vsel %vm330, %v211, 0.0
  %v343 = vadd.f32 %v341, %v342
  %v344 = vsel %vm330, %v214, 0.0
  %v345 = vadd.f32 %v343, %v344
  %v346 = vsel %vm330, %v219, 0.0
  %v347 = vadd.f32 %v345, %v346
  %v348 = vsel %vm330, %v222, 0.0
  %v349 = vadd.f32 %v347, %v348
  %v350 = vsel %vm330, %v227, 0.0
  %v351 = vadd.f32 %v349, %v350
  %v352 = vsel %vm330, %v230, 0.0
  %v353 = vadd.f32 %v351, %v352
  %v354 = vsel %vm330, %v235, 0.0
  %v355 = vadd.f32 %v353, %v354
  %v356 = vsel %vm330, %v238, 0.0
  %v357 = vadd.f32 %v355, %v356
  %v358 = vsel %vm330, %v243, 0.0
  %v359 = vadd.f32 %v357, %v358
  %v360 = vsel %vm330, %v246, 0.0
  %v361 = vadd.f32 %v359, %v360
  %v362 = vrot.slane %v361, 4
  %v363 = vadd.f32 %v361, %v362
  %v364 = vrot.slane %v363, 2
  %v365 = vadd.f32 %v363, %v364
  %v366 = vrot.slane %v365, 1
  %v367 = vadd.f32 %v365, %v366
  %v368 = vmul.f32 %v187, %v187
  %v369 = vmul.f32 %v190, %v190
  %v370 = vmul.f32 %v195, %v195
  %v371 = vmul.f32 %v198, %v198
  %v372 = vmul.f32 %v203, %v203
  %v373 = vmul.f32 %v206, %v206
  %v374 = vmul.f32 %v211, %v211
  %v375 = vmul.f32 %v214, %v214
  %v376 = vmul.f32 %v219, %v219
  %v377 = vmul.f32 %v222, %v222
  %v378 = vmul.f32 %v227, %v227
  %v379 = vmul.f32 %v230, %v230
  %v380 = vmul.f32 %v235, %v235
  %v381 = vmul.f32 %v238, %v238
  %v382 = vmul.f32 %v243, %v243
  %v383 = vmul.f32 %v246, %v246
  %v384 = vsel %vm330, %v368, 0.0
  %v385 = vsel %vm330, %v369, 0.0
  %v386 = vadd.f32 %v384, %v385
  %v387 = vsel %vm330, %v370, 0.0
  %v388 = vadd.f32 %v386, %v387
  %v389 = vsel %vm330, %v371, 0.0
  %v390 = vadd.f32 %v388, %v389
  %v391 = vsel %vm330, %v372, 0.0
  %v392 = vadd.f32 %v390, %v391
  %v393 = vsel %vm330, %v373, 0.0
  %v394 = vadd.f32 %v392, %v393
  %v395 = vsel %vm330, %v374, 0.0
  %v396 = vadd.f32 %v394, %v395
  %v397 = vsel %vm330, %v375, 0.0
  %v398 = vadd.f32 %v396, %v397
  %v399 = vsel %vm330, %v376, 0.0
  %v400 = vadd.f32 %v398, %v399
  %v401 = vsel %vm330, %v377, 0.0
  %v402 = vadd.f32 %v400, %v401
  %v403 = vsel %vm330, %v378, 0.0
  %v404 = vadd.f32 %v402, %v403
  %v405 = vsel %vm330, %v379, 0.0
  %v406 = vadd.f32 %v404, %v405
  %v407 = vsel %vm330, %v380, 0.0
  %v408 = vadd.f32 %v406, %v407
  %v409 = vsel %vm330, %v381, 0.0
  %v410 = vadd.f32 %v408, %v409
  %v411 = vsel %vm330, %v382, 0.0
  %v412 = vadd.f32 %v410, %v411
  %v413 = vsel %vm330, %v383, 0.0
  %v414 = vadd.f32 %v412, %v413
  %v415 = vrot.slane %v414, 4
  %v416 = vadd.f32 %v414, %v415
  %v417 = vrot.slane %v416, 2
  %v418 = vadd.f32 %v416, %v417
  %v419 = vrot.slane %v418, 1
  %v420 = vadd.f32 %v418, %v419
  %v421 = vlaneseq
  %v422 = vshrl.u32 %v421, 7
  %vm423 = vcmp.eq.s32.totalorder %v422, 0
  %v424 = vsel %vm423, %v367, 0.0
  %vm425 = vcmp.eq.s32.totalorder %v422, 1
  %v426 = vsel %vm425, %v420, 0.0
  %v427 = vadd.f32 %v424, %v426
  %428 = vst.msk [vmem:[%s4] sm:$0xff] %vm330, %v427
  // Predicated region
  $region14: #{cvae_forward.16} parent=0 // pred_check
    _
  $region15: #{cvae_forward.16} parent=0 // pred_check_branch
    %430 = sbr.rel (0) target = $region17
  $region16: #{cvae_forward.16} parent=0 // pred_region
    _
  $region17: #{cvae_forward.16} parent=0 // pred_fallthru
    _
  // Predicated region
  $region18: #{cvae_forward.16} parent=0 // pred_check
    _
  $region19: #{cvae_forward.16} parent=0 // pred_check_branch
    %432 = sbr.rel (0) target = $region21
  $region20: #{cvae_forward.16} parent=0 // pred_region
    _
  $region21: #{cvae_forward.16} parent=0 // pred_fallthru
    _
  // Predicated region
  $region22: #{cvae_forward.16} parent=0 // pred_check
    _
  $region23: #{cvae_forward.16} parent=0 // pred_check_branch
    %434 = sbr.rel (0) target = $region25
  $region24: #{cvae_forward.16} parent=0 // pred_region
    _
  $region25: #{cvae_forward.16} parent=0 // pred_fallthru
    _
  // Predicated region
  $region26: #{cvae_forward.16} parent=0 // pred_check
    _
  $region27: #{cvae_forward.16} parent=0 // pred_check_branch
    %436 = sbr.rel (0) target = $region29
  $region28: #{cvae_forward.16} parent=0 // pred_region
    _
  $region29: #{cvae_forward.16} parent=0 // pred_fallthru
    _

// kernel: tile.67
$region0: #{tile.67}
  #allocation0 [shape = 's32[1]{0}', space=sflag, size = 0x4, scoped, tag = 'scoped memory for tile.67']
  %s0 = inlined_call_operand.vmem [shape: f32[8], index: 0, kind: input, shape index: {}]
  %s1 = inlined_call_operand.vmem [shape: f32[4,8], index: 1, kind: output, shape index: {}]
  // Predicated region
  $region2: #{tile.67} parent=0 // pred_check
    _
  $region3: #{tile.67} parent=0 // pred_check_branch
    %3 = sbr.rel (0) target = $region5
  $region4: #{tile.67} parent=0 // pred_region
    _
  $region5: #{tile.67} parent=0 // pred_fallthru
    _
  %v4 = vld [vmem:[%s0] ss:$0 sm:$0xff]
  %5 = vst [vmem:[%s1] sm:$0xf] %v4

// kernel: cvae_forward.17
$region0: #{cvae_forward.17}
  #allocation0 [shape = 'u32[]', space=smem, size = 0x4, offset = 0x4, fixed_abs, tag = 'smem constant byte address 0x4 - core index']
  #allocation1 [shape = 'u32[144,128]{1,0:T(1,128)}', space=vmem, size = 0x12000, scoped, tag = 'internal scratch']
  %s0 = inlined_call_operand.vmem [shape: bf16[512,64], index: 0, kind: input, shape index: {}]
  %s1 = inlined_call_operand.vmem [shape: bf16[64,32], index: 1, kind: input, shape index: {}]
  %s2 = inlined_call_operand.vmem [shape: f32[1,32], index: 2, kind: input, shape index: {}]
  %s3 = inlined_call_operand.vmem [shape: bf16[512,32], index: 3, kind: output, shape index: {0}]
  %s4 = inlined_call_operand.vmem [shape: f32[8,32], index: 4, kind: output, shape index: {1}]
  %5 = xla_tuple %s3, %s4
  %s6 = sld [smem:[#allocation0]]
  $region30: #{cvae_forward.17} parent=0
    _
  %s8 = ssub.s32 1, %s6
  %s9 = scalar_select 0, %s8, %s6
  // Predicated region
  $region2: #{cvae_forward.17} parent=0 // pred_check
    _
  $region3: #{cvae_forward.17} parent=0 // pred_check_branch
    %11 = sbr.rel (0) target = $region5
  $region4: #{cvae_forward.17} parent=0 // pred_region
    _
  $region5: #{cvae_forward.17} parent=0 // pred_fallthru
    _
  // Predicated region
  $region6: #{cvae_forward.17} parent=0 // pred_check
    _
  $region7: #{cvae_forward.17} parent=0 // pred_check_branch
    %13 = sbr.rel (0) target = $region9
  $region8: #{cvae_forward.17} parent=0 // pred_region
    _
  $region9: #{cvae_forward.17} parent=0 // pred_fallthru
    _
  // Predicated region
  $region10: #{cvae_forward.17} parent=0 // pred_check
    _
  $region11: #{cvae_forward.17} parent=0 // pred_check_branch
    %15 = sbr.rel (0) target = $region13
  $region12: #{cvae_forward.17} parent=0 // pred_region
    _
  $region13: #{cvae_forward.17} parent=0 // pred_fallthru
    _
  %v17 = vld [vmem:[%s0] sm:$0xf]
  %v18 = vld [vmem:[%s0 + $0x4] sm:$0xf]
  %v19 = vld [vmem:[%s0 + $0x8] sm:$0xf]
  %v20 = vld [vmem:[%s0 + $0xc] sm:$0xf]
  %v21 = vld [vmem:[%s0 + $0x10] sm:$0xf]
  %v22 = vld [vmem:[%s0 + $0x14] sm:$0xf]
  %v23 = vld [vmem:[%s0 + $0x18] sm:$0xf]
  %v24 = vld [vmem:[%s0 + $0x1c] sm:$0xf]
  %v25 = vld [vmem:[%s0 + $0x20] sm:$0xf]
  %v26 = vld [vmem:[%s0 + $0x24] sm:$0xf]
  %v27 = vld [vmem:[%s0 + $0x28] sm:$0xf]
  %v28 = vld [vmem:[%s0 + $0x2c] sm:$0xf]
  %v29 = vld [vmem:[%s0 + $0x30] sm:$0xf]
  %v30 = vld [vmem:[%s0 + $0x34] sm:$0xf]
  %v31 = vld [vmem:[%s0 + $0x38] sm:$0xf]
  %v32 = vld [vmem:[%s0 + $0x3c] sm:$0xf]
  %v33 = vld [vmem:[%s0 + $0x40] sm:$0xf]
  %v34 = vld [vmem:[%s0 + $0x44] sm:$0xf]
  %v35 = vld [vmem:[%s0 + $0x48] sm:$0xf]
  %v36 = vld [vmem:[%s0 + $0x4c] sm:$0xf]
  %v37 = vld [vmem:[%s0 + $0x50] sm:$0xf]
  %v38 = vld [vmem:[%s0 + $0x54] sm:$0xf]
  %v39 = vld [vmem:[%s0 + $0x58] sm:$0xf]
  %v40 = vld [vmem:[%s0 + $0x5c] sm:$0xf]
  %v41 = vld [vmem:[%s0 + $0x60] sm:$0xf]
  %v42 = vld [vmem:[%s0 + $0x64] sm:$0xf]
  %v43 = vld [vmem:[%s0 + $0x68] sm:$0xf]
  %v44 = vld [vmem:[%s0 + $0x6c] sm:$0xf]
  %v45 = vld [vmem:[%s0 + $0x70] sm:$0xf]
  %v46 = vld [vmem:[%s0 + $0x74] sm:$0xf]
  %v47 = vld [vmem:[%s0 + $0x78] sm:$0xf]
  %v48 = vld [vmem:[%s0 + $0x7c] sm:$0xf]
  %v49 = vld [vmem:[%s0 + $0x80] sm:$0xf]
  %v50 = vld [vmem:[%s0 + $0x84] sm:$0xf]
  %v51 = vld [vmem:[%s0 + $0x88] sm:$0xf]
  %v52 = vld [vmem:[%s0 + $0x8c] sm:$0xf]
  %v53 = vld [vmem:[%s0 + $0x90] sm:$0xf]
  %v54 = vld [vmem:[%s0 + $0x94] sm:$0xf]
  %v55 = vld [vmem:[%s0 + $0x98] sm:$0xf]
  %v56 = vld [vmem:[%s0 + $0x9c] sm:$0xf]
  %v57 = vld [vmem:[%s0 + $0xa0] sm:$0xf]
  %v58 = vld [vmem:[%s0 + $0xa4] sm:$0xf]
  %v59 = vld [vmem:[%s0 + $0xa8] sm:$0xf]
  %v60 = vld [vmem:[%s0 + $0xac] sm:$0xf]
  %v61 = vld [vmem:[%s0 + $0xb0] sm:$0xf]
  %v62 = vld [vmem:[%s0 + $0xb4] sm:$0xf]
  %v63 = vld [vmem:[%s0 + $0xb8] sm:$0xf]
  %v64 = vld [vmem:[%s0 + $0xbc] sm:$0xf]
  %v65 = vld [vmem:[%s0 + $0xc0] sm:$0xf]
  %v66 = vld [vmem:[%s0 + $0xc4] sm:$0xf]
  %v67 = vld [vmem:[%s0 + $0xc8] sm:$0xf]
  %v68 = vld [vmem:[%s0 + $0xcc] sm:$0xf]
  %v69 = vld [vmem:[%s0 + $0xd0] sm:$0xf]
  %v70 = vld [vmem:[%s0 + $0xd4] sm:$0xf]
  %v71 = vld [vmem:[%s0 + $0xd8] sm:$0xf]
  %v72 = vld [vmem:[%s0 + $0xdc] sm:$0xf]
  %v73 = vld [vmem:[%s0 + $0xe0] sm:$0xf]
  %v74 = vld [vmem:[%s0 + $0xe4] sm:$0xf]
  %v75 = vld [vmem:[%s0 + $0xe8] sm:$0xf]
  %v76 = vld [vmem:[%s0 + $0xec] sm:$0xf]
  %v77 = vld [vmem:[%s0 + $0xf0] sm:$0xf]
  %v78 = vld [vmem:[%s0 + $0xf4] sm:$0xf]
  %v79 = vld [vmem:[%s0 + $0xf8] sm:$0xf]
  %v80 = vld [vmem:[%s0 + $0xfc] sm:$0xf]
  %v81 = vld [vmem:[%s1] sm:$0xf]
  %v82 = vld [vmem:[%s1 + $0x4] sm:$0xf]
  %v83 = vld [vmem:[%s1 + $0x8] sm:$0xf]
  %v84 = vld [vmem:[%s1 + $0xc] sm:$0xf]
  %v85 = vld [vmem:[%s1 + $0x10] sm:$0xf]
  %v86 = vld [vmem:[%s1 + $0x14] sm:$0xf]
  %v87 = vld [vmem:[%s1 + $0x18] sm:$0xf]
  %v88 = vld [vmem:[%s1 + $0x1c] sm:$0xf]
  %v89 = vld [vmem:[%s2] sm:$0x1]
  %v91 = vlaneseq
  %v92 = vshrl.u32 %v91, 7
  %v93 = vsub.s32 0, %v92
  %v94 = vrot.slane %v89, %v93
  %v160 = vunpack.c.l.b16 %v17
  %v161 = vunpack.c.l.b16 %v18
  %v162 = vunpack.c.l.b16 %v19
  %v163 = vunpack.c.l.b16 %v20
  %v164 = vunpack.c.l.b16 %v21
  %v165 = vunpack.c.l.b16 %v22
  %v166 = vunpack.c.l.b16 %v23
  %v167 = vunpack.c.l.b16 %v24
  %v168 = vunpack.c.l.b16 %v25
  %v169 = vunpack.c.l.b16 %v26
  %v170 = vunpack.c.l.b16 %v27
  %v171 = vunpack.c.l.b16 %v28
  %v172 = vunpack.c.l.b16 %v29
  %v173 = vunpack.c.l.b16 %v30
  %v174 = vunpack.c.l.b16 %v31
  %v175 = vunpack.c.l.b16 %v32
  %v176 = vunpack.c.l.b16 %v33
  %v177 = vunpack.c.l.b16 %v34
  %v178 = vunpack.c.l.b16 %v35
  %v179 = vunpack.c.l.b16 %v36
  %v180 = vunpack.c.l.b16 %v37
  %v181 = vunpack.c.l.b16 %v38
  %v182 = vunpack.c.l.b16 %v39
  %v183 = vunpack.c.l.b16 %v40
  %v184 = vunpack.c.l.b16 %v41
  %v185 = vunpack.c.l.b16 %v42
  %v186 = vunpack.c.l.b16 %v43
  %v187 = vunpack.c.l.b16 %v44
  %v188 = vunpack.c.l.b16 %v45
  %v189 = vunpack.c.l.b16 %v46
  %v190 = vunpack.c.l.b16 %v47
  %v191 = vunpack.c.l.b16 %v48
  %v192 = vunpack.c.l.b16 %v49
  %v193 = vunpack.c.l.b16 %v50
  %v194 = vunpack.c.l.b16 %v51
  %v195 = vunpack.c.l.b16 %v52
  %v196 = vunpack.c.l.b16 %v53
  %v197 = vunpack.c.l.b16 %v54
  %v198 = vunpack.c.l.b16 %v55
  %v199 = vunpack.c.l.b16 %v56
  %v200 = vunpack.c.l.b16 %v57
  %v201 = vunpack.c.l.b16 %v58
  %v202 = vunpack.c.l.b16 %v59
  %v203 = vunpack.c.l.b16 %v60
  %v204 = vunpack.c.l.b16 %v61
  %v205 = vunpack.c.l.b16 %v62
  %v206 = vunpack.c.l.b16 %v63
  %v207 = vunpack.c.l.b16 %v64
  %v208 = vunpack.c.l.b16 %v65
  %v209 = vunpack.c.l.b16 %v66
  %v210 = vunpack.c.l.b16 %v67
  %v211 = vunpack.c.l.b16 %v68
  %v212 = vunpack.c.l.b16 %v69
  %v213 = vunpack.c.l.b16 %v70
  %v214 = vunpack.c.l.b16 %v71
  %v215 = vunpack.c.l.b16 %v72
  %v216 = vunpack.c.l.b16 %v73
  %v217 = vunpack.c.l.b16 %v74
  %v218 = vunpack.c.l.b16 %v75
  %v219 = vunpack.c.l.b16 %v76
  %v220 = vunpack.c.l.b16 %v77
  %v221 = vunpack.c.l.b16 %v78
  %v222 = vunpack.c.l.b16 %v79
  %v223 = vunpack.c.l.b16 %v80
  %v224 = vpack.c.b16 %v161, %v160
  %v225 = vpack.c.b16 %v163, %v162
  %v226 = vpack.c.b16 %v165, %v164
  %v227 = vpack.c.b16 %v167, %v166
  %v228 = vpack.c.b16 %v169, %v168
  %v229 = vpack.c.b16 %v171, %v170
  %v230 = vpack.c.b16 %v173, %v172
  %v231 = vpack.c.b16 %v175, %v174
  %v232 = vpack.c.b16 %v177, %v176
  %v233 = vpack.c.b16 %v179, %v178
  %v234 = vpack.c.b16 %v181, %v180
  %v235 = vpack.c.b16 %v183, %v182
  %v236 = vpack.c.b16 %v185, %v184
  %v237 = vpack.c.b16 %v187, %v186
  %v238 = vpack.c.b16 %v189, %v188
  %v239 = vpack.c.b16 %v191, %v190
  %v240 = vpack.c.b16 %v193, %v192
  %v241 = vpack.c.b16 %v195, %v194
  %v242 = vpack.c.b16 %v197, %v196
  %v243 = vpack.c.b16 %v199, %v198
  %v244 = vpack.c.b16 %v201, %v200
  %v245 = vpack.c.b16 %v203, %v202
  %v246 = vpack.c.b16 %v205, %v204
  %v247 = vpack.c.b16 %v207, %v206
  %v248 = vpack.c.b16 %v209, %v208
  %v249 = vpack.c.b16 %v211, %v210
  %v250 = vpack.c.b16 %v213, %v212
  %v251 = vpack.c.b16 %v215, %v214
  %v252 = vpack.c.b16 %v217, %v216
  %v253 = vpack.c.b16 %v219, %v218
  %v254 = vpack.c.b16 %v221, %v220
  %v255 = vpack.c.b16 %v223, %v222
  %v264 = vunpack.c.l.b16 %v81
  %v265 = vunpack.c.l.b16 %v82
  %v266 = vunpack.c.l.b16 %v83
  %v267 = vunpack.c.l.b16 %v84
  %v268 = vunpack.c.l.b16 %v85
  %v269 = vunpack.c.l.b16 %v86
  %v270 = vunpack.c.l.b16 %v87
  %v271 = vunpack.c.l.b16 %v88
  %v272 = vpack.c.b16 %v265, %v264
  %v273 = vpack.c.b16 %v267, %v266
  %v274 = vpack.c.b16 %v269, %v268
  %v275 = vpack.c.b16 %v271, %v270
  %vm280 = vcmask 523264
  %v282 = vsel %vm280, %v224, 0
  %v285 = vsel %vm280, %v225, 0
  %v288 = vsel %vm280, %v226, 0
  %v291 = vsel %vm280, %v227, 0
  %v294 = vsel %vm280, %v228, 0
  %v297 = vsel %vm280, %v229, 0
  %v300 = vsel %vm280, %v230, 0
  %v303 = vsel %vm280, %v231, 0
  %v306 = vsel %vm280, %v232, 0
  %v309 = vsel %vm280, %v233, 0
  %v312 = vsel %vm280, %v234, 0
  %v315 = vsel %vm280, %v235, 0
  %v318 = vsel %vm280, %v236, 0
  %v321 = vsel %vm280, %v237, 0
  %v324 = vsel %vm280, %v238, 0
  %v327 = vsel %vm280, %v239, 0
  %v330 = vsel %vm280, %v240, 0
  %v333 = vsel %vm280, %v241, 0
  %v336 = vsel %vm280, %v242, 0
  %v339 = vsel %vm280, %v243, 0
  %v342 = vsel %vm280, %v244, 0
  %v345 = vsel %vm280, %v245, 0
  %v348 = vsel %vm280, %v246, 0
  %v351 = vsel %vm280, %v247, 0
  %v354 = vsel %vm280, %v248, 0
  %v357 = vsel %vm280, %v249, 0
  %v360 = vsel %vm280, %v250, 0
  %v363 = vsel %vm280, %v251, 0
  %v366 = vsel %vm280, %v252, 0
  %v369 = vsel %vm280, %v253, 0
  %v372 = vsel %vm280, %v254, 0
  %v375 = vsel %vm280, %v255, 0
  %377 = vmatprep.subr.bf16.mxu0 0
  %378 = vmatpush1.bf16.msra.mxu0 0
  %379 = vmatprep.subr.bf16.mxu0 0
  %380 = vmatpush1.bf16.msra.mxu0 0
  %381 = vmatprep.subr.bf16.mxu0 0
  %382 = vmatpush1.bf16.msra.mxu0 0
  %383 = vmatprep.subr.bf16.mxu0 0
  %384 = vmatpush1.bf16.msra.mxu0 0
  %385 = vmatprep.subr.bf16.mxu0 0
  %386 = vmatpush1.bf16.msra.mxu0 %v275
  %387 = vmatprep.subr.bf16.mxu0 0
  %388 = vmatpush1.bf16.msra.mxu0 %v274
  %389 = vmatprep.subr.bf16.mxu0 0
  %390 = vmatpush1.bf16.msra.mxu0 %v273
  %391 = vmatprep.subr.bf16.mxu0 0
  %392 = vmatpush1.bf16.msra.mxu0 %v272
  %393 = vmatprep.subr.bf16.mxu0 0
  %394 = vmatpush2.bf16.msra.mxu0 0
  %395 = vmatprep.subr.bf16.mxu0 0
  %396 = vmatpush2.bf16.msra.mxu0 0
  %397 = vmatprep.subr.bf16.mxu0 0
  %398 = vmatpush2.bf16.msra.mxu0 0
  %399 = vmatprep.subr.bf16.mxu0 0
  %400 = vmatpush2.bf16.msra.mxu0 0
  %401 = vmatprep.subr.bf16.mxu0 0
  %402 = vmatpush2.bf16.msra.mxu0 0
  %403 = vmatprep.subr.bf16.mxu0 0
  %404 = vmatpush2.bf16.msra.mxu0 0
  %405 = vmatprep.subr.bf16.mxu0 0
  %406 = vmatpush2.bf16.msra.mxu0 0
  %407 = vmatprep.subr.bf16.mxu0 0
  %408 = vmatpush2.bf16.msra.mxu0 0
  %409 = vmatprep.mubr.bf16.mxu0 0
  %410 = vmatmul.mubr.bf16.gmra.mxu0 %v282
  %v411 = vpop.f32.mrf.mxu0
  %v412 = vadd.f32 %v94, %v411
  %v413 = vpop.f32.mrf.mxu0
  %v414 = vpop.f32.mrf.mxu0
  %v415 = vadd.f32 %v94, %v414
  %v416 = vpop.f32.mrf.mxu0
  %417 = vmatprep.mubr.bf16.mxu0 0
  %418 = vmatmul.mubr.bf16.gmra.mxu0 %v285
  %v419 = vpop.f32.mrf.mxu0
  %v420 = vadd.f32 %v94, %v419
  %v421 = vpop.f32.mrf.mxu0
  %v422 = vpop.f32.mrf.mxu0
  %v423 = vadd.f32 %v94, %v422
  %v424 = vpop.f32.mrf.mxu0
  %425 = vmatprep.mubr.bf16.mxu0 0
  %426 = vmatmul.mubr.bf16.gmra.mxu0 %v288
  %v427 = vpop.f32.mrf.mxu0
  %v428 = vadd.f32 %v94, %v427
  %v429 = vpop.f32.mrf.mxu0
  %v430 = vpop.f32.mrf.mxu0
  %v431 = vadd.f32 %v94, %v430
  %v432 = vpop.f32.mrf.mxu0
  %433 = vmatprep.mubr.bf16.mxu0 0
  %434 = vmatmul.mubr.bf16.gmra.mxu0 %v291
  %v435 = vpop.f32.mrf.mxu0
  %v436 = vadd.f32 %v94, %v435
  %v437 = vpop.f32.mrf.mxu0
  %v438 = vpop.f32.mrf.mxu0
  %v439 = vadd.f32 %v94, %v438
  %v440 = vpop.f32.mrf.mxu0
  %441 = vmatprep.mubr.bf16.mxu0 0
  %442 = vmatmul.mubr.bf16.gmra.mxu0 %v294
  %v443 = vpop.f32.mrf.mxu0
  %v444 = vadd.f32 %v94, %v443
  %v445 = vpop.f32.mrf.mxu0
  %v446 = vpop.f32.mrf.mxu0
  %v447 = vadd.f32 %v94, %v446
  %v448 = vpop.f32.mrf.mxu0
  %449 = vmatprep.mubr.bf16.mxu0 0
  %450 = vmatmul.mubr.bf16.gmra.mxu0 %v297
  %v451 = vpop.f32.mrf.mxu0
  %v452 = vadd.f32 %v94, %v451
  %v453 = vpop.f32.mrf.mxu0
  %v454 = vpop.f32.mrf.mxu0
  %v455 = vadd.f32 %v94, %v454
  %v456 = vpop.f32.mrf.mxu0
  %457 = vmatprep.mubr.bf16.mxu0 0
  %458 = vmatmul.mubr.bf16.gmra.mxu0 %v300
  %v459 = vpop.f32.mrf.mxu0
  %v460 = vadd.f32 %v94, %v459
  %v461 = vpop.f32.mrf.mxu0
  %v462 = vpop.f32.mrf.mxu0
  %v463 = vadd.f32 %v94, %v462
  %v464 = vpop.f32.mrf.mxu0
  %465 = vmatprep.mubr.bf16.mxu0 0
  %466 = vmatmul.mubr.bf16.gmra.mxu0 %v303
  %v467 = vpop.f32.mrf.mxu0
  %v468 = vadd.f32 %v94, %v467
  %v469 = vpop.f32.mrf.mxu0
  %v470 = vpop.f32.mrf.mxu0
  %v471 = vadd.f32 %v94, %v470
  %v472 = vpop.f32.mrf.mxu0
  %473 = vmatprep.mubr.bf16.mxu0 0
  %474 = vmatmul.mubr.bf16.gmra.mxu0 %v306
  %v475 = vpop.f32.mrf.mxu0
  %v476 = vadd.f32 %v94, %v475
  %v477 = vpop.f32.mrf.mxu0
  %v478 = vpop.f32.mrf.mxu0
  %v479 = vadd.f32 %v94, %v478
  %v480 = vpop.f32.mrf.mxu0
  %481 = vmatprep.mubr.bf16.mxu0 0
  %482 = vmatmul.mubr.bf16.gmra.mxu0 %v309
  %v483 = vpop.f32.mrf.mxu0
  %v484 = vadd.f32 %v94, %v483
  %v485 = vpop.f32.mrf.mxu0
  %v486 = vpop.f32.mrf.mxu0
  %v487 = vadd.f32 %v94, %v486
  %v488 = vpop.f32.mrf.mxu0
  %489 = vmatprep.mubr.bf16.mxu0 0
  %490 = vmatmul.mubr.bf16.gmra.mxu0 %v312
  %v491 = vpop.f32.mrf.mxu0
  %v492 = vadd.f32 %v94, %v491
  %v493 = vpop.f32.mrf.mxu0
  %v494 = vpop.f32.mrf.mxu0
  %v495 = vadd.f32 %v94, %v494
  %v496 = vpop.f32.mrf.mxu0
  %497 = vmatprep.mubr.bf16.mxu0 0
  %498 = vmatmul.mubr.bf16.gmra.mxu0 %v315
  %v499 = vpop.f32.mrf.mxu0
  %v500 = vadd.f32 %v94, %v499
  %v501 = vpop.f32.mrf.mxu0
  %v502 = vpop.f32.mrf.mxu0
  %v503 = vadd.f32 %v94, %v502
  %v504 = vpop.f32.mrf.mxu0
  %505 = vmatprep.mubr.bf16.mxu0 0
  %506 = vmatmul.mubr.bf16.gmra.mxu0 %v318
  %v507 = vpop.f32.mrf.mxu0
  %v508 = vadd.f32 %v94, %v507
  %v509 = vpop.f32.mrf.mxu0
  %v510 = vpop.f32.mrf.mxu0
  %v511 = vadd.f32 %v94, %v510
  %v512 = vpop.f32.mrf.mxu0
  %513 = vmatprep.mubr.bf16.mxu0 0
  %514 = vmatmul.mubr.bf16.gmra.mxu0 %v321
  %v515 = vpop.f32.mrf.mxu0
  %v516 = vadd.f32 %v94, %v515
  %v517 = vpop.f32.mrf.mxu0
  %v518 = vpop.f32.mrf.mxu0
  %v519 = vadd.f32 %v94, %v518
  %v520 = vpop.f32.mrf.mxu0
  %521 = vmatprep.mubr.bf16.mxu0 0
  %522 = vmatmul.mubr.bf16.gmra.mxu0 %v324
  %v523 = vpop.f32.mrf.mxu0
  %v524 = vadd.f32 %v94, %v523
  %v525 = vpop.f32.mrf.mxu0
  %v526 = vpop.f32.mrf.mxu0
  %v527 = vadd.f32 %v94, %v526
  %v528 = vpop.f32.mrf.mxu0
  %529 = vmatprep.mubr.bf16.mxu0 0
  %530 = vmatmul.mubr.bf16.gmra.mxu0 %v327
  %v531 = vpop.f32.mrf.mxu0
  %v532 = vadd.f32 %v94, %v531
  %v533 = vpop.f32.mrf.mxu0
  %v534 = vpop.f32.mrf.mxu0
  %v535 = vadd.f32 %v94, %v534
  %v536 = vpop.f32.mrf.mxu0
  %537 = vmatprep.mubr.bf16.mxu0 0
  %538 = vmatmul.mubr.bf16.gmra.mxu0 %v330
  %v539 = vpop.f32.mrf.mxu0
  %v540 = vadd.f32 %v94, %v539
  %v541 = vpop.f32.mrf.mxu0
  %v542 = vpop.f32.mrf.mxu0
  %v543 = vadd.f32 %v94, %v542
  %v544 = vpop.f32.mrf.mxu0
  %545 = vmatprep.mubr.bf16.mxu0 0
  %546 = vmatmul.mubr.bf16.gmra.mxu0 %v333
  %v547 = vpop.f32.mrf.mxu0
  %v548 = vadd.f32 %v94, %v547
  %v549 = vpop.f32.mrf.mxu0
  %v550 = vpop.f32.mrf.mxu0
  %v551 = vadd.f32 %v94, %v550
  %v552 = vpop.f32.mrf.mxu0
  %553 = vmatprep.mubr.bf16.mxu0 0
  %554 = vmatmul.mubr.bf16.gmra.mxu0 %v336
  %v555 = vpop.f32.mrf.mxu0
  %v556 = vadd.f32 %v94, %v555
  %v557 = vpop.f32.mrf.mxu0
  %v558 = vpop.f32.mrf.mxu0
  %v559 = vadd.f32 %v94, %v558
  %v560 = vpop.f32.mrf.mxu0
  %561 = vmatprep.mubr.bf16.mxu0 0
  %562 = vmatmul.mubr.bf16.gmra.mxu0 %v339
  %v563 = vpop.f32.mrf.mxu0
  %v564 = vadd.f32 %v94, %v563
  %v565 = vpop.f32.mrf.mxu0
  %v566 = vpop.f32.mrf.mxu0
  %v567 = vadd.f32 %v94, %v566
  %v568 = vpop.f32.mrf.mxu0
  %569 = vmatprep.mubr.bf16.mxu0 0
  %570 = vmatmul.mubr.bf16.gmra.mxu0 %v342
  %v571 = vpop.f32.mrf.mxu0
  %v572 = vadd.f32 %v94, %v571
  %v573 = vpop.f32.mrf.mxu0
  %v574 = vpop.f32.mrf.mxu0
  %v575 = vadd.f32 %v94, %v574
  %v576 = vpop.f32.mrf.mxu0
  %577 = vmatprep.mubr.bf16.mxu0 0
  %578 = vmatmul.mubr.bf16.gmra.mxu0 %v345
  %v579 = vpop.f32.mrf.mxu0
  %v580 = vadd.f32 %v94, %v579
  %v581 = vpop.f32.mrf.mxu0
  %v582 = vpop.f32.mrf.mxu0
  %v583 = vadd.f32 %v94, %v582
  %v584 = vpop.f32.mrf.mxu0
  %585 = vmatprep.mubr.bf16.mxu0 0
  %586 = vmatmul.mubr.bf16.gmra.mxu0 %v348
  %v587 = vpop.f32.mrf.mxu0
  %v588 = vadd.f32 %v94, %v587
  %v589 = vpop.f32.mrf.mxu0
  %v590 = vpop.f32.mrf.mxu0
  %v591 = vadd.f32 %v94, %v590
  %v592 = vpop.f32.mrf.mxu0
  %593 = vmatprep.mubr.bf16.mxu0 0
  %594 = vmatmul.mubr.bf16.gmra.mxu0 %v351
  %v595 = vpop.f32.mrf.mxu0
  %v596 = vadd.f32 %v94, %v595
  %v597 = vpop.f32.mrf.mxu0
  %v598 = vpop.f32.mrf.mxu0
  %v599 = vadd.f32 %v94, %v598
  %v600 = vpop.f32.mrf.mxu0
  %601 = vmatprep.mubr.bf16.mxu0 0
  %602 = vmatmul.mubr.bf16.gmra.mxu0 %v354
  %v603 = vpop.f32.mrf.mxu0
  %v604 = vadd.f32 %v94, %v603
  %v605 = vpop.f32.mrf.mxu0
  %v606 = vpop.f32.mrf.mxu0
  %v607 = vadd.f32 %v94, %v606
  %v608 = vpop.f32.mrf.mxu0
  %609 = vmatprep.mubr.bf16.mxu0 0
  %610 = vmatmul.mubr.bf16.gmra.mxu0 %v357
  %v611 = vpop.f32.mrf.mxu0
  %v612 = vadd.f32 %v94, %v611
  %v613 = vpop.f32.mrf.mxu0
  %v614 = vpop.f32.mrf.mxu0
  %v615 = vadd.f32 %v94, %v614
  %v616 = vpop.f32.mrf.mxu0
  %617 = vmatprep.mubr.bf16.mxu0 0
  %618 = vmatmul.mubr.bf16.gmra.mxu0 %v360
  %v619 = vpop.f32.mrf.mxu0
  %v620 = vadd.f32 %v94, %v619
  %v621 = vpop.f32.mrf.mxu0
  %v622 = vpop.f32.mrf.mxu0
  %v623 = vadd.f32 %v94, %v622
  %v624 = vpop.f32.mrf.mxu0
  %625 = vmatprep.mubr.bf16.mxu0 0
  %626 = vmatmul.mubr.bf16.gmra.mxu0 %v363
  %v627 = vpop.f32.mrf.mxu0
  %v628 = vadd.f32 %v94, %v627
  %v629 = vpop.f32.mrf.mxu0
  %v630 = vpop.f32.mrf.mxu0
  %v631 = vadd.f32 %v94, %v630
  %v632 = vpop.f32.mrf.mxu0
  %633 = vmatprep.mubr.bf16.mxu0 0
  %634 = vmatmul.mubr.bf16.gmra.mxu0 %v366
  %v635 = vpop.f32.mrf.mxu0
  %v636 = vadd.f32 %v94, %v635
  %v637 = vpop.f32.mrf.mxu0
  %v638 = vpop.f32.mrf.mxu0
  %v639 = vadd.f32 %v94, %v638
  %v640 = vpop.f32.mrf.mxu0
  %641 = vmatprep.mubr.bf16.mxu0 0
  %642 = vmatmul.mubr.bf16.gmra.mxu0 %v369
  %v643 = vpop.f32.mrf.mxu0
  %v644 = vadd.f32 %v94, %v643
  %v645 = vpop.f32.mrf.mxu0
  %v646 = vpop.f32.mrf.mxu0
  %v647 = vadd.f32 %v94, %v646
  %v648 = vpop.f32.mrf.mxu0
  %649 = vmatprep.mubr.bf16.mxu0 0
  %650 = vmatmul.mubr.bf16.gmra.mxu0 %v372
  %v651 = vpop.f32.mrf.mxu0
  %v652 = vadd.f32 %v94, %v651
  %v653 = vpop.f32.mrf.mxu0
  %v654 = vpop.f32.mrf.mxu0
  %v655 = vadd.f32 %v94, %v654
  %v656 = vpop.f32.mrf.mxu0
  %657 = vmatprep.mubr.bf16.mxu0 0
  %658 = vmatmul.mubr.bf16.gmra.mxu0 %v375
  %v659 = vpop.f32.mrf.mxu0
  %v660 = vadd.f32 %v94, %v659
  %v661 = vpop.f32.mrf.mxu0
  %v662 = vpop.f32.mrf.mxu0
  %v663 = vadd.f32 %v94, %v662
  %v664 = vpop.f32.mrf.mxu0
  %665 = vdwg.mxu0
  %v666 = vpack.c.bf16 %v415, %v412
  %v667 = vpack.c.bf16 %v423, %v420
  %v668 = vpack.c.bf16 %v431, %v428
  %v669 = vpack.c.bf16 %v439, %v436
  %v670 = vpack.c.bf16 %v447, %v444
  %v671 = vpack.c.bf16 %v455, %v452
  %v672 = vpack.c.bf16 %v463, %v460
  %v673 = vpack.c.bf16 %v471, %v468
  %v674 = vpack.c.bf16 %v479, %v476
  %v675 = vpack.c.bf16 %v487, %v484
  %v676 = vpack.c.bf16 %v495, %v492
  %v677 = vpack.c.bf16 %v503, %v500
  %v678 = vpack.c.bf16 %v511, %v508
  %v679 = vpack.c.bf16 %v519, %v516
  %v680 = vpack.c.bf16 %v527, %v524
  %v681 = vpack.c.bf16 %v535, %v532
  %v682 = vpack.c.bf16 %v543, %v540
  %v683 = vpack.c.bf16 %v551, %v548
  %v684 = vpack.c.bf16 %v559, %v556
  %v685 = vpack.c.bf16 %v567, %v564
  %v686 = vpack.c.bf16 %v575, %v572
  %v687 = vpack.c.bf16 %v583, %v580
  %v688 = vpack.c.bf16 %v591, %v588
  %v689 = vpack.c.bf16 %v599, %v596
  %v690 = vpack.c.bf16 %v607, %v604
  %v691 = vpack.c.bf16 %v615, %v612
  %v692 = vpack.c.bf16 %v623, %v620
  %v693 = vpack.c.bf16 %v631, %v628
  %v694 = vpack.c.bf16 %v639, %v636
  %v695 = vpack.c.bf16 %v647, %v644
  %v696 = vpack.c.bf16 %v655, %v652
  %v697 = vpack.c.bf16 %v663, %v660
  %v730 = vunpack.c.l.b16 %v666
  %v731 = vunpack.c.h.b16 %v666
  %v732 = vunpack.c.l.b16 %v667
  %v733 = vunpack.c.h.b16 %v667
  %v734 = vunpack.c.l.b16 %v668
  %v735 = vunpack.c.h.b16 %v668
  %v736 = vunpack.c.l.b16 %v669
  %v737 = vunpack.c.h.b16 %v669
  %v738 = vunpack.c.l.b16 %v670
  %v739 = vunpack.c.h.b16 %v670
  %v740 = vunpack.c.l.b16 %v671
  %v741 = vunpack.c.h.b16 %v671
  %v742 = vunpack.c.l.b16 %v672
  %v743 = vunpack.c.h.b16 %v672
  %v744 = vunpack.c.l.b16 %v673
  %v745 = vunpack.c.h.b16 %v673
  %v746 = vunpack.c.l.b16 %v674
  %v747 = vunpack.c.h.b16 %v674
  %v748 = vunpack.c.l.b16 %v675
  %v749 = vunpack.c.h.b16 %v675
  %v750 = vunpack.c.l.b16 %v676
  %v751 = vunpack.c.h.b16 %v676
  %v752 = vunpack.c.l.b16 %v677
  %v753 = vunpack.c.h.b16 %v677
  %v754 = vunpack.c.l.b16 %v678
  %v755 = vunpack.c.h.b16 %v678
  %v756 = vunpack.c.l.b16 %v679
  %v757 = vunpack.c.h.b16 %v679
  %v758 = vunpack.c.l.b16 %v680
  %v759 = vunpack.c.h.b16 %v680
  %v760 = vunpack.c.l.b16 %v681
  %v761 = vunpack.c.h.b16 %v681
  %v762 = vunpack.c.l.b16 %v682
  %v763 = vunpack.c.h.b16 %v682
  %v764 = vunpack.c.l.b16 %v683
  %v765 = vunpack.c.h.b16 %v683
  %v766 = vunpack.c.l.b16 %v684
  %v767 = vunpack.c.h.b16 %v684
  %v768 = vunpack.c.l.b16 %v685
  %v769 = vunpack.c.h.b16 %v685
  %v770 = vunpack.c.l.b16 %v686
  %v771 = vunpack.c.h.b16 %v686
  %v772 = vunpack.c.l.b16 %v687
  %v773 = vunpack.c.h.b16 %v687
  %v774 = vunpack.c.l.b16 %v688
  %v775 = vunpack.c.h.b16 %v688
  %v776 = vunpack.c.l.b16 %v689
  %v777 = vunpack.c.h.b16 %v689
  %v778 = vunpack.c.l.b16 %v690
  %v779 = vunpack.c.h.b16 %v690
  %v780 = vunpack.c.l.b16 %v691
  %v781 = vunpack.c.h.b16 %v691
  %v782 = vunpack.c.l.b16 %v692
  %v783 = vunpack.c.h.b16 %v692
  %v784 = vunpack.c.l.b16 %v693
  %v785 = vunpack.c.h.b16 %v693
  %v786 = vunpack.c.l.b16 %v694
  %v787 = vunpack.c.h.b16 %v694
  %v788 = vunpack.c.l.b16 %v695
  %v789 = vunpack.c.h.b16 %v695
  %v790 = vunpack.c.l.b16 %v696
  %v791 = vunpack.c.h.b16 %v696
  %v792 = vunpack.c.l.b16 %v697
  %v793 = vunpack.c.h.b16 %v697
  %v794 = vpack.c.b16 %v730, %v730
  %v795 = vpack.c.b16 %v731, %v731
  %v796 = vpack.c.b16 %v732, %v732
  %v797 = vpack.c.b16 %v733, %v733
  %v798 = vpack.c.b16 %v734, %v734
  %v799 = vpack.c.b16 %v735, %v735
  %v800 = vpack.c.b16 %v736, %v736
  %v801 = vpack.c.b16 %v737, %v737
  %v802 = vpack.c.b16 %v738, %v738
  %v803 = vpack.c.b16 %v739, %v739
  %v804 = vpack.c.b16 %v740, %v740
  %v805 = vpack.c.b16 %v741, %v741
  %v806 = vpack.c.b16 %v742, %v742
  %v807 = vpack.c.b16 %v743, %v743
  %v808 = vpack.c.b16 %v744, %v744
  %v809 = vpack.c.b16 %v745, %v745
  %v810 = vpack.c.b16 %v746, %v746
  %v811 = vpack.c.b16 %v747, %v747
  %v812 = vpack.c.b16 %v748, %v748
  %v813 = vpack.c.b16 %v749, %v749
  %v814 = vpack.c.b16 %v750, %v750
  %v815 = vpack.c.b16 %v751, %v751
  %v816 = vpack.c.b16 %v752, %v752
  %v817 = vpack.c.b16 %v753, %v753
  %v818 = vpack.c.b16 %v754, %v754
  %v819 = vpack.c.b16 %v755, %v755
  %v820 = vpack.c.b16 %v756, %v756
  %v821 = vpack.c.b16 %v757, %v757
  %v822 = vpack.c.b16 %v758, %v758
  %v823 = vpack.c.b16 %v759, %v759
  %v824 = vpack.c.b16 %v760, %v760
  %v825 = vpack.c.b16 %v761, %v761
  %v826 = vpack.c.b16 %v762, %v762
  %v827 = vpack.c.b16 %v763, %v763
  %v828 = vpack.c.b16 %v764, %v764
  %v829 = vpack.c.b16 %v765, %v765
  %v830 = vpack.c.b16 %v766, %v766
  %v831 = vpack.c.b16 %v767, %v767
  %v832 = vpack.c.b16 %v768, %v768
  %v833 = vpack.c.b16 %v769, %v769
  %v834 = vpack.c.b16 %v770, %v770
  %v835 = vpack.c.b16 %v771, %v771
  %v836 = vpack.c.b16 %v772, %v772
  %v837 = vpack.c.b16 %v773, %v773
  %v838 = vpack.c.b16 %v774, %v774
  %v839 = vpack.c.b16 %v775, %v775
  %v840 = vpack.c.b16 %v776, %v776
  %v841 = vpack.c.b16 %v777, %v777
  %v842 = vpack.c.b16 %v778, %v778
  %v843 = vpack.c.b16 %v779, %v779
  %v844 = vpack.c.b16 %v780, %v780
  %v845 = vpack.c.b16 %v781, %v781
  %v846 = vpack.c.b16 %v782, %v782
  %v847 = vpack.c.b16 %v783, %v783
  %v848 = vpack.c.b16 %v784, %v784
  %v849 = vpack.c.b16 %v785, %v785
  %v850 = vpack.c.b16 %v786, %v786
  %v851 = vpack.c.b16 %v787, %v787
  %v852 = vpack.c.b16 %v788, %v788
  %v853 = vpack.c.b16 %v789, %v789
  %v854 = vpack.c.b16 %v790, %v790
  %v855 = vpack.c.b16 %v791, %v791
  %v856 = vpack.c.b16 %v792, %v792
  %v857 = vpack.c.b16 %v793, %v793
  %vm922 = vcmask 257024
  %923 = vst.msk [vmem:[%s3] sm:$0xf] %vm922, %v794
  %924 = vst.msk [vmem:[%s3 + $0x4] sm:$0xf] %vm922, %v795
  %925 = vst.msk [vmem:[%s3 + $0x8] sm:$0xf] %vm922, %v796
  %926 = vst.msk [vmem:[%s3 + $0xc] sm:$0xf] %vm922, %v797
  %927 = vst.msk [vmem:[%s3 + $0x10] sm:$0xf] %vm922, %v798
  %928 = vst.msk [vmem:[%s3 + $0x14] sm:$0xf] %vm922, %v799
  %929 = vst.msk [vmem:[%s3 + $0x18] sm:$0xf] %vm922, %v800
  %930 = vst.msk [vmem:[%s3 + $0x1c] sm:$0xf] %vm922, %v801
  %931 = vst.msk [vmem:[%s3 + $0x20] sm:$0xf] %vm922, %v802
  %932 = vst.msk [vmem:[%s3 + $0x24] sm:$0xf] %vm922, %v803
  %933 = vst.msk [vmem:[%s3 + $0x28] sm:$0xf] %vm922, %v804
  %934 = vst.msk [vmem:[%s3 + $0x2c] sm:$0xf] %vm922, %v805
  %935 = vst.msk [vmem:[%s3 + $0x30] sm:$0xf] %vm922, %v806
  %936 = vst.msk [vmem:[%s3 + $0x34] sm:$0xf] %vm922, %v807
  %937 = vst.msk [vmem:[%s3 + $0x38] sm:$0xf] %vm922, %v808
  %938 = vst.msk [vmem:[%s3 + $0x3c] sm:$0xf] %vm922, %v809
  %939 = vst.msk [vmem:[%s3 + $0x40] sm:$0xf] %vm922, %v810
  %940 = vst.msk [vmem:[%s3 + $0x44] sm:$0xf] %vm922, %v811
  %941 = vst.msk [vmem:[%s3 + $0x48] sm:$0xf] %vm922, %v812
  %942 = vst.msk [vmem:[%s3 + $0x4c] sm:$0xf] %vm922, %v813
  %943 = vst.msk [vmem:[%s3 + $0x50] sm:$0xf] %vm922, %v814
  %944 = vst.msk [vmem:[%s3 + $0x54] sm:$0xf] %vm922, %v815
  %945 = vst.msk [vmem:[%s3 + $0x58] sm:$0xf] %vm922, %v816
  %946 = vst.msk [vmem:[%s3 + $0x5c] sm:$0xf] %vm922, %v817
  %947 = vst.msk [vmem:[%s3 + $0x60] sm:$0xf] %vm922, %v818
  %948 = vst.msk [vmem:[%s3 + $0x64] sm:$0xf] %vm922, %v819
  %949 = vst.msk [vmem:[%s3 + $0x68] sm:$0xf] %vm922, %v820
  %950 = vst.msk [vmem:[%s3 + $0x6c] sm:$0xf] %vm922, %v821
  %951 = vst.msk [vmem:[%s3 + $0x70] sm:$0xf] %vm922, %v822
  %952 = vst.msk [vmem:[%s3 + $0x74] sm:$0xf] %vm922, %v823
  %953 = vst.msk [vmem:[%s3 + $0x78] sm:$0xf] %vm922, %v824
  %954 = vst.msk [vmem:[%s3 + $0x7c] sm:$0xf] %vm922, %v825
  %955 = vst.msk [vmem:[%s3 + $0x80] sm:$0xf] %vm922, %v826
  %956 = vst.msk [vmem:[%s3 + $0x84] sm:$0xf] %vm922, %v827
  %957 = vst.msk [vmem:[%s3 + $0x88] sm:$0xf] %vm922, %v828
  %958 = vst.msk [vmem:[%s3 + $0x8c] sm:$0xf] %vm922, %v829
  %959 = vst.msk [vmem:[%s3 + $0x90] sm:$0xf] %vm922, %v830
  %960 = vst.msk [vmem:[%s3 + $0x94] sm:$0xf] %vm922, %v831
  %961 = vst.msk [vmem:[%s3 + $0x98] sm:$0xf] %vm922, %v832
  %962 = vst.msk [vmem:[%s3 + $0x9c] sm:$0xf] %vm922, %v833
  %963 = vst.msk [vmem:[%s3 + $0xa0] sm:$0xf] %vm922, %v834
  %964 = vst.msk [vmem:[%s3 + $0xa4] sm:$0xf] %vm922, %v835
  %965 = vst.msk [vmem:[%s3 + $0xa8] sm:$0xf] %vm922, %v836
  %966 = vst.msk [vmem:[%s3 + $0xac] sm:$0xf] %vm922, %v837
  %967 = vst.msk [vmem:[%s3 + $0xb0] sm:$0xf] %vm922, %v838
  %968 = vst.msk [vmem:[%s3 + $0xb4] sm:$0xf] %vm922, %v839
  %969 = vst.msk [vmem:[%s3 + $0xb8] sm:$0xf] %vm922, %v840
  %970 = vst.msk [vmem:[%s3 + $0xbc] sm:$0xf] %vm922, %v841
  %971 = vst.msk [vmem:[%s3 + $0xc0] sm:$0xf] %vm922, %v842
  %972 = vst.msk [vmem:[%s3 + $0xc4] sm:$0xf] %vm922, %v843
  %973 = vst.msk [vmem:[%s3 + $0xc8] sm:$0xf] %vm922, %v844
  %974 = vst.msk [vmem:[%s3 + $0xcc] sm:$0xf] %vm922, %v845
  %975 = vst.msk [vmem:[%s3 + $0xd0] sm:$0xf] %vm922, %v846
  %976 = vst.msk [vmem:[%s3 + $0xd4] sm:$0xf] %vm922, %v847
  %977 = vst.msk [vmem:[%s3 + $0xd8] sm:$0xf] %vm922, %v848
  %978 = vst.msk [vmem:[%s3 + $0xdc] sm:$0xf] %vm922, %v849
  %979 = vst.msk [vmem:[%s3 + $0xe0] sm:$0xf] %vm922, %v850
  %980 = vst.msk [vmem:[%s3 + $0xe4] sm:$0xf] %vm922, %v851
  %981 = vst.msk [vmem:[%s3 + $0xe8] sm:$0xf] %vm922, %v852
  %982 = vst.msk [vmem:[%s3 + $0xec] sm:$0xf] %vm922, %v853
  %983 = vst.msk [vmem:[%s3 + $0xf0] sm:$0xf] %vm922, %v854
  %984 = vst.msk [vmem:[%s3 + $0xf4] sm:$0xf] %vm922, %v855
  %985 = vst.msk [vmem:[%s3 + $0xf8] sm:$0xf] %vm922, %v856
  %986 = vst.msk [vmem:[%s3 + $0xfc] sm:$0xf] %vm922, %v857
  %vm987 = vcmask 261120
  %v988 = vsel %vm987, %v412, 0.0
  %v989 = vsel %vm987, %v415, 0.0
  %v990 = vadd.f32 %v988, %v989
  %v991 = vsel %vm987, %v420, 0.0
  %v992 = vadd.f32 %v990, %v991
  %v993 = vsel %vm987, %v423, 0.0
  %v994 = vadd.f32 %v992, %v993
  %v995 = vsel %vm987, %v428, 0.0
  %v996 = vadd.f32 %v994, %v995
  %v997 = vsel %vm987, %v431, 0.0
  %v998 = vadd.f32 %v996, %v997
  %v999 = vsel %vm987, %v436, 0.0
  %v1000 = vadd.f32 %v998, %v999
  %v1001 = vsel %vm987, %v439, 0.0
  %v1002 = vadd.f32 %v1000, %v1001
  %v1003 = vsel %vm987, %v444, 0.0
  %v1004 = vadd.f32 %v1002, %v1003
  %v1005 = vsel %vm987, %v447, 0.0
  %v1006 = vadd.f32 %v1004, %v1005
  %v1007 = vsel %vm987, %v452, 0.0
  %v1008 = vadd.f32 %v1006, %v1007
  %v1009 = vsel %vm987, %v455, 0.0
  %v1010 = vadd.f32 %v1008, %v1009
  %v1011 = vsel %vm987, %v460, 0.0
  %v1012 = vadd.f32 %v1010, %v1011
  %v1013 = vsel %vm987, %v463, 0.0
  %v1014 = vadd.f32 %v1012, %v1013
  %v1015 = vsel %vm987, %v468, 0.0
  %v1016 = vadd.f32 %v1014, %v1015
  %v1017 = vsel %vm987, %v471, 0.0
  %v1018 = vadd.f32 %v1016, %v1017
  %v1019 = vsel %vm987, %v476, 0.0
  %v1020 = vadd.f32 %v1018, %v1019
  %v1021 = vsel %vm987, %v479, 0.0
  %v1022 = vadd.f32 %v1020, %v1021
  %v1023 = vsel %vm987, %v484, 0.0
  %v1024 = vadd.f32 %v1022, %v1023
  %v1025 = vsel %vm987, %v487, 0.0
  %v1026 = vadd.f32 %v1024, %v1025
  %v1027 = vsel %vm987, %v492, 0.0
  %v1028 = vadd.f32 %v1026, %v1027
  %v1029 = vsel %vm987, %v495, 0.0
  %v1030 = vadd.f32 %v1028, %v1029
  %v1031 = vsel %vm987, %v500, 0.0
  %v1032 = vadd.f32 %v1030, %v1031
  %v1033 = vsel %vm987, %v503, 0.0
  %v1034 = vadd.f32 %v1032, %v1033
  %v1035 = vsel %vm987, %v508, 0.0
  %v1036 = vadd.f32 %v1034, %v1035
  %v1037 = vsel %vm987, %v511, 0.0
  %v1038 = vadd.f32 %v1036, %v1037
  %v1039 = vsel %vm987, %v516, 0.0
  %v1040 = vadd.f32 %v1038, %v1039
  %v1041 = vsel %vm987, %v519, 0.0
  %v1042 = vadd.f32 %v1040, %v1041
  %v1043 = vsel %vm987, %v524, 0.0
  %v1044 = vadd.f32 %v1042, %v1043
  %v1045 = vsel %vm987, %v527, 0.0
  %v1046 = vadd.f32 %v1044, %v1045
  %v1047 = vsel %vm987, %v532, 0.0
  %v1048 = vadd.f32 %v1046, %v1047
  %v1049 = vsel %vm987, %v535, 0.0
  %v1050 = vadd.f32 %v1048, %v1049
  %v1051 = vsel %vm987, %v540, 0.0
  %v1052 = vadd.f32 %v1050, %v1051
  %v1053 = vsel %vm987, %v543, 0.0
  %v1054 = vadd.f32 %v1052, %v1053
  %v1055 = vsel %vm987, %v548, 0.0
  %v1056 = vadd.f32 %v1054, %v1055
  %v1057 = vsel %vm987, %v551, 0.0
  %v1058 = vadd.f32 %v1056, %v1057
  %v1059 = vsel %vm987, %v556, 0.0
  %v1060 = vadd.f32 %v1058, %v1059
  %v1061 = vsel %vm987, %v559, 0.0
  %v1062 = vadd.f32 %v1060, %v1061
  %v1063 = vsel %vm987, %v564, 0.0
  %v1064 = vadd.f32 %v1062, %v1063
  %v1065 = vsel %vm987, %v567, 0.0
  %v1066 = vadd.f32 %v1064, %v1065
  %v1067 = vsel %vm987, %v572, 0.0
  %v1068 = vadd.f32 %v1066, %v1067
  %v1069 = vsel %vm987, %v575, 0.0
  %v1070 = vadd.f32 %v1068, %v1069
  %v1071 = vsel %vm987, %v580, 0.0
  %v1072 = vadd.f32 %v1070, %v1071
  %v1073 = vsel %vm987, %v583, 0.0
  %v1074 = vadd.f32 %v1072, %v1073
  %v1075 = vsel %vm987, %v588, 0.0
  %v1076 = vadd.f32 %v1074, %v1075
  %v1077 = vsel %vm987, %v591, 0.0
  %v1078 = vadd.f32 %v1076, %v1077
  %v1079 = vsel %vm987, %v596, 0.0
  %v1080 = vadd.f32 %v1078, %v1079
  %v1081 = vsel %vm987, %v599, 0.0
  %v1082 = vadd.f32 %v1080, %v1081
  %v1083 = vsel %vm987, %v604, 0.0
  %v1084 = vadd.f32 %v1082, %v1083
  %v1085 = vsel %vm987, %v607, 0.0
  %v1086 = vadd.f32 %v1084, %v1085
  %v1087 = vsel %vm987, %v612, 0.0
  %v1088 = vadd.f32 %v1086, %v1087
  %v1089 = vsel %vm987, %v615, 0.0
  %v1090 = vadd.f32 %v1088, %v1089
  %v1091 = vsel %vm987, %v620, 0.0
  %v1092 = vadd.f32 %v1090, %v1091
  %v1093 = vsel %vm987, %v623, 0.0
  %v1094 = vadd.f32 %v1092, %v1093
  %v1095 = vsel %vm987, %v628, 0.0
  %v1096 = vadd.f32 %v1094, %v1095
  %v1097 = vsel %vm987, %v631, 0.0
  %v1098 = vadd.f32 %v1096, %v1097
  %v1099 = vsel %vm987, %v636, 0.0
  %v1100 = vadd.f32 %v1098, %v1099
  %v1101 = vsel %vm987, %v639, 0.0
  %v1102 = vadd.f32 %v1100, %v1101
  %v1103 = vsel %vm987, %v644, 0.0
  %v1104 = vadd.f32 %v1102, %v1103
  %v1105 = vsel %vm987, %v647, 0.0
  %v1106 = vadd.f32 %v1104, %v1105
  %v1107 = vsel %vm987, %v652, 0.0
  %v1108 = vadd.f32 %v1106, %v1107
  %v1109 = vsel %vm987, %v655, 0.0
  %v1110 = vadd.f32 %v1108, %v1109
  %v1111 = vsel %vm987, %v660, 0.0
  %v1112 = vadd.f32 %v1110, %v1111
  %v1113 = vsel %vm987, %v663, 0.0
  %v1114 = vadd.f32 %v1112, %v1113
  %v1115 = vrot.slane %v1114, 4
  %v1116 = vadd.f32 %v1114, %v1115
  %v1117 = vrot.slane %v1116, 2
  %v1118 = vadd.f32 %v1116, %v1117
  %v1119 = vrot.slane %v1118, 1
  %v1120 = vadd.f32 %v1118, %v1119
  %v1121 = vmul.f32 %v412, %v412
  %v1122 = vmul.f32 %v415, %v415
  %v1123 = vmul.f32 %v420, %v420
  %v1124 = vmul.f32 %v423, %v423
  %v1125 = vmul.f32 %v428, %v428
  %v1126 = vmul.f32 %v431, %v431
  %v1127 = vmul.f32 %v436, %v436
  %v1128 = vmul.f32 %v439, %v439
  %v1129 = vmul.f32 %v444, %v444
  %v1130 = vmul.f32 %v447, %v447
  %v1131 = vmul.f32 %v452, %v452
  %v1132 = vmul.f32 %v455, %v455
  %v1133 = vmul.f32 %v460, %v460
  %v1134 = vmul.f32 %v463, %v463
  %v1135 = vmul.f32 %v468, %v468
  %v1136 = vmul.f32 %v471, %v471
  %v1137 = vmul.f32 %v476, %v476
  %v1138 = vmul.f32 %v479, %v479
  %v1139 = vmul.f32 %v484, %v484
  %v1140 = vmul.f32 %v487, %v487
  %v1141 = vmul.f32 %v492, %v492
  %v1142 = vmul.f32 %v495, %v495
  %v1143 = vmul.f32 %v500, %v500
  %v1144 = vmul.f32 %v503, %v503
  %v1145 = vmul.f32 %v508, %v508
  %v1146 = vmul.f32 %v511, %v511
  %v1147 = vmul.f32 %v516, %v516
  %v1148 = vmul.f32 %v519, %v519
  %v1149 = vmul.f32 %v524, %v524
  %v1150 = vmul.f32 %v527, %v527
  %v1151 = vmul.f32 %v532, %v532
  %v1152 = vmul.f32 %v535, %v535
  %v1153 = vmul.f32 %v540, %v540
  %v1154 = vmul.f32 %v543, %v543
  %v1155 = vmul.f32 %v548, %v548
  %v1156 = vmul.f32 %v551, %v551
  %v1157 = vmul.f32 %v556, %v556
  %v1158 = vmul.f32 %v559, %v559
  %v1159 = vmul.f32 %v564, %v564
  %v1160 = vmul.f32 %v567, %v567
  %v1161 = vmul.f32 %v572, %v572
  %v1162 = vmul.f32 %v575, %v575
  %v1163 = vmul.f32 %v580, %v580
  %v1164 = vmul.f32 %v583, %v583
  %v1165 = vmul.f32 %v588, %v588
  %v1166 = vmul.f32 %v591, %v591
  %v1167 = vmul.f32 %v596, %v596
  %v1168 = vmul.f32 %v599, %v599
  %v1169 = vmul.f32 %v604, %v604
  %v1170 = vmul.f32 %v607, %v607
  %v1171 = vmul.f32 %v612, %v612
  %v1172 = vmul.f32 %v615, %v615
  %v1173 = vmul.f32 %v620, %v620
  %v1174 = vmul.f32 %v623, %v623
  %v1175 = vmul.f32 %v628, %v628
  %v1176 = vmul.f32 %v631, %v631
  %v1177 = vmul.f32 %v636, %v636
  %v1178 = vmul.f32 %v639, %v639
  %v1179 = vmul.f32 %v644, %v644
  %v1180 = vmul.f32 %v647, %v647
  %v1181 = vmul.f32 %v652, %v652
  %v1182 = vmul.f32 %v655, %v655
  %v1183 = vmul.f32 %v660, %v660
  %v1184 = vmul.f32 %v663, %v663
  %v1185 = vsel %vm987, %v1121, 0.0
  %v1186 = vsel %vm987, %v1122, 0.0
  %v1187 = vadd.f32 %v1185, %v1186
  %v1188 = vsel %vm987, %v1123, 0.0
  %v1189 = vadd.f32 %v1187, %v1188
  %v1190 = vsel %vm987, %v1124, 0.0
  %v1191 = vadd.f32 %v1189, %v1190
  %v1192 = vsel %vm987, %v1125, 0.0
  %v1193 = vadd.f32 %v1191, %v1192
  %v1194 = vsel %vm987, %v1126, 0.0
  %v1195 = vadd.f32 %v1193, %v1194
  %v1196 = vsel %vm987, %v1127, 0.0
  %v1197 = vadd.f32 %v1195, %v1196
  %v1198 = vsel %vm987, %v1128, 0.0
  %v1199 = vadd.f32 %v1197, %v1198
  %v1200 = vsel %vm987, %v1129, 0.0
  %v1201 = vadd.f32 %v1199, %v1200
  %v1202 = vsel %vm987, %v1130, 0.0
  %v1203 = vadd.f32 %v1201, %v1202
  %v1204 = vsel %vm987, %v1131, 0.0
  %v1205 = vadd.f32 %v1203, %v1204
  %v1206 = vsel %vm987, %v1132, 0.0
  %v1207 = vadd.f32 %v1205, %v1206
  %v1208 = vsel %vm987, %v1133, 0.0
  %v1209 = vadd.f32 %v1207, %v1208
  %v1210 = vsel %vm987, %v1134, 0.0
  %v1211 = vadd.f32 %v1209, %v1210
  %v1212 = vsel %vm987, %v1135, 0.0
  %v1213 = vadd.f32 %v1211, %v1212
  %v1214 = vsel %vm987, %v1136, 0.0
  %v1215 = vadd.f32 %v1213, %v1214
  %v1216 = vsel %vm987, %v1137, 0.0
  %v1217 = vadd.f32 %v1215, %v1216
  %v1218 = vsel %vm987, %v1138, 0.0
  %v1219 = vadd.f32 %v1217, %v1218
  %v1220 = vsel %vm987, %v1139, 0.0
  %v1221 = vadd.f32 %v1219, %v1220
  %v1222 = vsel %vm987, %v1140, 0.0
  %v1223 = vadd.f32 %v1221, %v1222
  %v1224 = vsel %vm987, %v1141, 0.0
  %v1225 = vadd.f32 %v1223, %v1224
  %v1226 = vsel %vm987, %v1142, 0.0
  %v1227 = vadd.f32 %v1225, %v1226
  %v1228 = vsel %vm987, %v1143, 0.0
  %v1229 = vadd.f32 %v1227, %v1228
  %v1230 = vsel %vm987, %v1144, 0.0
  %v1231 = vadd.f32 %v1229, %v1230
  %v1232 = vsel %vm987, %v1145, 0.0
  %v1233 = vadd.f32 %v1231, %v1232
  %v1234 = vsel %vm987, %v1146, 0.0
  %v1235 = vadd.f32 %v1233, %v1234
  %v1236 = vsel %vm987, %v1147, 0.0
  %v1237 = vadd.f32 %v1235, %v1236
  %v1238 = vsel %vm987, %v1148, 0.0
  %v1239 = vadd.f32 %v1237, %v1238
  %v1240 = vsel %vm987, %v1149, 0.0
  %v1241 = vadd.f32 %v1239, %v1240
  %v1242 = vsel %vm987, %v1150, 0.0
  %v1243 = vadd.f32 %v1241, %v1242
  %v1244 = vsel %vm987, %v1151, 0.0
  %v1245 = vadd.f32 %v1243, %v1244
  %v1246 = vsel %vm987, %v1152, 0.0
  %v1247 = vadd.f32 %v1245, %v1246
  %v1248 = vsel %vm987, %v1153, 0.0
  %v1249 = vadd.f32 %v1247, %v1248
  %v1250 = vsel %vm987, %v1154, 0.0
  %v1251 = vadd.f32 %v1249, %v1250
  %v1252 = vsel %vm987, %v1155, 0.0
  %v1253 = vadd.f32 %v1251, %v1252
  %v1254 = vsel %vm987, %v1156, 0.0
  %v1255 = vadd.f32 %v1253, %v1254
  %v1256 = vsel %vm987, %v1157, 0.0
  %v1257 = vadd.f32 %v1255, %v1256
  %v1258 = vsel %vm987, %v1158, 0.0
  %v1259 = vadd.f32 %v1257, %v1258
  %v1260 = vsel %vm987, %v1159, 0.0
  %v1261 = vadd.f32 %v1259, %v1260
  %v1262 = vsel %vm987, %v1160, 0.0
  %v1263 = vadd.f32 %v1261, %v1262
  %v1264 = vsel %vm987, %v1161, 0.0
  %v1265 = vadd.f32 %v1263, %v1264
  %v1266 = vsel %vm987, %v1162, 0.0
  %v1267 = vadd.f32 %v1265, %v1266
  %v1268 = vsel %vm987, %v1163, 0.0
  %v1269 = vadd.f32 %v1267, %v1268
  %v1270 = vsel %vm987, %v1164, 0.0
  %v1271 = vadd.f32 %v1269, %v1270
  %v1272 = vsel %vm987, %v1165, 0.0
  %v1273 = vadd.f32 %v1271, %v1272
  %v1274 = vsel %vm987, %v1166, 0.0
  %v1275 = vadd.f32 %v1273, %v1274
  %v1276 = vsel %vm987, %v1167, 0.0
  %v1277 = vadd.f32 %v1275, %v1276
  %v1278 = vsel %vm987, %v1168, 0.0
  %v1279 = vadd.f32 %v1277, %v1278
  %v1280 = vsel %vm987, %v1169, 0.0
  %v1281 = vadd.f32 %v1279, %v1280
  %v1282 = vsel %vm987, %v1170, 0.0
  %v1283 = vadd.f32 %v1281, %v1282
  %v1284 = vsel %vm987, %v1171, 0.0
  %v1285 = vadd.f32 %v1283, %v1284
  %v1286 = vsel %vm987, %v1172, 0.0
  %v1287 = vadd.f32 %v1285, %v1286
  %v1288 = vsel %vm987, %v1173, 0.0
  %v1289 = vadd.f32 %v1287, %v1288
  %v1290 = vsel %vm987, %v1174, 0.0
  %v1291 = vadd.f32 %v1289, %v1290
  %v1292 = vsel %vm987, %v1175, 0.0
  %v1293 = vadd.f32 %v1291, %v1292
  %v1294 = vsel %vm987, %v1176, 0.0
  %v1295 = vadd.f32 %v1293, %v1294
  %v1296 = vsel %vm987, %v1177, 0.0
  %v1297 = vadd.f32 %v1295, %v1296
  %v1298 = vsel %vm987, %v1178, 0.0
  %v1299 = vadd.f32 %v1297, %v1298
  %v1300 = vsel %vm987, %v1179, 0.0
  %v1301 = vadd.f32 %v1299, %v1300
  %v1302 = vsel %vm987, %v1180, 0.0
  %v1303 = vadd.f32 %v1301, %v1302
  %v1304 = vsel %vm987, %v1181, 0.0
  %v1305 = vadd.f32 %v1303, %v1304
  %v1306 = vsel %vm987, %v1182, 0.0
  %v1307 = vadd.f32 %v1305, %v1306
  %v1308 = vsel %vm987, %v1183, 0.0
  %v1309 = vadd.f32 %v1307, %v1308
  %v1310 = vsel %vm987, %v1184, 0.0
  %v1311 = vadd.f32 %v1309, %v1310
  %v1312 = vrot.slane %v1311, 4
  %v1313 = vadd.f32 %v1311, %v1312
  %v1314 = vrot.slane %v1313, 2
  %v1315 = vadd.f32 %v1313, %v1314
  %v1316 = vrot.slane %v1315, 1
  %v1317 = vadd.f32 %v1315, %v1316
  %v1318 = vlaneseq
  %v1319 = vshrl.u32 %v1318, 7
  %vm1320 = vcmp.eq.s32.totalorder %v1319, 0
  %v1321 = vsel %vm1320, %v1120, 0.0
  %vm1322 = vcmp.eq.s32.totalorder %v1319, 1
  %v1323 = vsel %vm1322, %v1317, 0.0
  %v1324 = vadd.f32 %v1321, %v1323
  %1325 = vst.msk [vmem:[%s4] sm:$0xff] %vm987, %v1324
  // Predicated region
  $region14: #{cvae_forward.17} parent=0 // pred_check
    _
  $region15: #{cvae_forward.17} parent=0 // pred_check_branch
    %1327 = sbr.rel (0) target = $region17
  $region16: #{cvae_forward.17} parent=0 // pred_region
    _
  $region17: #{cvae_forward.17} parent=0 // pred_fallthru
    _
  // Predicated region
  $region18: #{cvae_forward.17} parent=0 // pred_check
    _
  $region19: #{cvae_forward.17} parent=0 // pred_check_branch
    %1329 = sbr.rel (0) target = $region21
  $region20: #{cvae_forward.17} parent=0 // pred_region
    _
  $region21: #{cvae_forward.17} parent=0 // pred_fallthru
    _
  // Predicated region
  $region22: #{cvae_forward.17} parent=0 // pred_check
    _
  $region23: #{cvae_forward.17} parent=0 // pred_check_branch
    %1331 = sbr.rel (0) target = $region25
  $region24: #{cvae_forward.17} parent=0 // pred_region
    _
  $region25: #{cvae_forward.17} parent=0 // pred_fallthru
    _
  // Predicated region
  $region26: #{cvae_forward.17} parent=0 // pred_check
    _
  $region27: #{cvae_forward.17} parent=0 // pred_check_branch
    %1333 = sbr.rel (0) target = $region29
  $region28: #{cvae_forward.17} parent=0 // pred_region
    _
  $region29: #{cvae_forward.17} parent=0 // pred_fallthru
    _

// kernel: cvae_forward.18
$region0: #{cvae_forward.18}
  #allocation0 [shape = 'u32[]', space=smem, size = 0x4, offset = 0x4, fixed_abs, tag = 'smem constant byte address 0x4 - core index']
  #allocation1 [shape = 'u32[144,128]{1,0:T(1,128)}', space=vmem, size = 0x12000, scoped, tag = 'internal scratch']
  %s0 = inlined_call_operand.vmem [shape: bf16[2048,32], index: 0, kind: input, shape index: {}]
  %s1 = inlined_call_operand.vmem [shape: bf16[32,32], index: 1, kind: input, shape index: {}]
  %s2 = inlined_call_operand.vmem [shape: f32[1,32], index: 2, kind: input, shape index: {}]
  %s3 = inlined_call_operand.vmem [shape: bf16[2048,32], index: 3, kind: output, shape index: {0}]
  %s4 = inlined_call_operand.vmem [shape: f32[16,32], index: 4, kind: output, shape index: {1}]
  %5 = xla_tuple %s3, %s4
  %s6 = sld [smem:[#allocation0]]
  $region53: #{cvae_forward.18} parent=0
    _
  %s8 = ssub.s32 1, %s6
  %s9 = scalar_select 0, %s8, %s6
  loop: start=0, step=1, limit=4
  $region2: #{cvae_forward.18} parent=0 // loop_pre_header
    _
  $region3: #{cvae_forward.18} parent=0 // loop_header
    %s11 = sphi 0, %s15
    %p12 = scmp.ge.s32.totalorder %s11, 4
    %s21 = sphi 0, %s23
    %s24 = sphi 0, %s21
    %s25 = sphi 0, %s24
    %s41 = sphi 0, %s25
    %s45 = sphi 0, %s45
    %s47 = sphi 0, %s45
    %s48 = sphi 0, %s47
    %s62 = sphi 0, %s48
    %s66 = sphi 0, %s66
    %s68 = sphi 0, %s66
    %s69 = sphi 0, %s68
    %s83 = sphi 0, %s69
    %s89 = sphi 0, %s91
    %s92 = sphi 0, %s89
    %s93 = sphi 0, %s92
    %s109 = sphi 0, %s93
    %s115 = sphi 0, %s117
    %s118 = sphi 0, %s115
    %s119 = sphi 0, %s118
    %s135 = sphi 0, %s119
  $region4: #{cvae_forward.18} parent=0 // loop_header_branch
    %14 = sbr.rel (%p12) target = $region8
  $region5: #{cvae_forward.18} parent=0 // loop_body
    %s16 = ssub.s32 %s11, 1
    %s17 = ssub.s32 %s11, 2
    %s18 = sadd.s32 %s11, 1
    %s19 = ssub.s32 %s11, %s18
    %p20 = scmp.eq.s32.totalorder %s19, 0
    %s22 = sadd.s32 %s21, 1
    %s23 = scalar_select %p20, %s21, %s22
    %p26 = pneg %p20
    %p27 = scmp.eq.s32.totalorder %s11, 1
    %p28 = por %p26, %p27
    %p29 = scmp.ne.s32.totalorder %s21, %s24
    %p30 = scmp.eq.s32.totalorder %s11, 0
    %p31 = por %p29, %p30
    %p32 = scmp.ne.s32.totalorder %s21, %s24
    %p33 = scmp.eq.s32.totalorder %s16, 1
    %p34 = por %p32, %p33
    %p35 = scmp.ne.s32.totalorder %s24, %s25
    %p36 = scmp.eq.s32.totalorder %s16, 0
    %p37 = por %p35, %p36
    %p38 = scmp.ne.s32.totalorder %s24, %s25
    %p39 = scmp.eq.s32.totalorder %s17, 1
    %p40 = por %p38, %p39
    %p42 = scmp.ne.s32.totalorder %s25, %s41
    %p43 = scmp.eq.s32.totalorder %s17, 0
    %p44 = por %p42, %p43
    %s46 = sadd.s32 %s45, 1
    %p49 = scmp.eq.s32.totalorder %s11, 1
    %p50 = scmp.ne.s32.totalorder %s45, %s47
    %p51 = scmp.eq.s32.totalorder %s11, 0
    %p52 = por %p50, %p51
    %p53 = scmp.ne.s32.totalorder %s45, %s47
    %p54 = scmp.eq.s32.totalorder %s16, 1
    %p55 = por %p53, %p54
    %p56 = scmp.ne.s32.totalorder %s47, %s48
    %p57 = scmp.eq.s32.totalorder %s16, 0
    %p58 = por %p56, %p57
    %p59 = scmp.ne.s32.totalorder %s47, %s48
    %p60 = scmp.eq.s32.totalorder %s17, 1
    %p61 = por %p59, %p60
    %p63 = scmp.ne.s32.totalorder %s48, %s62
    %p64 = scmp.eq.s32.totalorder %s17, 0
    %p65 = por %p63, %p64
    %s67 = sadd.s32 %s66, 1
    %p70 = scmp.eq.s32.totalorder %s11, 1
    %p71 = scmp.ne.s32.totalorder %s66, %s68
    %p72 = scmp.eq.s32.totalorder %s11, 0
    %p73 = por %p71, %p72
    %p74 = scmp.ne.s32.totalorder %s66, %s68
    %p75 = scmp.eq.s32.totalorder %s16, 1
    %p76 = por %p74, %p75
    %p77 = scmp.ne.s32.totalorder %s68, %s69
    %p78 = scmp.eq.s32.totalorder %s16, 0
    %p79 = por %p77, %p78
    %p80 = scmp.ne.s32.totalorder %s68, %s69
    %p81 = scmp.eq.s32.totalorder %s17, 1
    %p82 = por %p80, %p81
    %p84 = scmp.ne.s32.totalorder %s69, %s83
    %p85 = scmp.eq.s32.totalorder %s17, 0
    %p86 = por %p84, %p85
    %s87 = ssub.s32 %s11, %s18
    %p88 = scmp.eq.s32.totalorder %s87, 0
    %s90 = sadd.s32 %s89, 1
    %s91 = scalar_select %p88, %s89, %s90
    %p94 = pneg %p88
    %p95 = scmp.eq.s32.totalorder %s11, 1
    %p96 = por %p94, %p95
    %p97 = scmp.ne.s32.totalorder %s89, %s92
    %p98 = scmp.eq.s32.totalorder %s11, 0
    %p99 = por %p97, %p98
    %p100 = scmp.ne.s32.totalorder %s89, %s92
    %p101 = scmp.eq.s32.totalorder %s16, 1
    %p102 = por %p100, %p101
    %p103 = scmp.ne.s32.totalorder %s92, %s93
    %p104 = scmp.eq.s32.totalorder %s16, 0
    %p105 = por %p103, %p104
    %p106 = scmp.ne.s32.totalorder %s92, %s93
    %p107 = scmp.eq.s32.totalorder %s17, 1
    %p108 = por %p106, %p107
    %p110 = scmp.ne.s32.totalorder %s93, %s109
    %p111 = scmp.eq.s32.totalorder %s17, 0
    %p112 = por %p110, %p111
    %s113 = ssub.s32 %s11, %s18
    %p114 = scmp.eq.s32.totalorder %s113, 0
    %s116 = sadd.s32 %s115, 1
    %s117 = scalar_select %p114, %s115, %s116
    %p120 = pneg %p114
    %p121 = scmp.eq.s32.totalorder %s11, 1
    %p122 = por %p120, %p121
    %p123 = scmp.ne.s32.totalorder %s115, %s118
    %p124 = scmp.eq.s32.totalorder %s11, 0
    %p125 = por %p123, %p124
    %p126 = scmp.ne.s32.totalorder %s115, %s118
    %p127 = scmp.eq.s32.totalorder %s16, 1
    %p128 = por %p126, %p127
    %p129 = scmp.ne.s32.totalorder %s118, %s119
    %p130 = scmp.eq.s32.totalorder %s16, 0
    %p131 = por %p129, %p130
    %p132 = scmp.ne.s32.totalorder %s118, %s119
    %p133 = scmp.eq.s32.totalorder %s17, 1
    %p134 = por %p132, %p133
    %p136 = scmp.ne.s32.totalorder %s119, %s135
    %p137 = scmp.eq.s32.totalorder %s17, 0
    %p138 = por %p136, %p137
    %p139 = scmp.le.s32.totalorder 1, %s11
    %p140 = scmp.lt.s32.totalorder %s11, 3
    %p141 = pnand %p139, %p140
    %p142 = pneg %p141
    // Predicated region
    $region9: #{cvae_forward.18} parent=5 // pred_check
      _
    $region10: #{cvae_forward.18} parent=5 // pred_check_branch
      %144 = sbr.rel (%p141) target = $region12
    $region11: #{cvae_forward.18} parent=5 // pred_region
      %s145 = ssub.s32 %s11, 1
      // Predicated region
      $region13: #{cvae_forward.18} parent=11 // pred_check
        %p146 = pneg %p58
      $region14: #{cvae_forward.18} parent=11 // pred_check_branch
        %148 = sbr.rel (%p146) target = $region16
      $region15: #{cvae_forward.18} parent=11 // pred_region
        _
      $region16: #{cvae_forward.18} parent=11 // pred_fallthru
        _
      // Predicated region
      $region17: #{cvae_forward.18} parent=11 // pred_check
        %p149 = pneg %p79
      $region18: #{cvae_forward.18} parent=11 // pred_check_branch
        %151 = sbr.rel (%p149) target = $region20
      $region19: #{cvae_forward.18} parent=11 // pred_region
        _
      $region20: #{cvae_forward.18} parent=11 // pred_fallthru
        _
    $region12: #{cvae_forward.18} parent=5 // pred_fallthru
      _
    %p152 = scmp.lt.s32.totalorder %s11, 2
    // Predicated region
    $region21: #{cvae_forward.18} parent=5 // pred_check
      %p153 = pneg %p152
    $region22: #{cvae_forward.18} parent=5 // pred_check_branch
      %155 = sbr.rel (%p153) target = $region24
    $region23: #{cvae_forward.18} parent=5 // pred_region
      // Predicated region
      $region25: #{cvae_forward.18} parent=23 // pred_check
        %p156 = pneg %p31
      $region26: #{cvae_forward.18} parent=23 // pred_check_branch
        %158 = sbr.rel (%p156) target = $region28
      $region27: #{cvae_forward.18} parent=23 // pred_region
        %s159 = smul.u32 128, %s11
        %p160 = scmp.lt.s32.totalorder %s159, 255
        %s161 = scalar_select %p160, %s159, 255
        %s162 = smul.addr %s161, 4
        %s163 = scalar_lea.vmem %s0, %s162
        %s164 = smul.u32 128, %s11
      $region28: #{cvae_forward.18} parent=23 // pred_fallthru
        _
    $region24: #{cvae_forward.18} parent=5 // pred_fallthru
      _
    %p165 = scmp.le.s32.totalorder 1, %s11
    %p166 = scmp.lt.s32.totalorder %s11, 3
    %p167 = pnand %p165, %p166
    %p168 = pneg %p167
    // Predicated region
    $region29: #{cvae_forward.18} parent=5 // pred_check
      _
    $region30: #{cvae_forward.18} parent=5 // pred_check_branch
      %170 = sbr.rel (%p167) target = $region32
    $region31: #{cvae_forward.18} parent=5 // pred_region
      %s171 = ssub.s32 %s11, 1
      %s172 = smul.u32 128, %s16
      %p173 = scmp.lt.s32.totalorder %s172, 255
      %s174 = scalar_select %p173, %s172, 255
      %s175 = smul.addr %s174, 4
      %s176 = scalar_lea.vmem %s0, %s175
      %p177 = pneg %p37
      %p178 = pneg %p34
      %p179 = pneg %p58
      %p180 = pneg %p55
      %p181 = pneg %p79
      %p182 = pneg %p76
      %p183 = pneg %p105
      %p184 = pneg %p102
      %s185 = smul.u32 128, %s16
      %p186 = scmp.lt.s32.totalorder %s185, 255
      %s187 = scalar_select %p186, %s185, 255
      %s188 = smul.addr %s187, 4
      %s189 = scalar_lea.vmem %s3, %s188
      %p190 = pneg %p131
      %p191 = pneg %p128
      %p192 = scmp.lt.s32.totalorder %s16, 1
      %s193 = scalar_select %p192, %s16, 1
      %s194 = smul.addr %s193, 8
      %s195 = scalar_lea.vmem %s4, %s194
      %s196 = smul.u32 128, %s16
      %p197 = scmp.lt.s32.totalorder %s196, 255
      %s198 = scalar_select %p197, %s196, 255
      %s199 = smul.addr %s198, 4
      %s200 = scalar_lea.vmem %s0, %s199
      %s201 = smul.u32 128, %s16
      %s202 = smul.u32 128, %s16
      %p203 = scmp.lt.s32.totalorder %s202, 255
      %s204 = scalar_select %p203, %s202, 255
      %s205 = smul.addr %s204, 4
      %s206 = scalar_lea.vmem %s3, %s205
      %s207 = smul.u32 128, %s16
      %p208 = scmp.lt.s32.totalorder %s16, 1
      %s209 = scalar_select %p208, %s16, 1
      %s210 = smul.addr %s209, 8
      %s211 = scalar_lea.vmem %s4, %s210
      %v213 = vld [vmem:[%s200] sm:$0xf]
      %v214 = vld [vmem:[%s200 + $0x4] sm:$0xf]
      %v215 = vld [vmem:[%s200 + $0x8] sm:$0xf]
      %v216 = vld [vmem:[%s200 + $0xc] sm:$0xf]
      %v217 = vld [vmem:[%s200 + $0x10] sm:$0xf]
      %v218 = vld [vmem:[%s200 + $0x14] sm:$0xf]
      %v219 = vld [vmem:[%s200 + $0x18] sm:$0xf]
      %v220 = vld [vmem:[%s200 + $0x1c] sm:$0xf]
      %v221 = vld [vmem:[%s200 + $0x20] sm:$0xf]
      %v222 = vld [vmem:[%s200 + $0x24] sm:$0xf]
      %v223 = vld [vmem:[%s200 + $0x28] sm:$0xf]
      %v224 = vld [vmem:[%s200 + $0x2c] sm:$0xf]
      %v225 = vld [vmem:[%s200 + $0x30] sm:$0xf]
      %v226 = vld [vmem:[%s200 + $0x34] sm:$0xf]
      %v227 = vld [vmem:[%s200 + $0x38] sm:$0xf]
      %v228 = vld [vmem:[%s200 + $0x3c] sm:$0xf]
      %v229 = vld [vmem:[%s200 + $0x40] sm:$0xf]
      %v230 = vld [vmem:[%s200 + $0x44] sm:$0xf]
      %v231 = vld [vmem:[%s200 + $0x48] sm:$0xf]
      %v232 = vld [vmem:[%s200 + $0x4c] sm:$0xf]
      %v233 = vld [vmem:[%s200 + $0x50] sm:$0xf]
      %v234 = vld [vmem:[%s200 + $0x54] sm:$0xf]
      %v235 = vld [vmem:[%s200 + $0x58] sm:$0xf]
      %v236 = vld [vmem:[%s200 + $0x5c] sm:$0xf]
      %v237 = vld [vmem:[%s200 + $0x60] sm:$0xf]
      %v238 = vld [vmem:[%s200 + $0x64] sm:$0xf]
      %v239 = vld [vmem:[%s200 + $0x68] sm:$0xf]
      %v240 = vld [vmem:[%s200 + $0x6c] sm:$0xf]
      %v241 = vld [vmem:[%s200 + $0x70] sm:$0xf]
      %v242 = vld [vmem:[%s200 + $0x74] sm:$0xf]
      %v243 = vld [vmem:[%s200 + $0x78] sm:$0xf]
      %v244 = vld [vmem:[%s200 + $0x7c] sm:$0xf]
      %v245 = vld [vmem:[%s200 + $0x80] sm:$0xf]
      %v246 = vld [vmem:[%s200 + $0x84] sm:$0xf]
      %v247 = vld [vmem:[%s200 + $0x88] sm:$0xf]
      %v248 = vld [vmem:[%s200 + $0x8c] sm:$0xf]
      %v249 = vld [vmem:[%s200 + $0x90] sm:$0xf]
      %v250 = vld [vmem:[%s200 + $0x94] sm:$0xf]
      %v251 = vld [vmem:[%s200 + $0x98] sm:$0xf]
      %v252 = vld [vmem:[%s200 + $0x9c] sm:$0xf]
      %v253 = vld [vmem:[%s200 + $0xa0] sm:$0xf]
      %v254 = vld [vmem:[%s200 + $0xa4] sm:$0xf]
      %v255 = vld [vmem:[%s200 + $0xa8] sm:$0xf]
      %v256 = vld [vmem:[%s200 + $0xac] sm:$0xf]
      %v257 = vld [vmem:[%s200 + $0xb0] sm:$0xf]
      %v258 = vld [vmem:[%s200 + $0xb4] sm:$0xf]
      %v259 = vld [vmem:[%s200 + $0xb8] sm:$0xf]
      %v260 = vld [vmem:[%s200 + $0xbc] sm:$0xf]
      %v261 = vld [vmem:[%s200 + $0xc0] sm:$0xf]
      %v262 = vld [vmem:[%s200 + $0xc4] sm:$0xf]
      %v263 = vld [vmem:[%s200 + $0xc8] sm:$0xf]
      %v264 = vld [vmem:[%s200 + $0xcc] sm:$0xf]
      %v265 = vld [vmem:[%s200 + $0xd0] sm:$0xf]
      %v266 = vld [vmem:[%s200 + $0xd4] sm:$0xf]
      %v267 = vld [vmem:[%s200 + $0xd8] sm:$0xf]
      %v268 = vld [vmem:[%s200 + $0xdc] sm:$0xf]
      %v269 = vld [vmem:[%s200 + $0xe0] sm:$0xf]
      %v270 = vld [vmem:[%s200 + $0xe4] sm:$0xf]
      %v271 = vld [vmem:[%s200 + $0xe8] sm:$0xf]
      %v272 = vld [vmem:[%s200 + $0xec] sm:$0xf]
      %v273 = vld [vmem:[%s200 + $0xf0] sm:$0xf]
      %v274 = vld [vmem:[%s200 + $0xf4] sm:$0xf]
      %v275 = vld [vmem:[%s200 + $0xf8] sm:$0xf]
      %v276 = vld [vmem:[%s200 + $0xfc] sm:$0xf]
      %v277 = vld [vmem:[%s200 + $0x100] sm:$0xf]
      %v278 = vld [vmem:[%s200 + $0x104] sm:$0xf]
      %v279 = vld [vmem:[%s200 + $0x108] sm:$0xf]
      %v280 = vld [vmem:[%s200 + $0x10c] sm:$0xf]
      %v281 = vld [vmem:[%s200 + $0x110] sm:$0xf]
      %v282 = vld [vmem:[%s200 + $0x114] sm:$0xf]
      %v283 = vld [vmem:[%s200 + $0x118] sm:$0xf]
      %v284 = vld [vmem:[%s200 + $0x11c] sm:$0xf]
      %v285 = vld [vmem:[%s200 + $0x120] sm:$0xf]
      %v286 = vld [vmem:[%s200 + $0x124] sm:$0xf]
      %v287 = vld [vmem:[%s200 + $0x128] sm:$0xf]
      %v288 = vld [vmem:[%s200 + $0x12c] sm:$0xf]
      %v289 = vld [vmem:[%s200 + $0x130] sm:$0xf]
      %v290 = vld [vmem:[%s200 + $0x134] sm:$0xf]
      %v291 = vld [vmem:[%s200 + $0x138] sm:$0xf]
      %v292 = vld [vmem:[%s200 + $0x13c] sm:$0xf]
      %v293 = vld [vmem:[%s200 + $0x140] sm:$0xf]
      %v294 = vld [vmem:[%s200 + $0x144] sm:$0xf]
      %v295 = vld [vmem:[%s200 + $0x148] sm:$0xf]
      %v296 = vld [vmem:[%s200 + $0x14c] sm:$0xf]
      %v297 = vld [vmem:[%s200 + $0x150] sm:$0xf]
      %v298 = vld [vmem:[%s200 + $0x154] sm:$0xf]
      %v299 = vld [vmem:[%s200 + $0x158] sm:$0xf]
      %v300 = vld [vmem:[%s200 + $0x15c] sm:$0xf]
      %v301 = vld [vmem:[%s200 + $0x160] sm:$0xf]
      %v302 = vld [vmem:[%s200 + $0x164] sm:$0xf]
      %v303 = vld [vmem:[%s200 + $0x168] sm:$0xf]
      %v304 = vld [vmem:[%s200 + $0x16c] sm:$0xf]
      %v305 = vld [vmem:[%s200 + $0x170] sm:$0xf]
      %v306 = vld [vmem:[%s200 + $0x174] sm:$0xf]
      %v307 = vld [vmem:[%s200 + $0x178] sm:$0xf]
      %v308 = vld [vmem:[%s200 + $0x17c] sm:$0xf]
      %v309 = vld [vmem:[%s200 + $0x180] sm:$0xf]
      %v310 = vld [vmem:[%s200 + $0x184] sm:$0xf]
      %v311 = vld [vmem:[%s200 + $0x188] sm:$0xf]
      %v312 = vld [vmem:[%s200 + $0x18c] sm:$0xf]
      %v313 = vld [vmem:[%s200 + $0x190] sm:$0xf]
      %v314 = vld [vmem:[%s200 + $0x194] sm:$0xf]
      %v315 = vld [vmem:[%s200 + $0x198] sm:$0xf]
      %v316 = vld [vmem:[%s200 + $0x19c] sm:$0xf]
      %v317 = vld [vmem:[%s200 + $0x1a0] sm:$0xf]
      %v318 = vld [vmem:[%s200 + $0x1a4] sm:$0xf]
      %v319 = vld [vmem:[%s200 + $0x1a8] sm:$0xf]
      %v320 = vld [vmem:[%s200 + $0x1ac] sm:$0xf]
      %v321 = vld [vmem:[%s200 + $0x1b0] sm:$0xf]
      %v322 = vld [vmem:[%s200 + $0x1b4] sm:$0xf]
      %v323 = vld [vmem:[%s200 + $0x1b8] sm:$0xf]
      %v324 = vld [vmem:[%s200 + $0x1bc] sm:$0xf]
      %v325 = vld [vmem:[%s200 + $0x1c0] sm:$0xf]
      %v326 = vld [vmem:[%s200 + $0x1c4] sm:$0xf]
      %v327 = vld [vmem:[%s200 + $0x1c8] sm:$0xf]
      %v328 = vld [vmem:[%s200 + $0x1cc] sm:$0xf]
      %v329 = vld [vmem:[%s200 + $0x1d0] sm:$0xf]
      %v330 = vld [vmem:[%s200 + $0x1d4] sm:$0xf]
      %v331 = vld [vmem:[%s200 + $0x1d8] sm:$0xf]
      %v332 = vld [vmem:[%s200 + $0x1dc] sm:$0xf]
      %v333 = vld [vmem:[%s200 + $0x1e0] sm:$0xf]
      %v334 = vld [vmem:[%s200 + $0x1e4] sm:$0xf]
      %v335 = vld [vmem:[%s200 + $0x1e8] sm:$0xf]
      %v336 = vld [vmem:[%s200 + $0x1ec] sm:$0xf]
      %v337 = vld [vmem:[%s200 + $0x1f0] sm:$0xf]
      %v338 = vld [vmem:[%s200 + $0x1f4] sm:$0xf]
      %v339 = vld [vmem:[%s200 + $0x1f8] sm:$0xf]
      %v340 = vld [vmem:[%s200 + $0x1fc] sm:$0xf]
      %v341 = vld [vmem:[%s1] sm:$0xf]
      %v342 = vld [vmem:[%s1 + $0x4] sm:$0xf]
      %v343 = vld [vmem:[%s1 + $0x8] sm:$0xf]
      %v344 = vld [vmem:[%s1 + $0xc] sm:$0xf]
      %v345 = vld [vmem:[%s2] sm:$0x1]
      %v347 = vlaneseq
      %v348 = vshrl.u32 %v347, 7
      %v349 = vsub.s32 0, %v348
      %v350 = vrot.slane %v345, %v349
      %v480 = vunpack.c.l.b16 %v213
      %v481 = vunpack.c.l.b16 %v214
      %v482 = vunpack.c.l.b16 %v215
      %v483 = vunpack.c.l.b16 %v216
      %v484 = vunpack.c.l.b16 %v217
      %v485 = vunpack.c.l.b16 %v218
      %v486 = vunpack.c.l.b16 %v219
      %v487 = vunpack.c.l.b16 %v220
      %v488 = vunpack.c.l.b16 %v221
      %v489 = vunpack.c.l.b16 %v222
      %v490 = vunpack.c.l.b16 %v223
      %v491 = vunpack.c.l.b16 %v224
      %v492 = vunpack.c.l.b16 %v225
      %v493 = vunpack.c.l.b16 %v226
      %v494 = vunpack.c.l.b16 %v227
      %v495 = vunpack.c.l.b16 %v228
      %v496 = vunpack.c.l.b16 %v229
      %v497 = vunpack.c.l.b16 %v230
      %v498 = vunpack.c.l.b16 %v231
      %v499 = vunpack.c.l.b16 %v232
      %v500 = vunpack.c.l.b16 %v233
      %v501 = vunpack.c.l.b16 %v234
      %v502 = vunpack.c.l.b16 %v235
      %v503 = vunpack.c.l.b16 %v236
      %v504 = vunpack.c.l.b16 %v237
      %v505 = vunpack.c.l.b16 %v238
      %v506 = vunpack.c.l.b16 %v239
      %v507 = vunpack.c.l.b16 %v240
      %v508 = vunpack.c.l.b16 %v241
      %v509 = vunpack.c.l.b16 %v242
      %v510 = vunpack.c.l.b16 %v243
      %v511 = vunpack.c.l.b16 %v244
      %v512 = vunpack.c.l.b16 %v245
      %v513 = vunpack.c.l.b16 %v246
      %v514 = vunpack.c.l.b16 %v247
      %v515 = vunpack.c.l.b16 %v248
      %v516 = vunpack.c.l.b16 %v249
      %v517 = vunpack.c.l.b16 %v250
      %v518 = vunpack.c.l.b16 %v251
      %v519 = vunpack.c.l.b16 %v252
      %v520 = vunpack.c.l.b16 %v253
      %v521 = vunpack.c.l.b16 %v254
      %v522 = vunpack.c.l.b16 %v255
      %v523 = vunpack.c.l.b16 %v256
      %v524 = vunpack.c.l.b16 %v257
      %v525 = vunpack.c.l.b16 %v258
      %v526 = vunpack.c.l.b16 %v259
      %v527 = vunpack.c.l.b16 %v260
      %v528 = vunpack.c.l.b16 %v261
      %v529 = vunpack.c.l.b16 %v262
      %v530 = vunpack.c.l.b16 %v263
      %v531 = vunpack.c.l.b16 %v264
      %v532 = vunpack.c.l.b16 %v265
      %v533 = vunpack.c.l.b16 %v266
      %v534 = vunpack.c.l.b16 %v267
      %v535 = vunpack.c.l.b16 %v268
      %v536 = vunpack.c.l.b16 %v269
      %v537 = vunpack.c.l.b16 %v270
      %v538 = vunpack.c.l.b16 %v271
      %v539 = vunpack.c.l.b16 %v272
      %v540 = vunpack.c.l.b16 %v273
      %v541 = vunpack.c.l.b16 %v274
      %v542 = vunpack.c.l.b16 %v275
      %v543 = vunpack.c.l.b16 %v276
      %v544 = vunpack.c.l.b16 %v277
      %v545 = vunpack.c.l.b16 %v278
      %v546 = vunpack.c.l.b16 %v279
      %v547 = vunpack.c.l.b16 %v280
      %v548 = vunpack.c.l.b16 %v281
      %v549 = vunpack.c.l.b16 %v282
      %v550 = vunpack.c.l.b16 %v283
      %v551 = vunpack.c.l.b16 %v284
      %v552 = vunpack.c.l.b16 %v285
      %v553 = vunpack.c.l.b16 %v286
      %v554 = vunpack.c.l.b16 %v287
      %v555 = vunpack.c.l.b16 %v288
      %v556 = vunpack.c.l.b16 %v289
      %v557 = vunpack.c.l.b16 %v290
      %v558 = vunpack.c.l.b16 %v291
      %v559 = vunpack.c.l.b16 %v292
      %v560 = vunpack.c.l.b16 %v293
      %v561 = vunpack.c.l.b16 %v294
      %v562 = vunpack.c.l.b16 %v295
      %v563 = vunpack.c.l.b16 %v296
      %v564 = vunpack.c.l.b16 %v297
      %v565 = vunpack.c.l.b16 %v298
      %v566 = vunpack.c.l.b16 %v299
      %v567 = vunpack.c.l.b16 %v300
      %v568 = vunpack.c.l.b16 %v301
      %v569 = vunpack.c.l.b16 %v302
      %v570 = vunpack.c.l.b16 %v303
      %v571 = vunpack.c.l.b16 %v304
      %v572 = vunpack.c.l.b16 %v305
      %v573 = vunpack.c.l.b16 %v306
      %v574 = vunpack.c.l.b16 %v307
      %v575 = vunpack.c.l.b16 %v308
      %v576 = vunpack.c.l.b16 %v309
      %v577 = vunpack.c.l.b16 %v310
      %v578 = vunpack.c.l.b16 %v311
      %v579 = vunpack.c.l.b16 %v312
      %v580 = vunpack.c.l.b16 %v313
      %v581 = vunpack.c.l.b16 %v314
      %v582 = vunpack.c.l.b16 %v315
      %v583 = vunpack.c.l.b16 %v316
      %v584 = vunpack.c.l.b16 %v317
      %v585 = vunpack.c.l.b16 %v318
      %v586 = vunpack.c.l.b16 %v319
      %v587 = vunpack.c.l.b16 %v320
      %v588 = vunpack.c.l.b16 %v321
      %v589 = vunpack.c.l.b16 %v322
      %v590 = vunpack.c.l.b16 %v323
      %v591 = vunpack.c.l.b16 %v324
      %v592 = vunpack.c.l.b16 %v325
      %v593 = vunpack.c.l.b16 %v326
      %v594 = vunpack.c.l.b16 %v327
      %v595 = vunpack.c.l.b16 %v328
      %v596 = vunpack.c.l.b16 %v329
      %v597 = vunpack.c.l.b16 %v330
      %v598 = vunpack.c.l.b16 %v331
      %v599 = vunpack.c.l.b16 %v332
      %v600 = vunpack.c.l.b16 %v333
      %v601 = vunpack.c.l.b16 %v334
      %v602 = vunpack.c.l.b16 %v335
      %v603 = vunpack.c.l.b16 %v336
      %v604 = vunpack.c.l.b16 %v337
      %v605 = vunpack.c.l.b16 %v338
      %v606 = vunpack.c.l.b16 %v339
      %v607 = vunpack.c.l.b16 %v340
      %v608 = vpack.c.b16 %v481, %v480
      %v609 = vpack.c.b16 %v483, %v482
      %v610 = vpack.c.b16 %v485, %v484
      %v611 = vpack.c.b16 %v487, %v486
      %v612 = vpack.c.b16 %v489, %v488
      %v613 = vpack.c.b16 %v491, %v490
      %v614 = vpack.c.b16 %v493, %v492
      %v615 = vpack.c.b16 %v495, %v494
      %v616 = vpack.c.b16 %v497, %v496
      %v617 = vpack.c.b16 %v499, %v498
      %v618 = vpack.c.b16 %v501, %v500
      %v619 = vpack.c.b16 %v503, %v502
      %v620 = vpack.c.b16 %v505, %v504
      %v621 = vpack.c.b16 %v507, %v506
      %v622 = vpack.c.b16 %v509, %v508
      %v623 = vpack.c.b16 %v511, %v510
      %v624 = vpack.c.b16 %v513, %v512
      %v625 = vpack.c.b16 %v515, %v514
      %v626 = vpack.c.b16 %v517, %v516
      %v627 = vpack.c.b16 %v519, %v518
      %v628 = vpack.c.b16 %v521, %v520
      %v629 = vpack.c.b16 %v523, %v522
      %v630 = vpack.c.b16 %v525, %v524
      %v631 = vpack.c.b16 %v527, %v526
      %v632 = vpack.c.b16 %v529, %v528
      %v633 = vpack.c.b16 %v531, %v530
      %v634 = vpack.c.b16 %v533, %v532
      %v635 = vpack.c.b16 %v535, %v534
      %v636 = vpack.c.b16 %v537, %v536
      %v637 = vpack.c.b16 %v539, %v538
      %v638 = vpack.c.b16 %v541, %v540
      %v639 = vpack.c.b16 %v543, %v542
      %v640 = vpack.c.b16 %v545, %v544
      %v641 = vpack.c.b16 %v547, %v546
      %v642 = vpack.c.b16 %v549, %v548
      %v643 = vpack.c.b16 %v551, %v550
      %v644 = vpack.c.b16 %v553, %v552
      %v645 = vpack.c.b16 %v555, %v554
      %v646 = vpack.c.b16 %v557, %v556
      %v647 = vpack.c.b16 %v559, %v558
      %v648 = vpack.c.b16 %v561, %v560
      %v649 = vpack.c.b16 %v563, %v562
      %v650 = vpack.c.b16 %v565, %v564
      %v651 = vpack.c.b16 %v567, %v566
      %v652 = vpack.c.b16 %v569, %v568
      %v653 = vpack.c.b16 %v571, %v570
      %v654 = vpack.c.b16 %v573, %v572
      %v655 = vpack.c.b16 %v575, %v574
      %v656 = vpack.c.b16 %v577, %v576
      %v657 = vpack.c.b16 %v579, %v578
      %v658 = vpack.c.b16 %v581, %v580
      %v659 = vpack.c.b16 %v583, %v582
      %v660 = vpack.c.b16 %v585, %v584
      %v661 = vpack.c.b16 %v587, %v586
      %v662 = vpack.c.b16 %v589, %v588
      %v663 = vpack.c.b16 %v591, %v590
      %v664 = vpack.c.b16 %v593, %v592
      %v665 = vpack.c.b16 %v595, %v594
      %v666 = vpack.c.b16 %v597, %v596
      %v667 = vpack.c.b16 %v599, %v598
      %v668 = vpack.c.b16 %v601, %v600
      %v669 = vpack.c.b16 %v603, %v602
      %v670 = vpack.c.b16 %v605, %v604
      %v671 = vpack.c.b16 %v607, %v606
      %v676 = vunpack.c.l.b16 %v341
      %v677 = vunpack.c.l.b16 %v342
      %v678 = vunpack.c.l.b16 %v343
      %v679 = vunpack.c.l.b16 %v344
      %v680 = vpack.c.b16 %v677, %v676
      %v681 = vpack.c.b16 %v679, %v678
      %vm684 = vcmask 261120
      %v686 = vsel %vm684, %v608, 0
      %v689 = vsel %vm684, %v609, 0
      %v692 = vsel %vm684, %v610, 0
      %v695 = vsel %vm684, %v611, 0
      %v698 = vsel %vm684, %v612, 0
      %v701 = vsel %vm684, %v613, 0
      %v704 = vsel %vm684, %v614, 0
      %v707 = vsel %vm684, %v615, 0
      %v710 = vsel %vm684, %v616, 0
      %v713 = vsel %vm684, %v617, 0
      %v716 = vsel %vm684, %v618, 0
      %v719 = vsel %vm684, %v619, 0
      %v722 = vsel %vm684, %v620, 0
      %v725 = vsel %vm684, %v621, 0
      %v728 = vsel %vm684, %v622, 0
      %v731 = vsel %vm684, %v623, 0
      %v734 = vsel %vm684, %v624, 0
      %v737 = vsel %vm684, %v625, 0
      %v740 = vsel %vm684, %v626, 0
      %v743 = vsel %vm684, %v627, 0
      %v746 = vsel %vm684, %v628, 0
      %v749 = vsel %vm684, %v629, 0
      %v752 = vsel %vm684, %v630, 0
      %v755 = vsel %vm684, %v631, 0
      %v758 = vsel %vm684, %v632, 0
      %v761 = vsel %vm684, %v633, 0
      %v764 = vsel %vm684, %v634, 0
      %v767 = vsel %vm684, %v635, 0
      %v770 = vsel %vm684, %v636, 0
      %v773 = vsel %vm684, %v637, 0
      %v776 = vsel %vm684, %v638, 0
      %v779 = vsel %vm684, %v639, 0
      %v782 = vsel %vm684, %v640, 0
      %v785 = vsel %vm684, %v641, 0
      %v788 = vsel %vm684, %v642, 0
      %v791 = vsel %vm684, %v643, 0
      %v794 = vsel %vm684, %v644, 0
      %v797 = vsel %vm684, %v645, 0
      %v800 = vsel %vm684, %v646, 0
      %v803 = vsel %vm684, %v647, 0
      %v806 = vsel %vm684, %v648, 0
      %v809 = vsel %vm684, %v649, 0
      %v812 = vsel %vm684, %v650, 0
      %v815 = vsel %vm684, %v651, 0
      %v818 = vsel %vm684, %v652, 0
      %v821 = vsel %vm684, %v653, 0
      %v824 = vsel %vm684, %v654, 0
      %v827 = vsel %vm684, %v655, 0
      %v830 = vsel %vm684, %v656, 0
      %v833 = vsel %vm684, %v657, 0
      %v836 = vsel %vm684, %v658, 0
      %v839 = vsel %vm684, %v659, 0
      %v842 = vsel %vm684, %v660, 0
      %v845 = vsel %vm684, %v661, 0
      %v848 = vsel %vm684, %v662, 0
      %v851 = vsel %vm684, %v663, 0
      %v854 = vsel %vm684, %v664, 0
      %v857 = vsel %vm684, %v665, 0
      %v860 = vsel %vm684, %v666, 0
      %v863 = vsel %vm684, %v667, 0
      %v866 = vsel %vm684, %v668, 0
      %v869 = vsel %vm684, %v669, 0
      %v872 = vsel %vm684, %v670, 0
      %v875 = vsel %vm684, %v671, 0
      %877 = vmatprep.subr.bf16.mxu0 0
      %878 = vmatpush1.bf16.msra.mxu0 0
      %879 = vmatprep.subr.bf16.mxu0 0
      %880 = vmatpush1.bf16.msra.mxu0 0
      %881 = vmatprep.subr.bf16.mxu0 0
      %882 = vmatpush1.bf16.msra.mxu0 0
      %883 = vmatprep.subr.bf16.mxu0 0
      %884 = vmatpush1.bf16.msra.mxu0 0
      %885 = vmatprep.subr.bf16.mxu0 0
      %886 = vmatpush1.bf16.msra.mxu0 0
      %887 = vmatprep.subr.bf16.mxu0 0
      %888 = vmatpush1.bf16.msra.mxu0 0
      %889 = vmatprep.subr.bf16.mxu0 0
      %890 = vmatpush1.bf16.msra.mxu0 %v681
      %891 = vmatprep.subr.bf16.mxu0 0
      %892 = vmatpush1.bf16.msra.mxu0 %v680
      %893 = vmatprep.subr.bf16.mxu0 0
      %894 = vmatpush2.bf16.msra.mxu0 0
      %895 = vmatprep.subr.bf16.mxu0 0
      %896 = vmatpush2.bf16.msra.mxu0 0
      %897 = vmatprep.subr.bf16.mxu0 0
      %898 = vmatpush2.bf16.msra.mxu0 0
      %899 = vmatprep.subr.bf16.mxu0 0
      %900 = vmatpush2.bf16.msra.mxu0 0
      %901 = vmatprep.subr.bf16.mxu0 0
      %902 = vmatpush2.bf16.msra.mxu0 0
      %903 = vmatprep.subr.bf16.mxu0 0
      %904 = vmatpush2.bf16.msra.mxu0 0
      %905 = vmatprep.subr.bf16.mxu0 0
      %906 = vmatpush2.bf16.msra.mxu0 0
      %907 = vmatprep.subr.bf16.mxu0 0
      %908 = vmatpush2.bf16.msra.mxu0 0
      %909 = vmatprep.mubr.bf16.mxu0 0
      %910 = vmatmul.mubr.bf16.gmra.mxu0 %v686
      %v911 = vpop.f32.mrf.mxu0
      %v912 = vadd.f32 %v350, %v911
      %v913 = vpop.f32.mrf.mxu0
      %v914 = vpop.f32.mrf.mxu0
      %v915 = vadd.f32 %v350, %v914
      %v916 = vpop.f32.mrf.mxu0
      %917 = vmatprep.mubr.bf16.mxu0 0
      %918 = vmatmul.mubr.bf16.gmra.mxu0 %v689
      %v919 = vpop.f32.mrf.mxu0
      %v920 = vadd.f32 %v350, %v919
      %v921 = vpop.f32.mrf.mxu0
      %v922 = vpop.f32.mrf.mxu0
      %v923 = vadd.f32 %v350, %v922
      %v924 = vpop.f32.mrf.mxu0
      %925 = vmatprep.mubr.bf16.mxu0 0
      %926 = vmatmul.mubr.bf16.gmra.mxu0 %v692
      %v927 = vpop.f32.mrf.mxu0
      %v928 = vadd.f32 %v350, %v927
      %v929 = vpop.f32.mrf.mxu0
      %v930 = vpop.f32.mrf.mxu0
      %v931 = vadd.f32 %v350, %v930
      %v932 = vpop.f32.mrf.mxu0
      %933 = vmatprep.mubr.bf16.mxu0 0
      %934 = vmatmul.mubr.bf16.gmra.mxu0 %v695
      %v935 = vpop.f32.mrf.mxu0
      %v936 = vadd.f32 %v350, %v935
      %v937 = vpop.f32.mrf.mxu0
      %v938 = vpop.f32.mrf.mxu0
      %v939 = vadd.f32 %v350, %v938
      %v940 = vpop.f32.mrf.mxu0
      %941 = vmatprep.mubr.bf16.mxu0 0
      %942 = vmatmul.mubr.bf16.gmra.mxu0 %v698
      %v943 = vpop.f32.mrf.mxu0
      %v944 = vadd.f32 %v350, %v943
      %v945 = vpop.f32.mrf.mxu0
      %v946 = vpop.f32.mrf.mxu0
      %v947 = vadd.f32 %v350, %v946
      %v948 = vpop.f32.mrf.mxu0
      %949 = vmatprep.mubr.bf16.mxu0 0
      %950 = vmatmul.mubr.bf16.gmra.mxu0 %v701
      %v951 = vpop.f32.mrf.mxu0
      %v952 = vadd.f32 %v350, %v951
      %v953 = vpop.f32.mrf.mxu0
      %v954 = vpop.f32.mrf.mxu0
      %v955 = vadd.f32 %v350, %v954
      %v956 = vpop.f32.mrf.mxu0
      %957 = vmatprep.mubr.bf16.mxu0 0
      %958 = vmatmul.mubr.bf16.gmra.mxu0 %v704
      %v959 = vpop.f32.mrf.mxu0
      %v960 = vadd.f32 %v350, %v959
      %v961 = vpop.f32.mrf.mxu0
      %v962 = vpop.f32.mrf.mxu0
      %v963 = vadd.f32 %v350, %v962
      %v964 = vpop.f32.mrf.mxu0
      %965 = vmatprep.mubr.bf16.mxu0 0
      %966 = vmatmul.mubr.bf16.gmra.mxu0 %v707
      %v967 = vpop.f32.mrf.mxu0
      %v968 = vadd.f32 %v350, %v967
      %v969 = vpop.f32.mrf.mxu0
      %v970 = vpop.f32.mrf.mxu0
      %v971 = vadd.f32 %v350, %v970
      %v972 = vpop.f32.mrf.mxu0
      %973 = vmatprep.mubr.bf16.mxu0 0
      %974 = vmatmul.mubr.bf16.gmra.mxu0 %v710
      %v975 = vpop.f32.mrf.mxu0
      %v976 = vadd.f32 %v350, %v975
      %v977 = vpop.f32.mrf.mxu0
      %v978 = vpop.f32.mrf.mxu0
      %v979 = vadd.f32 %v350, %v978
      %v980 = vpop.f32.mrf.mxu0
      %981 = vmatprep.mubr.bf16.mxu0 0
      %982 = vmatmul.mubr.bf16.gmra.mxu0 %v713
      %v983 = vpop.f32.mrf.mxu0
      %v984 = vadd.f32 %v350, %v983
      %v985 = vpop.f32.mrf.mxu0
      %v986 = vpop.f32.mrf.mxu0
      %v987 = vadd.f32 %v350, %v986
      %v988 = vpop.f32.mrf.mxu0
      %989 = vmatprep.mubr.bf16.mxu0 0
      %990 = vmatmul.mubr.bf16.gmra.mxu0 %v716
      %v991 = vpop.f32.mrf.mxu0
      %v992 = vadd.f32 %v350, %v991
      %v993 = vpop.f32.mrf.mxu0
      %v994 = vpop.f32.mrf.mxu0
      %v995 = vadd.f32 %v350, %v994
      %v996 = vpop.f32.mrf.mxu0
      %997 = vmatprep.mubr.bf16.mxu0 0
      %998 = vmatmul.mubr.bf16.gmra.mxu0 %v719
      %v999 = vpop.f32.mrf.mxu0
      %v1000 = vadd.f32 %v350, %v999
      %v1001 = vpop.f32.mrf.mxu0
      %v1002 = vpop.f32.mrf.mxu0
      %v1003 = vadd.f32 %v350, %v1002
      %v1004 = vpop.f32.mrf.mxu0
      %1005 = vmatprep.mubr.bf16.mxu0 0
      %1006 = vmatmul.mubr.bf16.gmra.mxu0 %v722
      %v1007 = vpop.f32.mrf.mxu0
      %v1008 = vadd.f32 %v350, %v1007
      %v1009 = vpop.f32.mrf.mxu0
      %v1010 = vpop.f32.mrf.mxu0
      %v1011 = vadd.f32 %v350, %v1010
      %v1012 = vpop.f32.mrf.mxu0
      %1013 = vmatprep.mubr.bf16.mxu0 0
      %1014 = vmatmul.mubr.bf16.gmra.mxu0 %v725
      %v1015 = vpop.f32.mrf.mxu0
      %v1016 = vadd.f32 %v350, %v1015
      %v1017 = vpop.f32.mrf.mxu0
      %v1018 = vpop.f32.mrf.mxu0
      %v1019 = vadd.f32 %v350, %v1018
      %v1020 = vpop.f32.mrf.mxu0
      %1021 = vmatprep.mubr.bf16.mxu0 0
      %1022 = vmatmul.mubr.bf16.gmra.mxu0 %v728
      %v1023 = vpop.f32.mrf.mxu0
      %v1024 = vadd.f32 %v350, %v1023
      %v1025 = vpop.f32.mrf.mxu0
      %v1026 = vpop.f32.mrf.mxu0
      %v1027 = vadd.f32 %v350, %v1026
      %v1028 = vpop.f32.mrf.mxu0
      %1029 = vmatprep.mubr.bf16.mxu0 0
      %1030 = vmatmul.mubr.bf16.gmra.mxu0 %v731
      %v1031 = vpop.f32.mrf.mxu0
      %v1032 = vadd.f32 %v350, %v1031
      %v1033 = vpop.f32.mrf.mxu0
      %v1034 = vpop.f32.mrf.mxu0
      %v1035 = vadd.f32 %v350, %v1034
      %v1036 = vpop.f32.mrf.mxu0
      %1037 = vmatprep.mubr.bf16.mxu0 0
      %1038 = vmatmul.mubr.bf16.gmra.mxu0 %v734
      %v1039 = vpop.f32.mrf.mxu0
      %v1040 = vadd.f32 %v350, %v1039
      %v1041 = vpop.f32.mrf.mxu0
      %v1042 = vpop.f32.mrf.mxu0
      %v1043 = vadd.f32 %v350, %v1042
      %v1044 = vpop.f32.mrf.mxu0
      %1045 = vmatprep.mubr.bf16.mxu0 0
      %1046 = vmatmul.mubr.bf16.gmra.mxu0 %v737
      %v1047 = vpop.f32.mrf.mxu0
      %v1048 = vadd.f32 %v350, %v1047
      %v1049 = vpop.f32.mrf.mxu0
      %v1050 = vpop.f32.mrf.mxu0
      %v1051 = vadd.f32 %v350, %v1050
      %v1052 = vpop.f32.mrf.mxu0
      %1053 = vmatprep.mubr.bf16.mxu0 0
      %1054 = vmatmul.mubr.bf16.gmra.mxu0 %v740
      %v1055 = vpop.f32.mrf.mxu0
      %v1056 = vadd.f32 %v350, %v1055
      %v1057 = vpop.f32.mrf.mxu0
      %v1058 = vpop.f32.mrf.mxu0
      %v1059 = vadd.f32 %v350, %v1058
      %v1060 = vpop.f32.mrf.mxu0
      %1061 = vmatprep.mubr.bf16.mxu0 0
      %1062 = vmatmul.mubr.bf16.gmra.mxu0 %v743
      %v1063 = vpop.f32.mrf.mxu0
      %v1064 = vadd.f32 %v350, %v1063
      %v1065 = vpop.f32.mrf.mxu0
      %v1066 = vpop.f32.mrf.mxu0
      %v1067 = vadd.f32 %v350, %v1066
      %v1068 = vpop.f32.mrf.mxu0
      %1069 = vmatprep.mubr.bf16.mxu0 0
      %1070 = vmatmul.mubr.bf16.gmra.mxu0 %v746
      %v1071 = vpop.f32.mrf.mxu0
      %v1072 = vadd.f32 %v350, %v1071
      %v1073 = vpop.f32.mrf.mxu0
      %v1074 = vpop.f32.mrf.mxu0
      %v1075 = vadd.f32 %v350, %v1074
      %v1076 = vpop.f32.mrf.mxu0
      %1077 = vmatprep.mubr.bf16.mxu0 0
      %1078 = vmatmul.mubr.bf16.gmra.mxu0 %v749
      %v1079 = vpop.f32.mrf.mxu0
      %v1080 = vadd.f32 %v350, %v1079
      %v1081 = vpop.f32.mrf.mxu0
      %v1082 = vpop.f32.mrf.mxu0
      %v1083 = vadd.f32 %v350, %v1082
      %v1084 = vpop.f32.mrf.mxu0
      %1085 = vmatprep.mubr.bf16.mxu0 0
      %1086 = vmatmul.mubr.bf16.gmra.mxu0 %v752
      %v1087 = vpop.f32.mrf.mxu0
      %v1088 = vadd.f32 %v350, %v1087
      %v1089 = vpop.f32.mrf.mxu0
      %v1090 = vpop.f32.mrf.mxu0
      %v1091 = vadd.f32 %v350, %v1090
      %v1092 = vpop.f32.mrf.mxu0
      %1093 = vmatprep.mubr.bf16.mxu0 0
      %1094 = vmatmul.mubr.bf16.gmra.mxu0 %v755
      %v1095 = vpop.f32.mrf.mxu0
      %v1096 = vadd.f32 %v350, %v1095
      %v1097 = vpop.f32.mrf.mxu0
      %v1098 = vpop.f32.mrf.mxu0
      %v1099 = vadd.f32 %v350, %v1098
      %v1100 = vpop.f32.mrf.mxu0
      %1101 = vmatprep.mubr.bf16.mxu0 0
      %1102 = vmatmul.mubr.bf16.gmra.mxu0 %v758
      %v1103 = vpop.f32.mrf.mxu0
      %v1104 = vadd.f32 %v350, %v1103
      %v1105 = vpop.f32.mrf.mxu0
      %v1106 = vpop.f32.mrf.mxu0
      %v1107 = vadd.f32 %v350, %v1106
      %v1108 = vpop.f32.mrf.mxu0
      %1109 = vmatprep.mubr.bf16.mxu0 0
      %1110 = vmatmul.mubr.bf16.gmra.mxu0 %v761
      %v1111 = vpop.f32.mrf.mxu0
      %v1112 = vadd.f32 %v350, %v1111
      %v1113 = vpop.f32.mrf.mxu0
      %v1114 = vpop.f32.mrf.mxu0
      %v1115 = vadd.f32 %v350, %v1114
      %v1116 = vpop.f32.mrf.mxu0
      %1117 = vmatprep.mubr.bf16.mxu0 0
      %1118 = vmatmul.mubr.bf16.gmra.mxu0 %v764
      %v1119 = vpop.f32.mrf.mxu0
      %v1120 = vadd.f32 %v350, %v1119
      %v1121 = vpop.f32.mrf.mxu0
      %v1122 = vpop.f32.mrf.mxu0
      %v1123 = vadd.f32 %v350, %v1122
      %v1124 = vpop.f32.mrf.mxu0
      %1125 = vmatprep.mubr.bf16.mxu0 0
      %1126 = vmatmul.mubr.bf16.gmra.mxu0 %v767
      %v1127 = vpop.f32.mrf.mxu0
      %v1128 = vadd.f32 %v350, %v1127
      %v1129 = vpop.f32.mrf.mxu0
      %v1130 = vpop.f32.mrf.mxu0
      %v1131 = vadd.f32 %v350, %v1130
      %v1132 = vpop.f32.mrf.mxu0
      %1133 = vmatprep.mubr.bf16.mxu0 0
      %1134 = vmatmul.mubr.bf16.gmra.mxu0 %v770
      %v1135 = vpop.f32.mrf.mxu0
      %v1136 = vadd.f32 %v350, %v1135
      %v1137 = vpop.f32.mrf.mxu0
      %v1138 = vpop.f32.mrf.mxu0
      %v1139 = vadd.f32 %v350, %v1138
      %v1140 = vpop.f32.mrf.mxu0
      %1141 = vmatprep.mubr.bf16.mxu0 0
      %1142 = vmatmul.mubr.bf16.gmra.mxu0 %v773
      %v1143 = vpop.f32.mrf.mxu0
      %v1144 = vadd.f32 %v350, %v1143
      %v1145 = vpop.f32.mrf.mxu0
      %v1146 = vpop.f32.mrf.mxu0
      %v1147 = vadd.f32 %v350, %v1146
      %v1148 = vpop.f32.mrf.mxu0
      %1149 = vmatprep.mubr.bf16.mxu0 0
      %1150 = vmatmul.mubr.bf16.gmra.mxu0 %v776
      %v1151 = vpop.f32.mrf.mxu0
      %v1152 = vadd.f32 %v350, %v1151
      %v1153 = vpop.f32.mrf.mxu0
      %v1154 = vpop.f32.mrf.mxu0
      %v1155 = vadd.f32 %v350, %v1154
      %v1156 = vpop.f32.mrf.mxu0
      %1157 = vmatprep.mubr.bf16.mxu0 0
      %1158 = vmatmul.mubr.bf16.gmra.mxu0 %v779
      %v1159 = vpop.f32.mrf.mxu0
      %v1160 = vadd.f32 %v350, %v1159
      %v1161 = vpop.f32.mrf.mxu0
      %v1162 = vpop.f32.mrf.mxu0
      %v1163 = vadd.f32 %v350, %v1162
      %v1164 = vpop.f32.mrf.mxu0
      %1165 = vmatprep.mubr.bf16.mxu0 0
      %1166 = vmatmul.mubr.bf16.gmra.mxu0 %v782
      %v1167 = vpop.f32.mrf.mxu0
      %v1168 = vadd.f32 %v350, %v1167
      %v1169 = vpop.f32.mrf.mxu0
      %v1170 = vpop.f32.mrf.mxu0
      %v1171 = vadd.f32 %v350, %v1170
      %v1172 = vpop.f32.mrf.mxu0
      %1173 = vmatprep.mubr.bf16.mxu0 0
      %1174 = vmatmul.mubr.bf16.gmra.mxu0 %v785
      %v1175 = vpop.f32.mrf.mxu0
      %v1176 = vadd.f32 %v350, %v1175
      %v1177 = vpop.f32.mrf.mxu0
      %v1178 = vpop.f32.mrf.mxu0
      %v1179 = vadd.f32 %v350, %v1178
      %v1180 = vpop.f32.mrf.mxu0
      %1181 = vmatprep.mubr.bf16.mxu0 0
      %1182 = vmatmul.mubr.bf16.gmra.mxu0 %v788
      %v1183 = vpop.f32.mrf.mxu0
      %v1184 = vadd.f32 %v350, %v1183
      %v1185 = vpop.f32.mrf.mxu0
      %v1186 = vpop.f32.mrf.mxu0
      %v1187 = vadd.f32 %v350, %v1186
      %v1188 = vpop.f32.mrf.mxu0
      %1189 = vmatprep.mubr.bf16.mxu0 0
      %1190 = vmatmul.mubr.bf16.gmra.mxu0 %v791
      %v1191 = vpop.f32.mrf.mxu0
      %v1192 = vadd.f32 %v350, %v1191
      %v1193 = vpop.f32.mrf.mxu0
      %v1194 = vpop.f32.mrf.mxu0
      %v1195 = vadd.f32 %v350, %v1194
      %v1196 = vpop.f32.mrf.mxu0
      %1197 = vmatprep.mubr.bf16.mxu0 0
      %1198 = vmatmul.mubr.bf16.gmra.mxu0 %v794
      %v1199 = vpop.f32.mrf.mxu0
      %v1200 = vadd.f32 %v350, %v1199
      %v1201 = vpop.f32.mrf.mxu0
      %v1202 = vpop.f32.mrf.mxu0
      %v1203 = vadd.f32 %v350, %v1202
      %v1204 = vpop.f32.mrf.mxu0
      %1205 = vmatprep.mubr.bf16.mxu0 0
      %1206 = vmatmul.mubr.bf16.gmra.mxu0 %v797
      %v1207 = vpop.f32.mrf.mxu0
      %v1208 = vadd.f32 %v350, %v1207
      %v1209 = vpop.f32.mrf.mxu0
      %v1210 = vpop.f32.mrf.mxu0
      %v1211 = vadd.f32 %v350, %v1210
      %v1212 = vpop.f32.mrf.mxu0
      %1213 = vmatprep.mubr.bf16.mxu0 0
      %1214 = vmatmul.mubr.bf16.gmra.mxu0 %v800
      %v1215 = vpop.f32.mrf.mxu0
      %v1216 = vadd.f32 %v350, %v1215
      %v1217 = vpop.f32.mrf.mxu0
      %v1218 = vpop.f32.mrf.mxu0
      %v1219 = vadd.f32 %v350, %v1218
      %v1220 = vpop.f32.mrf.mxu0
      %1221 = vmatprep.mubr.bf16.mxu0 0
      %1222 = vmatmul.mubr.bf16.gmra.mxu0 %v803
      %v1223 = vpop.f32.mrf.mxu0
      %v1224 = vadd.f32 %v350, %v1223
      %v1225 = vpop.f32.mrf.mxu0
      %v1226 = vpop.f32.mrf.mxu0
      %v1227 = vadd.f32 %v350, %v1226
      %v1228 = vpop.f32.mrf.mxu0
      %1229 = vmatprep.mubr.bf16.mxu0 0
      %1230 = vmatmul.mubr.bf16.gmra.mxu0 %v806
      %v1231 = vpop.f32.mrf.mxu0
      %v1232 = vadd.f32 %v350, %v1231
      %v1233 = vpop.f32.mrf.mxu0
      %v1234 = vpop.f32.mrf.mxu0
      %v1235 = vadd.f32 %v350, %v1234
      %v1236 = vpop.f32.mrf.mxu0
      %1237 = vmatprep.mubr.bf16.mxu0 0
      %1238 = vmatmul.mubr.bf16.gmra.mxu0 %v809
      %v1239 = vpop.f32.mrf.mxu0
      %v1240 = vadd.f32 %v350, %v1239
      %v1241 = vpop.f32.mrf.mxu0
      %v1242 = vpop.f32.mrf.mxu0
      %v1243 = vadd.f32 %v350, %v1242
      %v1244 = vpop.f32.mrf.mxu0
      %1245 = vmatprep.mubr.bf16.mxu0 0
      %1246 = vmatmul.mubr.bf16.gmra.mxu0 %v812
      %v1247 = vpop.f32.mrf.mxu0
      %v1248 = vadd.f32 %v350, %v1247
      %v1249 = vpop.f32.mrf.mxu0
      %v1250 = vpop.f32.mrf.mxu0
      %v1251 = vadd.f32 %v350, %v1250
      %v1252 = vpop.f32.mrf.mxu0
      %1253 = vmatprep.mubr.bf16.mxu0 0
      %1254 = vmatmul.mubr.bf16.gmra.mxu0 %v815
      %v1255 = vpop.f32.mrf.mxu0
      %v1256 = vadd.f32 %v350, %v1255
      %v1257 = vpop.f32.mrf.mxu0
      %v1258 = vpop.f32.mrf.mxu0
      %v1259 = vadd.f32 %v350, %v1258
      %v1260 = vpop.f32.mrf.mxu0
      %1261 = vmatprep.mubr.bf16.mxu0 0
      %1262 = vmatmul.mubr.bf16.gmra.mxu0 %v818
      %v1263 = vpop.f32.mrf.mxu0
      %v1264 = vadd.f32 %v350, %v1263
      %v1265 = vpop.f32.mrf.mxu0
      %v1266 = vpop.f32.mrf.mxu0
      %v1267 = vadd.f32 %v350, %v1266
      %v1268 = vpop.f32.mrf.mxu0
      %1269 = vmatprep.mubr.bf16.mxu0 0
      %1270 = vmatmul.mubr.bf16.gmra.mxu0 %v821
      %v1271 = vpop.f32.mrf.mxu0
      %v1272 = vadd.f32 %v350, %v1271
      %v1273 = vpop.f32.mrf.mxu0
      %v1274 = vpop.f32.mrf.mxu0
      %v1275 = vadd.f32 %v350, %v1274
      %v1276 = vpop.f32.mrf.mxu0
      %1277 = vmatprep.mubr.bf16.mxu0 0
      %1278 = vmatmul.mubr.bf16.gmra.mxu0 %v824
      %v1279 = vpop.f32.mrf.mxu0
      %v1280 = vadd.f32 %v350, %v1279
      %v1281 = vpop.f32.mrf.mxu0
      %v1282 = vpop.f32.mrf.mxu0
      %v1283 = vadd.f32 %v350, %v1282
      %v1284 = vpop.f32.mrf.mxu0
      %1285 = vmatprep.mubr.bf16.mxu0 0
      %1286 = vmatmul.mubr.bf16.gmra.mxu0 %v827
      %v1287 = vpop.f32.mrf.mxu0
      %v1288 = vadd.f32 %v350, %v1287
      %v1289 = vpop.f32.mrf.mxu0
      %v1290 = vpop.f32.mrf.mxu0
      %v1291 = vadd.f32 %v350, %v1290
      %v1292 = vpop.f32.mrf.mxu0
      %1293 = vmatprep.mubr.bf16.mxu0 0
      %1294 = vmatmul.mubr.bf16.gmra.mxu0 %v830
      %v1295 = vpop.f32.mrf.mxu0
      %v1296 = vadd.f32 %v350, %v1295
      %v1297 = vpop.f32.mrf.mxu0
      %v1298 = vpop.f32.mrf.mxu0
      %v1299 = vadd.f32 %v350, %v1298
      %v1300 = vpop.f32.mrf.mxu0
      %1301 = vmatprep.mubr.bf16.mxu0 0
      %1302 = vmatmul.mubr.bf16.gmra.mxu0 %v833
      %v1303 = vpop.f32.mrf.mxu0
      %v1304 = vadd.f32 %v350, %v1303
      %v1305 = vpop.f32.mrf.mxu0
      %v1306 = vpop.f32.mrf.mxu0
      %v1307 = vadd.f32 %v350, %v1306
      %v1308 = vpop.f32.mrf.mxu0
      %1309 = vmatprep.mubr.bf16.mxu0 0
      %1310 = vmatmul.mubr.bf16.gmra.mxu0 %v836
      %v1311 = vpop.f32.mrf.mxu0
      %v1312 = vadd.f32 %v350, %v1311
      %v1313 = vpop.f32.mrf.mxu0
      %v1314 = vpop.f32.mrf.mxu0
      %v1315 = vadd.f32 %v350, %v1314
      %v1316 = vpop.f32.mrf.mxu0
      %1317 = vmatprep.mubr.bf16.mxu0 0
      %1318 = vmatmul.mubr.bf16.gmra.mxu0 %v839
      %v1319 = vpop.f32.mrf.mxu0
      %v1320 = vadd.f32 %v350, %v1319
      %v1321 = vpop.f32.mrf.mxu0
      %v1322 = vpop.f32.mrf.mxu0
      %v1323 = vadd.f32 %v350, %v1322
      %v1324 = vpop.f32.mrf.mxu0
      %1325 = vmatprep.mubr.bf16.mxu0 0
      %1326 = vmatmul.mubr.bf16.gmra.mxu0 %v842
      %v1327 = vpop.f32.mrf.mxu0
      %v1328 = vadd.f32 %v350, %v1327
      %v1329 = vpop.f32.mrf.mxu0
      %v1330 = vpop.f32.mrf.mxu0
      %v1331 = vadd.f32 %v350, %v1330
      %v1332 = vpop.f32.mrf.mxu0
      %1333 = vmatprep.mubr.bf16.mxu0 0
      %1334 = vmatmul.mubr.bf16.gmra.mxu0 %v845
      %v1335 = vpop.f32.mrf.mxu0
      %v1336 = vadd.f32 %v350, %v1335
      %v1337 = vpop.f32.mrf.mxu0
      %v1338 = vpop.f32.mrf.mxu0
      %v1339 = vadd.f32 %v350, %v1338
      %v1340 = vpop.f32.mrf.mxu0
      %1341 = vmatprep.mubr.bf16.mxu0 0
      %1342 = vmatmul.mubr.bf16.gmra.mxu0 %v848
      %v1343 = vpop.f32.mrf.mxu0
      %v1344 = vadd.f32 %v350, %v1343
      %v1345 = vpop.f32.mrf.mxu0
      %v1346 = vpop.f32.mrf.mxu0
      %v1347 = vadd.f32 %v350, %v1346
      %v1348 = vpop.f32.mrf.mxu0
      %1349 = vmatprep.mubr.bf16.mxu0 0
      %1350 = vmatmul.mubr.bf16.gmra.mxu0 %v851
      %v1351 = vpop.f32.mrf.mxu0
      %v1352 = vadd.f32 %v350, %v1351
      %v1353 = vpop.f32.mrf.mxu0
      %v1354 = vpop.f32.mrf.mxu0
      %v1355 = vadd.f32 %v350, %v1354
      %v1356 = vpop.f32.mrf.mxu0
      %1357 = vmatprep.mubr.bf16.mxu0 0
      %1358 = vmatmul.mubr.bf16.gmra.mxu0 %v854
      %v1359 = vpop.f32.mrf.mxu0
      %v1360 = vadd.f32 %v350, %v1359
      %v1361 = vpop.f32.mrf.mxu0
      %v1362 = vpop.f32.mrf.mxu0
      %v1363 = vadd.f32 %v350, %v1362
      %v1364 = vpop.f32.mrf.mxu0
      %1365 = vmatprep.mubr.bf16.mxu0 0
      %1366 = vmatmul.mubr.bf16.gmra.mxu0 %v857
      %v1367 = vpop.f32.mrf.mxu0
      %v1368 = vadd.f32 %v350, %v1367
      %v1369 = vpop.f32.mrf.mxu0
      %v1370 = vpop.f32.mrf.mxu0
      %v1371 = vadd.f32 %v350, %v1370
      %v1372 = vpop.f32.mrf.mxu0
      %1373 = vmatprep.mubr.bf16.mxu0 0
      %1374 = vmatmul.mubr.bf16.gmra.mxu0 %v860
      %v1375 = vpop.f32.mrf.mxu0
      %v1376 = vadd.f32 %v350, %v1375
      %v1377 = vpop.f32.mrf.mxu0
      %v1378 = vpop.f32.mrf.mxu0
      %v1379 = vadd.f32 %v350, %v1378
      %v1380 = vpop.f32.mrf.mxu0
      %1381 = vmatprep.mubr.bf16.mxu0 0
      %1382 = vmatmul.mubr.bf16.gmra.mxu0 %v863
      %v1383 = vpop.f32.mrf.mxu0
      %v1384 = vadd.f32 %v350, %v1383
      %v1385 = vpop.f32.mrf.mxu0
      %v1386 = vpop.f32.mrf.mxu0
      %v1387 = vadd.f32 %v350, %v1386
      %v1388 = vpop.f32.mrf.mxu0
      %1389 = vmatprep.mubr.bf16.mxu0 0
      %1390 = vmatmul.mubr.bf16.gmra.mxu0 %v866
      %v1391 = vpop.f32.mrf.mxu0
      %v1392 = vadd.f32 %v350, %v1391
      %v1393 = vpop.f32.mrf.mxu0
      %v1394 = vpop.f32.mrf.mxu0
      %v1395 = vadd.f32 %v350, %v1394
      %v1396 = vpop.f32.mrf.mxu0
      %1397 = vmatprep.mubr.bf16.mxu0 0
      %1398 = vmatmul.mubr.bf16.gmra.mxu0 %v869
      %v1399 = vpop.f32.mrf.mxu0
      %v1400 = vadd.f32 %v350, %v1399
      %v1401 = vpop.f32.mrf.mxu0
      %v1402 = vpop.f32.mrf.mxu0
      %v1403 = vadd.f32 %v350, %v1402
      %v1404 = vpop.f32.mrf.mxu0
      %1405 = vmatprep.mubr.bf16.mxu0 0
      %1406 = vmatmul.mubr.bf16.gmra.mxu0 %v872
      %v1407 = vpop.f32.mrf.mxu0
      %v1408 = vadd.f32 %v350, %v1407
      %v1409 = vpop.f32.mrf.mxu0
      %v1410 = vpop.f32.mrf.mxu0
      %v1411 = vadd.f32 %v350, %v1410
      %v1412 = vpop.f32.mrf.mxu0
      %1413 = vmatprep.mubr.bf16.mxu0 0
      %1414 = vmatmul.mubr.bf16.gmra.mxu0 %v875
      %v1415 = vpop.f32.mrf.mxu0
      %v1416 = vadd.f32 %v350, %v1415
      %v1417 = vpop.f32.mrf.mxu0
      %v1418 = vpop.f32.mrf.mxu0
      %v1419 = vadd.f32 %v350, %v1418
      %v1420 = vpop.f32.mrf.mxu0
      %1421 = vdwg.mxu0
      %v1422 = vpack.c.bf16 %v915, %v912
      %v1423 = vpack.c.bf16 %v923, %v920
      %v1424 = vpack.c.bf16 %v931, %v928
      %v1425 = vpack.c.bf16 %v939, %v936
      %v1426 = vpack.c.bf16 %v947, %v944
      %v1427 = vpack.c.bf16 %v955, %v952
      %v1428 = vpack.c.bf16 %v963, %v960
      %v1429 = vpack.c.bf16 %v971, %v968
      %v1430 = vpack.c.bf16 %v979, %v976
      %v1431 = vpack.c.bf16 %v987, %v984
      %v1432 = vpack.c.bf16 %v995, %v992
      %v1433 = vpack.c.bf16 %v1003, %v1000
      %v1434 = vpack.c.bf16 %v1011, %v1008
      %v1435 = vpack.c.bf16 %v1019, %v1016
      %v1436 = vpack.c.bf16 %v1027, %v1024
      %v1437 = vpack.c.bf16 %v1035, %v1032
      %v1438 = vpack.c.bf16 %v1043, %v1040
      %v1439 = vpack.c.bf16 %v1051, %v1048
      %v1440 = vpack.c.bf16 %v1059, %v1056
      %v1441 = vpack.c.bf16 %v1067, %v1064
      %v1442 = vpack.c.bf16 %v1075, %v1072
      %v1443 = vpack.c.bf16 %v1083, %v1080
      %v1444 = vpack.c.bf16 %v1091, %v1088
      %v1445 = vpack.c.bf16 %v1099, %v1096
      %v1446 = vpack.c.bf16 %v1107, %v1104
      %v1447 = vpack.c.bf16 %v1115, %v1112
      %v1448 = vpack.c.bf16 %v1123, %v1120
      %v1449 = vpack.c.bf16 %v1131, %v1128
      %v1450 = vpack.c.bf16 %v1139, %v1136
      %v1451 = vpack.c.bf16 %v1147, %v1144
      %v1452 = vpack.c.bf16 %v1155, %v1152
      %v1453 = vpack.c.bf16 %v1163, %v1160
      %v1454 = vpack.c.bf16 %v1171, %v1168
      %v1455 = vpack.c.bf16 %v1179, %v1176
      %v1456 = vpack.c.bf16 %v1187, %v1184
      %v1457 = vpack.c.bf16 %v1195, %v1192
      %v1458 = vpack.c.bf16 %v1203, %v1200
      %v1459 = vpack.c.bf16 %v1211, %v1208
      %v1460 = vpack.c.bf16 %v1219, %v1216
      %v1461 = vpack.c.bf16 %v1227, %v1224
      %v1462 = vpack.c.bf16 %v1235, %v1232
      %v1463 = vpack.c.bf16 %v1243, %v1240
      %v1464 = vpack.c.bf16 %v1251, %v1248
      %v1465 = vpack.c.bf16 %v1259, %v1256
      %v1466 = vpack.c.bf16 %v1267, %v1264
      %v1467 = vpack.c.bf16 %v1275, %v1272
      %v1468 = vpack.c.bf16 %v1283, %v1280
      %v1469 = vpack.c.bf16 %v1291, %v1288
      %v1470 = vpack.c.bf16 %v1299, %v1296
      %v1471 = vpack.c.bf16 %v1307, %v1304
      %v1472 = vpack.c.bf16 %v1315, %v1312
      %v1473 = vpack.c.bf16 %v1323, %v1320
      %v1474 = vpack.c.bf16 %v1331, %v1328
      %v1475 = vpack.c.bf16 %v1339, %v1336
      %v1476 = vpack.c.bf16 %v1347, %v1344
      %v1477 = vpack.c.bf16 %v1355, %v1352
      %v1478 = vpack.c.bf16 %v1363, %v1360
      %v1479 = vpack.c.bf16 %v1371, %v1368
      %v1480 = vpack.c.bf16 %v1379, %v1376
      %v1481 = vpack.c.bf16 %v1387, %v1384
      %v1482 = vpack.c.bf16 %v1395, %v1392
      %v1483 = vpack.c.bf16 %v1403, %v1400
      %v1484 = vpack.c.bf16 %v1411, %v1408
      %v1485 = vpack.c.bf16 %v1419, %v1416
      %v1550 = vunpack.c.l.b16 %v1422
      %v1551 = vunpack.c.h.b16 %v1422
      %v1552 = vunpack.c.l.b16 %v1423
      %v1553 = vunpack.c.h.b16 %v1423
      %v1554 = vunpack.c.l.b16 %v1424
      %v1555 = vunpack.c.h.b16 %v1424
      %v1556 = vunpack.c.l.b16 %v1425
      %v1557 = vunpack.c.h.b16 %v1425
      %v1558 = vunpack.c.l.b16 %v1426
      %v1559 = vunpack.c.h.b16 %v1426
      %v1560 = vunpack.c.l.b16 %v1427
      %v1561 = vunpack.c.h.b16 %v1427
      %v1562 = vunpack.c.l.b16 %v1428
      %v1563 = vunpack.c.h.b16 %v1428
      %v1564 = vunpack.c.l.b16 %v1429
      %v1565 = vunpack.c.h.b16 %v1429
      %v1566 = vunpack.c.l.b16 %v1430
      %v1567 = vunpack.c.h.b16 %v1430
      %v1568 = vunpack.c.l.b16 %v1431
      %v1569 = vunpack.c.h.b16 %v1431
      %v1570 = vunpack.c.l.b16 %v1432
      %v1571 = vunpack.c.h.b16 %v1432
      %v1572 = vunpack.c.l.b16 %v1433
      %v1573 = vunpack.c.h.b16 %v1433
      %v1574 = vunpack.c.l.b16 %v1434
      %v1575 = vunpack.c.h.b16 %v1434
      %v1576 = vunpack.c.l.b16 %v1435
      %v1577 = vunpack.c.h.b16 %v1435
      %v1578 = vunpack.c.l.b16 %v1436
      %v1579 = vunpack.c.h.b16 %v1436
      %v1580 = vunpack.c.l.b16 %v1437
      %v1581 = vunpack.c.h.b16 %v1437
      %v1582 = vunpack.c.l.b16 %v1438
      %v1583 = vunpack.c.h.b16 %v1438
      %v1584 = vunpack.c.l.b16 %v1439
      %v1585 = vunpack.c.h.b16 %v1439
      %v1586 = vunpack.c.l.b16 %v1440
      %v1587 = vunpack.c.h.b16 %v1440
      %v1588 = vunpack.c.l.b16 %v1441
      %v1589 = vunpack.c.h.b16 %v1441
      %v1590 = vunpack.c.l.b16 %v1442
      %v1591 = vunpack.c.h.b16 %v1442
      %v1592 = vunpack.c.l.b16 %v1443
      %v1593 = vunpack.c.h.b16 %v1443
      %v1594 = vunpack.c.l.b16 %v1444
      %v1595 = vunpack.c.h.b16 %v1444
      %v1596 = vunpack.c.l.b16 %v1445
      %v1597 = vunpack.c.h.b16 %v1445
      %v1598 = vunpack.c.l.b16 %v1446
      %v1599 = vunpack.c.h.b16 %v1446
      %v1600 = vunpack.c.l.b16 %v1447
      %v1601 = vunpack.c.h.b16 %v1447
      %v1602 = vunpack.c.l.b16 %v1448
      %v1603 = vunpack.c.h.b16 %v1448
      %v1604 = vunpack.c.l.b16 %v1449
      %v1605 = vunpack.c.h.b16 %v1449
      %v1606 = vunpack.c.l.b16 %v1450
      %v1607 = vunpack.c.h.b16 %v1450
      %v1608 = vunpack.c.l.b16 %v1451
      %v1609 = vunpack.c.h.b16 %v1451
      %v1610 = vunpack.c.l.b16 %v1452
      %v1611 = vunpack.c.h.b16 %v1452
      %v1612 = vunpack.c.l.b16 %v1453
      %v1613 = vunpack.c.h.b16 %v1453
      %v1614 = vunpack.c.l.b16 %v1454
      %v1615 = vunpack.c.h.b16 %v1454
      %v1616 = vunpack.c.l.b16 %v1455
      %v1617 = vunpack.c.h.b16 %v1455
      %v1618 = vunpack.c.l.b16 %v1456
      %v1619 = vunpack.c.h.b16 %v1456
      %v1620 = vunpack.c.l.b16 %v1457
      %v1621 = vunpack.c.h.b16 %v1457
      %v1622 = vunpack.c.l.b16 %v1458
      %v1623 = vunpack.c.h.b16 %v1458
      %v1624 = vunpack.c.l.b16 %v1459
      %v1625 = vunpack.c.h.b16 %v1459
      %v1626 = vunpack.c.l.b16 %v1460
      %v1627 = vunpack.c.h.b16 %v1460
      %v1628 = vunpack.c.l.b16 %v1461
      %v1629 = vunpack.c.h.b16 %v1461
      %v1630 = vunpack.c.l.b16 %v1462
      %v1631 = vunpack.c.h.b16 %v1462
      %v1632 = vunpack.c.l.b16 %v1463
      %v1633 = vunpack.c.h.b16 %v1463
      %v1634 = vunpack.c.l.b16 %v1464
      %v1635 = vunpack.c.h.b16 %v1464
      %v1636 = vunpack.c.l.b16 %v1465
      %v1637 = vunpack.c.h.b16 %v1465
      %v1638 = vunpack.c.l.b16 %v1466
      %v1639 = vunpack.c.h.b16 %v1466
      %v1640 = vunpack.c.l.b16 %v1467
      %v1641 = vunpack.c.h.b16 %v1467
      %v1642 = vunpack.c.l.b16 %v1468
      %v1643 = vunpack.c.h.b16 %v1468
      %v1644 = vunpack.c.l.b16 %v1469
      %v1645 = vunpack.c.h.b16 %v1469
      %v1646 = vunpack.c.l.b16 %v1470
      %v1647 = vunpack.c.h.b16 %v1470
      %v1648 = vunpack.c.l.b16 %v1471
      %v1649 = vunpack.c.h.b16 %v1471
      %v1650 = vunpack.c.l.b16 %v1472
      %v1651 = vunpack.c.h.b16 %v1472
      %v1652 = vunpack.c.l.b16 %v1473
      %v1653 = vunpack.c.h.b16 %v1473
      %v1654 = vunpack.c.l.b16 %v1474
      %v1655 = vunpack.c.h.b16 %v1474
      %v1656 = vunpack.c.l.b16 %v1475
      %v1657 = vunpack.c.h.b16 %v1475
      %v1658 = vunpack.c.l.b16 %v1476
      %v1659 = vunpack.c.h.b16 %v1476
      %v1660 = vunpack.c.l.b16 %v1477
      %v1661 = vunpack.c.h.b16 %v1477
      %v1662 = vunpack.c.l.b16 %v1478
      %v1663 = vunpack.c.h.b16 %v1478
      %v1664 = vunpack.c.l.b16 %v1479
      %v1665 = vunpack.c.h.b16 %v1479
      %v1666 = vunpack.c.l.b16 %v1480
      %v1667 = vunpack.c.h.b16 %v1480
      %v1668 = vunpack.c.l.b16 %v1481
      %v1669 = vunpack.c.h.b16 %v1481
      %v1670 = vunpack.c.l.b16 %v1482
      %v1671 = vunpack.c.h.b16 %v1482
      %v1672 = vunpack.c.l.b16 %v1483
      %v1673 = vunpack.c.h.b16 %v1483
      %v1674 = vunpack.c.l.b16 %v1484
      %v1675 = vunpack.c.h.b16 %v1484
      %v1676 = vunpack.c.l.b16 %v1485
      %v1677 = vunpack.c.h.b16 %v1485
      %v1678 = vpack.c.b16 %v1550, %v1550
      %v1679 = vpack.c.b16 %v1551, %v1551
      %v1680 = vpack.c.b16 %v1552, %v1552
      %v1681 = vpack.c.b16 %v1553, %v1553
      %v1682 = vpack.c.b16 %v1554, %v1554
      %v1683 = vpack.c.b16 %v1555, %v1555
      %v1684 = vpack.c.b16 %v1556, %v1556
      %v1685 = vpack.c.b16 %v1557, %v1557
      %v1686 = vpack.c.b16 %v1558, %v1558
      %v1687 = vpack.c.b16 %v1559, %v1559
      %v1688 = vpack.c.b16 %v1560, %v1560
      %v1689 = vpack.c.b16 %v1561, %v1561
      %v1690 = vpack.c.b16 %v1562, %v1562
      %v1691 = vpack.c.b16 %v1563, %v1563
      %v1692 = vpack.c.b16 %v1564, %v1564
      %v1693 = vpack.c.b16 %v1565, %v1565
      %v1694 = vpack.c.b16 %v1566, %v1566
      %v1695 = vpack.c.b16 %v1567, %v1567
      %v1696 = vpack.c.b16 %v1568, %v1568
      %v1697 = vpack.c.b16 %v1569, %v1569
      %v1698 = vpack.c.b16 %v1570, %v1570
      %v1699 = vpack.c.b16 %v1571, %v1571
      %v1700 = vpack.c.b16 %v1572, %v1572
      %v1701 = vpack.c.b16 %v1573, %v1573
      %v1702 = vpack.c.b16 %v1574, %v1574
      %v1703 = vpack.c.b16 %v1575, %v1575
      %v1704 = vpack.c.b16 %v1576, %v1576
      %v1705 = vpack.c.b16 %v1577, %v1577
      %v1706 = vpack.c.b16 %v1578, %v1578
      %v1707 = vpack.c.b16 %v1579, %v1579
      %v1708 = vpack.c.b16 %v1580, %v1580
      %v1709 = vpack.c.b16 %v1581, %v1581
      %v1710 = vpack.c.b16 %v1582, %v1582
      %v1711 = vpack.c.b16 %v1583, %v1583
      %v1712 = vpack.c.b16 %v1584, %v1584
      %v1713 = vpack.c.b16 %v1585, %v1585
      %v1714 = vpack.c.b16 %v1586, %v1586
      %v1715 = vpack.c.b16 %v1587, %v1587
      %v1716 = vpack.c.b16 %v1588, %v1588
      %v1717 = vpack.c.b16 %v1589, %v1589
      %v1718 = vpack.c.b16 %v1590, %v1590
      %v1719 = vpack.c.b16 %v1591, %v1591
      %v1720 = vpack.c.b16 %v1592, %v1592
      %v1721 = vpack.c.b16 %v1593, %v1593
      %v1722 = vpack.c.b16 %v1594, %v1594
      %v1723 = vpack.c.b16 %v1595, %v1595
      %v1724 = vpack.c.b16 %v1596, %v1596
      %v1725 = vpack.c.b16 %v1597, %v1597
      %v1726 = vpack.c.b16 %v1598, %v1598
      %v1727 = vpack.c.b16 %v1599, %v1599
      %v1728 = vpack.c.b16 %v1600, %v1600
      %v1729 = vpack.c.b16 %v1601, %v1601
      %v1730 = vpack.c.b16 %v1602, %v1602
      %v1731 = vpack.c.b16 %v1603, %v1603
      %v1732 = vpack.c.b16 %v1604, %v1604
      %v1733 = vpack.c.b16 %v1605, %v1605
      %v1734 = vpack.c.b16 %v1606, %v1606
      %v1735 = vpack.c.b16 %v1607, %v1607
      %v1736 = vpack.c.b16 %v1608, %v1608
      %v1737 = vpack.c.b16 %v1609, %v1609
      %v1738 = vpack.c.b16 %v1610, %v1610
      %v1739 = vpack.c.b16 %v1611, %v1611
      %v1740 = vpack.c.b16 %v1612, %v1612
      %v1741 = vpack.c.b16 %v1613, %v1613
      %v1742 = vpack.c.b16 %v1614, %v1614
      %v1743 = vpack.c.b16 %v1615, %v1615
      %v1744 = vpack.c.b16 %v1616, %v1616
      %v1745 = vpack.c.b16 %v1617, %v1617
      %v1746 = vpack.c.b16 %v1618, %v1618
      %v1747 = vpack.c.b16 %v1619, %v1619
      %v1748 = vpack.c.b16 %v1620, %v1620
      %v1749 = vpack.c.b16 %v1621, %v1621
      %v1750 = vpack.c.b16 %v1622, %v1622
      %v1751 = vpack.c.b16 %v1623, %v1623
      %v1752 = vpack.c.b16 %v1624, %v1624
      %v1753 = vpack.c.b16 %v1625, %v1625
      %v1754 = vpack.c.b16 %v1626, %v1626
      %v1755 = vpack.c.b16 %v1627, %v1627
      %v1756 = vpack.c.b16 %v1628, %v1628
      %v1757 = vpack.c.b16 %v1629, %v1629
      %v1758 = vpack.c.b16 %v1630, %v1630
      %v1759 = vpack.c.b16 %v1631, %v1631
      %v1760 = vpack.c.b16 %v1632, %v1632
      %v1761 = vpack.c.b16 %v1633, %v1633
      %v1762 = vpack.c.b16 %v1634, %v1634
      %v1763 = vpack.c.b16 %v1635, %v1635
      %v1764 = vpack.c.b16 %v1636, %v1636
      %v1765 = vpack.c.b16 %v1637, %v1637
      %v1766 = vpack.c.b16 %v1638, %v1638
      %v1767 = vpack.c.b16 %v1639, %v1639
      %v1768 = vpack.c.b16 %v1640, %v1640
      %v1769 = vpack.c.b16 %v1641, %v1641
      %v1770 = vpack.c.b16 %v1642, %v1642
      %v1771 = vpack.c.b16 %v1643, %v1643
      %v1772 = vpack.c.b16 %v1644, %v1644
      %v1773 = vpack.c.b16 %v1645, %v1645
      %v1774 = vpack.c.b16 %v1646, %v1646
      %v1775 = vpack.c.b16 %v1647, %v1647
      %v1776 = vpack.c.b16 %v1648, %v1648
      %v1777 = vpack.c.b16 %v1649, %v1649
      %v1778 = vpack.c.b16 %v1650, %v1650
      %v1779 = vpack.c.b16 %v1651, %v1651
      %v1780 = vpack.c.b16 %v1652, %v1652
      %v1781 = vpack.c.b16 %v1653, %v1653
      %v1782 = vpack.c.b16 %v1654, %v1654
      %v1783 = vpack.c.b16 %v1655, %v1655
      %v1784 = vpack.c.b16 %v1656, %v1656
      %v1785 = vpack.c.b16 %v1657, %v1657
      %v1786 = vpack.c.b16 %v1658, %v1658
      %v1787 = vpack.c.b16 %v1659, %v1659
      %v1788 = vpack.c.b16 %v1660, %v1660
      %v1789 = vpack.c.b16 %v1661, %v1661
      %v1790 = vpack.c.b16 %v1662, %v1662
      %v1791 = vpack.c.b16 %v1663, %v1663
      %v1792 = vpack.c.b16 %v1664, %v1664
      %v1793 = vpack.c.b16 %v1665, %v1665
      %v1794 = vpack.c.b16 %v1666, %v1666
      %v1795 = vpack.c.b16 %v1667, %v1667
      %v1796 = vpack.c.b16 %v1668, %v1668
      %v1797 = vpack.c.b16 %v1669, %v1669
      %v1798 = vpack.c.b16 %v1670, %v1670
      %v1799 = vpack.c.b16 %v1671, %v1671
      %v1800 = vpack.c.b16 %v1672, %v1672
      %v1801 = vpack.c.b16 %v1673, %v1673
      %v1802 = vpack.c.b16 %v1674, %v1674
      %v1803 = vpack.c.b16 %v1675, %v1675
      %v1804 = vpack.c.b16 %v1676, %v1676
      %v1805 = vpack.c.b16 %v1677, %v1677
      %vm1934 = vcmask 257024
      %1935 = vst.msk [vmem:[%s206] sm:$0xf] %vm1934, %v1678
      %1936 = vst.msk [vmem:[%s206 + $0x4] sm:$0xf] %vm1934, %v1679
      %1937 = vst.msk [vmem:[%s206 + $0x8] sm:$0xf] %vm1934, %v1680
      %1938 = vst.msk [vmem:[%s206 + $0xc] sm:$0xf] %vm1934, %v1681
      %1939 = vst.msk [vmem:[%s206 + $0x10] sm:$0xf] %vm1934, %v1682
      %1940 = vst.msk [vmem:[%s206 + $0x14] sm:$0xf] %vm1934, %v1683
      %1941 = vst.msk [vmem:[%s206 + $0x18] sm:$0xf] %vm1934, %v1684
      %1942 = vst.msk [vmem:[%s206 + $0x1c] sm:$0xf] %vm1934, %v1685
      %1943 = vst.msk [vmem:[%s206 + $0x20] sm:$0xf] %vm1934, %v1686
      %1944 = vst.msk [vmem:[%s206 + $0x24] sm:$0xf] %vm1934, %v1687
      %1945 = vst.msk [vmem:[%s206 + $0x28] sm:$0xf] %vm1934, %v1688
      %1946 = vst.msk [vmem:[%s206 + $0x2c] sm:$0xf] %vm1934, %v1689
      %1947 = vst.msk [vmem:[%s206 + $0x30] sm:$0xf] %vm1934, %v1690
      %1948 = vst.msk [vmem:[%s206 + $0x34] sm:$0xf] %vm1934, %v1691
      %1949 = vst.msk [vmem:[%s206 + $0x38] sm:$0xf] %vm1934, %v1692
      %1950 = vst.msk [vmem:[%s206 + $0x3c] sm:$0xf] %vm1934, %v1693
      %1951 = vst.msk [vmem:[%s206 + $0x40] sm:$0xf] %vm1934, %v1694
      %1952 = vst.msk [vmem:[%s206 + $0x44] sm:$0xf] %vm1934, %v1695
      %1953 = vst.msk [vmem:[%s206 + $0x48] sm:$0xf] %vm1934, %v1696
      %1954 = vst.msk [vmem:[%s206 + $0x4c] sm:$0xf] %vm1934, %v1697
      %1955 = vst.msk [vmem:[%s206 + $0x50] sm:$0xf] %vm1934, %v1698
      %1956 = vst.msk [vmem:[%s206 + $0x54] sm:$0xf] %vm1934, %v1699
      %1957 = vst.msk [vmem:[%s206 + $0x58] sm:$0xf] %vm1934, %v1700
      %1958 = vst.msk [vmem:[%s206 + $0x5c] sm:$0xf] %vm1934, %v1701
      %1959 = vst.msk [vmem:[%s206 + $0x60] sm:$0xf] %vm1934, %v1702
      %1960 = vst.msk [vmem:[%s206 + $0x64] sm:$0xf] %vm1934, %v1703
      %1961 = vst.msk [vmem:[%s206 + $0x68] sm:$0xf] %vm1934, %v1704
      %1962 = vst.msk [vmem:[%s206 + $0x6c] sm:$0xf] %vm1934, %v1705
      %1963 = vst.msk [vmem:[%s206 + $0x70] sm:$0xf] %vm1934, %v1706
      %1964 = vst.msk [vmem:[%s206 + $0x74] sm:$0xf] %vm1934, %v1707
      %1965 = vst.msk [vmem:[%s206 + $0x78] sm:$0xf] %vm1934, %v1708
      %1966 = vst.msk [vmem:[%s206 + $0x7c] sm:$0xf] %vm1934, %v1709
      %1967 = vst.msk [vmem:[%s206 + $0x80] sm:$0xf] %vm1934, %v1710
      %1968 = vst.msk [vmem:[%s206 + $0x84] sm:$0xf] %vm1934, %v1711
      %1969 = vst.msk [vmem:[%s206 + $0x88] sm:$0xf] %vm1934, %v1712
      %1970 = vst.msk [vmem:[%s206 + $0x8c] sm:$0xf] %vm1934, %v1713
      %1971 = vst.msk [vmem:[%s206 + $0x90] sm:$0xf] %vm1934, %v1714
      %1972 = vst.msk [vmem:[%s206 + $0x94] sm:$0xf] %vm1934, %v1715
      %1973 = vst.msk [vmem:[%s206 + $0x98] sm:$0xf] %vm1934, %v1716
      %1974 = vst.msk [vmem:[%s206 + $0x9c] sm:$0xf] %vm1934, %v1717
      %1975 = vst.msk [vmem:[%s206 + $0xa0] sm:$0xf] %vm1934, %v1718
      %1976 = vst.msk [vmem:[%s206 + $0xa4] sm:$0xf] %vm1934, %v1719
      %1977 = vst.msk [vmem:[%s206 + $0xa8] sm:$0xf] %vm1934, %v1720
      %1978 = vst.msk [vmem:[%s206 + $0xac] sm:$0xf] %vm1934, %v1721
      %1979 = vst.msk [vmem:[%s206 + $0xb0] sm:$0xf] %vm1934, %v1722
      %1980 = vst.msk [vmem:[%s206 + $0xb4] sm:$0xf] %vm1934, %v1723
      %1981 = vst.msk [vmem:[%s206 + $0xb8] sm:$0xf] %vm1934, %v1724
      %1982 = vst.msk [vmem:[%s206 + $0xbc] sm:$0xf] %vm1934, %v1725
      %1983 = vst.msk [vmem:[%s206 + $0xc0] sm:$0xf] %vm1934, %v1726
      %1984 = vst.msk [vmem:[%s206 + $0xc4] sm:$0xf] %vm1934, %v1727
      %1985 = vst.msk [vmem:[%s206 + $0xc8] sm:$0xf] %vm1934, %v1728
      %1986 = vst.msk [vmem:[%s206 + $0xcc] sm:$0xf] %vm1934, %v1729
      %1987 = vst.msk [vmem:[%s206 + $0xd0] sm:$0xf] %vm1934, %v1730
      %1988 = vst.msk [vmem:[%s206 + $0xd4] sm:$0xf] %vm1934, %v1731
      %1989 = vst.msk [vmem:[%s206 + $0xd8] sm:$0xf] %vm1934, %v1732
      %1990 = vst.msk [vmem:[%s206 + $0xdc] sm:$0xf] %vm1934, %v1733
      %1991 = vst.msk [vmem:[%s206 + $0xe0] sm:$0xf] %vm1934, %v1734
      %1992 = vst.msk [vmem:[%s206 + $0xe4] sm:$0xf] %vm1934, %v1735
      %1993 = vst.msk [vmem:[%s206 + $0xe8] sm:$0xf] %vm1934, %v1736
      %1994 = vst.msk [vmem:[%s206 + $0xec] sm:$0xf] %vm1934, %v1737
      %1995 = vst.msk [vmem:[%s206 + $0xf0] sm:$0xf] %vm1934, %v1738
      %1996 = vst.msk [vmem:[%s206 + $0xf4] sm:$0xf] %vm1934, %v1739
      %1997 = vst.msk [vmem:[%s206 + $0xf8] sm:$0xf] %vm1934, %v1740
      %1998 = vst.msk [vmem:[%s206 + $0xfc] sm:$0xf] %vm1934, %v1741
      %1999 = vst.msk [vmem:[%s206 + $0x100] sm:$0xf] %vm1934, %v1742
      %2000 = vst.msk [vmem:[%s206 + $0x104] sm:$0xf] %vm1934, %v1743
      %2001 = vst.msk [vmem:[%s206 + $0x108] sm:$0xf] %vm1934, %v1744
      %2002 = vst.msk [vmem:[%s206 + $0x10c] sm:$0xf] %vm1934, %v1745
      %2003 = vst.msk [vmem:[%s206 + $0x110] sm:$0xf] %vm1934, %v1746
      %2004 = vst.msk [vmem:[%s206 + $0x114] sm:$0xf] %vm1934, %v1747
      %2005 = vst.msk [vmem:[%s206 + $0x118] sm:$0xf] %vm1934, %v1748
      %2006 = vst.msk [vmem:[%s206 + $0x11c] sm:$0xf] %vm1934, %v1749
      %2007 = vst.msk [vmem:[%s206 + $0x120] sm:$0xf] %vm1934, %v1750
      %2008 = vst.msk [vmem:[%s206 + $0x124] sm:$0xf] %vm1934, %v1751
      %2009 = vst.msk [vmem:[%s206 + $0x128] sm:$0xf] %vm1934, %v1752
      %2010 = vst.msk [vmem:[%s206 + $0x12c] sm:$0xf] %vm1934, %v1753
      %2011 = vst.msk [vmem:[%s206 + $0x130] sm:$0xf] %vm1934, %v1754
      %2012 = vst.msk [vmem:[%s206 + $0x134] sm:$0xf] %vm1934, %v1755
      %2013 = vst.msk [vmem:[%s206 + $0x138] sm:$0xf] %vm1934, %v1756
      %2014 = vst.msk [vmem:[%s206 + $0x13c] sm:$0xf] %vm1934, %v1757
      %2015 = vst.msk [vmem:[%s206 + $0x140] sm:$0xf] %vm1934, %v1758
      %2016 = vst.msk [vmem:[%s206 + $0x144] sm:$0xf] %vm1934, %v1759
      %2017 = vst.msk [vmem:[%s206 + $0x148] sm:$0xf] %vm1934, %v1760
      %2018 = vst.msk [vmem:[%s206 + $0x14c] sm:$0xf] %vm1934, %v1761
      %2019 = vst.msk [vmem:[%s206 + $0x150] sm:$0xf] %vm1934, %v1762
      %2020 = vst.msk [vmem:[%s206 + $0x154] sm:$0xf] %vm1934, %v1763
      %2021 = vst.msk [vmem:[%s206 + $0x158] sm:$0xf] %vm1934, %v1764
      %2022 = vst.msk [vmem:[%s206 + $0x15c] sm:$0xf] %vm1934, %v1765
      %2023 = vst.msk [vmem:[%s206 + $0x160] sm:$0xf] %vm1934, %v1766
      %2024 = vst.msk [vmem:[%s206 + $0x164] sm:$0xf] %vm1934, %v1767
      %2025 = vst.msk [vmem:[%s206 + $0x168] sm:$0xf] %vm1934, %v1768
      %2026 = vst.msk [vmem:[%s206 + $0x16c] sm:$0xf] %vm1934, %v1769
      %2027 = vst.msk [vmem:[%s206 + $0x170] sm:$0xf] %vm1934, %v1770
      %2028 = vst.msk [vmem:[%s206 + $0x174] sm:$0xf] %vm1934, %v1771
      %2029 = vst.msk [vmem:[%s206 + $0x178] sm:$0xf] %vm1934, %v1772
      %2030 = vst.msk [vmem:[%s206 + $0x17c] sm:$0xf] %vm1934, %v1773
      %2031 = vst.msk [vmem:[%s206 + $0x180] sm:$0xf] %vm1934, %v1774
      %2032 = vst.msk [vmem:[%s206 + $0x184] sm:$0xf] %vm1934, %v1775
      %2033 = vst.msk [vmem:[%s206 + $0x188] sm:$0xf] %vm1934, %v1776
      %2034 = vst.msk [vmem:[%s206 + $0x18c] sm:$0xf] %vm1934, %v1777
      %2035 = vst.msk [vmem:[%s206 + $0x190] sm:$0xf] %vm1934, %v1778
      %2036 = vst.msk [vmem:[%s206 + $0x194] sm:$0xf] %vm1934, %v1779
      %2037 = vst.msk [vmem:[%s206 + $0x198] sm:$0xf] %vm1934, %v1780
      %2038 = vst.msk [vmem:[%s206 + $0x19c] sm:$0xf] %vm1934, %v1781
      %2039 = vst.msk [vmem:[%s206 + $0x1a0] sm:$0xf] %vm1934, %v1782
      %2040 = vst.msk [vmem:[%s206 + $0x1a4] sm:$0xf] %vm1934, %v1783
      %2041 = vst.msk [vmem:[%s206 + $0x1a8] sm:$0xf] %vm1934, %v1784
      %2042 = vst.msk [vmem:[%s206 + $0x1ac] sm:$0xf] %vm1934, %v1785
      %2043 = vst.msk [vmem:[%s206 + $0x1b0] sm:$0xf] %vm1934, %v1786
      %2044 = vst.msk [vmem:[%s206 + $0x1b4] sm:$0xf] %vm1934, %v1787
      %2045 = vst.msk [vmem:[%s206 + $0x1b8] sm:$0xf] %vm1934, %v1788
      %2046 = vst.msk [vmem:[%s206 + $0x1bc] sm:$0xf] %vm1934, %v1789
      %2047 = vst.msk [vmem:[%s206 + $0x1c0] sm:$0xf] %vm1934, %v1790
      %2048 = vst.msk [vmem:[%s206 + $0x1c4] sm:$0xf] %vm1934, %v1791
      %2049 = vst.msk [vmem:[%s206 + $0x1c8] sm:$0xf] %vm1934, %v1792
      %2050 = vst.msk [vmem:[%s206 + $0x1cc] sm:$0xf] %vm1934, %v1793
      %2051 = vst.msk [vmem:[%s206 + $0x1d0] sm:$0xf] %vm1934, %v1794
      %2052 = vst.msk [vmem:[%s206 + $0x1d4] sm:$0xf] %vm1934, %v1795
      %2053 = vst.msk [vmem:[%s206 + $0x1d8] sm:$0xf] %vm1934, %v1796
      %2054 = vst.msk [vmem:[%s206 + $0x1dc] sm:$0xf] %vm1934, %v1797
      %2055 = vst.msk [vmem:[%s206 + $0x1e0] sm:$0xf] %vm1934, %v1798
      %2056 = vst.msk [vmem:[%s206 + $0x1e4] sm:$0xf] %vm1934, %v1799
      %2057 = vst.msk [vmem:[%s206 + $0x1e8] sm:$0xf] %vm1934, %v1800
      %2058 = vst.msk [vmem:[%s206 + $0x1ec] sm:$0xf] %vm1934, %v1801
      %2059 = vst.msk [vmem:[%s206 + $0x1f0] sm:$0xf] %vm1934, %v1802
      %2060 = vst.msk [vmem:[%s206 + $0x1f4] sm:$0xf] %vm1934, %v1803
      %2061 = vst.msk [vmem:[%s206 + $0x1f8] sm:$0xf] %vm1934, %v1804
      %2062 = vst.msk [vmem:[%s206 + $0x1fc] sm:$0xf] %vm1934, %v1805
      %v2063 = vsel %vm684, %v912, 0.0
      %v2064 = vsel %vm684, %v915, 0.0
      %v2065 = vadd.f32 %v2063, %v2064
      %v2066 = vsel %vm684, %v920, 0.0
      %v2067 = vadd.f32 %v2065, %v2066
      %v2068 = vsel %vm684, %v923, 0.0
      %v2069 = vadd.f32 %v2067, %v2068
      %v2070 = vsel %vm684, %v928, 0.0
      %v2071 = vadd.f32 %v2069, %v2070
      %v2072 = vsel %vm684, %v931, 0.0
      %v2073 = vadd.f32 %v2071, %v2072
      %v2074 = vsel %vm684, %v936, 0.0
      %v2075 = vadd.f32 %v2073, %v2074
      %v2076 = vsel %vm684, %v939, 0.0
      %v2077 = vadd.f32 %v2075, %v2076
      %v2078 = vsel %vm684, %v944, 0.0
      %v2079 = vadd.f32 %v2077, %v2078
      %v2080 = vsel %vm684, %v947, 0.0
      %v2081 = vadd.f32 %v2079, %v2080
      %v2082 = vsel %vm684, %v952, 0.0
      %v2083 = vadd.f32 %v2081, %v2082
      %v2084 = vsel %vm684, %v955, 0.0
      %v2085 = vadd.f32 %v2083, %v2084
      %v2086 = vsel %vm684, %v960, 0.0
      %v2087 = vadd.f32 %v2085, %v2086
      %v2088 = vsel %vm684, %v963, 0.0
      %v2089 = vadd.f32 %v2087, %v2088
      %v2090 = vsel %vm684, %v968, 0.0
      %v2091 = vadd.f32 %v2089, %v2090
      %v2092 = vsel %vm684, %v971, 0.0
      %v2093 = vadd.f32 %v2091, %v2092
      %v2094 = vsel %vm684, %v976, 0.0
      %v2095 = vadd.f32 %v2093, %v2094
      %v2096 = vsel %vm684, %v979, 0.0
      %v2097 = vadd.f32 %v2095, %v2096
      %v2098 = vsel %vm684, %v984, 0.0
      %v2099 = vadd.f32 %v2097, %v2098
      %v2100 = vsel %vm684, %v987, 0.0
      %v2101 = vadd.f32 %v2099, %v2100
      %v2102 = vsel %vm684, %v992, 0.0
      %v2103 = vadd.f32 %v2101, %v2102
      %v2104 = vsel %vm684, %v995, 0.0
      %v2105 = vadd.f32 %v2103, %v2104
      %v2106 = vsel %vm684, %v1000, 0.0
      %v2107 = vadd.f32 %v2105, %v2106
      %v2108 = vsel %vm684, %v1003, 0.0
      %v2109 = vadd.f32 %v2107, %v2108
      %v2110 = vsel %vm684, %v1008, 0.0
      %v2111 = vadd.f32 %v2109, %v2110
      %v2112 = vsel %vm684, %v1011, 0.0
      %v2113 = vadd.f32 %v2111, %v2112
      %v2114 = vsel %vm684, %v1016, 0.0
      %v2115 = vadd.f32 %v2113, %v2114
      %v2116 = vsel %vm684, %v1019, 0.0
      %v2117 = vadd.f32 %v2115, %v2116
      %v2118 = vsel %vm684, %v1024, 0.0
      %v2119 = vadd.f32 %v2117, %v2118
      %v2120 = vsel %vm684, %v1027, 0.0
      %v2121 = vadd.f32 %v2119, %v2120
      %v2122 = vsel %vm684, %v1032, 0.0
      %v2123 = vadd.f32 %v2121, %v2122
      %v2124 = vsel %vm684, %v1035, 0.0
      %v2125 = vadd.f32 %v2123, %v2124
      %v2126 = vsel %vm684, %v1040, 0.0
      %v2127 = vadd.f32 %v2125, %v2126
      %v2128 = vsel %vm684, %v1043, 0.0
      %v2129 = vadd.f32 %v2127, %v2128
      %v2130 = vsel %vm684, %v1048, 0.0
      %v2131 = vadd.f32 %v2129, %v2130
      %v2132 = vsel %vm684, %v1051, 0.0
      %v2133 = vadd.f32 %v2131, %v2132
      %v2134 = vsel %vm684, %v1056, 0.0
      %v2135 = vadd.f32 %v2133, %v2134
      %v2136 = vsel %vm684, %v1059, 0.0
      %v2137 = vadd.f32 %v2135, %v2136
      %v2138 = vsel %vm684, %v1064, 0.0
      %v2139 = vadd.f32 %v2137, %v2138
      %v2140 = vsel %vm684, %v1067, 0.0
      %v2141 = vadd.f32 %v2139, %v2140
      %v2142 = vsel %vm684, %v1072, 0.0
      %v2143 = vadd.f32 %v2141, %v2142
      %v2144 = vsel %vm684, %v1075, 0.0
      %v2145 = vadd.f32 %v2143, %v2144
      %v2146 = vsel %vm684, %v1080, 0.0
      %v2147 = vadd.f32 %v2145, %v2146
      %v2148 = vsel %vm684, %v1083, 0.0
      %v2149 = vadd.f32 %v2147, %v2148
      %v2150 = vsel %vm684, %v1088, 0.0
      %v2151 = vadd.f32 %v2149, %v2150
      %v2152 = vsel %vm684, %v1091, 0.0
      %v2153 = vadd.f32 %v2151, %v2152
      %v2154 = vsel %vm684, %v1096, 0.0
      %v2155 = vadd.f32 %v2153, %v2154
      %v2156 = vsel %vm684, %v1099, 0.0
      %v2157 = vadd.f32 %v2155, %v2156
      %v2158 = vsel %vm684, %v1104, 0.0
      %v2159 = vadd.f32 %v2157, %v2158
      %v2160 = vsel %vm684, %v1107, 0.0
      %v2161 = vadd.f32 %v2159, %v2160
      %v2162 = vsel %vm684, %v1112, 0.0
      %v2163 = vadd.f32 %v2161, %v2162
      %v2164 = vsel %vm684, %v1115, 0.0
      %v2165 = vadd.f32 %v2163, %v2164
      %v2166 = vsel %vm684, %v1120, 0.0
      %v2167 = vadd.f32 %v2165, %v2166
      %v2168 = vsel %vm684, %v1123, 0.0
      %v2169 = vadd.f32 %v2167, %v2168
      %v2170 = vsel %vm684, %v1128, 0.0
      %v2171 = vadd.f32 %v2169, %v2170
      %v2172 = vsel %vm684, %v1131, 0.0
      %v2173 = vadd.f32 %v2171, %v2172
      %v2174 = vsel %vm684, %v1136, 0.0
      %v2175 = vadd.f32 %v2173, %v2174
      %v2176 = vsel %vm684, %v1139, 0.0
      %v2177 = vadd.f32 %v2175, %v2176
      %v2178 = vsel %vm684, %v1144, 0.0
      %v2179 = vadd.f32 %v2177, %v2178
      %v2180 = vsel %vm684, %v1147, 0.0
      %v2181 = vadd.f32 %v2179, %v2180
      %v2182 = vsel %vm684, %v1152, 0.0
      %v2183 = vadd.f32 %v2181, %v2182
      %v2184 = vsel %vm684, %v1155, 0.0
      %v2185 = vadd.f32 %v2183, %v2184
      %v2186 = vsel %vm684, %v1160, 0.0
      %v2187 = vadd.f32 %v2185, %v2186
      %v2188 = vsel %vm684, %v1163, 0.0
      %v2189 = vadd.f32 %v2187, %v2188
      %v2190 = vsel %vm684, %v1168, 0.0
      %v2191 = vadd.f32 %v2189, %v2190
      %v2192 = vsel %vm684, %v1171, 0.0
      %v2193 = vadd.f32 %v2191, %v2192
      %v2194 = vsel %vm684, %v1176, 0.0
      %v2195 = vadd.f32 %v2193, %v2194
      %v2196 = vsel %vm684, %v1179, 0.0
      %v2197 = vadd.f32 %v2195, %v2196
      %v2198 = vsel %vm684, %v1184, 0.0
      %v2199 = vadd.f32 %v2197, %v2198
      %v2200 = vsel %vm684, %v1187, 0.0
      %v2201 = vadd.f32 %v2199, %v2200
      %v2202 = vsel %vm684, %v1192, 0.0
      %v2203 = vadd.f32 %v2201, %v2202
      %v2204 = vsel %vm684, %v1195, 0.0
      %v2205 = vadd.f32 %v2203, %v2204
      %v2206 = vsel %vm684, %v1200, 0.0
      %v2207 = vadd.f32 %v2205, %v2206
      %v2208 = vsel %vm684, %v1203, 0.0
      %v2209 = vadd.f32 %v2207, %v2208
      %v2210 = vsel %vm684, %v1208, 0.0
      %v2211 = vadd.f32 %v2209, %v2210
      %v2212 = vsel %vm684, %v1211, 0.0
      %v2213 = vadd.f32 %v2211, %v2212
      %v2214 = vsel %vm684, %v1216, 0.0
      %v2215 = vadd.f32 %v2213, %v2214
      %v2216 = vsel %vm684, %v1219, 0.0
      %v2217 = vadd.f32 %v2215, %v2216
      %v2218 = vsel %vm684, %v1224, 0.0
      %v2219 = vadd.f32 %v2217, %v2218
      %v2220 = vsel %vm684, %v1227, 0.0
      %v2221 = vadd.f32 %v2219, %v2220
      %v2222 = vsel %vm684, %v1232, 0.0
      %v2223 = vadd.f32 %v2221, %v2222
      %v2224 = vsel %vm684, %v1235, 0.0
      %v2225 = vadd.f32 %v2223, %v2224
      %v2226 = vsel %vm684, %v1240, 0.0
      %v2227 = vadd.f32 %v2225, %v2226
      %v2228 = vsel %vm684, %v1243, 0.0
      %v2229 = vadd.f32 %v2227, %v2228
      %v2230 = vsel %vm684, %v1248, 0.0
      %v2231 = vadd.f32 %v2229, %v2230
      %v2232 = vsel %vm684, %v1251, 0.0
      %v2233 = vadd.f32 %v2231, %v2232
      %v2234 = vsel %vm684, %v1256, 0.0
      %v2235 = vadd.f32 %v2233, %v2234
      %v2236 = vsel %vm684, %v1259, 0.0
      %v2237 = vadd.f32 %v2235, %v2236
      %v2238 = vsel %vm684, %v1264, 0.0
      %v2239 = vadd.f32 %v2237, %v2238
      %v2240 = vsel %vm684, %v1267, 0.0
      %v2241 = vadd.f32 %v2239, %v2240
      %v2242 = vsel %vm684, %v1272, 0.0
      %v2243 = vadd.f32 %v2241, %v2242
      %v2244 = vsel %vm684, %v1275, 0.0
      %v2245 = vadd.f32 %v2243, %v2244
      %v2246 = vsel %vm684, %v1280, 0.0
      %v2247 = vadd.f32 %v2245, %v2246
      %v2248 = vsel %vm684, %v1283, 0.0
      %v2249 = vadd.f32 %v2247, %v2248
      %v2250 = vsel %vm684, %v1288, 0.0
      %v2251 = vadd.f32 %v2249, %v2250
      %v2252 = vsel %vm684, %v1291, 0.0
      %v2253 = vadd.f32 %v2251, %v2252
      %v2254 = vsel %vm684, %v1296, 0.0
      %v2255 = vadd.f32 %v2253, %v2254
      %v2256 = vsel %vm684, %v1299, 0.0
      %v2257 = vadd.f32 %v2255, %v2256
      %v2258 = vsel %vm684, %v1304, 0.0
      %v2259 = vadd.f32 %v2257, %v2258
      %v2260 = vsel %vm684, %v1307, 0.0
      %v2261 = vadd.f32 %v2259, %v2260
      %v2262 = vsel %vm684, %v1312, 0.0
      %v2263 = vadd.f32 %v2261, %v2262
      %v2264 = vsel %vm684, %v1315, 0.0
      %v2265 = vadd.f32 %v2263, %v2264
      %v2266 = vsel %vm684, %v1320, 0.0
      %v2267 = vadd.f32 %v2265, %v2266
      %v2268 = vsel %vm684, %v1323, 0.0
      %v2269 = vadd.f32 %v2267, %v2268
      %v2270 = vsel %vm684, %v1328, 0.0
      %v2271 = vadd.f32 %v2269, %v2270
      %v2272 = vsel %vm684, %v1331, 0.0
      %v2273 = vadd.f32 %v2271, %v2272
      %v2274 = vsel %vm684, %v1336, 0.0
      %v2275 = vadd.f32 %v2273, %v2274
      %v2276 = vsel %vm684, %v1339, 0.0
      %v2277 = vadd.f32 %v2275, %v2276
      %v2278 = vsel %vm684, %v1344, 0.0
      %v2279 = vadd.f32 %v2277, %v2278
      %v2280 = vsel %vm684, %v1347, 0.0
      %v2281 = vadd.f32 %v2279, %v2280
      %v2282 = vsel %vm684, %v1352, 0.0
      %v2283 = vadd.f32 %v2281, %v2282
      %v2284 = vsel %vm684, %v1355, 0.0
      %v2285 = vadd.f32 %v2283, %v2284
      %v2286 = vsel %vm684, %v1360, 0.0
      %v2287 = vadd.f32 %v2285, %v2286
      %v2288 = vsel %vm684, %v1363, 0.0
      %v2289 = vadd.f32 %v2287, %v2288
      %v2290 = vsel %vm684, %v1368, 0.0
      %v2291 = vadd.f32 %v2289, %v2290
      %v2292 = vsel %vm684, %v1371, 0.0
      %v2293 = vadd.f32 %v2291, %v2292
      %v2294 = vsel %vm684, %v1376, 0.0
      %v2295 = vadd.f32 %v2293, %v2294
      %v2296 = vsel %vm684, %v1379, 0.0
      %v2297 = vadd.f32 %v2295, %v2296
      %v2298 = vsel %vm684, %v1384, 0.0
      %v2299 = vadd.f32 %v2297, %v2298
      %v2300 = vsel %vm684, %v1387, 0.0
      %v2301 = vadd.f32 %v2299, %v2300
      %v2302 = vsel %vm684, %v1392, 0.0
      %v2303 = vadd.f32 %v2301, %v2302
      %v2304 = vsel %vm684, %v1395, 0.0
      %v2305 = vadd.f32 %v2303, %v2304
      %v2306 = vsel %vm684, %v1400, 0.0
      %v2307 = vadd.f32 %v2305, %v2306
      %v2308 = vsel %vm684, %v1403, 0.0
      %v2309 = vadd.f32 %v2307, %v2308
      %v2310 = vsel %vm684, %v1408, 0.0
      %v2311 = vadd.f32 %v2309, %v2310
      %v2312 = vsel %vm684, %v1411, 0.0
      %v2313 = vadd.f32 %v2311, %v2312
      %v2314 = vsel %vm684, %v1416, 0.0
      %v2315 = vadd.f32 %v2313, %v2314
      %v2316 = vsel %vm684, %v1419, 0.0
      %v2317 = vadd.f32 %v2315, %v2316
      %v2318 = vrot.slane %v2317, 4
      %v2319 = vadd.f32 %v2317, %v2318
      %v2320 = vrot.slane %v2319, 2
      %v2321 = vadd.f32 %v2319, %v2320
      %v2322 = vrot.slane %v2321, 1
      %v2323 = vadd.f32 %v2321, %v2322
      %v2324 = vmul.f32 %v912, %v912
      %v2325 = vmul.f32 %v915, %v915
      %v2326 = vmul.f32 %v920, %v920
      %v2327 = vmul.f32 %v923, %v923
      %v2328 = vmul.f32 %v928, %v928
      %v2329 = vmul.f32 %v931, %v931
      %v2330 = vmul.f32 %v936, %v936
      %v2331 = vmul.f32 %v939, %v939
      %v2332 = vmul.f32 %v944, %v944
      %v2333 = vmul.f32 %v947, %v947
      %v2334 = vmul.f32 %v952, %v952
      %v2335 = vmul.f32 %v955, %v955
      %v2336 = vmul.f32 %v960, %v960
      %v2337 = vmul.f32 %v963, %v963
      %v2338 = vmul.f32 %v968, %v968
      %v2339 = vmul.f32 %v971, %v971
      %v2340 = vmul.f32 %v976, %v976
      %v2341 = vmul.f32 %v979, %v979
      %v2342 = vmul.f32 %v984, %v984
      %v2343 = vmul.f32 %v987, %v987
      %v2344 = vmul.f32 %v992, %v992
      %v2345 = vmul.f32 %v995, %v995
      %v2346 = vmul.f32 %v1000, %v1000
      %v2347 = vmul.f32 %v1003, %v1003
      %v2348 = vmul.f32 %v1008, %v1008
      %v2349 = vmul.f32 %v1011, %v1011
      %v2350 = vmul.f32 %v1016, %v1016
      %v2351 = vmul.f32 %v1019, %v1019
      %v2352 = vmul.f32 %v1024, %v1024
      %v2353 = vmul.f32 %v1027, %v1027
      %v2354 = vmul.f32 %v1032, %v1032
      %v2355 = vmul.f32 %v1035, %v1035
      %v2356 = vmul.f32 %v1040, %v1040
      %v2357 = vmul.f32 %v1043, %v1043
      %v2358 = vmul.f32 %v1048, %v1048
      %v2359 = vmul.f32 %v1051, %v1051
      %v2360 = vmul.f32 %v1056, %v1056
      %v2361 = vmul.f32 %v1059, %v1059
      %v2362 = vmul.f32 %v1064, %v1064
      %v2363 = vmul.f32 %v1067, %v1067
      %v2364 = vmul.f32 %v1072, %v1072
      %v2365 = vmul.f32 %v1075, %v1075
      %v2366 = vmul.f32 %v1080, %v1080
      %v2367 = vmul.f32 %v1083, %v1083
      %v2368 = vmul.f32 %v1088, %v1088
      %v2369 = vmul.f32 %v1091, %v1091
      %v2370 = vmul.f32 %v1096, %v1096
      %v2371 = vmul.f32 %v1099, %v1099
      %v2372 = vmul.f32 %v1104, %v1104
      %v2373 = vmul.f32 %v1107, %v1107
      %v2374 = vmul.f32 %v1112, %v1112
      %v2375 = vmul.f32 %v1115, %v1115
      %v2376 = vmul.f32 %v1120, %v1120
      %v2377 = vmul.f32 %v1123, %v1123
      %v2378 = vmul.f32 %v1128, %v1128
      %v2379 = vmul.f32 %v1131, %v1131
      %v2380 = vmul.f32 %v1136, %v1136
      %v2381 = vmul.f32 %v1139, %v1139
      %v2382 = vmul.f32 %v1144, %v1144
      %v2383 = vmul.f32 %v1147, %v1147
      %v2384 = vmul.f32 %v1152, %v1152
      %v2385 = vmul.f32 %v1155, %v1155
      %v2386 = vmul.f32 %v1160, %v1160
      %v2387 = vmul.f32 %v1163, %v1163
      %v2388 = vmul.f32 %v1168, %v1168
      %v2389 = vmul.f32 %v1171, %v1171
      %v2390 = vmul.f32 %v1176, %v1176
      %v2391 = vmul.f32 %v1179, %v1179
      %v2392 = vmul.f32 %v1184, %v1184
      %v2393 = vmul.f32 %v1187, %v1187
      %v2394 = vmul.f32 %v1192, %v1192
      %v2395 = vmul.f32 %v1195, %v1195
      %v2396 = vmul.f32 %v1200, %v1200
      %v2397 = vmul.f32 %v1203, %v1203
      %v2398 = vmul.f32 %v1208, %v1208
      %v2399 = vmul.f32 %v1211, %v1211
      %v2400 = vmul.f32 %v1216, %v1216
      %v2401 = vmul.f32 %v1219, %v1219
      %v2402 = vmul.f32 %v1224, %v1224
      %v2403 = vmul.f32 %v1227, %v1227
      %v2404 = vmul.f32 %v1232, %v1232
      %v2405 = vmul.f32 %v1235, %v1235
      %v2406 = vmul.f32 %v1240, %v1240
      %v2407 = vmul.f32 %v1243, %v1243
      %v2408 = vmul.f32 %v1248, %v1248
      %v2409 = vmul.f32 %v1251, %v1251
      %v2410 = vmul.f32 %v1256, %v1256
      %v2411 = vmul.f32 %v1259, %v1259
      %v2412 = vmul.f32 %v1264, %v1264
      %v2413 = vmul.f32 %v1267, %v1267
      %v2414 = vmul.f32 %v1272, %v1272
      %v2415 = vmul.f32 %v1275, %v1275
      %v2416 = vmul.f32 %v1280, %v1280
      %v2417 = vmul.f32 %v1283, %v1283
      %v2418 = vmul.f32 %v1288, %v1288
      %v2419 = vmul.f32 %v1291, %v1291
      %v2420 = vmul.f32 %v1296, %v1296
      %v2421 = vmul.f32 %v1299, %v1299
      %v2422 = vmul.f32 %v1304, %v1304
      %v2423 = vmul.f32 %v1307, %v1307
      %v2424 = vmul.f32 %v1312, %v1312
      %v2425 = vmul.f32 %v1315, %v1315
      %v2426 = vmul.f32 %v1320, %v1320
      %v2427 = vmul.f32 %v1323, %v1323
      %v2428 = vmul.f32 %v1328, %v1328
      %v2429 = vmul.f32 %v1331, %v1331
      %v2430 = vmul.f32 %v1336, %v1336
      %v2431 = vmul.f32 %v1339, %v1339
      %v2432 = vmul.f32 %v1344, %v1344
      %v2433 = vmul.f32 %v1347, %v1347
      %v2434 = vmul.f32 %v1352, %v1352
      %v2435 = vmul.f32 %v1355, %v1355
      %v2436 = vmul.f32 %v1360, %v1360
      %v2437 = vmul.f32 %v1363, %v1363
      %v2438 = vmul.f32 %v1368, %v1368
      %v2439 = vmul.f32 %v1371, %v1371
      %v2440 = vmul.f32 %v1376, %v1376
      %v2441 = vmul.f32 %v1379, %v1379
      %v2442 = vmul.f32 %v1384, %v1384
      %v2443 = vmul.f32 %v1387, %v1387
      %v2444 = vmul.f32 %v1392, %v1392
      %v2445 = vmul.f32 %v1395, %v1395
      %v2446 = vmul.f32 %v1400, %v1400
      %v2447 = vmul.f32 %v1403, %v1403
      %v2448 = vmul.f32 %v1408, %v1408
      %v2449 = vmul.f32 %v1411, %v1411
      %v2450 = vmul.f32 %v1416, %v1416
      %v2451 = vmul.f32 %v1419, %v1419
      %v2452 = vsel %vm684, %v2324, 0.0
      %v2453 = vsel %vm684, %v2325, 0.0
      %v2454 = vadd.f32 %v2452, %v2453
      %v2455 = vsel %vm684, %v2326, 0.0
      %v2456 = vadd.f32 %v2454, %v2455
      %v2457 = vsel %vm684, %v2327, 0.0
      %v2458 = vadd.f32 %v2456, %v2457
      %v2459 = vsel %vm684, %v2328, 0.0
      %v2460 = vadd.f32 %v2458, %v2459
      %v2461 = vsel %vm684, %v2329, 0.0
      %v2462 = vadd.f32 %v2460, %v2461
      %v2463 = vsel %vm684, %v2330, 0.0
      %v2464 = vadd.f32 %v2462, %v2463
      %v2465 = vsel %vm684, %v2331, 0.0
      %v2466 = vadd.f32 %v2464, %v2465
      %v2467 = vsel %vm684, %v2332, 0.0
      %v2468 = vadd.f32 %v2466, %v2467
      %v2469 = vsel %vm684, %v2333, 0.0
      %v2470 = vadd.f32 %v2468, %v2469
      %v2471 = vsel %vm684, %v2334, 0.0
      %v2472 = vadd.f32 %v2470, %v2471
      %v2473 = vsel %vm684, %v2335, 0.0
      %v2474 = vadd.f32 %v2472, %v2473
      %v2475 = vsel %vm684, %v2336, 0.0
      %v2476 = vadd.f32 %v2474, %v2475
      %v2477 = vsel %vm684, %v2337, 0.0
      %v2478 = vadd.f32 %v2476, %v2477
      %v2479 = vsel %vm684, %v2338, 0.0
      %v2480 = vadd.f32 %v2478, %v2479
      %v2481 = vsel %vm684, %v2339, 0.0
      %v2482 = vadd.f32 %v2480, %v2481
      %v2483 = vsel %vm684, %v2340, 0.0
      %v2484 = vadd.f32 %v2482, %v2483
      %v2485 = vsel %vm684, %v2341, 0.0
      %v2486 = vadd.f32 %v2484, %v2485
      %v2487 = vsel %vm684, %v2342, 0.0
      %v2488 = vadd.f32 %v2486, %v2487
      %v2489 = vsel %vm684, %v2343, 0.0
      %v2490 = vadd.f32 %v2488, %v2489
      %v2491 = vsel %vm684, %v2344, 0.0
      %v2492 = vadd.f32 %v2490, %v2491
      %v2493 = vsel %vm684, %v2345, 0.0
      %v2494 = vadd.f32 %v2492, %v2493
      %v2495 = vsel %vm684, %v2346, 0.0
      %v2496 = vadd.f32 %v2494, %v2495
      %v2497 = vsel %vm684, %v2347, 0.0
      %v2498 = vadd.f32 %v2496, %v2497
      %v2499 = vsel %vm684, %v2348, 0.0
      %v2500 = vadd.f32 %v2498, %v2499
      %v2501 = vsel %vm684, %v2349, 0.0
      %v2502 = vadd.f32 %v2500, %v2501
      %v2503 = vsel %vm684, %v2350, 0.0
      %v2504 = vadd.f32 %v2502, %v2503
      %v2505 = vsel %vm684, %v2351, 0.0
      %v2506 = vadd.f32 %v2504, %v2505
      %v2507 = vsel %vm684, %v2352, 0.0
      %v2508 = vadd.f32 %v2506, %v2507
      %v2509 = vsel %vm684, %v2353, 0.0
      %v2510 = vadd.f32 %v2508, %v2509
      %v2511 = vsel %vm684, %v2354, 0.0
      %v2512 = vadd.f32 %v2510, %v2511
      %v2513 = vsel %vm684, %v2355, 0.0
      %v2514 = vadd.f32 %v2512, %v2513
      %v2515 = vsel %vm684, %v2356, 0.0
      %v2516 = vadd.f32 %v2514, %v2515
      %v2517 = vsel %vm684, %v2357, 0.0
      %v2518 = vadd.f32 %v2516, %v2517
      %v2519 = vsel %vm684, %v2358, 0.0
      %v2520 = vadd.f32 %v2518, %v2519
      %v2521 = vsel %vm684, %v2359, 0.0
      %v2522 = vadd.f32 %v2520, %v2521
      %v2523 = vsel %vm684, %v2360, 0.0
      %v2524 = vadd.f32 %v2522, %v2523
      %v2525 = vsel %vm684, %v2361, 0.0
      %v2526 = vadd.f32 %v2524, %v2525
      %v2527 = vsel %vm684, %v2362, 0.0
      %v2528 = vadd.f32 %v2526, %v2527
      %v2529 = vsel %vm684, %v2363, 0.0
      %v2530 = vadd.f32 %v2528, %v2529
      %v2531 = vsel %vm684, %v2364, 0.0
      %v2532 = vadd.f32 %v2530, %v2531
      %v2533 = vsel %vm684, %v2365, 0.0
      %v2534 = vadd.f32 %v2532, %v2533
      %v2535 = vsel %vm684, %v2366, 0.0
      %v2536 = vadd.f32 %v2534, %v2535
      %v2537 = vsel %vm684, %v2367, 0.0
      %v2538 = vadd.f32 %v2536, %v2537
      %v2539 = vsel %vm684, %v2368, 0.0
      %v2540 = vadd.f32 %v2538, %v2539
      %v2541 = vsel %vm684, %v2369, 0.0
      %v2542 = vadd.f32 %v2540, %v2541
      %v2543 = vsel %vm684, %v2370, 0.0
      %v2544 = vadd.f32 %v2542, %v2543
      %v2545 = vsel %vm684, %v2371, 0.0
      %v2546 = vadd.f32 %v2544, %v2545
      %v2547 = vsel %vm684, %v2372, 0.0
      %v2548 = vadd.f32 %v2546, %v2547
      %v2549 = vsel %vm684, %v2373, 0.0
      %v2550 = vadd.f32 %v2548, %v2549
      %v2551 = vsel %vm684, %v2374, 0.0
      %v2552 = vadd.f32 %v2550, %v2551
      %v2553 = vsel %vm684, %v2375, 0.0
      %v2554 = vadd.f32 %v2552, %v2553
      %v2555 = vsel %vm684, %v2376, 0.0
      %v2556 = vadd.f32 %v2554, %v2555
      %v2557 = vsel %vm684, %v2377, 0.0
      %v2558 = vadd.f32 %v2556, %v2557
      %v2559 = vsel %vm684, %v2378, 0.0
      %v2560 = vadd.f32 %v2558, %v2559
      %v2561 = vsel %vm684, %v2379, 0.0
      %v2562 = vadd.f32 %v2560, %v2561
      %v2563 = vsel %vm684, %v2380, 0.0
      %v2564 = vadd.f32 %v2562, %v2563
      %v2565 = vsel %vm684, %v2381, 0.0
      %v2566 = vadd.f32 %v2564, %v2565
      %v2567 = vsel %vm684, %v2382, 0.0
      %v2568 = vadd.f32 %v2566, %v2567
      %v2569 = vsel %vm684, %v2383, 0.0
      %v2570 = vadd.f32 %v2568, %v2569
      %v2571 = vsel %vm684, %v2384, 0.0
      %v2572 = vadd.f32 %v2570, %v2571
      %v2573 = vsel %vm684, %v2385, 0.0
      %v2574 = vadd.f32 %v2572, %v2573
      %v2575 = vsel %vm684, %v2386, 0.0
      %v2576 = vadd.f32 %v2574, %v2575
      %v2577 = vsel %vm684, %v2387, 0.0
      %v2578 = vadd.f32 %v2576, %v2577
      %v2579 = vsel %vm684, %v2388, 0.0
      %v2580 = vadd.f32 %v2578, %v2579
      %v2581 = vsel %vm684, %v2389, 0.0
      %v2582 = vadd.f32 %v2580, %v2581
      %v2583 = vsel %vm684, %v2390, 0.0
      %v2584 = vadd.f32 %v2582, %v2583
      %v2585 = vsel %vm684, %v2391, 0.0
      %v2586 = vadd.f32 %v2584, %v2585
      %v2587 = vsel %vm684, %v2392, 0.0
      %v2588 = vadd.f32 %v2586, %v2587
      %v2589 = vsel %vm684, %v2393, 0.0
      %v2590 = vadd.f32 %v2588, %v2589
      %v2591 = vsel %vm684, %v2394, 0.0
      %v2592 = vadd.f32 %v2590, %v2591
      %v2593 = vsel %vm684, %v2395, 0.0
      %v2594 = vadd.f32 %v2592, %v2593
      %v2595 = vsel %vm684, %v2396, 0.0
      %v2596 = vadd.f32 %v2594, %v2595
      %v2597 = vsel %vm684, %v2397, 0.0
      %v2598 = vadd.f32 %v2596, %v2597
      %v2599 = vsel %vm684, %v2398, 0.0
      %v2600 = vadd.f32 %v2598, %v2599
      %v2601 = vsel %vm684, %v2399, 0.0
      %v2602 = vadd.f32 %v2600, %v2601
      %v2603 = vsel %vm684, %v2400, 0.0
      %v2604 = vadd.f32 %v2602, %v2603
      %v2605 = vsel %vm684, %v2401, 0.0
      %v2606 = vadd.f32 %v2604, %v2605
      %v2607 = vsel %vm684, %v2402, 0.0
      %v2608 = vadd.f32 %v2606, %v2607
      %v2609 = vsel %vm684, %v2403, 0.0
      %v2610 = vadd.f32 %v2608, %v2609
      %v2611 = vsel %vm684, %v2404, 0.0
      %v2612 = vadd.f32 %v2610, %v2611
      %v2613 = vsel %vm684, %v2405, 0.0
      %v2614 = vadd.f32 %v2612, %v2613
      %v2615 = vsel %vm684, %v2406, 0.0
      %v2616 = vadd.f32 %v2614, %v2615
      %v2617 = vsel %vm684, %v2407, 0.0
      %v2618 = vadd.f32 %v2616, %v2617
      %v2619 = vsel %vm684, %v2408, 0.0
      %v2620 = vadd.f32 %v2618, %v2619
      %v2621 = vsel %vm684, %v2409, 0.0
      %v2622 = vadd.f32 %v2620, %v2621
      %v2623 = vsel %vm684, %v2410, 0.0
      %v2624 = vadd.f32 %v2622, %v2623
      %v2625 = vsel %vm684, %v2411, 0.0
      %v2626 = vadd.f32 %v2624, %v2625
      %v2627 = vsel %vm684, %v2412, 0.0
      %v2628 = vadd.f32 %v2626, %v2627
      %v2629 = vsel %vm684, %v2413, 0.0
      %v2630 = vadd.f32 %v2628, %v2629
      %v2631 = vsel %vm684, %v2414, 0.0
      %v2632 = vadd.f32 %v2630, %v2631
      %v2633 = vsel %vm684, %v2415, 0.0
      %v2634 = vadd.f32 %v2632, %v2633
      %v2635 = vsel %vm684, %v2416, 0.0
      %v2636 = vadd.f32 %v2634, %v2635
      %v2637 = vsel %vm684, %v2417, 0.0
      %v2638 = vadd.f32 %v2636, %v2637
      %v2639 = vsel %vm684, %v2418, 0.0
      %v2640 = vadd.f32 %v2638, %v2639
      %v2641 = vsel %vm684, %v2419, 0.0
      %v2642 = vadd.f32 %v2640, %v2641
      %v2643 = vsel %vm684, %v2420, 0.0
      %v2644 = vadd.f32 %v2642, %v2643
      %v2645 = vsel %vm684, %v2421, 0.0
      %v2646 = vadd.f32 %v2644, %v2645
      %v2647 = vsel %vm684, %v2422, 0.0
      %v2648 = vadd.f32 %v2646, %v2647
      %v2649 = vsel %vm684, %v2423, 0.0
      %v2650 = vadd.f32 %v2648, %v2649
      %v2651 = vsel %vm684, %v2424, 0.0
      %v2652 = vadd.f32 %v2650, %v2651
      %v2653 = vsel %vm684, %v2425, 0.0
      %v2654 = vadd.f32 %v2652, %v2653
      %v2655 = vsel %vm684, %v2426, 0.0
      %v2656 = vadd.f32 %v2654, %v2655
      %v2657 = vsel %vm684, %v2427, 0.0
      %v2658 = vadd.f32 %v2656, %v2657
      %v2659 = vsel %vm684, %v2428, 0.0
      %v2660 = vadd.f32 %v2658, %v2659
      %v2661 = vsel %vm684, %v2429, 0.0
      %v2662 = vadd.f32 %v2660, %v2661
      %v2663 = vsel %vm684, %v2430, 0.0
      %v2664 = vadd.f32 %v2662, %v2663
      %v2665 = vsel %vm684, %v2431, 0.0
      %v2666 = vadd.f32 %v2664, %v2665
      %v2667 = vsel %vm684, %v2432, 0.0
      %v2668 = vadd.f32 %v2666, %v2667
      %v2669 = vsel %vm684, %v2433, 0.0
      %v2670 = vadd.f32 %v2668, %v2669
      %v2671 = vsel %vm684, %v2434, 0.0
      %v2672 = vadd.f32 %v2670, %v2671
      %v2673 = vsel %vm684, %v2435, 0.0
      %v2674 = vadd.f32 %v2672, %v2673
      %v2675 = vsel %vm684, %v2436, 0.0
      %v2676 = vadd.f32 %v2674, %v2675
      %v2677 = vsel %vm684, %v2437, 0.0
      %v2678 = vadd.f32 %v2676, %v2677
      %v2679 = vsel %vm684, %v2438, 0.0
      %v2680 = vadd.f32 %v2678, %v2679
      %v2681 = vsel %vm684, %v2439, 0.0
      %v2682 = vadd.f32 %v2680, %v2681
      %v2683 = vsel %vm684, %v2440, 0.0
      %v2684 = vadd.f32 %v2682, %v2683
      %v2685 = vsel %vm684, %v2441, 0.0
      %v2686 = vadd.f32 %v2684, %v2685
      %v2687 = vsel %vm684, %v2442, 0.0
      %v2688 = vadd.f32 %v2686, %v2687
      %v2689 = vsel %vm684, %v2443, 0.0
      %v2690 = vadd.f32 %v2688, %v2689
      %v2691 = vsel %vm684, %v2444, 0.0
      %v2692 = vadd.f32 %v2690, %v2691
      %v2693 = vsel %vm684, %v2445, 0.0
      %v2694 = vadd.f32 %v2692, %v2693
      %v2695 = vsel %vm684, %v2446, 0.0
      %v2696 = vadd.f32 %v2694, %v2695
      %v2697 = vsel %vm684, %v2447, 0.0
      %v2698 = vadd.f32 %v2696, %v2697
      %v2699 = vsel %vm684, %v2448, 0.0
      %v2700 = vadd.f32 %v2698, %v2699
      %v2701 = vsel %vm684, %v2449, 0.0
      %v2702 = vadd.f32 %v2700, %v2701
      %v2703 = vsel %vm684, %v2450, 0.0
      %v2704 = vadd.f32 %v2702, %v2703
      %v2705 = vsel %vm684, %v2451, 0.0
      %v2706 = vadd.f32 %v2704, %v2705
      %v2707 = vrot.slane %v2706, 4
      %v2708 = vadd.f32 %v2706, %v2707
      %v2709 = vrot.slane %v2708, 2
      %v2710 = vadd.f32 %v2708, %v2709
      %v2711 = vrot.slane %v2710, 1
      %v2712 = vadd.f32 %v2710, %v2711
      %v2713 = vlaneseq
      %v2714 = vshrl.u32 %v2713, 7
      %vm2715 = vcmp.eq.s32.totalorder %v2714, 0
      %v2716 = vsel %vm2715, %v2323, 0.0
      %vm2717 = vcmp.eq.s32.totalorder %v2714, 1
      %v2718 = vsel %vm2717, %v2712, 0.0
      %v2719 = vadd.f32 %v2716, %v2718
      %2720 = vst.msk [vmem:[%s211] sm:$0xff] %vm684, %v2719
      %s2721 = smul.u32 128, %s16
      %p2722 = scmp.lt.s32.totalorder %s2721, 255
      %s2723 = scalar_select %p2722, %s2721, 255
      %s2724 = smul.addr %s2723, 4
      %s2725 = scalar_lea.vmem %s3, %s2724
      %p2726 = scmp.lt.s32.totalorder %s16, 1
      %s2727 = scalar_select %p2726, %s16, 1
      %s2728 = smul.addr %s2727, 8
      %s2729 = scalar_lea.vmem %s4, %s2728
      // Predicated region
      $region33: #{cvae_forward.18} parent=31 // pred_check
        %p2730 = pneg %p102
      $region34: #{cvae_forward.18} parent=31 // pred_check_branch
        %2732 = sbr.rel (%p2730) target = $region36
      $region35: #{cvae_forward.18} parent=31 // pred_region
        %s2733 = smul.u32 128, %s16
      $region36: #{cvae_forward.18} parent=31 // pred_fallthru
        _
      // Predicated region
      $region37: #{cvae_forward.18} parent=31 // pred_check
        %p2734 = pneg %p128
      $region38: #{cvae_forward.18} parent=31 // pred_check_branch
        %2736 = sbr.rel (%p2734) target = $region40
      $region39: #{cvae_forward.18} parent=31 // pred_region
        _
      $region40: #{cvae_forward.18} parent=31 // pred_fallthru
        _
    $region32: #{cvae_forward.18} parent=5 // pred_fallthru
      _
    %p2737 = scmp.le.s32.totalorder 2, %s11
    // Predicated region
    $region41: #{cvae_forward.18} parent=5 // pred_check
      %p2738 = pneg %p2737
    $region42: #{cvae_forward.18} parent=5 // pred_check_branch
      %2740 = sbr.rel (%p2738) target = $region44
    $region43: #{cvae_forward.18} parent=5 // pred_region
      %s2741 = ssub.s32 %s11, 2
      // Predicated region
      $region45: #{cvae_forward.18} parent=43 // pred_check
        %p2742 = pneg %p108
      $region46: #{cvae_forward.18} parent=43 // pred_check_branch
        %2744 = sbr.rel (%p2742) target = $region48
      $region47: #{cvae_forward.18} parent=43 // pred_region
        %s2745 = smul.u32 128, %s17
        %p2746 = scmp.lt.s32.totalorder %s2745, 255
        %s2747 = scalar_select %p2746, %s2745, 255
        %s2748 = smul.addr %s2747, 4
        %s2749 = scalar_lea.vmem %s3, %s2748
      $region48: #{cvae_forward.18} parent=43 // pred_fallthru
        _
      // Predicated region
      $region49: #{cvae_forward.18} parent=43 // pred_check
        %p2750 = pneg %p134
      $region50: #{cvae_forward.18} parent=43 // pred_check_branch
        %2752 = sbr.rel (%p2750) target = $region52
      $region51: #{cvae_forward.18} parent=43 // pred_region
        %p2753 = scmp.lt.s32.totalorder %s17, 1
        %s2754 = scalar_select %p2753, %s17, 1
        %s2755 = smul.addr %s2754, 8
        %s2756 = scalar_lea.vmem %s4, %s2755
      $region52: #{cvae_forward.18} parent=43 // pred_fallthru
        _
    $region44: #{cvae_forward.18} parent=5 // pred_fallthru
      _
  $region6: #{cvae_forward.18} parent=0 // loop_footer
    %s15 = sadd.s32 1, %s11
  $region7: #{cvae_forward.18} parent=0 // loop_footer_branch
    %10 = sbr.rel target = $region3
  $region8: #{cvae_forward.18} parent=0 // loop_exit
    _

// kernel: cvae_forward.19
$region0: #{cvae_forward.19}
  #allocation0 [shape = 'u32[]', space=smem, size = 0x4, offset = 0x4, fixed_abs, tag = 'smem constant byte address 0x4 - core index']
  #allocation1 [shape = 'u32[144,128]{1,0:T(1,128)}', space=vmem, size = 0x12000, scoped, tag = 'internal scratch']
  #allocation2 [shape = 'f32[1,1]{1,0:T(1,128)S(1)}', space=vmem, size = 0x200, scoped, tag = 'scoped memory for cvae_forward.19']
  %s0 = inlined_call_operand.vmem [shape: bf16[8,72], index: 0, kind: input, shape index: {}]
  %s1 = inlined_call_operand.vmem [shape: bf16[72,8192], index: 1, kind: input, shape index: {}]
  %s2 = inlined_call_operand.<no memory space> [shape: f32[1,1], index: 2, kind: input, shape index: {}]
  %s3 = inlined_call_operand.vmem [shape: f32[8,8192], index: 3, kind: output, shape index: {}]
  %s4 = sld [smem:[#allocation0]]
  $region68: #{cvae_forward.19} parent=0
    _
  %s6 = ssub.s32 1, %s4
  %s7 = scalar_select 0, %s6, %s4
  %v8 = vstv %s2
  %9 = vst [vmem:[#allocation2] sm:$0x1] %v8
  $region1: #{cvae_forward.19} parent=0
    #allocation3 [shape = 'u8[294912]{0}', space=vmem, size = 0x48000, scoped, tag = 'input window, operand 1']
    loop: start=0, step=1, limit=10
    $region2: #{cvae_forward.19} parent=1 // loop_pre_header
      _
    $region3: #{cvae_forward.19} parent=1 // loop_header
      %s11 = sphi 0, %s15
      %p12 = scmp.ge.s32.totalorder %s11, 10
      %s19 = sphi 0, %s19
      %s21 = sphi 0, %s19
      %s22 = sphi 0, %s21
      %s36 = sphi 0, %s22
      %s42 = sphi 0, %s44
      %s45 = sphi 0, %s42
      %s46 = sphi 0, %s45
      %s62 = sphi 0, %s46
      %s66 = sphi 0, %s66
      %s68 = sphi 0, %s66
      %s69 = sphi 0, %s68
      %s83 = sphi 0, %s69
      %s89 = sphi 0, %s91
      %s92 = sphi 0, %s89
      %s93 = sphi 0, %s92
      %s109 = sphi 0, %s93
    $region4: #{cvae_forward.19} parent=1 // loop_header_branch
      %14 = sbr.rel (%p12) target = $region8
    $region5: #{cvae_forward.19} parent=1 // loop_body
      %s16 = ssub.s32 %s11, 1
      %s17 = ssub.s32 %s11, 2
      %s18 = sadd.s32 %s11, 1
      %s20 = sadd.s32 %s19, 1
      %p23 = scmp.eq.s32.totalorder %s11, 7
      %p24 = scmp.ne.s32.totalorder %s19, %s21
      %p25 = scmp.eq.s32.totalorder %s11, 0
      %p26 = por %p24, %p25
      %p27 = scmp.ne.s32.totalorder %s19, %s21
      %p28 = scmp.eq.s32.totalorder %s16, 7
      %p29 = por %p27, %p28
      %p30 = scmp.ne.s32.totalorder %s21, %s22
      %p31 = scmp.eq.s32.totalorder %s16, 0
      %p32 = por %p30, %p31
      %p33 = scmp.ne.s32.totalorder %s21, %s22
      %p34 = scmp.eq.s32.totalorder %s17, 7
      %p35 = por %p33, %p34
      %p37 = scmp.ne.s32.totalorder %s22, %s36
      %p38 = scmp.eq.s32.totalorder %s17, 0
      %p39 = por %p37, %p38
      %s40 = ssub.s32 %s11, %s18
      %p41 = scmp.eq.s32.totalorder %s40, 0
      %s43 = sadd.s32 %s42, 1
      %s44 = scalar_select %p41, %s42, %s43
      %p47 = pneg %p41
      %p48 = scmp.eq.s32.totalorder %s11, 7
      %p49 = por %p47, %p48
      %p50 = scmp.ne.s32.totalorder %s42, %s45
      %p51 = scmp.eq.s32.totalorder %s11, 0
      %p52 = por %p50, %p51
      %p53 = scmp.ne.s32.totalorder %s42, %s45
      %p54 = scmp.eq.s32.totalorder %s16, 7
      %p55 = por %p53, %p54
      %p56 = scmp.ne.s32.totalorder %s45, %s46
      %p57 = scmp.eq.s32.totalorder %s16, 0
      %p58 = por %p56, %p57
      %p59 = scmp.ne.s32.totalorder %s45, %s46
      %p60 = scmp.eq.s32.totalorder %s17, 7
      %p61 = por %p59, %p60
      %p63 = scmp.ne.s32.totalorder %s46, %s62
      %p64 = scmp.eq.s32.totalorder %s17, 0
      %p65 = por %p63, %p64
      %s67 = sadd.s32 %s66, 1
      %p70 = scmp.eq.s32.totalorder %s11, 7
      %p71 = scmp.ne.s32.totalorder %s66, %s68
      %p72 = scmp.eq.s32.totalorder %s11, 0
      %p73 = por %p71, %p72
      %p74 = scmp.ne.s32.totalorder %s66, %s68
      %p75 = scmp.eq.s32.totalorder %s16, 7
      %p76 = por %p74, %p75
      %p77 = scmp.ne.s32.totalorder %s68, %s69
      %p78 = scmp.eq.s32.totalorder %s16, 0
      %p79 = por %p77, %p78
      %p80 = scmp.ne.s32.totalorder %s68, %s69
      %p81 = scmp.eq.s32.totalorder %s17, 7
      %p82 = por %p80, %p81
      %p84 = scmp.ne.s32.totalorder %s69, %s83
      %p85 = scmp.eq.s32.totalorder %s17, 0
      %p86 = por %p84, %p85
      %s87 = ssub.s32 %s11, %s18
      %p88 = scmp.eq.s32.totalorder %s87, 0
      %s90 = sadd.s32 %s89, 1
      %s91 = scalar_select %p88, %s89, %s90
      %p94 = pneg %p88
      %p95 = scmp.eq.s32.totalorder %s11, 7
      %p96 = por %p94, %p95
      %p97 = scmp.ne.s32.totalorder %s89, %s92
      %p98 = scmp.eq.s32.totalorder %s11, 0
      %p99 = por %p97, %p98
      %p100 = scmp.ne.s32.totalorder %s89, %s92
      %p101 = scmp.eq.s32.totalorder %s16, 7
      %p102 = por %p100, %p101
      %p103 = scmp.ne.s32.totalorder %s92, %s93
      %p104 = scmp.eq.s32.totalorder %s16, 0
      %p105 = por %p103, %p104
      %p106 = scmp.ne.s32.totalorder %s92, %s93
      %p107 = scmp.eq.s32.totalorder %s17, 7
      %p108 = por %p106, %p107
      %p110 = scmp.ne.s32.totalorder %s93, %s109
      %p111 = scmp.eq.s32.totalorder %s17, 0
      %p112 = por %p110, %p111
      %p113 = scmp.le.s32.totalorder 1, %s11
      %p114 = scmp.lt.s32.totalorder %s11, 9
      %p115 = pnand %p113, %p114
      %p116 = pneg %p115
      // Predicated region
      $region9: #{cvae_forward.19} parent=5 // pred_check
        _
      $region10: #{cvae_forward.19} parent=5 // pred_check_branch
        %118 = sbr.rel (%p115) target = $region12
      $region11: #{cvae_forward.19} parent=5 // pred_region
        %s119 = ssub.s32 %s11, 1
        // Predicated region
        $region13: #{cvae_forward.19} parent=11 // pred_check
          %p120 = pneg %p32
        $region14: #{cvae_forward.19} parent=11 // pred_check_branch
          %122 = sbr.rel (%p120) target = $region16
        $region15: #{cvae_forward.19} parent=11 // pred_region
          _
        $region16: #{cvae_forward.19} parent=11 // pred_fallthru
          _
        // Predicated region
        $region17: #{cvae_forward.19} parent=11 // pred_check
          %p123 = pneg %p79
        $region18: #{cvae_forward.19} parent=11 // pred_check_branch
          %125 = sbr.rel (%p123) target = $region20
        $region19: #{cvae_forward.19} parent=11 // pred_region
          _
        $region20: #{cvae_forward.19} parent=11 // pred_fallthru
          _
      $region12: #{cvae_forward.19} parent=5 // pred_fallthru
        _
      %p126 = scmp.lt.s32.totalorder %s11, 8
      // Predicated region
      $region21: #{cvae_forward.19} parent=5 // pred_check
        %p127 = pneg %p126
      $region22: #{cvae_forward.19} parent=5 // pred_check_branch
        %129 = sbr.rel (%p127) target = $region24
      $region23: #{cvae_forward.19} parent=5 // pred_region
        // Predicated region
        $region25: #{cvae_forward.19} parent=23 // pred_check
          %p130 = pneg %p52
        $region26: #{cvae_forward.19} parent=23 // pred_check_branch
          %132 = sbr.rel (%p130) target = $region28
        $region27: #{cvae_forward.19} parent=23 // pred_region
          %s133 = sand.u32 %s42, 1
          %s134 = sand.u32 %s42, 1
          %s135 = smul.addr %s134, 288
          %s136 = scalar_lea.vmem [#allocation3], %s135
          %s137 = smul.u32 8, %s11
          %s138 = smul.addr %s137, 4
          %s139 = scalar_lea.vmem %s1, %s138
          // Predicated region
          $region29: #{cvae_forward.19} parent=27 // pred_check
            _
          $region30: #{cvae_forward.19} parent=27 // pred_check_branch
            %141 = sbr.rel (0) target = $region32
          $region31: #{cvae_forward.19} parent=27 // pred_region
            // Predicated region
            $region33: #{cvae_forward.19} parent=31 // pred_check
              _
            $region34: #{cvae_forward.19} parent=31 // pred_check_branch
              %143 = sbr.rel (0) target = $region36
            $region35: #{cvae_forward.19} parent=31 // pred_region
              loop: start=0, step=1, limit=1
              $region37: #{cvae_forward.19} parent=35 // loop_pre_header
                _
              $region38: #{cvae_forward.19} parent=35 // loop_header
                %s145 = sphi 0, %s149
                %p146 = scmp.ge.s32.totalorder %s145, 1
                %s150 = sphi %s139, %s139
                %s151 = sphi %s136, %s136
              $region39: #{cvae_forward.19} parent=35 // loop_header_branch
                %148 = sbr.rel (%p146) target = $region43
              $region40: #{cvae_forward.19} parent=35 // loop_body
                %v152 = vld [vmem:[%s150] sm:$0xff]
                %153 = vst [vmem:[%s151] sm:$0xff] %v152
                %v154 = vld [vmem:[%s150 + $0x8] sm:$0xff]
                %155 = vst [vmem:[%s151 + $0x8] sm:$0xff] %v154
                %v156 = vld [vmem:[%s150 + $0x10] sm:$0xff]
                %157 = vst [vmem:[%s151 + $0x10] sm:$0xff] %v156
                %v158 = vld [vmem:[%s150 + $0x18] sm:$0xff]
                %159 = vst [vmem:[%s151 + $0x18] sm:$0xff] %v158
                %v160 = vld [vmem:[%s150 + $0x100] sm:$0xff]
                %161 = vst [vmem:[%s151 + $0x20] sm:$0xff] %v160
                %v162 = vld [vmem:[%s150 + $0x108] sm:$0xff]
                %163 = vst [vmem:[%s151 + $0x28] sm:$0xff] %v162
                %v164 = vld [vmem:[%s150 + $0x110] sm:$0xff]
                %165 = vst [vmem:[%s151 + $0x30] sm:$0xff] %v164
                %v166 = vld [vmem:[%s150 + $0x118] sm:$0xff]
                %167 = vst [vmem:[%s151 + $0x38] sm:$0xff] %v166
                %v168 = vld [vmem:[%s150 + $0x200] sm:$0xff]
                %169 = vst [vmem:[%s151 + $0x40] sm:$0xff] %v168
                %v170 = vld [vmem:[%s150 + $0x208] sm:$0xff]
                %171 = vst [vmem:[%s151 + $0x48] sm:$0xff] %v170
                %v172 = vld [vmem:[%s150 + $0x210] sm:$0xff]
                %173 = vst [vmem:[%s151 + $0x50] sm:$0xff] %v172
                %v174 = vld [vmem:[%s150 + $0x218] sm:$0xff]
                %175 = vst [vmem:[%s151 + $0x58] sm:$0xff] %v174
                %v176 = vld [vmem:[%s150 + $0x300] sm:$0xff]
                %177 = vst [vmem:[%s151 + $0x60] sm:$0xff] %v176
                %v178 = vld [vmem:[%s150 + $0x308] sm:$0xff]
                %179 = vst [vmem:[%s151 + $0x68] sm:$0xff] %v178
                %v180 = vld [vmem:[%s150 + $0x310] sm:$0xff]
                %181 = vst [vmem:[%s151 + $0x70] sm:$0xff] %v180
                %v182 = vld [vmem:[%s150 + $0x318] sm:$0xff]
                %183 = vst [vmem:[%s151 + $0x78] sm:$0xff] %v182
                %v184 = vld [vmem:[%s150 + $0x400] sm:$0xff]
                %185 = vst [vmem:[%s151 + $0x80] sm:$0xff] %v184
                %v186 = vld [vmem:[%s150 + $0x408] sm:$0xff]
                %187 = vst [vmem:[%s151 + $0x88] sm:$0xff] %v186
                %v188 = vld [vmem:[%s150 + $0x410] sm:$0xff]
                %189 = vst [vmem:[%s151 + $0x90] sm:$0xff] %v188
                %v190 = vld [vmem:[%s150 + $0x418] sm:$0xff]
                %191 = vst [vmem:[%s151 + $0x98] sm:$0xff] %v190
                %v192 = vld [vmem:[%s150 + $0x500] sm:$0xff]
                %193 = vst [vmem:[%s151 + $0xa0] sm:$0xff] %v192
                %v194 = vld [vmem:[%s150 + $0x508] sm:$0xff]
                %195 = vst [vmem:[%s151 + $0xa8] sm:$0xff] %v194
                %v196 = vld [vmem:[%s150 + $0x510] sm:$0xff]
                %197 = vst [vmem:[%s151 + $0xb0] sm:$0xff] %v196
                %v198 = vld [vmem:[%s150 + $0x518] sm:$0xff]
                %199 = vst [vmem:[%s151 + $0xb8] sm:$0xff] %v198
                %v200 = vld [vmem:[%s150 + $0x600] sm:$0xff]
                %201 = vst [vmem:[%s151 + $0xc0] sm:$0xff] %v200
                %v202 = vld [vmem:[%s150 + $0x608] sm:$0xff]
                %203 = vst [vmem:[%s151 + $0xc8] sm:$0xff] %v202
                %v204 = vld [vmem:[%s150 + $0x610] sm:$0xff]
                %205 = vst [vmem:[%s151 + $0xd0] sm:$0xff] %v204
                %v206 = vld [vmem:[%s150 + $0x618] sm:$0xff]
                %207 = vst [vmem:[%s151 + $0xd8] sm:$0xff] %v206
                %v208 = vld [vmem:[%s150 + $0x700] sm:$0xff]
                %209 = vst [vmem:[%s151 + $0xe0] sm:$0xff] %v208
                %v210 = vld [vmem:[%s150 + $0x708] sm:$0xff]
                %211 = vst [vmem:[%s151 + $0xe8] sm:$0xff] %v210
                %v212 = vld [vmem:[%s150 + $0x710] sm:$0xff]
                %213 = vst [vmem:[%s151 + $0xf0] sm:$0xff] %v212
                %v214 = vld [vmem:[%s150 + $0x718] sm:$0xff]
                %215 = vst [vmem:[%s151 + $0xf8] sm:$0xff] %v214
                %v216 = vld [vmem:[%s150 + $0x800] sm:$0xff]
                %217 = vst [vmem:[%s151 + $0x100] sm:$0xff] %v216
                %v218 = vld [vmem:[%s150 + $0x808] sm:$0xff]
                %219 = vst [vmem:[%s151 + $0x108] sm:$0xff] %v218
                %v220 = vld [vmem:[%s150 + $0x810] sm:$0xff]
                %221 = vst [vmem:[%s151 + $0x110] sm:$0xff] %v220
                %v222 = vld [vmem:[%s150 + $0x818] sm:$0xff]
                %223 = vst [vmem:[%s151 + $0x118] sm:$0xff] %v222
              $region41: #{cvae_forward.19} parent=35 // loop_footer
                %s149 = sadd.s32 1, %s145
              $region42: #{cvae_forward.19} parent=35 // loop_footer_branch
                %144 = sbr.rel target = $region38
              $region43: #{cvae_forward.19} parent=35 // loop_exit
                _
            $region36: #{cvae_forward.19} parent=31 // pred_fallthru
              _
            // Predicated region
            $region44: #{cvae_forward.19} parent=31 // pred_check
              _
            $region45: #{cvae_forward.19} parent=31 // pred_check_branch
              %225 = sbr.rel target = $region47
            $region46: #{cvae_forward.19} parent=31 // pred_region
              _
            $region47: #{cvae_forward.19} parent=31 // pred_fallthru
              _
          $region32: #{cvae_forward.19} parent=27 // pred_fallthru
            _
          %226 = vnop
        $region28: #{cvae_forward.19} parent=23 // pred_fallthru
          _
      $region24: #{cvae_forward.19} parent=5 // pred_fallthru
        _
      %p227 = scmp.le.s32.totalorder 1, %s11
      %p228 = scmp.lt.s32.totalorder %s11, 9
      %p229 = pnand %p227, %p228
      %p230 = pneg %p229
      // Predicated region
      $region48: #{cvae_forward.19} parent=5 // pred_check
        _
      $region49: #{cvae_forward.19} parent=5 // pred_check_branch
        %232 = sbr.rel (%p229) target = $region51
      $region50: #{cvae_forward.19} parent=5 // pred_region
        %s233 = ssub.s32 %s11, 1
        %s234 = sand.u32 %s45, 1
        %s235 = sand.u32 %s45, 1
        %s236 = smul.addr %s235, 288
        %s237 = scalar_lea.vmem [#allocation3], %s236
        // Predicated region
        $region52: #{cvae_forward.19} parent=50 // pred_check
          %p238 = pneg %p58
        $region53: #{cvae_forward.19} parent=50 // pred_check_branch
          %240 = sbr.rel (%p238) target = $region55
        $region54: #{cvae_forward.19} parent=50 // pred_region
          _
        $region55: #{cvae_forward.19} parent=50 // pred_fallthru
          _
        %p241 = pneg %p32
        %p242 = pneg %p29
        %s243 = sand.u32 %s45, 1
        %s244 = sand.u32 %s45, 1
        %s245 = smul.addr %s244, 288
        %s246 = scalar_lea.vmem [#allocation3], %s245
        %p247 = pneg %p58
        %p248 = pneg %p55
        %p249 = pneg %p79
        %p250 = pneg %p76
        %p251 = pneg %p105
        %p252 = pneg %p102
        %s253 = smul.u32 8, %s16
        %p254 = scmp.lt.s32.totalorder %s253, 63
        %s255 = scalar_select %p254, %s253, 63
        %s256 = smul.addr %s255, 8
        %s257 = scalar_lea.vmem %s3, %s256
        %s258 = smul.u32 8, %s16
        %s259 = smul.u32 8, %s16
        %p260 = scmp.lt.s32.totalorder %s259, 63
        %s261 = scalar_select %p260, %s259, 63
        %s262 = smul.addr %s261, 8
        %s263 = scalar_lea.vmem %s3, %s262
        %s264 = smul.u32 8, %s16
        %v266 = vld [vmem:[%s0] sm:$0xf]
        %v267 = vld [vmem:[%s237] sm:$0xff]
        %v268 = vld [vmem:[%s237 + $0x8] sm:$0xff]
        %v269 = vld [vmem:[%s237 + $0x10] sm:$0xff]
        %v270 = vld [vmem:[%s237 + $0x18] sm:$0xff]
        %v271 = vld [vmem:[%s237 + $0x20] sm:$0xff]
        %v272 = vld [vmem:[%s237 + $0x28] sm:$0xff]
        %v273 = vld [vmem:[%s237 + $0x30] sm:$0xff]
        %v274 = vld [vmem:[%s237 + $0x38] sm:$0xff]
        %v275 = vld [vmem:[%s237 + $0x40] sm:$0xff]
        %v276 = vld [vmem:[%s237 + $0x48] sm:$0xff]
        %v277 = vld [vmem:[%s237 + $0x50] sm:$0xff]
        %v278 = vld [vmem:[%s237 + $0x58] sm:$0xff]
        %v279 = vld [vmem:[%s237 + $0x60] sm:$0xff]
        %v280 = vld [vmem:[%s237 + $0x68] sm:$0xff]
        %v281 = vld [vmem:[%s237 + $0x70] sm:$0xff]
        %v282 = vld [vmem:[%s237 + $0x78] sm:$0xff]
        %v283 = vld [vmem:[%s237 + $0x80] sm:$0xff]
        %v284 = vld [vmem:[%s237 + $0x88] sm:$0xff]
        %v285 = vld [vmem:[%s237 + $0x90] sm:$0xff]
        %v286 = vld [vmem:[%s237 + $0x98] sm:$0xff]
        %v287 = vld [vmem:[%s237 + $0xa0] sm:$0xff]
        %v288 = vld [vmem:[%s237 + $0xa8] sm:$0xff]
        %v289 = vld [vmem:[%s237 + $0xb0] sm:$0xff]
        %v290 = vld [vmem:[%s237 + $0xb8] sm:$0xff]
        %v291 = vld [vmem:[%s237 + $0xc0] sm:$0xff]
        %v292 = vld [vmem:[%s237 + $0xc8] sm:$0xff]
        %v293 = vld [vmem:[%s237 + $0xd0] sm:$0xff]
        %v294 = vld [vmem:[%s237 + $0xd8] sm:$0xff]
        %v295 = vld [vmem:[%s237 + $0xe0] sm:$0xff]
        %v296 = vld [vmem:[%s237 + $0xe8] sm:$0xff]
        %v297 = vld [vmem:[%s237 + $0xf0] sm:$0xff]
        %v298 = vld [vmem:[%s237 + $0xf8] sm:$0xff]
        %v299 = vld [vmem:[%s237 + $0x100] sm:$0xff]
        %v300 = vld [vmem:[%s237 + $0x108] sm:$0xff]
        %v301 = vld [vmem:[%s237 + $0x110] sm:$0xff]
        %v302 = vld [vmem:[%s237 + $0x118] sm:$0xff]
        %v303 = vld [vmem:[#allocation2] sm:$0x1]
        %v305 = vlaneseq
        %v306 = vshrl.u32 %v305, 7
        %v307 = vsub.s32 0, %v306
        %v308 = vrot.slane %v303, %v307
        %309 = vset.pattern.permute.xlu0 0
        %310 = vperm.xlu0 %309, %v308
        %v311 = vpop.permute.xlu0 %310
        %v349 = vunpack.c.l.b16 %v267
        %v350 = vunpack.c.h.b16 %v267
        %v351 = vunpack.c.l.b16 %v268
        %v352 = vunpack.c.h.b16 %v268
        %v353 = vunpack.c.l.b16 %v269
        %v354 = vunpack.c.h.b16 %v269
        %v355 = vunpack.c.l.b16 %v270
        %v356 = vunpack.c.h.b16 %v270
        %v357 = vunpack.c.l.b16 %v271
        %v358 = vunpack.c.h.b16 %v271
        %v359 = vunpack.c.l.b16 %v272
        %v360 = vunpack.c.h.b16 %v272
        %v361 = vunpack.c.l.b16 %v273
        %v362 = vunpack.c.h.b16 %v273
        %v363 = vunpack.c.l.b16 %v274
        %v364 = vunpack.c.h.b16 %v274
        %v365 = vunpack.c.l.b16 %v275
        %v366 = vunpack.c.h.b16 %v275
        %v367 = vunpack.c.l.b16 %v276
        %v368 = vunpack.c.h.b16 %v276
        %v369 = vunpack.c.l.b16 %v277
        %v370 = vunpack.c.h.b16 %v277
        %v371 = vunpack.c.l.b16 %v278
        %v372 = vunpack.c.h.b16 %v278
        %v373 = vunpack.c.l.b16 %v279
        %v374 = vunpack.c.h.b16 %v279
        %v375 = vunpack.c.l.b16 %v280
        %v376 = vunpack.c.h.b16 %v280
        %v377 = vunpack.c.l.b16 %v281
        %v378 = vunpack.c.h.b16 %v281
        %v379 = vunpack.c.l.b16 %v282
        %v380 = vunpack.c.h.b16 %v282
        %v381 = vunpack.c.l.b16 %v283
        %v382 = vunpack.c.h.b16 %v283
        %v383 = vunpack.c.l.b16 %v284
        %v384 = vunpack.c.h.b16 %v284
        %v385 = vunpack.c.l.b16 %v285
        %v386 = vunpack.c.h.b16 %v285
        %v387 = vunpack.c.l.b16 %v286
        %v388 = vunpack.c.h.b16 %v286
        %v389 = vunpack.c.l.b16 %v287
        %v390 = vunpack.c.h.b16 %v287
        %v391 = vunpack.c.l.b16 %v288
        %v392 = vunpack.c.h.b16 %v288
        %v393 = vunpack.c.l.b16 %v289
        %v394 = vunpack.c.h.b16 %v289
        %v395 = vunpack.c.l.b16 %v290
        %v396 = vunpack.c.h.b16 %v290
        %v397 = vunpack.c.l.b16 %v291
        %v398 = vunpack.c.h.b16 %v291
        %v399 = vunpack.c.l.b16 %v292
        %v400 = vunpack.c.h.b16 %v292
        %v401 = vunpack.c.l.b16 %v293
        %v402 = vunpack.c.h.b16 %v293
        %v403 = vunpack.c.l.b16 %v294
        %v404 = vunpack.c.h.b16 %v294
        %v405 = vunpack.c.l.b16 %v295
        %v406 = vunpack.c.h.b16 %v295
        %v407 = vunpack.c.l.b16 %v296
        %v408 = vunpack.c.h.b16 %v296
        %v409 = vunpack.c.l.b16 %v297
        %v410 = vunpack.c.h.b16 %v297
        %v411 = vunpack.c.l.b16 %v298
        %v412 = vunpack.c.h.b16 %v298
        %v413 = vunpack.c.l.b16 %v299
        %v414 = vunpack.c.h.b16 %v299
        %v415 = vunpack.c.l.b16 %v300
        %v416 = vunpack.c.h.b16 %v300
        %v417 = vunpack.c.l.b16 %v301
        %v418 = vunpack.c.h.b16 %v301
        %v419 = vunpack.c.l.b16 %v302
        %v420 = vunpack.c.h.b16 %v302
        %v421 = vpack.c.b16 %v357, %v349
        %v422 = vpack.c.b16 %v358, %v350
        %v423 = vpack.c.b16 %v359, %v351
        %v424 = vpack.c.b16 %v360, %v352
        %v425 = vpack.c.b16 %v361, %v353
        %v426 = vpack.c.b16 %v362, %v354
        %v427 = vpack.c.b16 %v363, %v355
        %v428 = vpack.c.b16 %v364, %v356
        %v429 = vpack.c.b16 %v373, %v365
        %v430 = vpack.c.b16 %v374, %v366
        %v431 = vpack.c.b16 %v375, %v367
        %v432 = vpack.c.b16 %v376, %v368
        %v433 = vpack.c.b16 %v377, %v369
        %v434 = vpack.c.b16 %v378, %v370
        %v435 = vpack.c.b16 %v379, %v371
        %v436 = vpack.c.b16 %v380, %v372
        %v437 = vpack.c.b16 %v389, %v381
        %v438 = vpack.c.b16 %v390, %v382
        %v439 = vpack.c.b16 %v391, %v383
        %v440 = vpack.c.b16 %v392, %v384
        %v441 = vpack.c.b16 %v393, %v385
        %v442 = vpack.c.b16 %v394, %v386
        %v443 = vpack.c.b16 %v395, %v387
        %v444 = vpack.c.b16 %v396, %v388
        %v445 = vpack.c.b16 %v405, %v397
        %v446 = vpack.c.b16 %v406, %v398
        %v447 = vpack.c.b16 %v407, %v399
        %v448 = vpack.c.b16 %v408, %v400
        %v449 = vpack.c.b16 %v409, %v401
        %v450 = vpack.c.b16 %v410, %v402
        %v451 = vpack.c.b16 %v411, %v403
        %v452 = vpack.c.b16 %v412, %v404
        %v453 = vpack.c.b16 %v413, %v413
        %v454 = vpack.c.b16 %v414, %v414
        %v455 = vpack.c.b16 %v415, %v415
        %v456 = vpack.c.b16 %v416, %v416
        %v457 = vpack.c.b16 %v417, %v417
        %v458 = vpack.c.b16 %v418, %v418
        %v459 = vpack.c.b16 %v419, %v419
        %v460 = vpack.c.b16 %v420, %v420
        %vm493 = vcmask 588800
        %v495 = vsel %vm493, %v266, 0
        %vm497 = vcmask 1043456
        %v499 = vsel %vm497, %v453, 0
        %v502 = vsel %vm497, %v454, 0
        %v505 = vsel %vm497, %v455, 0
        %v508 = vsel %vm497, %v456, 0
        %v511 = vsel %vm497, %v457, 0
        %v514 = vsel %vm497, %v458, 0
        %v517 = vsel %vm497, %v459, 0
        %v520 = vsel %vm497, %v460, 0
        %522 = vmatprep.subr.bf16.mxu0 0
        %523 = vmatpush1.bf16.msra.mxu0 0
        %524 = vmatprep.subr.bf16.mxu0 0
        %525 = vmatpush1.bf16.msra.mxu0 0
        %526 = vmatprep.subr.bf16.mxu0 0
        %527 = vmatpush1.bf16.msra.mxu0 0
        %528 = vmatprep.subr.bf16.mxu0 %v502
        %529 = vmatpush1.bf16.msra.mxu0 %v499
        %530 = vmatprep.subr.bf16.mxu0 %v446
        %531 = vmatpush1.bf16.msra.mxu0 %v445
        %532 = vmatprep.subr.bf16.mxu0 %v438
        %533 = vmatpush1.bf16.msra.mxu0 %v437
        %534 = vmatprep.subr.bf16.mxu0 %v430
        %535 = vmatpush1.bf16.msra.mxu0 %v429
        %536 = vmatprep.subr.bf16.mxu0 %v422
        %537 = vmatpush1.bf16.msra.mxu0 %v421
        %538 = vmatprep.subr.bf16.mxu0 0
        %539 = vmatpush2.bf16.msra.mxu0 0
        %540 = vmatprep.subr.bf16.mxu0 0
        %541 = vmatpush2.bf16.msra.mxu0 0
        %542 = vmatprep.subr.bf16.mxu0 0
        %543 = vmatpush2.bf16.msra.mxu0 0
        %544 = vmatprep.subr.bf16.mxu0 0
        %545 = vmatpush2.bf16.msra.mxu0 0
        %546 = vmatprep.subr.bf16.mxu0 0
        %547 = vmatpush2.bf16.msra.mxu0 0
        %548 = vmatprep.subr.bf16.mxu0 0
        %549 = vmatpush2.bf16.msra.mxu0 0
        %550 = vmatprep.subr.bf16.mxu0 0
        %551 = vmatpush2.bf16.msra.mxu0 0
        %552 = vmatprep.subr.bf16.mxu0 0
        %553 = vmatpush2.bf16.msra.mxu0 0
        %554 = vmatprep.mubr.bf16.mxu0 0
        %555 = vmatmul.mubr.bf16.gmra.mxu0 %v495
        %v556 = vpop.f32.mrf.mxu0
        %v557 = vadd.f32 %v311, %v556
        %v558 = vpop.f32.mrf.mxu0
        %v559 = vadd.f32 %v311, %v558
        %v560 = vpop.f32.mrf.mxu0
        %v561 = vpop.f32.mrf.mxu0
        %562 = vdwg.mxu0
        %563 = vmatprep.subr.bf16.mxu0 0
        %564 = vmatpush1.bf16.msra.mxu0 0
        %565 = vmatprep.subr.bf16.mxu0 0
        %566 = vmatpush1.bf16.msra.mxu0 0
        %567 = vmatprep.subr.bf16.mxu0 0
        %568 = vmatpush1.bf16.msra.mxu0 0
        %569 = vmatprep.subr.bf16.mxu0 %v508
        %570 = vmatpush1.bf16.msra.mxu0 %v505
        %571 = vmatprep.subr.bf16.mxu0 %v448
        %572 = vmatpush1.bf16.msra.mxu0 %v447
        %573 = vmatprep.subr.bf16.mxu0 %v440
        %574 = vmatpush1.bf16.msra.mxu0 %v439
        %575 = vmatprep.subr.bf16.mxu0 %v432
        %576 = vmatpush1.bf16.msra.mxu0 %v431
        %577 = vmatprep.subr.bf16.mxu0 %v424
        %578 = vmatpush1.bf16.msra.mxu0 %v423
        %579 = vmatprep.subr.bf16.mxu0 0
        %580 = vmatpush2.bf16.msra.mxu0 0
        %581 = vmatprep.subr.bf16.mxu0 0
        %582 = vmatpush2.bf16.msra.mxu0 0
        %583 = vmatprep.subr.bf16.mxu0 0
        %584 = vmatpush2.bf16.msra.mxu0 0
        %585 = vmatprep.subr.bf16.mxu0 0
        %586 = vmatpush2.bf16.msra.mxu0 0
        %587 = vmatprep.subr.bf16.mxu0 0
        %588 = vmatpush2.bf16.msra.mxu0 0
        %589 = vmatprep.subr.bf16.mxu0 0
        %590 = vmatpush2.bf16.msra.mxu0 0
        %591 = vmatprep.subr.bf16.mxu0 0
        %592 = vmatpush2.bf16.msra.mxu0 0
        %593 = vmatprep.subr.bf16.mxu0 0
        %594 = vmatpush2.bf16.msra.mxu0 0
        %595 = vmatprep.mubr.bf16.mxu0 0
        %596 = vmatmul.mubr.bf16.gmra.mxu0 %v495
        %v597 = vpop.f32.mrf.mxu0
        %v598 = vadd.f32 %v311, %v597
        %v599 = vpop.f32.mrf.mxu0
        %v600 = vadd.f32 %v311, %v599
        %v601 = vpop.f32.mrf.mxu0
        %v602 = vpop.f32.mrf.mxu0
        %603 = vdwg.mxu0
        %604 = vmatprep.subr.bf16.mxu0 0
        %605 = vmatpush1.bf16.msra.mxu0 0
        %606 = vmatprep.subr.bf16.mxu0 0
        %607 = vmatpush1.bf16.msra.mxu0 0
        %608 = vmatprep.subr.bf16.mxu0 0
        %609 = vmatpush1.bf16.msra.mxu0 0
        %610 = vmatprep.subr.bf16.mxu0 %v514
        %611 = vmatpush1.bf16.msra.mxu0 %v511
        %612 = vmatprep.subr.bf16.mxu0 %v450
        %613 = vmatpush1.bf16.msra.mxu0 %v449
        %614 = vmatprep.subr.bf16.mxu0 %v442
        %615 = vmatpush1.bf16.msra.mxu0 %v441
        %616 = vmatprep.subr.bf16.mxu0 %v434
        %617 = vmatpush1.bf16.msra.mxu0 %v433
        %618 = vmatprep.subr.bf16.mxu0 %v426
        %619 = vmatpush1.bf16.msra.mxu0 %v425
        %620 = vmatprep.subr.bf16.mxu0 0
        %621 = vmatpush2.bf16.msra.mxu0 0
        %622 = vmatprep.subr.bf16.mxu0 0
        %623 = vmatpush2.bf16.msra.mxu0 0
        %624 = vmatprep.subr.bf16.mxu0 0
        %625 = vmatpush2.bf16.msra.mxu0 0
        %626 = vmatprep.subr.bf16.mxu0 0
        %627 = vmatpush2.bf16.msra.mxu0 0
        %628 = vmatprep.subr.bf16.mxu0 0
        %629 = vmatpush2.bf16.msra.mxu0 0
        %630 = vmatprep.subr.bf16.mxu0 0
        %631 = vmatpush2.bf16.msra.mxu0 0
        %632 = vmatprep.subr.bf16.mxu0 0
        %633 = vmatpush2.bf16.msra.mxu0 0
        %634 = vmatprep.subr.bf16.mxu0 0
        %635 = vmatpush2.bf16.msra.mxu0 0
        %636 = vmatprep.mubr.bf16.mxu0 0
        %637 = vmatmul.mubr.bf16.gmra.mxu0 %v495
        %v638 = vpop.f32.mrf.mxu0
        %v639 = vadd.f32 %v311, %v638
        %v640 = vpop.f32.mrf.mxu0
        %v641 = vadd.f32 %v311, %v640
        %v642 = vpop.f32.mrf.mxu0
        %v643 = vpop.f32.mrf.mxu0
        %644 = vdwg.mxu0
        %645 = vmatprep.subr.bf16.mxu0 0
        %646 = vmatpush1.bf16.msra.mxu0 0
        %647 = vmatprep.subr.bf16.mxu0 0
        %648 = vmatpush1.bf16.msra.mxu0 0
        %649 = vmatprep.subr.bf16.mxu0 0
        %650 = vmatpush1.bf16.msra.mxu0 0
        %651 = vmatprep.subr.bf16.mxu0 %v520
        %652 = vmatpush1.bf16.msra.mxu0 %v517
        %653 = vmatprep.subr.bf16.mxu0 %v452
        %654 = vmatpush1.bf16.msra.mxu0 %v451
        %655 = vmatprep.subr.bf16.mxu0 %v444
        %656 = vmatpush1.bf16.msra.mxu0 %v443
        %657 = vmatprep.subr.bf16.mxu0 %v436
        %658 = vmatpush1.bf16.msra.mxu0 %v435
        %659 = vmatprep.subr.bf16.mxu0 %v428
        %660 = vmatpush1.bf16.msra.mxu0 %v427
        %661 = vmatprep.subr.bf16.mxu0 0
        %662 = vmatpush2.bf16.msra.mxu0 0
        %663 = vmatprep.subr.bf16.mxu0 0
        %664 = vmatpush2.bf16.msra.mxu0 0
        %665 = vmatprep.subr.bf16.mxu0 0
        %666 = vmatpush2.bf16.msra.mxu0 0
        %667 = vmatprep.subr.bf16.mxu0 0
        %668 = vmatpush2.bf16.msra.mxu0 0
        %669 = vmatprep.subr.bf16.mxu0 0
        %670 = vmatpush2.bf16.msra.mxu0 0
        %671 = vmatprep.subr.bf16.mxu0 0
        %672 = vmatpush2.bf16.msra.mxu0 0
        %673 = vmatprep.subr.bf16.mxu0 0
        %674 = vmatpush2.bf16.msra.mxu0 0
        %675 = vmatprep.subr.bf16.mxu0 0
        %676 = vmatpush2.bf16.msra.mxu0 0
        %677 = vmatprep.mubr.bf16.mxu0 0
        %678 = vmatmul.mubr.bf16.gmra.mxu0 %v495
        %v679 = vpop.f32.mrf.mxu0
        %v680 = vadd.f32 %v311, %v679
        %v681 = vpop.f32.mrf.mxu0
        %v682 = vadd.f32 %v311, %v681
        %v683 = vpop.f32.mrf.mxu0
        %v684 = vpop.f32.mrf.mxu0
        %685 = vdwg.mxu0
        %v686 = vmax.f32 %v557, -30.0
        %v687 = vmax.f32 %v559, -30.0
        %v688 = vmax.f32 %v598, -30.0
        %v689 = vmax.f32 %v600, -30.0
        %v690 = vmax.f32 %v639, -30.0
        %v691 = vmax.f32 %v641, -30.0
        %v692 = vmax.f32 %v680, -30.0
        %v693 = vmax.f32 %v682, -30.0
        %v694 = vmin.f32 %v686, 30.0
        %v695 = vmin.f32 %v687, 30.0
        %v696 = vmin.f32 %v688, 30.0
        %v697 = vmin.f32 %v689, 30.0
        %v698 = vmin.f32 %v690, 30.0
        %v699 = vmin.f32 %v691, 30.0
        %v700 = vmin.f32 %v692, 30.0
        %v701 = vmin.f32 %v693, 30.0
        %v702 = vsub.f32 0.0, %v694
        %v703 = vsub.f32 0.0, %v695
        %v704 = vsub.f32 0.0, %v696
        %v705 = vsub.f32 0.0, %v697
        %v706 = vsub.f32 0.0, %v698
        %v707 = vsub.f32 0.0, %v699
        %v708 = vsub.f32 0.0, %v700
        %v709 = vsub.f32 0.0, %v701
        %v710 = vmul.f32 %v702, 1.442695
        %v711 = vpow.pop %v710
        %v712 = vmul.f32 %v703, 1.442695
        %v713 = vpow.pop %v712
        %v714 = vmul.f32 %v704, 1.442695
        %v715 = vpow.pop %v714
        %v716 = vmul.f32 %v705, 1.442695
        %v717 = vpow.pop %v716
        %v718 = vmul.f32 %v706, 1.442695
        %v719 = vpow.pop %v718
        %v720 = vmul.f32 %v707, 1.442695
        %v721 = vpow.pop %v720
        %v722 = vmul.f32 %v708, 1.442695
        %v723 = vpow.pop %v722
        %v724 = vmul.f32 %v709, 1.442695
        %v725 = vpow.pop %v724
        %v726 = vadd.f32 %v711, 1.0
        %v727 = vadd.f32 %v713, 1.0
        %v728 = vadd.f32 %v715, 1.0
        %v729 = vadd.f32 %v717, 1.0
        %v730 = vadd.f32 %v719, 1.0
        %v731 = vadd.f32 %v721, 1.0
        %v732 = vadd.f32 %v723, 1.0
        %v733 = vadd.f32 %v725, 1.0
        %v734 = vrcp.pop %v726
        %v735 = vrcp.pop %v727
        %v736 = vrcp.pop %v728
        %v737 = vrcp.pop %v729
        %v738 = vrcp.pop %v730
        %v739 = vrcp.pop %v731
        %v740 = vrcp.pop %v732
        %v741 = vrcp.pop %v733
        %742 = vst [vmem:[%s263] sm:$0xff] %v734
        %743 = vst [vmem:[%s263 + $0x8] sm:$0xff] %v735
        %744 = vst [vmem:[%s263 + $0x10] sm:$0xff] %v736
        %745 = vst [vmem:[%s263 + $0x18] sm:$0xff] %v737
        %746 = vst [vmem:[%s263 + $0x20] sm:$0xff] %v738
        %747 = vst [vmem:[%s263 + $0x28] sm:$0xff] %v739
        %748 = vst [vmem:[%s263 + $0x30] sm:$0xff] %v740
        %749 = vst [vmem:[%s263 + $0x38] sm:$0xff] %v741
        %s750 = smul.u32 8, %s16
        %p751 = scmp.lt.s32.totalorder %s750, 63
        %s752 = scalar_select %p751, %s750, 63
        %s753 = smul.addr %s752, 8
        %s754 = scalar_lea.vmem %s3, %s753
        // Predicated region
        $region56: #{cvae_forward.19} parent=50 // pred_check
          %p755 = pneg %p102
        $region57: #{cvae_forward.19} parent=50 // pred_check_branch
          %757 = sbr.rel (%p755) target = $region59
        $region58: #{cvae_forward.19} parent=50 // pred_region
          %s758 = smul.u32 8, %s16
        $region59: #{cvae_forward.19} parent=50 // pred_fallthru
          _
      $region51: #{cvae_forward.19} parent=5 // pred_fallthru
        _
      %p759 = scmp.le.s32.totalorder 2, %s11
      // Predicated region
      $region60: #{cvae_forward.19} parent=5 // pred_check
        %p760 = pneg %p759
      $region61: #{cvae_forward.19} parent=5 // pred_check_branch
        %762 = sbr.rel (%p760) target = $region63
      $region62: #{cvae_forward.19} parent=5 // pred_region
        %s763 = ssub.s32 %s11, 2
        // Predicated region
        $region64: #{cvae_forward.19} parent=62 // pred_check
          %p764 = pneg %p108
        $region65: #{cvae_forward.19} parent=62 // pred_check_branch
          %766 = sbr.rel (%p764) target = $region67
        $region66: #{cvae_forward.19} parent=62 // pred_region
          %s767 = smul.u32 8, %s17
          %p768 = scmp.lt.s32.totalorder %s767, 63
          %s769 = scalar_select %p768, %s767, 63
          %s770 = smul.addr %s769, 8
          %s771 = scalar_lea.vmem %s3, %s770
        $region67: #{cvae_forward.19} parent=62 // pred_fallthru
          _
      $region63: #{cvae_forward.19} parent=5 // pred_fallthru
        _
    $region6: #{cvae_forward.19} parent=1 // loop_footer
      %s15 = sadd.s32 1, %s11
    $region7: #{cvae_forward.19} parent=1 // loop_footer_branch
      %10 = sbr.rel target = $region3
    $region8: #{cvae_forward.19} parent=1 // loop_exit
      _

// kernel: squeeze.33
$region0: #{squeeze.33}
  %s0 = inlined_call_operand.vmem [shape: f32[8192], index: 0, kind: input, shape index: {}]
  %s1 = inlined_call_operand.hbm [shape: f32[2,1,64,64], index: 1, kind: output, shape index: {}]
  $region1: #{squeeze.33} parent=0
    #allocation0 [shape = 'u8[65536]{0}', space=vmem, size = 0x10000, scoped, tag = 'operand span for operand 1']
    #allocation1 [shape = 's32[1]{0}', space=sflag, size = 0x4, scoped, tag = 'scoped memory for squeeze.33']
    %2 = vsyncpa [#allocation1], 0
    %v3 = vld [vmem:[%s0] sm:$0xff]
    %vm4 = vcmask 523264
    %5 = vst.msk [vmem:[#allocation0] ss:$2 sm:$0xff] %vm4, %v3
    %s6 = scalar_lea.vmem %s0, 8
    %v7 = vld [vmem:[%s6] sm:$0xff]
    %vm8 = vcmask 523264
    %s9 = scalar_lea.vmem [#allocation0], 16
    %10 = vst.msk [vmem:[%s9] ss:$2 sm:$0xff] %vm8, %v7
    %s11 = scalar_lea.vmem %s0, 16
    %v12 = vld [vmem:[%s11] sm:$0xff]
    %vm13 = vcmask 523264
    %s14 = scalar_lea.vmem [#allocation0], 32
    %15 = vst.msk [vmem:[%s14] ss:$2 sm:$0xff] %vm13, %v12
    %s16 = scalar_lea.vmem %s0, 24
    %v17 = vld [vmem:[%s16] sm:$0xff]
    %vm18 = vcmask 523264
    %s19 = scalar_lea.vmem [#allocation0], 48
    %20 = vst.msk [vmem:[%s19] ss:$2 sm:$0xff] %vm18, %v17
    %s21 = scalar_lea.vmem %s0, 32
    %v22 = vld [vmem:[%s21] sm:$0xff]
    %vm23 = vcmask 523264
    %s24 = scalar_lea.vmem [#allocation0], 64
    %25 = vst.msk [vmem:[%s24] ss:$2 sm:$0xff] %vm23, %v22
    %s26 = scalar_lea.vmem %s0, 40
    %v27 = vld [vmem:[%s26] sm:$0xff]
    %vm28 = vcmask 523264
    %s29 = scalar_lea.vmem [#allocation0], 80
    %30 = vst.msk [vmem:[%s29] ss:$2 sm:$0xff] %vm28, %v27
    %s31 = scalar_lea.vmem %s0, 48
    %v32 = vld [vmem:[%s31] sm:$0xff]
    %vm33 = vcmask 523264
    %s34 = scalar_lea.vmem [#allocation0], 96
    %35 = vst.msk [vmem:[%s34] ss:$2 sm:$0xff] %vm33, %v32
    %s36 = scalar_lea.vmem %s0, 56
    %v37 = vld [vmem:[%s36] sm:$0xff]
    %vm38 = vcmask 523264
    %s39 = scalar_lea.vmem [#allocation0], 112
    %40 = vst.msk [vmem:[%s39] ss:$2 sm:$0xff] %vm38, %v37
    %v41 = vld [vmem:[%s0] sm:$0xff]
    %42 = vrot.lane.b32.xlu0 %v41, 64
    %v43 = vpop.permute.xlu0 %42
    %vm44 = vcmask 523264
    %s45 = scalar_lea.vmem [#allocation0], 1
    %46 = vst.msk [vmem:[%s45] ss:$2 sm:$0xff] %vm44, %v43
    %s47 = scalar_lea.vmem %s0, 16
    %v48 = vld [vmem:[%s47] sm:$0xff]
    %49 = vrot.lane.b32.xlu0 %v48, 64
    %v50 = vpop.permute.xlu0 %49
    %vm51 = vcmask 523264
    %s52 = scalar_lea.vmem [#allocation0], 33
    %53 = vst.msk [vmem:[%s52] ss:$2 sm:$0xff] %vm51, %v50
    %s54 = scalar_lea.vmem %s0, 32
    %v55 = vld [vmem:[%s54] sm:$0xff]
    %56 = vrot.lane.b32.xlu0 %v55, 64
    %v57 = vpop.permute.xlu0 %56
    %vm58 = vcmask 523264
    %s59 = scalar_lea.vmem [#allocation0], 65
    %60 = vst.msk [vmem:[%s59] ss:$2 sm:$0xff] %vm58, %v57
    %s61 = scalar_lea.vmem %s0, 48
    %v62 = vld [vmem:[%s61] sm:$0xff]
    %63 = vrot.lane.b32.xlu0 %v62, 64
    %v64 = vpop.permute.xlu0 %63
    %vm65 = vcmask 523264
    %s66 = scalar_lea.vmem [#allocation0], 97
    %67 = vst.msk [vmem:[%s66] ss:$2 sm:$0xff] %vm65, %v64
    %s68 = scalar_lea.vmem %s0, 8
    %v69 = vld [vmem:[%s68] sm:$0xff]
    %70 = vrot.lane.b32.xlu0 %v69, 64
    %v71 = vpop.permute.xlu0 %70
    %vm72 = vcmask 523264
    %s73 = scalar_lea.vmem [#allocation0], 17
    %74 = vst.msk [vmem:[%s73] ss:$2 sm:$0xff] %vm72, %v71
    %s75 = scalar_lea.vmem %s0, 24
    %v76 = vld [vmem:[%s75] sm:$0xff]
    %77 = vrot.lane.b32.xlu0 %v76, 64
    %v78 = vpop.permute.xlu0 %77
    %vm79 = vcmask 523264
    %s80 = scalar_lea.vmem [#allocation0], 49
    %81 = vst.msk [vmem:[%s80] ss:$2 sm:$0xff] %vm79, %v78
    %s82 = scalar_lea.vmem %s0, 40
    %v83 = vld [vmem:[%s82] sm:$0xff]
    %84 = vrot.lane.b32.xlu0 %v83, 64
    %v85 = vpop.permute.xlu0 %84
    %vm86 = vcmask 523264
    %s87 = scalar_lea.vmem [#allocation0], 81
    %88 = vst.msk [vmem:[%s87] ss:$2 sm:$0xff] %vm86, %v85
    %s89 = scalar_lea.vmem %s0, 56
    %v90 = vld [vmem:[%s89] sm:$0xff]
    %91 = vrot.lane.b32.xlu0 %v90, 64
    %v92 = vpop.permute.xlu0 %91
    %vm93 = vcmask 523264
    %s94 = scalar_lea.vmem [#allocation0], 113
    %95 = vst.msk [vmem:[%s94] ss:$2 sm:$0xff] %vm93, %v92
    %s97 = ssub.s32 2048, 2048
    %98 = vsyncadd [#allocation1], %s97
    %s100 = sshll.u32 [#allocation0], 4
    %s101 = int_to_ptr.vmem [resolvable:$true] %s100
    %103 = dma.vmem_to_hbm [thread:$0]  %s101, 2048, %s1, [#allocation1]
    %104 = dma.done [#allocation1], 2048
    %105 = vsyncpa [#allocation1], 1

</llo_original>
